<compile_context>
chip_gen: v6e
topology: v6e:2x2x1
jax: 0.10.0
libtpu: 0.0.40
codegen_flags: <defaults>
</compile_context>

<pallas_src>
import functools

import jax
import jax.numpy as jnp
from jax.experimental import pallas as pl
from jax.experimental.pallas import tpu as pltpu


# ------------------------------ fused kernel ------------------------------ #

def _critic_kernel(xc_ref, w1_ref, w2_ref, consts_ref, fc1w_ref,
                   out_ref, a1_ref, a2_ref, acc_ref, *,
                   H, W, N, NB, HW_STEP):
    """Fused critic forward.

    Grid axis k streams the fc1 weight in (HW_STEP*64, 256) bf16 chunks.
    Step 0 additionally runs both convolutions and parks the conv2 activation
    in a lane-dense VMEM layout; later steps only consume it, so the remaining
    fc1 weight DMA overlaps the conv compute.
    """
    k = pl.program_id(0)
    Wp = W + 2
    C1 = w1_ref.shape[1]            # 32
    C2 = w2_ref.shape[2]            # 64
    D1 = acc_ref.shape[1]           # 256
    RC = H * Wp * NB                # conv2 compute rows: hp in [1, H], all wp
    base = NB + Wp * NB             # a1 row of padded position (hp=1, wp=0)

    # ---------------- step 0: both convolutions (activations -> VMEM) ------
    @pl.when(k == 0)
    def _convs():
        # conv1: a single big-K bf16 matmul on the wrapper-built im2col rows.
        b1 = consts_ref[0:1, :C1]
        y1 = jnp.dot(xc_ref[...], w1_ref[...],
                     preferred_element_type=jnp.float32)
        y1 = jnp.maximum(y1 + b1, 0.0).astype(jnp.bfloat16)     # (H*W*NB, 32)

        # Park conv1's output in a zero-halo (H+2)x(W+2) padded layout so each
        # conv2 tap below is a plain statically-offset slice (no copy/mask).
        a1_ref[...] = jnp.zeros_like(a1_ref)
        for h in range(H):
            dst = base + (h * Wp + 1) * NB        # interior row (hp=h+1, wp=1)
            a1_ref[dst:dst + W * NB, :] = y1[h * W * NB:(h + 1) * W * NB, :]

        # conv2: 9 halo-offset slices -> bf16 dots, accumulated in f32.
        # (Optionally these 9 taps could be lane-concatenated into one K=288
        #  matmul; at this size the 9 K=32 dots are simpler and roughly equal.)
        b2 = consts_ref[1:2, :C2]
        acc2 = jnp.zeros((RC, C2), jnp.float32)
        for di in range(3):
            for dj in range(3):
                off = ((di - 1) * Wp + (dj - 1)) * NB
                lhs = a1_ref[base + off:base + off + RC, :]
                acc2 = acc2 + jnp.dot(lhs, w2_ref[di * 3 + dj],
                                      preferred_element_type=jnp.float32)
        y2 = jnp.maximum(acc2 + b2, 0.0)

        # Scatter interior positions into the lane-dense fc1 LHS layout:
        # a2[p // HW_STEP, n, (p % HW_STEP)*C2 + c]  with p = h*W + w, matching
        # the pre-permuted fc1 weight rows (PyTorch (c,h,w) flatten baked in).
        for h in range(H):
            for w in range(W):
                p = h * W + w
                src = (h * Wp + (w + 1)) * NB     # interior row of the RC block
                lo = (p % HW_STEP) * C2
                a2_ref[p // HW_STEP, :, lo:lo + C2] = (
                    y2[src:src + NB, :].astype(jnp.bfloat16))

        acc_ref[...] = jnp.zeros_like(acc_ref)

    # ---------------- every step: one lane-dense, big-K fc1 matmul ---------
    acc_ref[...] += jnp.dot(a2_ref[k], fc1w_ref[0],
                            preferred_element_type=jnp.float32)

    # ---------------- last step: fc1 bias+ReLU, fc2 on VPU/XLU, write ------
    @pl.when(k == pl.num_programs(0) - 1)
    def _head():
        h1 = jnp.maximum(acc_ref[...] + consts_ref[2:3, :D1], 0.0)  # (NB, 256)
        v = jnp.sum(h1 * consts_ref[3:4, :D1], axis=-1, keepdims=True)
        out_ref[...] = (v + consts_ref[4:5, 0:1])[:N, :]            # drop pad


# ------------------------------ parameters -------------------------------- #

def init_params(key, input_shape):
    """PyTorch-style uniform(-1/sqrt(fan_in)) synthetic parameters.

    input_shape is (H, W, C) as in the original module.
    """
    H, W, C = input_shape
    ks = jax.random.split(key, 8)

    def u(k, shape, fan_in):
        bound = 1.0 / jnp.sqrt(jnp.float32(fan_in))
        return jax.random.uniform(k, shape, jnp.float32, -bound, bound)

    return {
        "conv1_w": u(ks[0], (32, C, 3, 3), C * 9),
        "conv1_b": u(ks[1], (32,), C * 9),
        "conv2_w": u(ks[2], (64, 32, 3, 3), 32 * 9),
        "conv2_b": u(ks[3], (64,), 32 * 9),
        "fc1_w": u(ks[4], (256, 64 * H * W), 64 * H * W),   # (out, in) like torch
        "fc1_b": u(ks[5], (256,), 64 * H * W),
        "fc2_w": u(ks[6], (1, 256), 256),
        "fc2_b": u(ks[7], (1,), 256),
    }


def prepare_params(params, input_shape):
    """One-time layout prep so the forward path does zero weight reshuffling.

    * conv weights OIHW -> (tap-major, in, out) bf16 matmul layouts
    * fc1 weight (256, 64*H*W) -> (H*W*64, 256) bf16 with PyTorch's (C,H,W)
      flatten baked into the row permutation (rows ordered (h, w, c))
    * all small constants packed into one (5, 256) f32 block:
      row 0 = conv1 bias, 1 = conv2 bias, 2 = fc1 bias, 3 = fc2 weight,
      row 4 lane 0 = fc2 bias.
    """
    H, W, C = input_shape
    c1 = params["conv1_b"].shape[0]                              # 32
    c2 = params["conv2_b"].shape[0]                              # 64
    d1 = params["fc1_b"].shape[0]                                # 256

    w1 = jnp.transpose(params["conv1_w"], (2, 3, 1, 0)).reshape(9 * C, c1)
    w2 = jnp.transpose(params["conv2_w"], (2, 3, 1, 0)).reshape(9, c1, c2)
    fc1 = params["fc1_w"].reshape(d1, c2, H, W)                  # (d, c, h, w)
    fc1 = jnp.transpose(fc1, (2, 3, 1, 0)).reshape(H * W * c2, d1)

    consts = jnp.zeros((5, d1), jnp.float32)
    consts = consts.at[0, :c1].set(params["conv1_b"])
    consts = consts.at[1, :c2].set(params["conv2_b"])
    consts = consts.at[2, :].set(params["fc1_b"])
    consts = consts.at[3, :].set(params["fc2_w"].reshape(-1))
    consts = consts.at[4, 0].set(params["fc2_b"][0])

    return {
        "w1": w1.astype(jnp.bfloat16),
        "w2": w2.astype(jnp.bfloat16),
        "fc1_w": fc1.astype(jnp.bfloat16),                       # ~2 MiB, streamed
        "consts": consts,
    }


# -------------------------------- forward --------------------------------- #

def critic_forward(prepped, state):
    """state: (N, C, H, W) float32 (PyTorch NCHW). Returns (N, 1) float32."""
    N, C, H, W = state.shape
    NB = ((N + 7) // 8) * 8                 # batch rows padded to sublane tile
    HW = H * W
    Hp, Wp = H + 2, W + 2
    c1 = prepped["w1"].shape[1]             # 32
    c2 = prepped["w2"].shape[2]             # 64
    d1 = prepped["consts"].shape[1]         # 256

    # fc1 chunking: largest divisor of H*W whose bf16 chunk stays <= ~1 MiB
    # (=> <= 2 MiB double-buffered; safe for v5e's 16 MiB scoped VMEM default
    # and v7x's 64 MiB physical VMEM).  For this toy shape nk = 2, so default
    # double buffering already hides the whole fc1 fetch behind step-0 convs.
    # TODO(synk): for very large H*W add pipeline_mode=pl.Buffered(>2) on the
    # fc1 BlockSpec so every chunk's DMA hides behind the step-0 conv work.
    budget = 1 << 20
    hw_per_step = max(d for d in range(1, HW + 1)
                      if HW % d == 0 and d * c2 * d1 * 2 <= budget)
    nk = HW // hw_per_step
    chunk = hw_per_step * c2

    # One-time im2col for conv1 (tiny: (H*W*NB, 9*C) bf16), rows ordered
    # (h, w, n) with the batch zero-padded to a sublane multiple; lane order
    # (tap, c) matches the pre-reshaped conv1 weight.
    xp = jnp.pad(state, ((0, NB - N), (0, 0), (1, 1), (1, 1)))
    pats = jnp.stack([xp[:, :, di:di + H, dj:dj + W]
                      for di in range(3) for dj in range(3)], axis=0)
    x_cols = jnp.transpose(pats, (3, 4, 1, 0, 2))          # (H, W, NB, 9, C)
    x_cols = x_cols.reshape(HW * NB, 9 * C).astype(jnp.bfloat16)

    fc1_w = prepped["fc1_w"].reshape(nk, chunk, d1)        # free leading split

    kernel = functools.partial(_critic_kernel, H=H, W=W, N=N, NB=NB,
                               HW_STEP=hw_per_step)

    # TODO(synk): at real batch sizes add a leading "parallel" grid axis over
    # NB-sized batch blocks to occupy v7x's second TensorCore.
    return pl.pallas_call(
        kernel,
        out_shape=jax.ShapeDtypeStruct((N, 1), jnp.float32),
        grid=(nk,),
        in_specs=[
            pl.BlockSpec((HW * NB, 9 * C), lambda k: (0, 0)),   # conv1 im2col
            pl.BlockSpec((9 * C, c1), lambda k: (0, 0)),        # conv1 weight
            pl.BlockSpec((9, c1, c2), lambda k: (0, 0, 0)),     # conv2 weight
            pl.BlockSpec((5, d1), lambda k: (0, 0)),            # packed consts
            pl.BlockSpec((1, chunk, d1), lambda k: (k, 0, 0)),  # fc1 w (streamed)
        ],
        out_specs=pl.BlockSpec((N, 1), lambda k: (0, 0)),
        scratch_shapes=[
            pltpu.VMEM((Hp * Wp * NB + 2 * NB, c1), jnp.bfloat16),  # a1 (halo)
            pltpu.VMEM((nk, NB, chunk), jnp.bfloat16),              # a2 (fc1 LHS)
            pltpu.VMEM((NB, d1), jnp.float32),                      # fc1 acc
        ],
        compiler_params=pltpu.CompilerParams(
            dimension_semantics=("arbitrary",)),
    )(x_cols, prepped["w1"], prepped["w2"], prepped["consts"], fc1_w)


# ------------------------------- reference --------------------------------- #

def critic_reference(params, state):
    """Pure-JAX reference mirroring the kernel's bf16 operand rounding."""
    f32 = jnp.float32
    bf = lambda a: a.astype(jnp.bfloat16).astype(f32)
    dn = ("NCHW", "OIHW", "NCHW")
    hp = jax.lax.Precision.HIGHEST
    y = jax.lax.conv_general_dilated(bf(state), bf(params["conv1_w"]), (1, 1),
                                     ((1, 1), (1, 1)), dimension_numbers=dn,
                                     precision=hp)
    y = bf(jnp.maximum(y + params["conv1_b"][None, :, None, None], 0.0))
    y = jax.lax.conv_general_dilated(y, bf(params["conv2_w"]), (1, 1),
                                     ((1, 1), (1, 1)), dimension_numbers=dn,
                                     precision=hp)
    y = jnp.maximum(y + params["conv2_b"][None, :, None, None], 0.0)
    flat = bf(y.reshape(y.shape[0], -1))
    h = jnp.maximum(jnp.dot(flat, bf(params["fc1_w"]).T, precision=hp)
                    + params["fc1_b"], 0.0)
    return jnp.dot(h, params["fc2_w"].T, precision=hp) + params["fc2_b"]


# ---------------------------------- main ----------------------------------- #

if __name__ == "__main__":
    key = jax.random.PRNGKey(0)
    k_param, k_state = jax.random.split(key)

    # Module-consistent small shapes: input_shape = (H, W, C) = (8, 8, 4),
    # batch = 2  =>  state is NCHW (2, 4, 8, 8).
    input_shape = (8, 8, 4)
    batch = 2

    params = init_params(k_param, input_shape)
    prepped = prepare_params(params, input_shape)
    state = jax.random.normal(
        k_state, (batch, input_shape[2], input_shape[0], input_shape[1]),
        dtype=jnp.float32)

    value = jax.block_until_ready(jax.jit(critic_forward)(prepped, state))

    assert value.shape == (batch, 1), value.shape
    assert value.dtype == jnp.float32, value.dtype

    ref = jax.block_until_ready(jax.jit(critic_reference)(params, state))
    assert jnp.allclose(value, ref, atol=5e-3, rtol=1e-2), (
        float(jnp.max(jnp.abs(value - ref))))

    print("KERNEL_OK")
</pallas_src>

<mosaic_0001>
module attributes {stable_mosaic.version = 11 : i64} {
  func.func @_critic_kernel(%arg0: i32, %arg1: memref<512x36xbf16, #tpu.memory_space<vmem>>, %arg2: memref<36x32xbf16, #tpu.memory_space<vmem>>, %arg3: memref<9x32x64xbf16, #tpu.memory_space<vmem>>, %arg4: memref<5x256xf32, #tpu.memory_space<vmem>>, %arg5: memref<1x2048x256xbf16, #tpu.memory_space<vmem>>, %arg6: memref<2x1xf32, #tpu.memory_space<vmem>>, %arg7: memref<816x32xbf16, #tpu.memory_space<vmem>>, %arg8: memref<2x8x2048xbf16, #tpu.memory_space<vmem>>, %arg9: memref<8x256xf32, #tpu.memory_space<vmem>>) attributes {dimension_semantics = [#tpu.dimension_semantics<arbitrary>], iteration_bounds = array<i64: 2>, scalar_prefetch = 0 : i64, scratch_operands = 3 : i64, tpu.core_type = #tpu.core_type<tc>, window_params = [{pipeline_mode = #tpu.pipeline_mode<synchronous>, transform_indices = @transform_0, window_bounds = array<i64: 512, 36>}, {pipeline_mode = #tpu.pipeline_mode<synchronous>, transform_indices = @transform_1, window_bounds = array<i64: 36, 32>}, {pipeline_mode = #tpu.pipeline_mode<synchronous>, transform_indices = @transform_2, window_bounds = array<i64: 9, 32, 64>}, {pipeline_mode = #tpu.pipeline_mode<synchronous>, transform_indices = @transform_3, window_bounds = array<i64: 5, 256>}, {transform_indices = @transform_4, window_bounds = array<i64: 1, 2048, 256>}, {pipeline_mode = #tpu.pipeline_mode<synchronous>, transform_indices = @transform_5, window_bounds = array<i64: 2, 1>}]} {
    %c0_i32 = arith.constant 0 : i32
    %0 = arith.cmpi eq, %arg0, %c0_i32 : i32
    %1 = arith.extui %0 : i1 to i32
    %c0_i32_0 = arith.constant 0 : i32
    %2 = arith.cmpi ne, %1, %c0_i32_0 : i32
    scf.if %2 {
      %c0_10 = arith.constant 0 : index
      %c0_11 = arith.constant 0 : index
      %15 = vector.load %arg4[%c0_10, %c0_11] : memref<5x256xf32, #tpu.memory_space<vmem>>, vector<1x32xf32>
      %c0_12 = arith.constant 0 : index
      %c0_13 = arith.constant 0 : index
      %16 = vector.load %arg1[%c0_12, %c0_13] : memref<512x36xbf16, #tpu.memory_space<vmem>>, vector<512x36xbf16>
      %c0_14 = arith.constant 0 : index
      %c0_15 = arith.constant 0 : index
      %17 = vector.load %arg2[%c0_14, %c0_15] : memref<36x32xbf16, #tpu.memory_space<vmem>>, vector<36x32xbf16>
      %cst_16 = arith.constant dense<0.000000e+00> : vector<512x32xf32>
      %18 = tpu.matmul %16, %17, %cst_16 {dimension_numbers = #tpu.dot_dimension_numbers<[1], [0], [0], [1], [0, 0, 1, 1], [], []>} : vector<512x36xbf16>, vector<36x32xbf16>, vector<512x32xf32> -> vector<512x32xf32>
      %19 = vector.broadcast %15 : vector<1x32xf32> to vector<512x32xf32>
      %20 = arith.addf %18, %19 : vector<512x32xf32>
      %cst_17 = arith.constant 0.000000e+00 : f32
      %21 = vector.broadcast %cst_17 : f32 to vector<512x32xf32>
      %22 = arith.maximumf %20, %21 : vector<512x32xf32>
      %23 = arith.truncf %22 : vector<512x32xf32> to vector<512x32xbf16>
      %cst_18 = arith.constant 0.000000e+00 : bf16
      %24 = vector.broadcast %cst_18 : bf16 to vector<816x32xbf16>
      %c0_19 = arith.constant 0 : index
      %c0_20 = arith.constant 0 : index
      %25 = vector.load %arg7[%c0_19, %c0_20] : memref<816x32xbf16, #tpu.memory_space<vmem>>, vector<816x32xbf16>
      tpu.vector_store %arg7[%c0_19, %c0_20], %24 {strides = array<i32>} : memref<816x32xbf16, #tpu.memory_space<vmem>>, vector<816x32xbf16>,
      %26 = vector.extract_strided_slice %23 {offsets = [0, 0], sizes = [64, 32], strides = [1, 1]} : vector<512x32xbf16> to vector<64x32xbf16>
      %c96 = arith.constant 96 : index
      %c0_21 = arith.constant 0 : index
      %27 = vector.load %arg7[%c96, %c0_21] : memref<816x32xbf16, #tpu.memory_space<vmem>>, vector<64x32xbf16>
      tpu.vector_store %arg7[%c96, %c0_21], %26 {strides = array<i32>} : memref<816x32xbf16, #tpu.memory_space<vmem>>, vector<64x32xbf16>,
      %28 = vector.extract_strided_slice %23 {offsets = [64, 0], sizes = [64, 32], strides = [1, 1]} : vector<512x32xbf16> to vector<64x32xbf16>
      %c176 = arith.constant 176 : index
      %c0_22 = arith.constant 0 : index
      %29 = vector.load %arg7[%c176, %c0_22] : memref<816x32xbf16, #tpu.memory_space<vmem>>, vector<64x32xbf16>
      tpu.vector_store %arg7[%c176, %c0_22], %28 {strides = array<i32>} : memref<816x32xbf16, #tpu.memory_space<vmem>>, vector<64x32xbf16>,
      %30 = vector.extract_strided_slice %23 {offsets = [128, 0], sizes = [64, 32], strides = [1, 1]} : vector<512x32xbf16> to vector<64x32xbf16>
      %c256 = arith.constant 256 : index
      %c0_23 = arith.constant 0 : index
      %31 = vector.load %arg7[%c256, %c0_23] : memref<816x32xbf16, #tpu.memory_space<vmem>>, vector<64x32xbf16>
      tpu.vector_store %arg7[%c256, %c0_23], %30 {strides = array<i32>} : memref<816x32xbf16, #tpu.memory_space<vmem>>, vector<64x32xbf16>,
      %32 = vector.extract_strided_slice %23 {offsets = [192, 0], sizes = [64, 32], strides = [1, 1]} : vector<512x32xbf16> to vector<64x32xbf16>
      %c336 = arith.constant 336 : index
      %c0_24 = arith.constant 0 : index
      %33 = vector.load %arg7[%c336, %c0_24] : memref<816x32xbf16, #tpu.memory_space<vmem>>, vector<64x32xbf16>
      tpu.vector_store %arg7[%c336, %c0_24], %32 {strides = array<i32>} : memref<816x32xbf16, #tpu.memory_space<vmem>>, vector<64x32xbf16>,
      %34 = vector.extract_strided_slice %23 {offsets = [256, 0], sizes = [64, 32], strides = [1, 1]} : vector<512x32xbf16> to vector<64x32xbf16>
      %c416 = arith.constant 416 : index
      %c0_25 = arith.constant 0 : index
      %35 = vector.load %arg7[%c416, %c0_25] : memref<816x32xbf16, #tpu.memory_space<vmem>>, vector<64x32xbf16>
      tpu.vector_store %arg7[%c416, %c0_25], %34 {strides = array<i32>} : memref<816x32xbf16, #tpu.memory_space<vmem>>, vector<64x32xbf16>,
      %36 = vector.extract_strided_slice %23 {offsets = [320, 0], sizes = [64, 32], strides = [1, 1]} : vector<512x32xbf16> to vector<64x32xbf16>
      %c496 = arith.constant 496 : index
      %c0_26 = arith.constant 0 : index
      %37 = vector.load %arg7[%c496, %c0_26] : memref<816x32xbf16, #tpu.memory_space<vmem>>, vector<64x32xbf16>
      tpu.vector_store %arg7[%c496, %c0_26], %36 {strides = array<i32>} : memref<816x32xbf16, #tpu.memory_space<vmem>>, vector<64x32xbf16>,
      %38 = vector.extract_strided_slice %23 {offsets = [384, 0], sizes = [64, 32], strides = [1, 1]} : vector<512x32xbf16> to vector<64x32xbf16>
      %c576 = arith.constant 576 : index
      %c0_27 = arith.constant 0 : index
      %39 = vector.load %arg7[%c576, %c0_27] : memref<816x32xbf16, #tpu.memory_space<vmem>>, vector<64x32xbf16>
      tpu.vector_store %arg7[%c576, %c0_27], %38 {strides = array<i32>} : memref<816x32xbf16, #tpu.memory_space<vmem>>, vector<64x32xbf16>,
      %40 = vector.extract_strided_slice %23 {offsets = [448, 0], sizes = [64, 32], strides = [1, 1]} : vector<512x32xbf16> to vector<64x32xbf16>
      %c656 = arith.constant 656 : index
      %c0_28 = arith.constant 0 : index
      %41 = vector.load %arg7[%c656, %c0_28] : memref<816x32xbf16, #tpu.memory_space<vmem>>, vector<64x32xbf16>
      tpu.vector_store %arg7[%c656, %c0_28], %40 {strides = array<i32>} : memref<816x32xbf16, #tpu.memory_space<vmem>>, vector<64x32xbf16>,
      %c1 = arith.constant 1 : index
      %c0_29 = arith.constant 0 : index
      %42 = vector.load %arg4[%c1, %c0_29] : memref<5x256xf32, #tpu.memory_space<vmem>>, vector<1x64xf32>
      %cst_30 = arith.constant 0.000000e+00 : f32
      %43 = vector.broadcast %cst_30 : f32 to vector<640x64xf32>
      %c0_31 = arith.constant 0 : index
      %c0_32 = arith.constant 0 : index
      %44 = vector.load %arg7[%c0_31, %c0_32] : memref<816x32xbf16, #tpu.memory_space<vmem>>, vector<640x32xbf16>
      %c0_33 = arith.constant 0 : index
      %c0_34 = arith.constant 0 : index
      %c0_35 = arith.constant 0 : index
      %45 = vector.load %arg3[%c0_33, %c0_34, %c0_35] : memref<9x32x64xbf16, #tpu.memory_space<vmem>>, vector<1x32x64xbf16>
      %46 = vector.shape_cast %45 : vector<1x32x64xbf16> to vector<32x64xbf16>
      %cst_36 = arith.constant dense<0.000000e+00> : vector<640x64xf32>
      %47 = tpu.matmul %44, %46, %cst_36 {dimension_numbers = #tpu.dot_dimension_numbers<[1], [0], [0], [1], [0, 0, 1, 1], [], []>} : vector<640x32xbf16>, vector<32x64xbf16>, vector<640x64xf32> -> vector<640x64xf32>
      %48 = arith.addf %43, %47 : vector<640x64xf32>
      %c8 = arith.constant 8 : index
      %c0_37 = arith.constant 0 : index
      %49 = vector.load %arg7[%c8, %c0_37] : memref<816x32xbf16, #tpu.memory_space<vmem>>, vector<640x32xbf16>
      %c1_38 = arith.constant 1 : index
      %c0_39 = arith.constant 0 : index
      %c0_40 = arith.constant 0 : index
      %50 = vector.load %arg3[%c1_38, %c0_39, %c0_40] : memref<9x32x64xbf16, #tpu.memory_space<vmem>>, vector<1x32x64xbf16>
      %51 = vector.shape_cast %50 : vector<1x32x64xbf16> to vector<32x64xbf16>
      %cst_41 = arith.constant dense<0.000000e+00> : vector<640x64xf32>
      %52 = tpu.matmul %49, %51, %cst_41 {dimension_numbers = #tpu.dot_dimension_numbers<[1], [0], [0], [1], [0, 0, 1, 1], [], []>} : vector<640x32xbf16>, vector<32x64xbf16>, vector<640x64xf32> -> vector<640x64xf32>
      %53 = arith.addf %48, %52 : vector<640x64xf32>
      %c16 = arith.constant 16 : index
      %c0_42 = arith.constant 0 : index
      %54 = vector.load %arg7[%c16, %c0_42] : memref<816x32xbf16, #tpu.memory_space<vmem>>, vector<640x32xbf16>
      %c2 = arith.constant 2 : index
      %c0_43 = arith.constant 0 : index
      %c0_44 = arith.constant 0 : index
      %55 = vector.load %arg3[%c2, %c0_43, %c0_44] : memref<9x32x64xbf16, #tpu.memory_space<vmem>>, vector<1x32x64xbf16>
      %56 = vector.shape_cast %55 : vector<1x32x64xbf16> to vector<32x64xbf16>
      %cst_45 = arith.constant dense<0.000000e+00> : vector<640x64xf32>
      %57 = tpu.matmul %54, %56, %cst_45 {dimension_numbers = #tpu.dot_dimension_numbers<[1], [0], [0], [1], [0, 0, 1, 1], [], []>} : vector<640x32xbf16>, vector<32x64xbf16>, vector<640x64xf32> -> vector<640x64xf32>
      %58 = arith.addf %53, %57 : vector<640x64xf32>
      %c80 = arith.constant 80 : index
      %c0_46 = arith.constant 0 : index
      %59 = vector.load %arg7[%c80, %c0_46] : memref<816x32xbf16, #tpu.memory_space<vmem>>, vector<640x32xbf16>
      %c3 = arith.constant 3 : index
      %c0_47 = arith.constant 0 : index
      %c0_48 = arith.constant 0 : index
      %60 = vector.load %arg3[%c3, %c0_47, %c0_48] : memref<9x32x64xbf16, #tpu.memory_space<vmem>>, vector<1x32x64xbf16>
      %61 = vector.shape_cast %60 : vector<1x32x64xbf16> to vector<32x64xbf16>
      %cst_49 = arith.constant dense<0.000000e+00> : vector<640x64xf32>
      %62 = tpu.matmul %59, %61, %cst_49 {dimension_numbers = #tpu.dot_dimension_numbers<[1], [0], [0], [1], [0, 0, 1, 1], [], []>} : vector<640x32xbf16>, vector<32x64xbf16>, vector<640x64xf32> -> vector<640x64xf32>
      %63 = arith.addf %58, %62 : vector<640x64xf32>
      %c88 = arith.constant 88 : index
      %c0_50 = arith.constant 0 : index
      %64 = vector.load %arg7[%c88, %c0_50] : memref<816x32xbf16, #tpu.memory_space<vmem>>, vector<640x32xbf16>
      %c4 = arith.constant 4 : index
      %c0_51 = arith.constant 0 : index
      %c0_52 = arith.constant 0 : index
      %65 = vector.load %arg3[%c4, %c0_51, %c0_52] : memref<9x32x64xbf16, #tpu.memory_space<vmem>>, vector<1x32x64xbf16>
      %66 = vector.shape_cast %65 : vector<1x32x64xbf16> to vector<32x64xbf16>
      %cst_53 = arith.constant dense<0.000000e+00> : vector<640x64xf32>
      %67 = tpu.matmul %64, %66, %cst_53 {dimension_numbers = #tpu.dot_dimension_numbers<[1], [0], [0], [1], [0, 0, 1, 1], [], []>} : vector<640x32xbf16>, vector<32x64xbf16>, vector<640x64xf32> -> vector<640x64xf32>
      %68 = arith.addf %63, %67 : vector<640x64xf32>
      %c96_54 = arith.constant 96 : index
      %c0_55 = arith.constant 0 : index
      %69 = vector.load %arg7[%c96_54, %c0_55] : memref<816x32xbf16, #tpu.memory_space<vmem>>, vector<640x32xbf16>
      %c5 = arith.constant 5 : index
      %c0_56 = arith.constant 0 : index
      %c0_57 = arith.constant 0 : index
      %70 = vector.load %arg3[%c5, %c0_56, %c0_57] : memref<9x32x64xbf16, #tpu.memory_space<vmem>>, vector<1x32x64xbf16>
      %71 = vector.shape_cast %70 : vector<1x32x64xbf16> to vector<32x64xbf16>
      %cst_58 = arith.constant dense<0.000000e+00> : vector<640x64xf32>
      %72 = tpu.matmul %69, %71, %cst_58 {dimension_numbers = #tpu.dot_dimension_numbers<[1], [0], [0], [1], [0, 0, 1, 1], [], []>} : vector<640x32xbf16>, vector<32x64xbf16>, vector<640x64xf32> -> vector<640x64xf32>
      %73 = arith.addf %68, %72 : vector<640x64xf32>
      %c160 = arith.constant 160 : index
      %c0_59 = arith.constant 0 : index
      %74 = vector.load %arg7[%c160, %c0_59] : memref<816x32xbf16, #tpu.memory_space<vmem>>, vector<640x32xbf16>
      %c6 = arith.constant 6 : index
      %c0_60 = arith.constant 0 : index
      %c0_61 = arith.constant 0 : index
      %75 = vector.load %arg3[%c6, %c0_60, %c0_61] : memref<9x32x64xbf16, #tpu.memory_space<vmem>>, vector<1x32x64xbf16>
      %76 = vector.shape_cast %75 : vector<1x32x64xbf16> to vector<32x64xbf16>
      %cst_62 = arith.constant dense<0.000000e+00> : vector<640x64xf32>
      %77 = tpu.matmul %74, %76, %cst_62 {dimension_numbers = #tpu.dot_dimension_numbers<[1], [0], [0], [1], [0, 0, 1, 1], [], []>} : vector<640x32xbf16>, vector<32x64xbf16>, vector<640x64xf32> -> vector<640x64xf32>
      %78 = arith.addf %73, %77 : vector<640x64xf32>
      %c168 = arith.constant 168 : index
      %c0_63 = arith.constant 0 : index
      %79 = vector.load %arg7[%c168, %c0_63] : memref<816x32xbf16, #tpu.memory_space<vmem>>, vector<640x32xbf16>
      %c7 = arith.constant 7 : index
      %c0_64 = arith.constant 0 : index
      %c0_65 = arith.constant 0 : index
      %80 = vector.load %arg3[%c7, %c0_64, %c0_65] : memref<9x32x64xbf16, #tpu.memory_space<vmem>>, vector<1x32x64xbf16>
      %81 = vector.shape_cast %80 : vector<1x32x64xbf16> to vector<32x64xbf16>
      %cst_66 = arith.constant dense<0.000000e+00> : vector<640x64xf32>
      %82 = tpu.matmul %79, %81, %cst_66 {dimension_numbers = #tpu.dot_dimension_numbers<[1], [0], [0], [1], [0, 0, 1, 1], [], []>} : vector<640x32xbf16>, vector<32x64xbf16>, vector<640x64xf32> -> vector<640x64xf32>
      %83 = arith.addf %78, %82 : vector<640x64xf32>
      %c176_67 = arith.constant 176 : index
      %c0_68 = arith.constant 0 : index
      %84 = vector.load %arg7[%c176_67, %c0_68] : memref<816x32xbf16, #tpu.memory_space<vmem>>, vector<640x32xbf16>
      %c8_69 = arith.constant 8 : index
      %c0_70 = arith.constant 0 : index
      %c0_71 = arith.constant 0 : index
      %85 = vector.load %arg3[%c8_69, %c0_70, %c0_71] : memref<9x32x64xbf16, #tpu.memory_space<vmem>>, vector<1x32x64xbf16>
      %86 = vector.shape_cast %85 : vector<1x32x64xbf16> to vector<32x64xbf16>
      %cst_72 = arith.constant dense<0.000000e+00> : vector<640x64xf32>
      %87 = tpu.matmul %84, %86, %cst_72 {dimension_numbers = #tpu.dot_dimension_numbers<[1], [0], [0], [1], [0, 0, 1, 1], [], []>} : vector<640x32xbf16>, vector<32x64xbf16>, vector<640x64xf32> -> vector<640x64xf32>
      %88 = arith.addf %83, %87 : vector<640x64xf32>
      %89 = vector.broadcast %42 : vector<1x64xf32> to vector<640x64xf32>
      %90 = arith.addf %88, %89 : vector<640x64xf32>
      %cst_73 = arith.constant 0.000000e+00 : f32
      %91 = vector.broadcast %cst_73 : f32 to vector<640x64xf32>
      %92 = arith.maximumf %90, %91 : vector<640x64xf32>
      %93 = vector.extract_strided_slice %92 {offsets = [8, 0], sizes = [8, 64], strides = [1, 1]} : vector<640x64xf32> to vector<8x64xf32>
      %94 = arith.truncf %93 : vector<8x64xf32> to vector<8x64xbf16>
      %c0_74 = arith.constant 0 : index
      %c0_75 = arith.constant 0 : index
      %c0_76 = arith.constant 0 : index
      %95 = vector.load %arg8[%c0_74, %c0_75, %c0_76] : memref<2x8x2048xbf16, #tpu.memory_space<vmem>>, vector<1x8x64xbf16>
      %96 = vector.shape_cast %95 : vector<1x8x64xbf16> to vector<8x64xbf16>
      %97 = vector.shape_cast %94 : vector<8x64xbf16> to vector<1x8x64xbf16>
      tpu.vector_store %arg8[%c0_74, %c0_75, %c0_76], %97 {strides = array<i32>} : memref<2x8x2048xbf16, #tpu.memory_space<vmem>>, vector<1x8x64xbf16>,
      %98 = vector.extract_strided_slice %92 {offsets = [16, 0], sizes = [8, 64], strides = [1, 1]} : vector<640x64xf32> to vector<8x64xf32>
      %99 = arith.truncf %98 : vector<8x64xf32> to vector<8x64xbf16>
      %c0_77 = arith.constant 0 : index
      %c0_78 = arith.constant 0 : index
      %c64 = arith.constant 64 : index
      %100 = vector.load %arg8[%c0_77, %c0_78, %c64] : memref<2x8x2048xbf16, #tpu.memory_space<vmem>>, vector<1x8x64xbf16>
      %101 = vector.shape_cast %100 : vector<1x8x64xbf16> to vector<8x64xbf16>
      %102 = vector.shape_cast %99 : vector<8x64xbf16> to vector<1x8x64xbf16>
      tpu.vector_store %arg8[%c0_77, %c0_78, %c64], %102 {strides = array<i32>} : memref<2x8x2048xbf16, #tpu.memory_space<vmem>>, vector<1x8x64xbf16>,
      %103 = vector.extract_strided_slice %92 {offsets = [24, 0], sizes = [8, 64], strides = [1, 1]} : vector<640x64xf32> to vector<8x64xf32>
      %104 = arith.truncf %103 : vector<8x64xf32> to vector<8x64xbf16>
      %c0_79 = arith.constant 0 : index
      %c0_80 = arith.constant 0 : index
      %c128 = arith.constant 128 : index
      %105 = vector.load %arg8[%c0_79, %c0_80, %c128] : memref<2x8x2048xbf16, #tpu.memory_space<vmem>>, vector<1x8x64xbf16>
      %106 = vector.shape_cast %105 : vector<1x8x64xbf16> to vector<8x64xbf16>
      %107 = vector.shape_cast %104 : vector<8x64xbf16> to vector<1x8x64xbf16>
      tpu.vector_store %arg8[%c0_79, %c0_80, %c128], %107 {strides = array<i32>} : memref<2x8x2048xbf16, #tpu.memory_space<vmem>>, vector<1x8x64xbf16>,
      %108 = vector.extract_strided_slice %92 {offsets = [32, 0], sizes = [8, 64], strides = [1, 1]} : vector<640x64xf32> to vector<8x64xf32>
      %109 = arith.truncf %108 : vector<8x64xf32> to vector<8x64xbf16>
      %c0_81 = arith.constant 0 : index
      %c0_82 = arith.constant 0 : index
      %c192 = arith.constant 192 : index
      %110 = vector.load %arg8[%c0_81, %c0_82, %c192] : memref<2x8x2048xbf16, #tpu.memory_space<vmem>>, vector<1x8x64xbf16>
      %111 = vector.shape_cast %110 : vector<1x8x64xbf16> to vector<8x64xbf16>
      %112 = vector.shape_cast %109 : vector<8x64xbf16> to vector<1x8x64xbf16>
      tpu.vector_store %arg8[%c0_81, %c0_82, %c192], %112 {strides = array<i32>} : memref<2x8x2048xbf16, #tpu.memory_space<vmem>>, vector<1x8x64xbf16>,
      %113 = vector.extract_strided_slice %92 {offsets = [40, 0], sizes = [8, 64], strides = [1, 1]} : vector<640x64xf32> to vector<8x64xf32>
      %114 = arith.truncf %113 : vector<8x64xf32> to vector<8x64xbf16>
      %c0_83 = arith.constant 0 : index
      %c0_84 = arith.constant 0 : index
      %c256_85 = arith.constant 256 : index
      %115 = vector.load %arg8[%c0_83, %c0_84, %c256_85] : memref<2x8x2048xbf16, #tpu.memory_space<vmem>>, vector<1x8x64xbf16>
      %116 = vector.shape_cast %115 : vector<1x8x64xbf16> to vector<8x64xbf16>
      %117 = vector.shape_cast %114 : vector<8x64xbf16> to vector<1x8x64xbf16>
      tpu.vector_store %arg8[%c0_83, %c0_84, %c256_85], %117 {strides = array<i32>} : memref<2x8x2048xbf16, #tpu.memory_space<vmem>>, vector<1x8x64xbf16>,
      %118 = vector.extract_strided_slice %92 {offsets = [48, 0], sizes = [8, 64], strides = [1, 1]} : vector<640x64xf32> to vector<8x64xf32>
      %119 = arith.truncf %118 : vector<8x64xf32> to vector<8x64xbf16>
      %c0_86 = arith.constant 0 : index
      %c0_87 = arith.constant 0 : index
      %c320 = arith.constant 320 : index
      %120 = vector.load %arg8[%c0_86, %c0_87, %c320] : memref<2x8x2048xbf16, #tpu.memory_space<vmem>>, vector<1x8x64xbf16>
      %121 = vector.shape_cast %120 : vector<1x8x64xbf16> to vector<8x64xbf16>
      %122 = vector.shape_cast %119 : vector<8x64xbf16> to vector<1x8x64xbf16>
      tpu.vector_store %arg8[%c0_86, %c0_87, %c320], %122 {strides = array<i32>} : memref<2x8x2048xbf16, #tpu.memory_space<vmem>>, vector<1x8x64xbf16>,
      %123 = vector.extract_strided_slice %92 {offsets = [56, 0], sizes = [8, 64], strides = [1, 1]} : vector<640x64xf32> to vector<8x64xf32>
      %124 = arith.truncf %123 : vector<8x64xf32> to vector<8x64xbf16>
      %c0_88 = arith.constant 0 : index
      %c0_89 = arith.constant 0 : index
      %c384 = arith.constant 384 : index
      %125 = vector.load %arg8[%c0_88, %c0_89, %c384] : memref<2x8x2048xbf16, #tpu.memory_space<vmem>>, vector<1x8x64xbf16>
      %126 = vector.shape_cast %125 : vector<1x8x64xbf16> to vector<8x64xbf16>
      %127 = vector.shape_cast %124 : vector<8x64xbf16> to vector<1x8x64xbf16>
      tpu.vector_store %arg8[%c0_88, %c0_89, %c384], %127 {strides = array<i32>} : memref<2x8x2048xbf16, #tpu.memory_space<vmem>>, vector<1x8x64xbf16>,
      %128 = vector.extract_strided_slice %92 {offsets = [64, 0], sizes = [8, 64], strides = [1, 1]} : vector<640x64xf32> to vector<8x64xf32>
      %129 = arith.truncf %128 : vector<8x64xf32> to vector<8x64xbf16>
      %c0_90 = arith.constant 0 : index
      %c0_91 = arith.constant 0 : index
      %c448 = arith.constant 448 : index
      %130 = vector.load %arg8[%c0_90, %c0_91, %c448] : memref<2x8x2048xbf16, #tpu.memory_space<vmem>>, vector<1x8x64xbf16>
      %131 = vector.shape_cast %130 : vector<1x8x64xbf16> to vector<8x64xbf16>
      %132 = vector.shape_cast %129 : vector<8x64xbf16> to vector<1x8x64xbf16>
      tpu.vector_store %arg8[%c0_90, %c0_91, %c448], %132 {strides = array<i32>} : memref<2x8x2048xbf16, #tpu.memory_space<vmem>>, vector<1x8x64xbf16>,
      %133 = vector.extract_strided_slice %92 {offsets = [88, 0], sizes = [8, 64], strides = [1, 1]} : vector<640x64xf32> to vector<8x64xf32>
      %134 = arith.truncf %133 : vector<8x64xf32> to vector<8x64xbf16>
      %c0_92 = arith.constant 0 : index
      %c0_93 = arith.constant 0 : index
      %c512 = arith.constant 512 : index
      %135 = vector.load %arg8[%c0_92, %c0_93, %c512] : memref<2x8x2048xbf16, #tpu.memory_space<vmem>>, vector<1x8x64xbf16>
      %136 = vector.shape_cast %135 : vector<1x8x64xbf16> to vector<8x64xbf16>
      %137 = vector.shape_cast %134 : vector<8x64xbf16> to vector<1x8x64xbf16>
      tpu.vector_store %arg8[%c0_92, %c0_93, %c512], %137 {strides = array<i32>} : memref<2x8x2048xbf16, #tpu.memory_space<vmem>>, vector<1x8x64xbf16>,
      %138 = vector.extract_strided_slice %92 {offsets = [96, 0], sizes = [8, 64], strides = [1, 1]} : vector<640x64xf32> to vector<8x64xf32>
      %139 = arith.truncf %138 : vector<8x64xf32> to vector<8x64xbf16>
      %c0_94 = arith.constant 0 : index
      %c0_95 = arith.constant 0 : index
      %c576_96 = arith.constant 576 : index
      %140 = vector.load %arg8[%c0_94, %c0_95, %c576_96] : memref<2x8x2048xbf16, #tpu.memory_space<vmem>>, vector<1x8x64xbf16>
      %141 = vector.shape_cast %140 : vector<1x8x64xbf16> to vector<8x64xbf16>
      %142 = vector.shape_cast %139 : vector<8x64xbf16> to vector<1x8x64xbf16>
      tpu.vector_store %arg8[%c0_94, %c0_95, %c576_96], %142 {strides = array<i32>} : memref<2x8x2048xbf16, #tpu.memory_space<vmem>>, vector<1x8x64xbf16>,
      %143 = vector.extract_strided_slice %92 {offsets = [104, 0], sizes = [8, 64], strides = [1, 1]} : vector<640x64xf32> to vector<8x64xf32>
      %144 = arith.truncf %143 : vector<8x64xf32> to vector<8x64xbf16>
      %c0_97 = arith.constant 0 : index
      %c0_98 = arith.constant 0 : index
      %c640 = arith.constant 640 : index
      %145 = vector.load %arg8[%c0_97, %c0_98, %c640] : memref<2x8x2048xbf16, #tpu.memory_space<vmem>>, vector<1x8x64xbf16>
      %146 = vector.shape_cast %145 : vector<1x8x64xbf16> to vector<8x64xbf16>
      %147 = vector.shape_cast %144 : vector<8x64xbf16> to vector<1x8x64xbf16>
      tpu.vector_store %arg8[%c0_97, %c0_98, %c640], %147 {strides = array<i32>} : memref<2x8x2048xbf16, #tpu.memory_space<vmem>>, vector<1x8x64xbf16>,
      %148 = vector.extract_strided_slice %92 {offsets = [112, 0], sizes = [8, 64], strides = [1, 1]} : vector<640x64xf32> to vector<8x64xf32>
      %149 = arith.truncf %148 : vector<8x64xf32> to vector<8x64xbf16>
      %c0_99 = arith.constant 0 : index
      %c0_100 = arith.constant 0 : index
      %c704 = arith.constant 704 : index
      %150 = vector.load %arg8[%c0_99, %c0_100, %c704] : memref<2x8x2048xbf16, #tpu.memory_space<vmem>>, vector<1x8x64xbf16>
      %151 = vector.shape_cast %150 : vector<1x8x64xbf16> to vector<8x64xbf16>
      %152 = vector.shape_cast %149 : vector<8x64xbf16> to vector<1x8x64xbf16>
      tpu.vector_store %arg8[%c0_99, %c0_100, %c704], %152 {strides = array<i32>} : memref<2x8x2048xbf16, #tpu.memory_space<vmem>>, vector<1x8x64xbf16>,
      %153 = vector.extract_strided_slice %92 {offsets = [120, 0], sizes = [8, 64], strides = [1, 1]} : vector<640x64xf32> to vector<8x64xf32>
      %154 = arith.truncf %153 : vector<8x64xf32> to vector<8x64xbf16>
      %c0_101 = arith.constant 0 : index
      %c0_102 = arith.constant 0 : index
      %c768 = arith.constant 768 : index
      %155 = vector.load %arg8[%c0_101, %c0_102, %c768] : memref<2x8x2048xbf16, #tpu.memory_space<vmem>>, vector<1x8x64xbf16>
      %156 = vector.shape_cast %155 : vector<1x8x64xbf16> to vector<8x64xbf16>
      %157 = vector.shape_cast %154 : vector<8x64xbf16> to vector<1x8x64xbf16>
      tpu.vector_store %arg8[%c0_101, %c0_102, %c768], %157 {strides = array<i32>} : memref<2x8x2048xbf16, #tpu.memory_space<vmem>>, vector<1x8x64xbf16>,
      %158 = vector.extract_strided_slice %92 {offsets = [128, 0], sizes = [8, 64], strides = [1, 1]} : vector<640x64xf32> to vector<8x64xf32>
      %159 = arith.truncf %158 : vector<8x64xf32> to vector<8x64xbf16>
      %c0_103 = arith.constant 0 : index
      %c0_104 = arith.constant 0 : index
      %c832 = arith.constant 832 : index
      %160 = vector.load %arg8[%c0_103, %c0_104, %c832] : memref<2x8x2048xbf16, #tpu.memory_space<vmem>>, vector<1x8x64xbf16>
      %161 = vector.shape_cast %160 : vector<1x8x64xbf16> to vector<8x64xbf16>
      %162 = vector.shape_cast %159 : vector<8x64xbf16> to vector<1x8x64xbf16>
      tpu.vector_store %arg8[%c0_103, %c0_104, %c832], %162 {strides = array<i32>} : memref<2x8x2048xbf16, #tpu.memory_space<vmem>>, vector<1x8x64xbf16>,
      %163 = vector.extract_strided_slice %92 {offsets = [136, 0], sizes = [8, 64], strides = [1, 1]} : vector<640x64xf32> to vector<8x64xf32>
      %164 = arith.truncf %163 : vector<8x64xf32> to vector<8x64xbf16>
      %c0_105 = arith.constant 0 : index
      %c0_106 = arith.constant 0 : index
      %c896 = arith.constant 896 : index
      %165 = vector.load %arg8[%c0_105, %c0_106, %c896] : memref<2x8x2048xbf16, #tpu.memory_space<vmem>>, vector<1x8x64xbf16>
      %166 = vector.shape_cast %165 : vector<1x8x64xbf16> to vector<8x64xbf16>
      %167 = vector.shape_cast %164 : vector<8x64xbf16> to vector<1x8x64xbf16>
      tpu.vector_store %arg8[%c0_105, %c0_106, %c896], %167 {strides = array<i32>} : memref<2x8x2048xbf16, #tpu.memory_space<vmem>>, vector<1x8x64xbf16>,
      %168 = vector.extract_strided_slice %92 {offsets = [144, 0], sizes = [8, 64], strides = [1, 1]} : vector<640x64xf32> to vector<8x64xf32>
      %169 = arith.truncf %168 : vector<8x64xf32> to vector<8x64xbf16>
      %c0_107 = arith.constant 0 : index
      %c0_108 = arith.constant 0 : index
      %c960 = arith.constant 960 : index
      %170 = vector.load %arg8[%c0_107, %c0_108, %c960] : memref<2x8x2048xbf16, #tpu.memory_space<vmem>>, vector<1x8x64xbf16>
      %171 = vector.shape_cast %170 : vector<1x8x64xbf16> to vector<8x64xbf16>
      %172 = vector.shape_cast %169 : vector<8x64xbf16> to vector<1x8x64xbf16>
      tpu.vector_store %arg8[%c0_107, %c0_108, %c960], %172 {strides = array<i32>} : memref<2x8x2048xbf16, #tpu.memory_space<vmem>>, vector<1x8x64xbf16>,
      %173 = vector.extract_strided_slice %92 {offsets = [168, 0], sizes = [8, 64], strides = [1, 1]} : vector<640x64xf32> to vector<8x64xf32>
      %174 = arith.truncf %173 : vector<8x64xf32> to vector<8x64xbf16>
      %c0_109 = arith.constant 0 : index
      %c0_110 = arith.constant 0 : index
      %c1024 = arith.constant 1024 : index
      %175 = vector.load %arg8[%c0_109, %c0_110, %c1024] : memref<2x8x2048xbf16, #tpu.memory_space<vmem>>, vector<1x8x64xbf16>
      %176 = vector.shape_cast %175 : vector<1x8x64xbf16> to vector<8x64xbf16>
      %177 = vector.shape_cast %174 : vector<8x64xbf16> to vector<1x8x64xbf16>
      tpu.vector_store %arg8[%c0_109, %c0_110, %c1024], %177 {strides = array<i32>} : memref<2x8x2048xbf16, #tpu.memory_space<vmem>>, vector<1x8x64xbf16>,
      %178 = vector.extract_strided_slice %92 {offsets = [176, 0], sizes = [8, 64], strides = [1, 1]} : vector<640x64xf32> to vector<8x64xf32>
      %179 = arith.truncf %178 : vector<8x64xf32> to vector<8x64xbf16>
      %c0_111 = arith.constant 0 : index
      %c0_112 = arith.constant 0 : index
      %c1088 = arith.constant 1088 : index
      %180 = vector.load %arg8[%c0_111, %c0_112, %c1088] : memref<2x8x2048xbf16, #tpu.memory_space<vmem>>, vector<1x8x64xbf16>
      %181 = vector.shape_cast %180 : vector<1x8x64xbf16> to vector<8x64xbf16>
      %182 = vector.shape_cast %179 : vector<8x64xbf16> to vector<1x8x64xbf16>
      tpu.vector_store %arg8[%c0_111, %c0_112, %c1088], %182 {strides = array<i32>} : memref<2x8x2048xbf16, #tpu.memory_space<vmem>>, vector<1x8x64xbf16>,
      %183 = vector.extract_strided_slice %92 {offsets = [184, 0], sizes = [8, 64], strides = [1, 1]} : vector<640x64xf32> to vector<8x64xf32>
      %184 = arith.truncf %183 : vector<8x64xf32> to vector<8x64xbf16>
      %c0_113 = arith.constant 0 : index
      %c0_114 = arith.constant 0 : index
      %c1152 = arith.constant 1152 : index
      %185 = vector.load %arg8[%c0_113, %c0_114, %c1152] : memref<2x8x2048xbf16, #tpu.memory_space<vmem>>, vector<1x8x64xbf16>
      %186 = vector.shape_cast %185 : vector<1x8x64xbf16> to vector<8x64xbf16>
      %187 = vector.shape_cast %184 : vector<8x64xbf16> to vector<1x8x64xbf16>
      tpu.vector_store %arg8[%c0_113, %c0_114, %c1152], %187 {strides = array<i32>} : memref<2x8x2048xbf16, #tpu.memory_space<vmem>>, vector<1x8x64xbf16>,
      %188 = vector.extract_strided_slice %92 {offsets = [192, 0], sizes = [8, 64], strides = [1, 1]} : vector<640x64xf32> to vector<8x64xf32>
      %189 = arith.truncf %188 : vector<8x64xf32> to vector<8x64xbf16>
      %c0_115 = arith.constant 0 : index
      %c0_116 = arith.constant 0 : index
      %c1216 = arith.constant 1216 : index
      %190 = vector.load %arg8[%c0_115, %c0_116, %c1216] : memref<2x8x2048xbf16, #tpu.memory_space<vmem>>, vector<1x8x64xbf16>
      %191 = vector.shape_cast %190 : vector<1x8x64xbf16> to vector<8x64xbf16>
      %192 = vector.shape_cast %189 : vector<8x64xbf16> to vector<1x8x64xbf16>
      tpu.vector_store %arg8[%c0_115, %c0_116, %c1216], %192 {strides = array<i32>} : memref<2x8x2048xbf16, #tpu.memory_space<vmem>>, vector<1x8x64xbf16>,
      %193 = vector.extract_strided_slice %92 {offsets = [200, 0], sizes = [8, 64], strides = [1, 1]} : vector<640x64xf32> to vector<8x64xf32>
      %194 = arith.truncf %193 : vector<8x64xf32> to vector<8x64xbf16>
      %c0_117 = arith.constant 0 : index
      %c0_118 = arith.constant 0 : index
      %c1280 = arith.constant 1280 : index
      %195 = vector.load %arg8[%c0_117, %c0_118, %c1280] : memref<2x8x2048xbf16, #tpu.memory_space<vmem>>, vector<1x8x64xbf16>
      %196 = vector.shape_cast %195 : vector<1x8x64xbf16> to vector<8x64xbf16>
      %197 = vector.shape_cast %194 : vector<8x64xbf16> to vector<1x8x64xbf16>
      tpu.vector_store %arg8[%c0_117, %c0_118, %c1280], %197 {strides = array<i32>} : memref<2x8x2048xbf16, #tpu.memory_space<vmem>>, vector<1x8x64xbf16>,
      %198 = vector.extract_strided_slice %92 {offsets = [208, 0], sizes = [8, 64], strides = [1, 1]} : vector<640x64xf32> to vector<8x64xf32>
      %199 = arith.truncf %198 : vector<8x64xf32> to vector<8x64xbf16>
      %c0_119 = arith.constant 0 : index
      %c0_120 = arith.constant 0 : index
      %c1344 = arith.constant 1344 : index
      %200 = vector.load %arg8[%c0_119, %c0_120, %c1344] : memref<2x8x2048xbf16, #tpu.memory_space<vmem>>, vector<1x8x64xbf16>
      %201 = vector.shape_cast %200 : vector<1x8x64xbf16> to vector<8x64xbf16>
      %202 = vector.shape_cast %199 : vector<8x64xbf16> to vector<1x8x64xbf16>
      tpu.vector_store %arg8[%c0_119, %c0_120, %c1344], %202 {strides = array<i32>} : memref<2x8x2048xbf16, #tpu.memory_space<vmem>>, vector<1x8x64xbf16>,
      %203 = vector.extract_strided_slice %92 {offsets = [216, 0], sizes = [8, 64], strides = [1, 1]} : vector<640x64xf32> to vector<8x64xf32>
      %204 = arith.truncf %203 : vector<8x64xf32> to vector<8x64xbf16>
      %c0_121 = arith.constant 0 : index
      %c0_122 = arith.constant 0 : index
      %c1408 = arith.constant 1408 : index
      %205 = vector.load %arg8[%c0_121, %c0_122, %c1408] : memref<2x8x2048xbf16, #tpu.memory_space<vmem>>, vector<1x8x64xbf16>
      %206 = vector.shape_cast %205 : vector<1x8x64xbf16> to vector<8x64xbf16>
      %207 = vector.shape_cast %204 : vector<8x64xbf16> to vector<1x8x64xbf16>
      tpu.vector_store %arg8[%c0_121, %c0_122, %c1408], %207 {strides = array<i32>} : memref<2x8x2048xbf16, #tpu.memory_space<vmem>>, vector<1x8x64xbf16>,
      %208 = vector.extract_strided_slice %92 {offsets = [224, 0], sizes = [8, 64], strides = [1, 1]} : vector<640x64xf32> to vector<8x64xf32>
      %209 = arith.truncf %208 : vector<8x64xf32> to vector<8x64xbf16>
      %c0_123 = arith.constant 0 : index
      %c0_124 = arith.constant 0 : index
      %c1472 = arith.constant 1472 : index
      %210 = vector.load %arg8[%c0_123, %c0_124, %c1472] : memref<2x8x2048xbf16, #tpu.memory_space<vmem>>, vector<1x8x64xbf16>
      %211 = vector.shape_cast %210 : vector<1x8x64xbf16> to vector<8x64xbf16>
      %212 = vector.shape_cast %209 : vector<8x64xbf16> to vector<1x8x64xbf16>
      tpu.vector_store %arg8[%c0_123, %c0_124, %c1472], %212 {strides = array<i32>} : memref<2x8x2048xbf16, #tpu.memory_space<vmem>>, vector<1x8x64xbf16>,
      %213 = vector.extract_strided_slice %92 {offsets = [248, 0], sizes = [8, 64], strides = [1, 1]} : vector<640x64xf32> to vector<8x64xf32>
      %214 = arith.truncf %213 : vector<8x64xf32> to vector<8x64xbf16>
      %c0_125 = arith.constant 0 : index
      %c0_126 = arith.constant 0 : index
      %c1536 = arith.constant 1536 : index
      %215 = vector.load %arg8[%c0_125, %c0_126, %c1536] : memref<2x8x2048xbf16, #tpu.memory_space<vmem>>, vector<1x8x64xbf16>
      %216 = vector.shape_cast %215 : vector<1x8x64xbf16> to vector<8x64xbf16>
      %217 = vector.shape_cast %214 : vector<8x64xbf16> to vector<1x8x64xbf16>
      tpu.vector_store %arg8[%c0_125, %c0_126, %c1536], %217 {strides = array<i32>} : memref<2x8x2048xbf16, #tpu.memory_space<vmem>>, vector<1x8x64xbf16>,
      %218 = vector.extract_strided_slice %92 {offsets = [256, 0], sizes = [8, 64], strides = [1, 1]} : vector<640x64xf32> to vector<8x64xf32>
      %219 = arith.truncf %218 : vector<8x64xf32> to vector<8x64xbf16>
      %c0_127 = arith.constant 0 : index
      %c0_128 = arith.constant 0 : index
      %c1600 = arith.constant 1600 : index
      %220 = vector.load %arg8[%c0_127, %c0_128, %c1600] : memref<2x8x2048xbf16, #tpu.memory_space<vmem>>, vector<1x8x64xbf16>
      %221 = vector.shape_cast %220 : vector<1x8x64xbf16> to vector<8x64xbf16>
      %222 = vector.shape_cast %219 : vector<8x64xbf16> to vector<1x8x64xbf16>
      tpu.vector_store %arg8[%c0_127, %c0_128, %c1600], %222 {strides = array<i32>} : memref<2x8x2048xbf16, #tpu.memory_space<vmem>>, vector<1x8x64xbf16>,
      %223 = vector.extract_strided_slice %92 {offsets = [264, 0], sizes = [8, 64], strides = [1, 1]} : vector<640x64xf32> to vector<8x64xf32>
      %224 = arith.truncf %223 : vector<8x64xf32> to vector<8x64xbf16>
      %c0_129 = arith.constant 0 : index
      %c0_130 = arith.constant 0 : index
      %c1664 = arith.constant 1664 : index
      %225 = vector.load %arg8[%c0_129, %c0_130, %c1664] : memref<2x8x2048xbf16, #tpu.memory_space<vmem>>, vector<1x8x64xbf16>
      %226 = vector.shape_cast %225 : vector<1x8x64xbf16> to vector<8x64xbf16>
      %227 = vector.shape_cast %224 : vector<8x64xbf16> to vector<1x8x64xbf16>
      tpu.vector_store %arg8[%c0_129, %c0_130, %c1664], %227 {strides = array<i32>} : memref<2x8x2048xbf16, #tpu.memory_space<vmem>>, vector<1x8x64xbf16>,
      %228 = vector.extract_strided_slice %92 {offsets = [272, 0], sizes = [8, 64], strides = [1, 1]} : vector<640x64xf32> to vector<8x64xf32>
      %229 = arith.truncf %228 : vector<8x64xf32> to vector<8x64xbf16>
      %c0_131 = arith.constant 0 : index
      %c0_132 = arith.constant 0 : index
      %c1728 = arith.constant 1728 : index
      %230 = vector.load %arg8[%c0_131, %c0_132, %c1728] : memref<2x8x2048xbf16, #tpu.memory_space<vmem>>, vector<1x8x64xbf16>
      %231 = vector.shape_cast %230 : vector<1x8x64xbf16> to vector<8x64xbf16>
      %232 = vector.shape_cast %229 : vector<8x64xbf16> to vector<1x8x64xbf16>
      tpu.vector_store %arg8[%c0_131, %c0_132, %c1728], %232 {strides = array<i32>} : memref<2x8x2048xbf16, #tpu.memory_space<vmem>>, vector<1x8x64xbf16>,
      %233 = vector.extract_strided_slice %92 {offsets = [280, 0], sizes = [8, 64], strides = [1, 1]} : vector<640x64xf32> to vector<8x64xf32>
      %234 = arith.truncf %233 : vector<8x64xf32> to vector<8x64xbf16>
      %c0_133 = arith.constant 0 : index
      %c0_134 = arith.constant 0 : index
      %c1792 = arith.constant 1792 : index
      %235 = vector.load %arg8[%c0_133, %c0_134, %c1792] : memref<2x8x2048xbf16, #tpu.memory_space<vmem>>, vector<1x8x64xbf16>
      %236 = vector.shape_cast %235 : vector<1x8x64xbf16> to vector<8x64xbf16>
      %237 = vector.shape_cast %234 : vector<8x64xbf16> to vector<1x8x64xbf16>
      tpu.vector_store %arg8[%c0_133, %c0_134, %c1792], %237 {strides = array<i32>} : memref<2x8x2048xbf16, #tpu.memory_space<vmem>>, vector<1x8x64xbf16>,
      %238 = vector.extract_strided_slice %92 {offsets = [288, 0], sizes = [8, 64], strides = [1, 1]} : vector<640x64xf32> to vector<8x64xf32>
      %239 = arith.truncf %238 : vector<8x64xf32> to vector<8x64xbf16>
      %c0_135 = arith.constant 0 : index
      %c0_136 = arith.constant 0 : index
      %c1856 = arith.constant 1856 : index
      %240 = vector.load %arg8[%c0_135, %c0_136, %c1856] : memref<2x8x2048xbf16, #tpu.memory_space<vmem>>, vector<1x8x64xbf16>
      %241 = vector.shape_cast %240 : vector<1x8x64xbf16> to vector<8x64xbf16>
      %242 = vector.shape_cast %239 : vector<8x64xbf16> to vector<1x8x64xbf16>
      tpu.vector_store %arg8[%c0_135, %c0_136, %c1856], %242 {strides = array<i32>} : memref<2x8x2048xbf16, #tpu.memory_space<vmem>>, vector<1x8x64xbf16>,
      %243 = vector.extract_strided_slice %92 {offsets = [296, 0], sizes = [8, 64], strides = [1, 1]} : vector<640x64xf32> to vector<8x64xf32>
      %244 = arith.truncf %243 : vector<8x64xf32> to vector<8x64xbf16>
      %c0_137 = arith.constant 0 : index
      %c0_138 = arith.constant 0 : index
      %c1920 = arith.constant 1920 : index
      %245 = vector.load %arg8[%c0_137, %c0_138, %c1920] : memref<2x8x2048xbf16, #tpu.memory_space<vmem>>, vector<1x8x64xbf16>
      %246 = vector.shape_cast %245 : vector<1x8x64xbf16> to vector<8x64xbf16>
      %247 = vector.shape_cast %244 : vector<8x64xbf16> to vector<1x8x64xbf16>
      tpu.vector_store %arg8[%c0_137, %c0_138, %c1920], %247 {strides = array<i32>} : memref<2x8x2048xbf16, #tpu.memory_space<vmem>>, vector<1x8x64xbf16>,
      %248 = vector.extract_strided_slice %92 {offsets = [304, 0], sizes = [8, 64], strides = [1, 1]} : vector<640x64xf32> to vector<8x64xf32>
      %249 = arith.truncf %248 : vector<8x64xf32> to vector<8x64xbf16>
      %c0_139 = arith.constant 0 : index
      %c0_140 = arith.constant 0 : index
      %c1984 = arith.constant 1984 : index
      %250 = vector.load %arg8[%c0_139, %c0_140, %c1984] : memref<2x8x2048xbf16, #tpu.memory_space<vmem>>, vector<1x8x64xbf16>
      %251 = vector.shape_cast %250 : vector<1x8x64xbf16> to vector<8x64xbf16>
      %252 = vector.shape_cast %249 : vector<8x64xbf16> to vector<1x8x64xbf16>
      tpu.vector_store %arg8[%c0_139, %c0_140, %c1984], %252 {strides = array<i32>} : memref<2x8x2048xbf16, #tpu.memory_space<vmem>>, vector<1x8x64xbf16>,
      %253 = vector.extract_strided_slice %92 {offsets = [328, 0], sizes = [8, 64], strides = [1, 1]} : vector<640x64xf32> to vector<8x64xf32>
      %254 = arith.truncf %253 : vector<8x64xf32> to vector<8x64xbf16>
      %c1_141 = arith.constant 1 : index
      %c0_142 = arith.constant 0 : index
      %c0_143 = arith.constant 0 : index
      %255 = vector.load %arg8[%c1_141, %c0_142, %c0_143] : memref<2x8x2048xbf16, #tpu.memory_space<vmem>>, vector<1x8x64xbf16>
      %256 = vector.shape_cast %255 : vector<1x8x64xbf16> to vector<8x64xbf16>
      %257 = vector.shape_cast %254 : vector<8x64xbf16> to vector<1x8x64xbf16>
      tpu.vector_store %arg8[%c1_141, %c0_142, %c0_143], %257 {strides = array<i32>} : memref<2x8x2048xbf16, #tpu.memory_space<vmem>>, vector<1x8x64xbf16>,
      %258 = vector.extract_strided_slice %92 {offsets = [336, 0], sizes = [8, 64], strides = [1, 1]} : vector<640x64xf32> to vector<8x64xf32>
      %259 = arith.truncf %258 : vector<8x64xf32> to vector<8x64xbf16>
      %c1_144 = arith.constant 1 : index
      %c0_145 = arith.constant 0 : index
      %c64_146 = arith.constant 64 : index
      %260 = vector.load %arg8[%c1_144, %c0_145, %c64_146] : memref<2x8x2048xbf16, #tpu.memory_space<vmem>>, vector<1x8x64xbf16>
      %261 = vector.shape_cast %260 : vector<1x8x64xbf16> to vector<8x64xbf16>
      %262 = vector.shape_cast %259 : vector<8x64xbf16> to vector<1x8x64xbf16>
      tpu.vector_store %arg8[%c1_144, %c0_145, %c64_146], %262 {strides = array<i32>} : memref<2x8x2048xbf16, #tpu.memory_space<vmem>>, vector<1x8x64xbf16>,
      %263 = vector.extract_strided_slice %92 {offsets = [344, 0], sizes = [8, 64], strides = [1, 1]} : vector<640x64xf32> to vector<8x64xf32>
      %264 = arith.truncf %263 : vector<8x64xf32> to vector<8x64xbf16>
      %c1_147 = arith.constant 1 : index
      %c0_148 = arith.constant 0 : index
      %c128_149 = arith.constant 128 : index
      %265 = vector.load %arg8[%c1_147, %c0_148, %c128_149] : memref<2x8x2048xbf16, #tpu.memory_space<vmem>>, vector<1x8x64xbf16>
      %266 = vector.shape_cast %265 : vector<1x8x64xbf16> to vector<8x64xbf16>
      %267 = vector.shape_cast %264 : vector<8x64xbf16> to vector<1x8x64xbf16>
      tpu.vector_store %arg8[%c1_147, %c0_148, %c128_149], %267 {strides = array<i32>} : memref<2x8x2048xbf16, #tpu.memory_space<vmem>>, vector<1x8x64xbf16>,
      %268 = vector.extract_strided_slice %92 {offsets = [352, 0], sizes = [8, 64], strides = [1, 1]} : vector<640x64xf32> to vector<8x64xf32>
      %269 = arith.truncf %268 : vector<8x64xf32> to vector<8x64xbf16>
      %c1_150 = arith.constant 1 : index
      %c0_151 = arith.constant 0 : index
      %c192_152 = arith.constant 192 : index
      %270 = vector.load %arg8[%c1_150, %c0_151, %c192_152] : memref<2x8x2048xbf16, #tpu.memory_space<vmem>>, vector<1x8x64xbf16>
      %271 = vector.shape_cast %270 : vector<1x8x64xbf16> to vector<8x64xbf16>
      %272 = vector.shape_cast %269 : vector<8x64xbf16> to vector<1x8x64xbf16>
      tpu.vector_store %arg8[%c1_150, %c0_151, %c192_152], %272 {strides = array<i32>} : memref<2x8x2048xbf16, #tpu.memory_space<vmem>>, vector<1x8x64xbf16>,
      %273 = vector.extract_strided_slice %92 {offsets = [360, 0], sizes = [8, 64], strides = [1, 1]} : vector<640x64xf32> to vector<8x64xf32>
      %274 = arith.truncf %273 : vector<8x64xf32> to vector<8x64xbf16>
      %c1_153 = arith.constant 1 : index
      %c0_154 = arith.constant 0 : index
      %c256_155 = arith.constant 256 : index
      %275 = vector.load %arg8[%c1_153, %c0_154, %c256_155] : memref<2x8x2048xbf16, #tpu.memory_space<vmem>>, vector<1x8x64xbf16>
      %276 = vector.shape_cast %275 : vector<1x8x64xbf16> to vector<8x64xbf16>
      %277 = vector.shape_cast %274 : vector<8x64xbf16> to vector<1x8x64xbf16>
      tpu.vector_store %arg8[%c1_153, %c0_154, %c256_155], %277 {strides = array<i32>} : memref<2x8x2048xbf16, #tpu.memory_space<vmem>>, vector<1x8x64xbf16>,
      %278 = vector.extract_strided_slice %92 {offsets = [368, 0], sizes = [8, 64], strides = [1, 1]} : vector<640x64xf32> to vector<8x64xf32>
      %279 = arith.truncf %278 : vector<8x64xf32> to vector<8x64xbf16>
      %c1_156 = arith.constant 1 : index
      %c0_157 = arith.constant 0 : index
      %c320_158 = arith.constant 320 : index
      %280 = vector.load %arg8[%c1_156, %c0_157, %c320_158] : memref<2x8x2048xbf16, #tpu.memory_space<vmem>>, vector<1x8x64xbf16>
      %281 = vector.shape_cast %280 : vector<1x8x64xbf16> to vector<8x64xbf16>
      %282 = vector.shape_cast %279 : vector<8x64xbf16> to vector<1x8x64xbf16>
      tpu.vector_store %arg8[%c1_156, %c0_157, %c320_158], %282 {strides = array<i32>} : memref<2x8x2048xbf16, #tpu.memory_space<vmem>>, vector<1x8x64xbf16>,
      %283 = vector.extract_strided_slice %92 {offsets = [376, 0], sizes = [8, 64], strides = [1, 1]} : vector<640x64xf32> to vector<8x64xf32>
      %284 = arith.truncf %283 : vector<8x64xf32> to vector<8x64xbf16>
      %c1_159 = arith.constant 1 : index
      %c0_160 = arith.constant 0 : index
      %c384_161 = arith.constant 384 : index
      %285 = vector.load %arg8[%c1_159, %c0_160, %c384_161] : memref<2x8x2048xbf16, #tpu.memory_space<vmem>>, vector<1x8x64xbf16>
      %286 = vector.shape_cast %285 : vector<1x8x64xbf16> to vector<8x64xbf16>
      %287 = vector.shape_cast %284 : vector<8x64xbf16> to vector<1x8x64xbf16>
      tpu.vector_store %arg8[%c1_159, %c0_160, %c384_161], %287 {strides = array<i32>} : memref<2x8x2048xbf16, #tpu.memory_space<vmem>>, vector<1x8x64xbf16>,
      %288 = vector.extract_strided_slice %92 {offsets = [384, 0], sizes = [8, 64], strides = [1, 1]} : vector<640x64xf32> to vector<8x64xf32>
      %289 = arith.truncf %288 : vector<8x64xf32> to vector<8x64xbf16>
      %c1_162 = arith.constant 1 : index
      %c0_163 = arith.constant 0 : index
      %c448_164 = arith.constant 448 : index
      %290 = vector.load %arg8[%c1_162, %c0_163, %c448_164] : memref<2x8x2048xbf16, #tpu.memory_space<vmem>>, vector<1x8x64xbf16>
      %291 = vector.shape_cast %290 : vector<1x8x64xbf16> to vector<8x64xbf16>
      %292 = vector.shape_cast %289 : vector<8x64xbf16> to vector<1x8x64xbf16>
      tpu.vector_store %arg8[%c1_162, %c0_163, %c448_164], %292 {strides = array<i32>} : memref<2x8x2048xbf16, #tpu.memory_space<vmem>>, vector<1x8x64xbf16>,
      %293 = vector.extract_strided_slice %92 {offsets = [408, 0], sizes = [8, 64], strides = [1, 1]} : vector<640x64xf32> to vector<8x64xf32>
      %294 = arith.truncf %293 : vector<8x64xf32> to vector<8x64xbf16>
      %c1_165 = arith.constant 1 : index
      %c0_166 = arith.constant 0 : index
      %c512_167 = arith.constant 512 : index
      %295 = vector.load %arg8[%c1_165, %c0_166, %c512_167] : memref<2x8x2048xbf16, #tpu.memory_space<vmem>>, vector<1x8x64xbf16>
      %296 = vector.shape_cast %295 : vector<1x8x64xbf16> to vector<8x64xbf16>
      %297 = vector.shape_cast %294 : vector<8x64xbf16> to vector<1x8x64xbf16>
      tpu.vector_store %arg8[%c1_165, %c0_166, %c512_167], %297 {strides = array<i32>} : memref<2x8x2048xbf16, #tpu.memory_space<vmem>>, vector<1x8x64xbf16>,
      %298 = vector.extract_strided_slice %92 {offsets = [416, 0], sizes = [8, 64], strides = [1, 1]} : vector<640x64xf32> to vector<8x64xf32>
      %299 = arith.truncf %298 : vector<8x64xf32> to vector<8x64xbf16>
      %c1_168 = arith.constant 1 : index
      %c0_169 = arith.constant 0 : index
      %c576_170 = arith.constant 576 : index
      %300 = vector.load %arg8[%c1_168, %c0_169, %c576_170] : memref<2x8x2048xbf16, #tpu.memory_space<vmem>>, vector<1x8x64xbf16>
      %301 = vector.shape_cast %300 : vector<1x8x64xbf16> to vector<8x64xbf16>
      %302 = vector.shape_cast %299 : vector<8x64xbf16> to vector<1x8x64xbf16>
      tpu.vector_store %arg8[%c1_168, %c0_169, %c576_170], %302 {strides = array<i32>} : memref<2x8x2048xbf16, #tpu.memory_space<vmem>>, vector<1x8x64xbf16>,
      %303 = vector.extract_strided_slice %92 {offsets = [424, 0], sizes = [8, 64], strides = [1, 1]} : vector<640x64xf32> to vector<8x64xf32>
      %304 = arith.truncf %303 : vector<8x64xf32> to vector<8x64xbf16>
      %c1_171 = arith.constant 1 : index
      %c0_172 = arith.constant 0 : index
      %c640_173 = arith.constant 640 : index
      %305 = vector.load %arg8[%c1_171, %c0_172, %c640_173] : memref<2x8x2048xbf16, #tpu.memory_space<vmem>>, vector<1x8x64xbf16>
      %306 = vector.shape_cast %305 : vector<1x8x64xbf16> to vector<8x64xbf16>
      %307 = vector.shape_cast %304 : vector<8x64xbf16> to vector<1x8x64xbf16>
      tpu.vector_store %arg8[%c1_171, %c0_172, %c640_173], %307 {strides = array<i32>} : memref<2x8x2048xbf16, #tpu.memory_space<vmem>>, vector<1x8x64xbf16>,
      %308 = vector.extract_strided_slice %92 {offsets = [432, 0], sizes = [8, 64], strides = [1, 1]} : vector<640x64xf32> to vector<8x64xf32>
      %309 = arith.truncf %308 : vector<8x64xf32> to vector<8x64xbf16>
      %c1_174 = arith.constant 1 : index
      %c0_175 = arith.constant 0 : index
      %c704_176 = arith.constant 704 : index
      %310 = vector.load %arg8[%c1_174, %c0_175, %c704_176] : memref<2x8x2048xbf16, #tpu.memory_space<vmem>>, vector<1x8x64xbf16>
      %311 = vector.shape_cast %310 : vector<1x8x64xbf16> to vector<8x64xbf16>
      %312 = vector.shape_cast %309 : vector<8x64xbf16> to vector<1x8x64xbf16>
      tpu.vector_store %arg8[%c1_174, %c0_175, %c704_176], %312 {strides = array<i32>} : memref<2x8x2048xbf16, #tpu.memory_space<vmem>>, vector<1x8x64xbf16>,
      %313 = vector.extract_strided_slice %92 {offsets = [440, 0], sizes = [8, 64], strides = [1, 1]} : vector<640x64xf32> to vector<8x64xf32>
      %314 = arith.truncf %313 : vector<8x64xf32> to vector<8x64xbf16>
      %c1_177 = arith.constant 1 : index
      %c0_178 = arith.constant 0 : index
      %c768_179 = arith.constant 768 : index
      %315 = vector.load %arg8[%c1_177, %c0_178, %c768_179] : memref<2x8x2048xbf16, #tpu.memory_space<vmem>>, vector<1x8x64xbf16>
      %316 = vector.shape_cast %315 : vector<1x8x64xbf16> to vector<8x64xbf16>
      %317 = vector.shape_cast %314 : vector<8x64xbf16> to vector<1x8x64xbf16>
      tpu.vector_store %arg8[%c1_177, %c0_178, %c768_179], %317 {strides = array<i32>} : memref<2x8x2048xbf16, #tpu.memory_space<vmem>>, vector<1x8x64xbf16>,
      %318 = vector.extract_strided_slice %92 {offsets = [448, 0], sizes = [8, 64], strides = [1, 1]} : vector<640x64xf32> to vector<8x64xf32>
      %319 = arith.truncf %318 : vector<8x64xf32> to vector<8x64xbf16>
      %c1_180 = arith.constant 1 : index
      %c0_181 = arith.constant 0 : index
      %c832_182 = arith.constant 832 : index
      %320 = vector.load %arg8[%c1_180, %c0_181, %c832_182] : memref<2x8x2048xbf16, #tpu.memory_space<vmem>>, vector<1x8x64xbf16>
      %321 = vector.shape_cast %320 : vector<1x8x64xbf16> to vector<8x64xbf16>
      %322 = vector.shape_cast %319 : vector<8x64xbf16> to vector<1x8x64xbf16>
      tpu.vector_store %arg8[%c1_180, %c0_181, %c832_182], %322 {strides = array<i32>} : memref<2x8x2048xbf16, #tpu.memory_space<vmem>>, vector<1x8x64xbf16>,
      %323 = vector.extract_strided_slice %92 {offsets = [456, 0], sizes = [8, 64], strides = [1, 1]} : vector<640x64xf32> to vector<8x64xf32>
      %324 = arith.truncf %323 : vector<8x64xf32> to vector<8x64xbf16>
      %c1_183 = arith.constant 1 : index
      %c0_184 = arith.constant 0 : index
      %c896_185 = arith.constant 896 : index
      %325 = vector.load %arg8[%c1_183, %c0_184, %c896_185] : memref<2x8x2048xbf16, #tpu.memory_space<vmem>>, vector<1x8x64xbf16>
      %326 = vector.shape_cast %325 : vector<1x8x64xbf16> to vector<8x64xbf16>
      %327 = vector.shape_cast %324 : vector<8x64xbf16> to vector<1x8x64xbf16>
      tpu.vector_store %arg8[%c1_183, %c0_184, %c896_185], %327 {strides = array<i32>} : memref<2x8x2048xbf16, #tpu.memory_space<vmem>>, vector<1x8x64xbf16>,
      %328 = vector.extract_strided_slice %92 {offsets = [464, 0], sizes = [8, 64], strides = [1, 1]} : vector<640x64xf32> to vector<8x64xf32>
      %329 = arith.truncf %328 : vector<8x64xf32> to vector<8x64xbf16>
      %c1_186 = arith.constant 1 : index
      %c0_187 = arith.constant 0 : index
      %c960_188 = arith.constant 960 : index
      %330 = vector.load %arg8[%c1_186, %c0_187, %c960_188] : memref<2x8x2048xbf16, #tpu.memory_space<vmem>>, vector<1x8x64xbf16>
      %331 = vector.shape_cast %330 : vector<1x8x64xbf16> to vector<8x64xbf16>
      %332 = vector.shape_cast %329 : vector<8x64xbf16> to vector<1x8x64xbf16>
      tpu.vector_store %arg8[%c1_186, %c0_187, %c960_188], %332 {strides = array<i32>} : memref<2x8x2048xbf16, #tpu.memory_space<vmem>>, vector<1x8x64xbf16>,
      %333 = vector.extract_strided_slice %92 {offsets = [488, 0], sizes = [8, 64], strides = [1, 1]} : vector<640x64xf32> to vector<8x64xf32>
      %334 = arith.truncf %333 : vector<8x64xf32> to vector<8x64xbf16>
      %c1_189 = arith.constant 1 : index
      %c0_190 = arith.constant 0 : index
      %c1024_191 = arith.constant 1024 : index
      %335 = vector.load %arg8[%c1_189, %c0_190, %c1024_191] : memref<2x8x2048xbf16, #tpu.memory_space<vmem>>, vector<1x8x64xbf16>
      %336 = vector.shape_cast %335 : vector<1x8x64xbf16> to vector<8x64xbf16>
      %337 = vector.shape_cast %334 : vector<8x64xbf16> to vector<1x8x64xbf16>
      tpu.vector_store %arg8[%c1_189, %c0_190, %c1024_191], %337 {strides = array<i32>} : memref<2x8x2048xbf16, #tpu.memory_space<vmem>>, vector<1x8x64xbf16>,
      %338 = vector.extract_strided_slice %92 {offsets = [496, 0], sizes = [8, 64], strides = [1, 1]} : vector<640x64xf32> to vector<8x64xf32>
      %339 = arith.truncf %338 : vector<8x64xf32> to vector<8x64xbf16>
      %c1_192 = arith.constant 1 : index
      %c0_193 = arith.constant 0 : index
      %c1088_194 = arith.constant 1088 : index
      %340 = vector.load %arg8[%c1_192, %c0_193, %c1088_194] : memref<2x8x2048xbf16, #tpu.memory_space<vmem>>, vector<1x8x64xbf16>
      %341 = vector.shape_cast %340 : vector<1x8x64xbf16> to vector<8x64xbf16>
      %342 = vector.shape_cast %339 : vector<8x64xbf16> to vector<1x8x64xbf16>
      tpu.vector_store %arg8[%c1_192, %c0_193, %c1088_194], %342 {strides = array<i32>} : memref<2x8x2048xbf16, #tpu.memory_space<vmem>>, vector<1x8x64xbf16>,
      %343 = vector.extract_strided_slice %92 {offsets = [504, 0], sizes = [8, 64], strides = [1, 1]} : vector<640x64xf32> to vector<8x64xf32>
      %344 = arith.truncf %343 : vector<8x64xf32> to vector<8x64xbf16>
      %c1_195 = arith.constant 1 : index
      %c0_196 = arith.constant 0 : index
      %c1152_197 = arith.constant 1152 : index
      %345 = vector.load %arg8[%c1_195, %c0_196, %c1152_197] : memref<2x8x2048xbf16, #tpu.memory_space<vmem>>, vector<1x8x64xbf16>
      %346 = vector.shape_cast %345 : vector<1x8x64xbf16> to vector<8x64xbf16>
      %347 = vector.shape_cast %344 : vector<8x64xbf16> to vector<1x8x64xbf16>
      tpu.vector_store %arg8[%c1_195, %c0_196, %c1152_197], %347 {strides = array<i32>} : memref<2x8x2048xbf16, #tpu.memory_space<vmem>>, vector<1x8x64xbf16>,
      %348 = vector.extract_strided_slice %92 {offsets = [512, 0], sizes = [8, 64], strides = [1, 1]} : vector<640x64xf32> to vector<8x64xf32>
      %349 = arith.truncf %348 : vector<8x64xf32> to vector<8x64xbf16>
      %c1_198 = arith.constant 1 : index
      %c0_199 = arith.constant 0 : index
      %c1216_200 = arith.constant 1216 : index
      %350 = vector.load %arg8[%c1_198, %c0_199, %c1216_200] : memref<2x8x2048xbf16, #tpu.memory_space<vmem>>, vector<1x8x64xbf16>
      %351 = vector.shape_cast %350 : vector<1x8x64xbf16> to vector<8x64xbf16>
      %352 = vector.shape_cast %349 : vector<8x64xbf16> to vector<1x8x64xbf16>
      tpu.vector_store %arg8[%c1_198, %c0_199, %c1216_200], %352 {strides = array<i32>} : memref<2x8x2048xbf16, #tpu.memory_space<vmem>>, vector<1x8x64xbf16>,
      %353 = vector.extract_strided_slice %92 {offsets = [520, 0], sizes = [8, 64], strides = [1, 1]} : vector<640x64xf32> to vector<8x64xf32>
      %354 = arith.truncf %353 : vector<8x64xf32> to vector<8x64xbf16>
      %c1_201 = arith.constant 1 : index
      %c0_202 = arith.constant 0 : index
      %c1280_203 = arith.constant 1280 : index
      %355 = vector.load %arg8[%c1_201, %c0_202, %c1280_203] : memref<2x8x2048xbf16, #tpu.memory_space<vmem>>, vector<1x8x64xbf16>
      %356 = vector.shape_cast %355 : vector<1x8x64xbf16> to vector<8x64xbf16>
      %357 = vector.shape_cast %354 : vector<8x64xbf16> to vector<1x8x64xbf16>
      tpu.vector_store %arg8[%c1_201, %c0_202, %c1280_203], %357 {strides = array<i32>} : memref<2x8x2048xbf16, #tpu.memory_space<vmem>>, vector<1x8x64xbf16>,
      %358 = vector.extract_strided_slice %92 {offsets = [528, 0], sizes = [8, 64], strides = [1, 1]} : vector<640x64xf32> to vector<8x64xf32>
      %359 = arith.truncf %358 : vector<8x64xf32> to vector<8x64xbf16>
      %c1_204 = arith.constant 1 : index
      %c0_205 = arith.constant 0 : index
      %c1344_206 = arith.constant 1344 : index
      %360 = vector.load %arg8[%c1_204, %c0_205, %c1344_206] : memref<2x8x2048xbf16, #tpu.memory_space<vmem>>, vector<1x8x64xbf16>
      %361 = vector.shape_cast %360 : vector<1x8x64xbf16> to vector<8x64xbf16>
      %362 = vector.shape_cast %359 : vector<8x64xbf16> to vector<1x8x64xbf16>
      tpu.vector_store %arg8[%c1_204, %c0_205, %c1344_206], %362 {strides = array<i32>} : memref<2x8x2048xbf16, #tpu.memory_space<vmem>>, vector<1x8x64xbf16>,
      %363 = vector.extract_strided_slice %92 {offsets = [536, 0], sizes = [8, 64], strides = [1, 1]} : vector<640x64xf32> to vector<8x64xf32>
      %364 = arith.truncf %363 : vector<8x64xf32> to vector<8x64xbf16>
      %c1_207 = arith.constant 1 : index
      %c0_208 = arith.constant 0 : index
      %c1408_209 = arith.constant 1408 : index
      %365 = vector.load %arg8[%c1_207, %c0_208, %c1408_209] : memref<2x8x2048xbf16, #tpu.memory_space<vmem>>, vector<1x8x64xbf16>
      %366 = vector.shape_cast %365 : vector<1x8x64xbf16> to vector<8x64xbf16>
      %367 = vector.shape_cast %364 : vector<8x64xbf16> to vector<1x8x64xbf16>
      tpu.vector_store %arg8[%c1_207, %c0_208, %c1408_209], %367 {strides = array<i32>} : memref<2x8x2048xbf16, #tpu.memory_space<vmem>>, vector<1x8x64xbf16>,
      %368 = vector.extract_strided_slice %92 {offsets = [544, 0], sizes = [8, 64], strides = [1, 1]} : vector<640x64xf32> to vector<8x64xf32>
      %369 = arith.truncf %368 : vector<8x64xf32> to vector<8x64xbf16>
      %c1_210 = arith.constant 1 : index
      %c0_211 = arith.constant 0 : index
      %c1472_212 = arith.constant 1472 : index
      %370 = vector.load %arg8[%c1_210, %c0_211, %c1472_212] : memref<2x8x2048xbf16, #tpu.memory_space<vmem>>, vector<1x8x64xbf16>
      %371 = vector.shape_cast %370 : vector<1x8x64xbf16> to vector<8x64xbf16>
      %372 = vector.shape_cast %369 : vector<8x64xbf16> to vector<1x8x64xbf16>
      tpu.vector_store %arg8[%c1_210, %c0_211, %c1472_212], %372 {strides = array<i32>} : memref<2x8x2048xbf16, #tpu.memory_space<vmem>>, vector<1x8x64xbf16>,
      %373 = vector.extract_strided_slice %92 {offsets = [568, 0], sizes = [8, 64], strides = [1, 1]} : vector<640x64xf32> to vector<8x64xf32>
      %374 = arith.truncf %373 : vector<8x64xf32> to vector<8x64xbf16>
      %c1_213 = arith.constant 1 : index
      %c0_214 = arith.constant 0 : index
      %c1536_215 = arith.constant 1536 : index
      %375 = vector.load %arg8[%c1_213, %c0_214, %c1536_215] : memref<2x8x2048xbf16, #tpu.memory_space<vmem>>, vector<1x8x64xbf16>
      %376 = vector.shape_cast %375 : vector<1x8x64xbf16> to vector<8x64xbf16>
      %377 = vector.shape_cast %374 : vector<8x64xbf16> to vector<1x8x64xbf16>
      tpu.vector_store %arg8[%c1_213, %c0_214, %c1536_215], %377 {strides = array<i32>} : memref<2x8x2048xbf16, #tpu.memory_space<vmem>>, vector<1x8x64xbf16>,
      %378 = vector.extract_strided_slice %92 {offsets = [576, 0], sizes = [8, 64], strides = [1, 1]} : vector<640x64xf32> to vector<8x64xf32>
      %379 = arith.truncf %378 : vector<8x64xf32> to vector<8x64xbf16>
      %c1_216 = arith.constant 1 : index
      %c0_217 = arith.constant 0 : index
      %c1600_218 = arith.constant 1600 : index
      %380 = vector.load %arg8[%c1_216, %c0_217, %c1600_218] : memref<2x8x2048xbf16, #tpu.memory_space<vmem>>, vector<1x8x64xbf16>
      %381 = vector.shape_cast %380 : vector<1x8x64xbf16> to vector<8x64xbf16>
      %382 = vector.shape_cast %379 : vector<8x64xbf16> to vector<1x8x64xbf16>
      tpu.vector_store %arg8[%c1_216, %c0_217, %c1600_218], %382 {strides = array<i32>} : memref<2x8x2048xbf16, #tpu.memory_space<vmem>>, vector<1x8x64xbf16>,
      %383 = vector.extract_strided_slice %92 {offsets = [584, 0], sizes = [8, 64], strides = [1, 1]} : vector<640x64xf32> to vector<8x64xf32>
      %384 = arith.truncf %383 : vector<8x64xf32> to vector<8x64xbf16>
      %c1_219 = arith.constant 1 : index
      %c0_220 = arith.constant 0 : index
      %c1664_221 = arith.constant 1664 : index
      %385 = vector.load %arg8[%c1_219, %c0_220, %c1664_221] : memref<2x8x2048xbf16, #tpu.memory_space<vmem>>, vector<1x8x64xbf16>
      %386 = vector.shape_cast %385 : vector<1x8x64xbf16> to vector<8x64xbf16>
      %387 = vector.shape_cast %384 : vector<8x64xbf16> to vector<1x8x64xbf16>
      tpu.vector_store %arg8[%c1_219, %c0_220, %c1664_221], %387 {strides = array<i32>} : memref<2x8x2048xbf16, #tpu.memory_space<vmem>>, vector<1x8x64xbf16>,
      %388 = vector.extract_strided_slice %92 {offsets = [592, 0], sizes = [8, 64], strides = [1, 1]} : vector<640x64xf32> to vector<8x64xf32>
      %389 = arith.truncf %388 : vector<8x64xf32> to vector<8x64xbf16>
      %c1_222 = arith.constant 1 : index
      %c0_223 = arith.constant 0 : index
      %c1728_224 = arith.constant 1728 : index
      %390 = vector.load %arg8[%c1_222, %c0_223, %c1728_224] : memref<2x8x2048xbf16, #tpu.memory_space<vmem>>, vector<1x8x64xbf16>
      %391 = vector.shape_cast %390 : vector<1x8x64xbf16> to vector<8x64xbf16>
      %392 = vector.shape_cast %389 : vector<8x64xbf16> to vector<1x8x64xbf16>
      tpu.vector_store %arg8[%c1_222, %c0_223, %c1728_224], %392 {strides = array<i32>} : memref<2x8x2048xbf16, #tpu.memory_space<vmem>>, vector<1x8x64xbf16>,
      %393 = vector.extract_strided_slice %92 {offsets = [600, 0], sizes = [8, 64], strides = [1, 1]} : vector<640x64xf32> to vector<8x64xf32>
      %394 = arith.truncf %393 : vector<8x64xf32> to vector<8x64xbf16>
      %c1_225 = arith.constant 1 : index
      %c0_226 = arith.constant 0 : index
      %c1792_227 = arith.constant 1792 : index
      %395 = vector.load %arg8[%c1_225, %c0_226, %c1792_227] : memref<2x8x2048xbf16, #tpu.memory_space<vmem>>, vector<1x8x64xbf16>
      %396 = vector.shape_cast %395 : vector<1x8x64xbf16> to vector<8x64xbf16>
      %397 = vector.shape_cast %394 : vector<8x64xbf16> to vector<1x8x64xbf16>
      tpu.vector_store %arg8[%c1_225, %c0_226, %c1792_227], %397 {strides = array<i32>} : memref<2x8x2048xbf16, #tpu.memory_space<vmem>>, vector<1x8x64xbf16>,
      %398 = vector.extract_strided_slice %92 {offsets = [608, 0], sizes = [8, 64], strides = [1, 1]} : vector<640x64xf32> to vector<8x64xf32>
      %399 = arith.truncf %398 : vector<8x64xf32> to vector<8x64xbf16>
      %c1_228 = arith.constant 1 : index
      %c0_229 = arith.constant 0 : index
      %c1856_230 = arith.constant 1856 : index
      %400 = vector.load %arg8[%c1_228, %c0_229, %c1856_230] : memref<2x8x2048xbf16, #tpu.memory_space<vmem>>, vector<1x8x64xbf16>
      %401 = vector.shape_cast %400 : vector<1x8x64xbf16> to vector<8x64xbf16>
      %402 = vector.shape_cast %399 : vector<8x64xbf16> to vector<1x8x64xbf16>
      tpu.vector_store %arg8[%c1_228, %c0_229, %c1856_230], %402 {strides = array<i32>} : memref<2x8x2048xbf16, #tpu.memory_space<vmem>>, vector<1x8x64xbf16>,
      %403 = vector.extract_strided_slice %92 {offsets = [616, 0], sizes = [8, 64], strides = [1, 1]} : vector<640x64xf32> to vector<8x64xf32>
      %404 = arith.truncf %403 : vector<8x64xf32> to vector<8x64xbf16>
      %c1_231 = arith.constant 1 : index
      %c0_232 = arith.constant 0 : index
      %c1920_233 = arith.constant 1920 : index
      %405 = vector.load %arg8[%c1_231, %c0_232, %c1920_233] : memref<2x8x2048xbf16, #tpu.memory_space<vmem>>, vector<1x8x64xbf16>
      %406 = vector.shape_cast %405 : vector<1x8x64xbf16> to vector<8x64xbf16>
      %407 = vector.shape_cast %404 : vector<8x64xbf16> to vector<1x8x64xbf16>
      tpu.vector_store %arg8[%c1_231, %c0_232, %c1920_233], %407 {strides = array<i32>} : memref<2x8x2048xbf16, #tpu.memory_space<vmem>>, vector<1x8x64xbf16>,
      %408 = vector.extract_strided_slice %92 {offsets = [624, 0], sizes = [8, 64], strides = [1, 1]} : vector<640x64xf32> to vector<8x64xf32>
      %409 = arith.truncf %408 : vector<8x64xf32> to vector<8x64xbf16>
      %c1_234 = arith.constant 1 : index
      %c0_235 = arith.constant 0 : index
      %c1984_236 = arith.constant 1984 : index
      %410 = vector.load %arg8[%c1_234, %c0_235, %c1984_236] : memref<2x8x2048xbf16, #tpu.memory_space<vmem>>, vector<1x8x64xbf16>
      %411 = vector.shape_cast %410 : vector<1x8x64xbf16> to vector<8x64xbf16>
      %412 = vector.shape_cast %409 : vector<8x64xbf16> to vector<1x8x64xbf16>
      tpu.vector_store %arg8[%c1_234, %c0_235, %c1984_236], %412 {strides = array<i32>} : memref<2x8x2048xbf16, #tpu.memory_space<vmem>>, vector<1x8x64xbf16>,
      %cst_237 = arith.constant 0.000000e+00 : f32
      %413 = vector.broadcast %cst_237 : f32 to vector<8x256xf32>
      %c0_238 = arith.constant 0 : index
      %c0_239 = arith.constant 0 : index
      %414 = vector.load %arg9[%c0_238, %c0_239] : memref<8x256xf32, #tpu.memory_space<vmem>>, vector<8x256xf32>
      tpu.vector_store %arg9[%c0_238, %c0_239], %413 {strides = array<i32>} : memref<8x256xf32, #tpu.memory_space<vmem>>, vector<8x256xf32>,
    } else {
    }
    %c0 = arith.constant 0 : index
    %c0_1 = arith.constant 0 : index
    %3 = vector.load %arg9[%c0, %c0_1] : memref<8x256xf32, #tpu.memory_space<vmem>>, vector<8x256xf32>
    %4 = arith.index_cast %arg0 : i32 to index
    %c0_2 = arith.constant 0 : index
    %c0_3 = arith.constant 0 : index
    %5 = vector.load %arg8[%4, %c0_2, %c0_3] : memref<2x8x2048xbf16, #tpu.memory_space<vmem>>, vector<1x8x2048xbf16>
    %6 = vector.shape_cast %5 : vector<1x8x2048xbf16> to vector<8x2048xbf16>
    %c0_4 = arith.constant 0 : index
    %c0_5 = arith.constant 0 : index
    %c0_6 = arith.constant 0 : index
    %7 = vector.load %arg5[%c0_4, %c0_5, %c0_6] : memref<1x2048x256xbf16, #tpu.memory_space<vmem>>, vector<1x2048x256xbf16>
    %8 = vector.shape_cast %7 : vector<1x2048x256xbf16> to vector<2048x256xbf16>
    %cst = arith.constant dense<0.000000e+00> : vector<8x256xf32>
    %9 = tpu.matmul %6, %8, %cst {dimension_numbers = #tpu.dot_dimension_numbers<[1], [0], [0], [1], [0, 0, 1, 1], [], []>} : vector<8x2048xbf16>, vector<2048x256xbf16>, vector<8x256xf32> -> vector<8x256xf32>
    %10 = arith.addf %3, %9 : vector<8x256xf32>
    %c0_7 = arith.constant 0 : index
    %c0_8 = arith.constant 0 : index
    %11 = vector.load %arg9[%c0_7, %c0_8] : memref<8x256xf32, #tpu.memory_space<vmem>>, vector<8x256xf32>
    tpu.vector_store %arg9[%c0_7, %c0_8], %10 {strides = array<i32>} : memref<8x256xf32, #tpu.memory_space<vmem>>, vector<8x256xf32>,
    %c1_i32 = arith.constant 1 : i32
    %12 = arith.cmpi eq, %arg0, %c1_i32 : i32
    %13 = arith.extui %12 : i1 to i32
    %c0_i32_9 = arith.constant 0 : i32
    %14 = arith.cmpi ne, %13, %c0_i32_9 : i32
    scf.if %14 {
      %c0_10 = arith.constant 0 : index
      %c0_11 = arith.constant 0 : index
      %15 = vector.load %arg9[%c0_10, %c0_11] : memref<8x256xf32, #tpu.memory_space<vmem>>, vector<8x256xf32>
      %c2 = arith.constant 2 : index
      %c0_12 = arith.constant 0 : index
      %16 = vector.load %arg4[%c2, %c0_12] : memref<5x256xf32, #tpu.memory_space<vmem>>, vector<1x256xf32>
      %17 = vector.broadcast %16 : vector<1x256xf32> to vector<8x256xf32>
      %18 = arith.addf %15, %17 : vector<8x256xf32>
      %cst_13 = arith.constant 0.000000e+00 : f32
      %19 = vector.broadcast %cst_13 : f32 to vector<8x256xf32>
      %20 = arith.maximumf %18, %19 : vector<8x256xf32>
      %c3 = arith.constant 3 : index
      %c0_14 = arith.constant 0 : index
      %21 = vector.load %arg4[%c3, %c0_14] : memref<5x256xf32, #tpu.memory_space<vmem>>, vector<1x256xf32>
      %22 = vector.broadcast %21 : vector<1x256xf32> to vector<8x256xf32>
      %23 = arith.mulf %20, %22 : vector<8x256xf32>
      %cst_15 = arith.constant dense<0.000000e+00> : vector<8xf32>
      %24 = vector.multi_reduction <add>, %23, %cst_15 [1] : vector<8x256xf32> to vector<8xf32>
      %25 = vector.shape_cast %24 : vector<8xf32> to vector<8x1xf32>
      %c4 = arith.constant 4 : index
      %c0_16 = arith.constant 0 : index
      %26 = vector.load %arg4[%c4, %c0_16] : memref<5x256xf32, #tpu.memory_space<vmem>>, vector<1x1xf32>
      %27 = vector.broadcast %26 : vector<1x1xf32> to vector<8x1xf32>
      %28 = arith.addf %25, %27 : vector<8x1xf32>
      %29 = vector.extract_strided_slice %28 {offsets = [0, 0], sizes = [2, 1], strides = [1, 1]} : vector<8x1xf32> to vector<2x1xf32>
      %c0_17 = arith.constant 0 : index
      %c0_18 = arith.constant 0 : index
      %30 = vector.load %arg6[%c0_17, %c0_18] : memref<2x1xf32, #tpu.memory_space<vmem>>, vector<2x1xf32>
      tpu.vector_store %arg6[%c0_17, %c0_18], %29 {strides = array<i32>} : memref<2x1xf32, #tpu.memory_space<vmem>>, vector<2x1xf32>,
    } else {
    }
    return
  }
  func.func @transform_0(%arg0: i32) -> (i32, i32) {
    %c0_i32 = arith.constant 0 : i32
    %c0_i32_0 = arith.constant 0 : i32
    %c0_i32_1 = arith.constant 0 : i32
    return %c0_i32, %c0_i32_0 : i32, i32
  }
  func.func @transform_1(%arg0: i32) -> (i32, i32) {
    %c0_i32 = arith.constant 0 : i32
    %c0_i32_0 = arith.constant 0 : i32
    %c0_i32_1 = arith.constant 0 : i32
    return %c0_i32, %c0_i32_0 : i32, i32
  }
  func.func @transform_2(%arg0: i32) -> (i32, i32, i32) {
    %c0_i32 = arith.constant 0 : i32
    %c0_i32_0 = arith.constant 0 : i32
    %c0_i32_1 = arith.constant 0 : i32
    %c0_i32_2 = arith.constant 0 : i32
    return %c0_i32, %c0_i32_0, %c0_i32_1 : i32, i32, i32
  }
  func.func @transform_3(%arg0: i32) -> (i32, i32) {
    %c0_i32 = arith.constant 0 : i32
    %c0_i32_0 = arith.constant 0 : i32
    %c0_i32_1 = arith.constant 0 : i32
    return %c0_i32, %c0_i32_0 : i32, i32
  }
  func.func @transform_4(%arg0: i32) -> (i32, i32, i32) {
    %c0_i32 = arith.constant 0 : i32
    %c0_i32_0 = arith.constant 0 : i32
    %c0_i32_1 = arith.constant 0 : i32
    return %arg0, %c0_i32, %c0_i32_0 : i32, i32, i32
  }
  func.func @transform_5(%arg0: i32) -> (i32, i32) {
    %c0_i32 = arith.constant 0 : i32
    %c0_i32_0 = arith.constant 0 : i32
    %c0_i32_1 = arith.constant 0 : i32
    return %c0_i32, %c0_i32_0 : i32, i32
  }
}

</mosaic_0001>

<llo_original>
// kernel: critic_forward.1
$region0: #{critic_forward.1}
  #allocation0 [shape = 'u32[]', space=smem, size = 0x4, offset = 0x4, fixed_abs, tag = 'smem constant byte address 0x4 - core index']
  #allocation1 [shape = 'u32[144,128]{1,0:T(1,128)}', space=vmem, size = 0x12000, scoped, tag = 'internal scratch']
  #allocation2 [shape = 'bf16[816,32]{1,0:T(8,128)(2,1)}', space=vmem, size = 0x33000, scoped, tag = 'scratch operand']
  #allocation3 [shape = 'bf16[2,8,2048]{2,1,0:T(8,128)(2,1)}', space=vmem, size = 0x10000, scoped, tag = 'scratch operand']
  #allocation4 [shape = 'f32[8,256]{1,0:T(8,128)}', space=vmem, size = 0x2000, scoped, tag = 'scratch operand']
  %s0 = inlined_call_operand.vmem [shape: bf16[512,36], index: 0, kind: input, shape index: {}]
  %s1 = inlined_call_operand.vmem [shape: bf16[36,32], index: 1, kind: input, shape index: {}]
  %s2 = inlined_call_operand.vmem [shape: bf16[9,32,64], index: 2, kind: input, shape index: {}]
  %s3 = inlined_call_operand.vmem [shape: f32[5,256], index: 3, kind: input, shape index: {}]
  %s4 = inlined_call_operand.vmem [shape: bf16[2,2048,256], index: 4, kind: input, shape index: {}]
  %s5 = inlined_call_operand.vmem [shape: f32[2,1], index: 5, kind: output, shape index: {}]
  %s6 = sld [smem:[#allocation0]]
  $region61: #{critic_forward.1} parent=0
    _
  %s8 = ssub.s32 1, %s6
  %s9 = scalar_select 0, %s8, %s6
  loop: start=0, step=1, limit=4
  $region2: #{critic_forward.1} parent=0 // loop_pre_header
    _
  $region3: #{critic_forward.1} parent=0 // loop_header
    %s11 = sphi 0, %s15
    %p12 = scmp.ge.s32.totalorder %s11, 4
    %s19 = sphi 0, %s19
    %s21 = sphi 0, %s19
    %s22 = sphi 0, %s21
    %s36 = sphi 0, %s22
    %s40 = sphi 0, %s40
    %s42 = sphi 0, %s40
    %s43 = sphi 0, %s42
    %s57 = sphi 0, %s43
    %s61 = sphi 0, %s61
    %s63 = sphi 0, %s61
    %s64 = sphi 0, %s63
    %s78 = sphi 0, %s64
    %s82 = sphi 0, %s82
    %s84 = sphi 0, %s82
    %s85 = sphi 0, %s84
    %s99 = sphi 0, %s85
    %s105 = sphi 0, %s107
    %s108 = sphi 0, %s105
    %s109 = sphi 0, %s108
    %s125 = sphi 0, %s109
    %s129 = sphi 0, %s129
    %s131 = sphi 0, %s129
    %s132 = sphi 0, %s131
    %s146 = sphi 0, %s132
  $region4: #{critic_forward.1} parent=0 // loop_header_branch
    %14 = sbr.rel (%p12) target = $region8
  $region5: #{critic_forward.1} parent=0 // loop_body
    %s16 = ssub.s32 %s11, 1
    %s17 = ssub.s32 %s11, 2
    %s18 = sadd.s32 %s11, 1
    %s20 = sadd.s32 %s19, 1
    %p23 = scmp.eq.s32.totalorder %s11, 1
    %p24 = scmp.ne.s32.totalorder %s19, %s21
    %p25 = scmp.eq.s32.totalorder %s11, 0
    %p26 = por %p24, %p25
    %p27 = scmp.ne.s32.totalorder %s19, %s21
    %p28 = scmp.eq.s32.totalorder %s16, 1
    %p29 = por %p27, %p28
    %p30 = scmp.ne.s32.totalorder %s21, %s22
    %p31 = scmp.eq.s32.totalorder %s16, 0
    %p32 = por %p30, %p31
    %p33 = scmp.ne.s32.totalorder %s21, %s22
    %p34 = scmp.eq.s32.totalorder %s17, 1
    %p35 = por %p33, %p34
    %p37 = scmp.ne.s32.totalorder %s22, %s36
    %p38 = scmp.eq.s32.totalorder %s17, 0
    %p39 = por %p37, %p38
    %s41 = sadd.s32 %s40, 1
    %p44 = scmp.eq.s32.totalorder %s11, 1
    %p45 = scmp.ne.s32.totalorder %s40, %s42
    %p46 = scmp.eq.s32.totalorder %s11, 0
    %p47 = por %p45, %p46
    %p48 = scmp.ne.s32.totalorder %s40, %s42
    %p49 = scmp.eq.s32.totalorder %s16, 1
    %p50 = por %p48, %p49
    %p51 = scmp.ne.s32.totalorder %s42, %s43
    %p52 = scmp.eq.s32.totalorder %s16, 0
    %p53 = por %p51, %p52
    %p54 = scmp.ne.s32.totalorder %s42, %s43
    %p55 = scmp.eq.s32.totalorder %s17, 1
    %p56 = por %p54, %p55
    %p58 = scmp.ne.s32.totalorder %s43, %s57
    %p59 = scmp.eq.s32.totalorder %s17, 0
    %p60 = por %p58, %p59
    %s62 = sadd.s32 %s61, 1
    %p65 = scmp.eq.s32.totalorder %s11, 1
    %p66 = scmp.ne.s32.totalorder %s61, %s63
    %p67 = scmp.eq.s32.totalorder %s11, 0
    %p68 = por %p66, %p67
    %p69 = scmp.ne.s32.totalorder %s61, %s63
    %p70 = scmp.eq.s32.totalorder %s16, 1
    %p71 = por %p69, %p70
    %p72 = scmp.ne.s32.totalorder %s63, %s64
    %p73 = scmp.eq.s32.totalorder %s16, 0
    %p74 = por %p72, %p73
    %p75 = scmp.ne.s32.totalorder %s63, %s64
    %p76 = scmp.eq.s32.totalorder %s17, 1
    %p77 = por %p75, %p76
    %p79 = scmp.ne.s32.totalorder %s64, %s78
    %p80 = scmp.eq.s32.totalorder %s17, 0
    %p81 = por %p79, %p80
    %s83 = sadd.s32 %s82, 1
    %p86 = scmp.eq.s32.totalorder %s11, 1
    %p87 = scmp.ne.s32.totalorder %s82, %s84
    %p88 = scmp.eq.s32.totalorder %s11, 0
    %p89 = por %p87, %p88
    %p90 = scmp.ne.s32.totalorder %s82, %s84
    %p91 = scmp.eq.s32.totalorder %s16, 1
    %p92 = por %p90, %p91
    %p93 = scmp.ne.s32.totalorder %s84, %s85
    %p94 = scmp.eq.s32.totalorder %s16, 0
    %p95 = por %p93, %p94
    %p96 = scmp.ne.s32.totalorder %s84, %s85
    %p97 = scmp.eq.s32.totalorder %s17, 1
    %p98 = por %p96, %p97
    %p100 = scmp.ne.s32.totalorder %s85, %s99
    %p101 = scmp.eq.s32.totalorder %s17, 0
    %p102 = por %p100, %p101
    %s103 = ssub.s32 %s11, %s18
    %p104 = scmp.eq.s32.totalorder %s103, 0
    %s106 = sadd.s32 %s105, 1
    %s107 = scalar_select %p104, %s105, %s106
    %p110 = pneg %p104
    %p111 = scmp.eq.s32.totalorder %s11, 1
    %p112 = por %p110, %p111
    %p113 = scmp.ne.s32.totalorder %s105, %s108
    %p114 = scmp.eq.s32.totalorder %s11, 0
    %p115 = por %p113, %p114
    %p116 = scmp.ne.s32.totalorder %s105, %s108
    %p117 = scmp.eq.s32.totalorder %s16, 1
    %p118 = por %p116, %p117
    %p119 = scmp.ne.s32.totalorder %s108, %s109
    %p120 = scmp.eq.s32.totalorder %s16, 0
    %p121 = por %p119, %p120
    %p122 = scmp.ne.s32.totalorder %s108, %s109
    %p123 = scmp.eq.s32.totalorder %s17, 1
    %p124 = por %p122, %p123
    %p126 = scmp.ne.s32.totalorder %s109, %s125
    %p127 = scmp.eq.s32.totalorder %s17, 0
    %p128 = por %p126, %p127
    %s130 = sadd.s32 %s129, 1
    %p133 = scmp.eq.s32.totalorder %s11, 1
    %p134 = scmp.ne.s32.totalorder %s129, %s131
    %p135 = scmp.eq.s32.totalorder %s11, 0
    %p136 = por %p134, %p135
    %p137 = scmp.ne.s32.totalorder %s129, %s131
    %p138 = scmp.eq.s32.totalorder %s16, 1
    %p139 = por %p137, %p138
    %p140 = scmp.ne.s32.totalorder %s131, %s132
    %p141 = scmp.eq.s32.totalorder %s16, 0
    %p142 = por %p140, %p141
    %p143 = scmp.ne.s32.totalorder %s131, %s132
    %p144 = scmp.eq.s32.totalorder %s17, 1
    %p145 = por %p143, %p144
    %p147 = scmp.ne.s32.totalorder %s132, %s146
    %p148 = scmp.eq.s32.totalorder %s17, 0
    %p149 = por %p147, %p148
    %p150 = scmp.le.s32.totalorder 1, %s11
    %p151 = scmp.lt.s32.totalorder %s11, 3
    %p152 = pnand %p150, %p151
    %p153 = pneg %p152
    // Predicated region
    $region9: #{critic_forward.1} parent=5 // pred_check
      _
    $region10: #{critic_forward.1} parent=5 // pred_check_branch
      %155 = sbr.rel (%p152) target = $region12
    $region11: #{critic_forward.1} parent=5 // pred_region
      %s156 = ssub.s32 %s11, 1
      // Predicated region
      $region13: #{critic_forward.1} parent=11 // pred_check
        %p157 = pneg %p32
      $region14: #{critic_forward.1} parent=11 // pred_check_branch
        %159 = sbr.rel (%p157) target = $region16
      $region15: #{critic_forward.1} parent=11 // pred_region
        _
      $region16: #{critic_forward.1} parent=11 // pred_fallthru
        _
      // Predicated region
      $region17: #{critic_forward.1} parent=11 // pred_check
        %p160 = pneg %p53
      $region18: #{critic_forward.1} parent=11 // pred_check_branch
        %162 = sbr.rel (%p160) target = $region20
      $region19: #{critic_forward.1} parent=11 // pred_region
        _
      $region20: #{critic_forward.1} parent=11 // pred_fallthru
        _
      // Predicated region
      $region21: #{critic_forward.1} parent=11 // pred_check
        %p163 = pneg %p74
      $region22: #{critic_forward.1} parent=11 // pred_check_branch
        %165 = sbr.rel (%p163) target = $region24
      $region23: #{critic_forward.1} parent=11 // pred_region
        _
      $region24: #{critic_forward.1} parent=11 // pred_fallthru
        _
      // Predicated region
      $region25: #{critic_forward.1} parent=11 // pred_check
        %p166 = pneg %p95
      $region26: #{critic_forward.1} parent=11 // pred_check_branch
        %168 = sbr.rel (%p166) target = $region28
      $region27: #{critic_forward.1} parent=11 // pred_region
        _
      $region28: #{critic_forward.1} parent=11 // pred_fallthru
        _
    $region12: #{critic_forward.1} parent=5 // pred_fallthru
      _
    %p169 = scmp.lt.s32.totalorder %s11, 2
    // Predicated region
    $region29: #{critic_forward.1} parent=5 // pred_check
      %p170 = pneg %p169
    $region30: #{critic_forward.1} parent=5 // pred_check_branch
      %172 = sbr.rel (%p170) target = $region32
    $region31: #{critic_forward.1} parent=5 // pred_region
      // Predicated region
      $region33: #{critic_forward.1} parent=31 // pred_check
        %p173 = pneg %p115
      $region34: #{critic_forward.1} parent=31 // pred_check_branch
        %175 = sbr.rel (%p173) target = $region36
      $region35: #{critic_forward.1} parent=31 // pred_region
        %p176 = scmp.lt.s32.totalorder %s11, 1
        %s177 = scalar_select %p176, %s11, 1
        %s178 = smul.addr %s177, 512
        %s179 = smul.addr %s178, 4
        %s180 = scalar_lea.vmem %s4, %s179
      $region36: #{critic_forward.1} parent=31 // pred_fallthru
        _
    $region32: #{critic_forward.1} parent=5 // pred_fallthru
      _
    %p181 = scmp.le.s32.totalorder 1, %s11
    %p182 = scmp.lt.s32.totalorder %s11, 3
    %p183 = pnand %p181, %p182
    %p184 = pneg %p183
    // Predicated region
    $region37: #{critic_forward.1} parent=5 // pred_check
      _
    $region38: #{critic_forward.1} parent=5 // pred_check_branch
      %186 = sbr.rel (%p183) target = $region40
    $region39: #{critic_forward.1} parent=5 // pred_region
      %s187 = ssub.s32 %s11, 1
      %p188 = pneg %p32
      %p189 = pneg %p29
      %p190 = pneg %p53
      %p191 = pneg %p50
      %p192 = pneg %p74
      %p193 = pneg %p71
      %p194 = pneg %p95
      %p195 = pneg %p92
      %p196 = scmp.lt.s32.totalorder %s16, 1
      %s197 = scalar_select %p196, %s16, 1
      %s198 = smul.addr %s197, 512
      %s199 = smul.addr %s198, 4
      %s200 = scalar_lea.vmem %s4, %s199
      %p201 = pneg %p121
      %p202 = pneg %p118
      %p203 = pneg %p142
      %p204 = pneg %p139
      %p205 = scmp.lt.s32.totalorder %s16, 1
      %s206 = scalar_select %p205, %s16, 1
      %s207 = smul.addr %s206, 512
      %s208 = smul.addr %s207, 4
      %s209 = scalar_lea.vmem %s4, %s208
      %p211 = scmp.eq.s32.totalorder %s16, 0
      // Predicated region
      $region41: #{critic_forward.1} parent=39 // pred_check
        %p212 = pneg %p211
      $region42: #{critic_forward.1} parent=39 // pred_check_branch
        %214 = sbr.rel (%p212) target = $region44
      $region43: #{critic_forward.1} parent=39 // pred_region
        %v215 = vld [vmem:[%s3] ss:$0 sm:$0xff]
        %v216 = vld [vmem:[%s0] sm:$0xf]
        %v217 = vld [vmem:[%s0 + $0x4] sm:$0xf]
        %v218 = vld [vmem:[%s0 + $0x8] sm:$0xf]
        %v219 = vld [vmem:[%s0 + $0xc] sm:$0xf]
        %v220 = vld [vmem:[%s0 + $0x10] sm:$0xf]
        %v221 = vld [vmem:[%s0 + $0x14] sm:$0xf]
        %v222 = vld [vmem:[%s0 + $0x18] sm:$0xf]
        %v223 = vld [vmem:[%s0 + $0x1c] sm:$0xf]
        %v224 = vld [vmem:[%s0 + $0x20] sm:$0xf]
        %v225 = vld [vmem:[%s0 + $0x24] sm:$0xf]
        %v226 = vld [vmem:[%s0 + $0x28] sm:$0xf]
        %v227 = vld [vmem:[%s0 + $0x2c] sm:$0xf]
        %v228 = vld [vmem:[%s0 + $0x30] sm:$0xf]
        %v229 = vld [vmem:[%s0 + $0x34] sm:$0xf]
        %v230 = vld [vmem:[%s0 + $0x38] sm:$0xf]
        %v231 = vld [vmem:[%s0 + $0x3c] sm:$0xf]
        %v232 = vld [vmem:[%s0 + $0x40] sm:$0xf]
        %v233 = vld [vmem:[%s0 + $0x44] sm:$0xf]
        %v234 = vld [vmem:[%s0 + $0x48] sm:$0xf]
        %v235 = vld [vmem:[%s0 + $0x4c] sm:$0xf]
        %v236 = vld [vmem:[%s0 + $0x50] sm:$0xf]
        %v237 = vld [vmem:[%s0 + $0x54] sm:$0xf]
        %v238 = vld [vmem:[%s0 + $0x58] sm:$0xf]
        %v239 = vld [vmem:[%s0 + $0x5c] sm:$0xf]
        %v240 = vld [vmem:[%s0 + $0x60] sm:$0xf]
        %v241 = vld [vmem:[%s0 + $0x64] sm:$0xf]
        %v242 = vld [vmem:[%s0 + $0x68] sm:$0xf]
        %v243 = vld [vmem:[%s0 + $0x6c] sm:$0xf]
        %v244 = vld [vmem:[%s0 + $0x70] sm:$0xf]
        %v245 = vld [vmem:[%s0 + $0x74] sm:$0xf]
        %v246 = vld [vmem:[%s0 + $0x78] sm:$0xf]
        %v247 = vld [vmem:[%s0 + $0x7c] sm:$0xf]
        %v248 = vld [vmem:[%s0 + $0x80] sm:$0xf]
        %v249 = vld [vmem:[%s0 + $0x84] sm:$0xf]
        %v250 = vld [vmem:[%s0 + $0x88] sm:$0xf]
        %v251 = vld [vmem:[%s0 + $0x8c] sm:$0xf]
        %v252 = vld [vmem:[%s0 + $0x90] sm:$0xf]
        %v253 = vld [vmem:[%s0 + $0x94] sm:$0xf]
        %v254 = vld [vmem:[%s0 + $0x98] sm:$0xf]
        %v255 = vld [vmem:[%s0 + $0x9c] sm:$0xf]
        %v256 = vld [vmem:[%s0 + $0xa0] sm:$0xf]
        %v257 = vld [vmem:[%s0 + $0xa4] sm:$0xf]
        %v258 = vld [vmem:[%s0 + $0xa8] sm:$0xf]
        %v259 = vld [vmem:[%s0 + $0xac] sm:$0xf]
        %v260 = vld [vmem:[%s0 + $0xb0] sm:$0xf]
        %v261 = vld [vmem:[%s0 + $0xb4] sm:$0xf]
        %v262 = vld [vmem:[%s0 + $0xb8] sm:$0xf]
        %v263 = vld [vmem:[%s0 + $0xbc] sm:$0xf]
        %v264 = vld [vmem:[%s0 + $0xc0] sm:$0xf]
        %v265 = vld [vmem:[%s0 + $0xc4] sm:$0xf]
        %v266 = vld [vmem:[%s0 + $0xc8] sm:$0xf]
        %v267 = vld [vmem:[%s0 + $0xcc] sm:$0xf]
        %v268 = vld [vmem:[%s0 + $0xd0] sm:$0xf]
        %v269 = vld [vmem:[%s0 + $0xd4] sm:$0xf]
        %v270 = vld [vmem:[%s0 + $0xd8] sm:$0xf]
        %v271 = vld [vmem:[%s0 + $0xdc] sm:$0xf]
        %v272 = vld [vmem:[%s0 + $0xe0] sm:$0xf]
        %v273 = vld [vmem:[%s0 + $0xe4] sm:$0xf]
        %v274 = vld [vmem:[%s0 + $0xe8] sm:$0xf]
        %v275 = vld [vmem:[%s0 + $0xec] sm:$0xf]
        %v276 = vld [vmem:[%s0 + $0xf0] sm:$0xf]
        %v277 = vld [vmem:[%s0 + $0xf4] sm:$0xf]
        %v278 = vld [vmem:[%s0 + $0xf8] sm:$0xf]
        %v279 = vld [vmem:[%s0 + $0xfc] sm:$0xf]
        %v280 = vld [vmem:[%s1] sm:$0xf]
        %v281 = vld [vmem:[%s1 + $0x4] sm:$0xf]
        %v282 = vld [vmem:[%s1 + $0x8] sm:$0xf]
        %v283 = vld [vmem:[%s1 + $0xc] sm:$0xf]
        %v284 = vld [vmem:[%s1 + $0x10] sm:$0x3]
        %v349 = vunpack.c.l.b16 %v216
        %v350 = vunpack.c.l.b16 %v217
        %v351 = vunpack.c.l.b16 %v218
        %v352 = vunpack.c.l.b16 %v219
        %v353 = vunpack.c.l.b16 %v220
        %v354 = vunpack.c.l.b16 %v221
        %v355 = vunpack.c.l.b16 %v222
        %v356 = vunpack.c.l.b16 %v223
        %v357 = vunpack.c.l.b16 %v224
        %v358 = vunpack.c.l.b16 %v225
        %v359 = vunpack.c.l.b16 %v226
        %v360 = vunpack.c.l.b16 %v227
        %v361 = vunpack.c.l.b16 %v228
        %v362 = vunpack.c.l.b16 %v229
        %v363 = vunpack.c.l.b16 %v230
        %v364 = vunpack.c.l.b16 %v231
        %v365 = vunpack.c.l.b16 %v232
        %v366 = vunpack.c.l.b16 %v233
        %v367 = vunpack.c.l.b16 %v234
        %v368 = vunpack.c.l.b16 %v235
        %v369 = vunpack.c.l.b16 %v236
        %v370 = vunpack.c.l.b16 %v237
        %v371 = vunpack.c.l.b16 %v238
        %v372 = vunpack.c.l.b16 %v239
        %v373 = vunpack.c.l.b16 %v240
        %v374 = vunpack.c.l.b16 %v241
        %v375 = vunpack.c.l.b16 %v242
        %v376 = vunpack.c.l.b16 %v243
        %v377 = vunpack.c.l.b16 %v244
        %v378 = vunpack.c.l.b16 %v245
        %v379 = vunpack.c.l.b16 %v246
        %v380 = vunpack.c.l.b16 %v247
        %v381 = vunpack.c.l.b16 %v248
        %v382 = vunpack.c.l.b16 %v249
        %v383 = vunpack.c.l.b16 %v250
        %v384 = vunpack.c.l.b16 %v251
        %v385 = vunpack.c.l.b16 %v252
        %v386 = vunpack.c.l.b16 %v253
        %v387 = vunpack.c.l.b16 %v254
        %v388 = vunpack.c.l.b16 %v255
        %v389 = vunpack.c.l.b16 %v256
        %v390 = vunpack.c.l.b16 %v257
        %v391 = vunpack.c.l.b16 %v258
        %v392 = vunpack.c.l.b16 %v259
        %v393 = vunpack.c.l.b16 %v260
        %v394 = vunpack.c.l.b16 %v261
        %v395 = vunpack.c.l.b16 %v262
        %v396 = vunpack.c.l.b16 %v263
        %v397 = vunpack.c.l.b16 %v264
        %v398 = vunpack.c.l.b16 %v265
        %v399 = vunpack.c.l.b16 %v266
        %v400 = vunpack.c.l.b16 %v267
        %v401 = vunpack.c.l.b16 %v268
        %v402 = vunpack.c.l.b16 %v269
        %v403 = vunpack.c.l.b16 %v270
        %v404 = vunpack.c.l.b16 %v271
        %v405 = vunpack.c.l.b16 %v272
        %v406 = vunpack.c.l.b16 %v273
        %v407 = vunpack.c.l.b16 %v274
        %v408 = vunpack.c.l.b16 %v275
        %v409 = vunpack.c.l.b16 %v276
        %v410 = vunpack.c.l.b16 %v277
        %v411 = vunpack.c.l.b16 %v278
        %v412 = vunpack.c.l.b16 %v279
        %v413 = vpack.c.b16 %v350, %v349
        %v414 = vpack.c.b16 %v352, %v351
        %v415 = vpack.c.b16 %v354, %v353
        %v416 = vpack.c.b16 %v356, %v355
        %v417 = vpack.c.b16 %v358, %v357
        %v418 = vpack.c.b16 %v360, %v359
        %v419 = vpack.c.b16 %v362, %v361
        %v420 = vpack.c.b16 %v364, %v363
        %v421 = vpack.c.b16 %v366, %v365
        %v422 = vpack.c.b16 %v368, %v367
        %v423 = vpack.c.b16 %v370, %v369
        %v424 = vpack.c.b16 %v372, %v371
        %v425 = vpack.c.b16 %v374, %v373
        %v426 = vpack.c.b16 %v376, %v375
        %v427 = vpack.c.b16 %v378, %v377
        %v428 = vpack.c.b16 %v380, %v379
        %v429 = vpack.c.b16 %v382, %v381
        %v430 = vpack.c.b16 %v384, %v383
        %v431 = vpack.c.b16 %v386, %v385
        %v432 = vpack.c.b16 %v388, %v387
        %v433 = vpack.c.b16 %v390, %v389
        %v434 = vpack.c.b16 %v392, %v391
        %v435 = vpack.c.b16 %v394, %v393
        %v436 = vpack.c.b16 %v396, %v395
        %v437 = vpack.c.b16 %v398, %v397
        %v438 = vpack.c.b16 %v400, %v399
        %v439 = vpack.c.b16 %v402, %v401
        %v440 = vpack.c.b16 %v404, %v403
        %v441 = vpack.c.b16 %v406, %v405
        %v442 = vpack.c.b16 %v408, %v407
        %v443 = vpack.c.b16 %v410, %v409
        %v444 = vpack.c.b16 %v412, %v411
        %v450 = vunpack.c.l.b16 %v280
        %v451 = vunpack.c.l.b16 %v281
        %v452 = vunpack.c.l.b16 %v282
        %v453 = vunpack.c.l.b16 %v283
        %v454 = vunpack.c.l.b16 %v284
        %v455 = vpack.c.b16 %v451, %v450
        %v456 = vpack.c.b16 %v453, %v452
        %v457 = vpack.c.b16 %v454, %v454
        %vm460 = vcmask 293888
        %v462 = vsel %vm460, %v413, 0
        %v465 = vsel %vm460, %v414, 0
        %v468 = vsel %vm460, %v415, 0
        %v471 = vsel %vm460, %v416, 0
        %v474 = vsel %vm460, %v417, 0
        %v477 = vsel %vm460, %v418, 0
        %v480 = vsel %vm460, %v419, 0
        %v483 = vsel %vm460, %v420, 0
        %v486 = vsel %vm460, %v421, 0
        %v489 = vsel %vm460, %v422, 0
        %v492 = vsel %vm460, %v423, 0
        %v495 = vsel %vm460, %v424, 0
        %v498 = vsel %vm460, %v425, 0
        %v501 = vsel %vm460, %v426, 0
        %v504 = vsel %vm460, %v427, 0
        %v507 = vsel %vm460, %v428, 0
        %v510 = vsel %vm460, %v429, 0
        %v513 = vsel %vm460, %v430, 0
        %v516 = vsel %vm460, %v431, 0
        %v519 = vsel %vm460, %v432, 0
        %v522 = vsel %vm460, %v433, 0
        %v525 = vsel %vm460, %v434, 0
        %v528 = vsel %vm460, %v435, 0
        %v531 = vsel %vm460, %v436, 0
        %v534 = vsel %vm460, %v437, 0
        %v537 = vsel %vm460, %v438, 0
        %v540 = vsel %vm460, %v439, 0
        %v543 = vsel %vm460, %v440, 0
        %v546 = vsel %vm460, %v441, 0
        %v549 = vsel %vm460, %v442, 0
        %v552 = vsel %vm460, %v443, 0
        %v555 = vsel %vm460, %v444, 0
        %vm557 = vcmask 1041408
        %v559 = vsel %vm557, %v457, 0
        %561 = vmatprep.subr.bf16.mxu0 0
        %562 = vmatpush1.bf16.msra.mxu0 0
        %563 = vmatprep.subr.bf16.mxu0 0
        %564 = vmatpush1.bf16.msra.mxu0 0
        %565 = vmatprep.subr.bf16.mxu0 0
        %566 = vmatpush1.bf16.msra.mxu0 0
        %567 = vmatprep.subr.bf16.mxu0 0
        %568 = vmatpush1.bf16.msra.mxu0 0
        %569 = vmatprep.subr.bf16.mxu0 0
        %570 = vmatpush1.bf16.msra.mxu0 0
        %571 = vmatprep.subr.bf16.mxu0 0
        %572 = vmatpush1.bf16.msra.mxu0 %v559
        %573 = vmatprep.subr.bf16.mxu0 0
        %574 = vmatpush1.bf16.msra.mxu0 %v456
        %575 = vmatprep.subr.bf16.mxu0 0
        %576 = vmatpush1.bf16.msra.mxu0 %v455
        %577 = vmatprep.subr.bf16.mxu0 0
        %578 = vmatpush2.bf16.msra.mxu0 0
        %579 = vmatprep.subr.bf16.mxu0 0
        %580 = vmatpush2.bf16.msra.mxu0 0
        %581 = vmatprep.subr.bf16.mxu0 0
        %582 = vmatpush2.bf16.msra.mxu0 0
        %583 = vmatprep.subr.bf16.mxu0 0
        %584 = vmatpush2.bf16.msra.mxu0 0
        %585 = vmatprep.subr.bf16.mxu0 0
        %586 = vmatpush2.bf16.msra.mxu0 0
        %587 = vmatprep.subr.bf16.mxu0 0
        %588 = vmatpush2.bf16.msra.mxu0 0
        %589 = vmatprep.subr.bf16.mxu0 0
        %590 = vmatpush2.bf16.msra.mxu0 0
        %591 = vmatprep.subr.bf16.mxu0 0
        %592 = vmatpush2.bf16.msra.mxu0 0
        %593 = vmatprep.mubr.bf16.mxu0 0
        %594 = vmatmul.mubr.bf16.gmra.mxu0 %v462
        %v595 = vpop.f32.mrf.mxu0
        %v596 = vadd.f32 %v215, %v595
        %v597 = vpop.f32.mrf.mxu0
        %v598 = vpop.f32.mrf.mxu0
        %v599 = vadd.f32 %v215, %v598
        %v600 = vpop.f32.mrf.mxu0
        %601 = vmatprep.mubr.bf16.mxu0 0
        %602 = vmatmul.mubr.bf16.gmra.mxu0 %v465
        %v603 = vpop.f32.mrf.mxu0
        %v604 = vadd.f32 %v215, %v603
        %v605 = vpop.f32.mrf.mxu0
        %v606 = vpop.f32.mrf.mxu0
        %v607 = vadd.f32 %v215, %v606
        %v608 = vpop.f32.mrf.mxu0
        %609 = vmatprep.mubr.bf16.mxu0 0
        %610 = vmatmul.mubr.bf16.gmra.mxu0 %v468
        %v611 = vpop.f32.mrf.mxu0
        %v612 = vadd.f32 %v215, %v611
        %v613 = vpop.f32.mrf.mxu0
        %v614 = vpop.f32.mrf.mxu0
        %v615 = vadd.f32 %v215, %v614
        %v616 = vpop.f32.mrf.mxu0
        %617 = vmatprep.mubr.bf16.mxu0 0
        %618 = vmatmul.mubr.bf16.gmra.mxu0 %v471
        %v619 = vpop.f32.mrf.mxu0
        %v620 = vadd.f32 %v215, %v619
        %v621 = vpop.f32.mrf.mxu0
        %v622 = vpop.f32.mrf.mxu0
        %v623 = vadd.f32 %v215, %v622
        %v624 = vpop.f32.mrf.mxu0
        %625 = vmatprep.mubr.bf16.mxu0 0
        %626 = vmatmul.mubr.bf16.gmra.mxu0 %v474
        %v627 = vpop.f32.mrf.mxu0
        %v628 = vadd.f32 %v215, %v627
        %v629 = vpop.f32.mrf.mxu0
        %v630 = vpop.f32.mrf.mxu0
        %v631 = vadd.f32 %v215, %v630
        %v632 = vpop.f32.mrf.mxu0
        %633 = vmatprep.mubr.bf16.mxu0 0
        %634 = vmatmul.mubr.bf16.gmra.mxu0 %v477
        %v635 = vpop.f32.mrf.mxu0
        %v636 = vadd.f32 %v215, %v635
        %v637 = vpop.f32.mrf.mxu0
        %v638 = vpop.f32.mrf.mxu0
        %v639 = vadd.f32 %v215, %v638
        %v640 = vpop.f32.mrf.mxu0
        %641 = vmatprep.mubr.bf16.mxu0 0
        %642 = vmatmul.mubr.bf16.gmra.mxu0 %v480
        %v643 = vpop.f32.mrf.mxu0
        %v644 = vadd.f32 %v215, %v643
        %v645 = vpop.f32.mrf.mxu0
        %v646 = vpop.f32.mrf.mxu0
        %v647 = vadd.f32 %v215, %v646
        %v648 = vpop.f32.mrf.mxu0
        %649 = vmatprep.mubr.bf16.mxu0 0
        %650 = vmatmul.mubr.bf16.gmra.mxu0 %v483
        %v651 = vpop.f32.mrf.mxu0
        %v652 = vadd.f32 %v215, %v651
        %v653 = vpop.f32.mrf.mxu0
        %v654 = vpop.f32.mrf.mxu0
        %v655 = vadd.f32 %v215, %v654
        %v656 = vpop.f32.mrf.mxu0
        %657 = vmatprep.mubr.bf16.mxu0 0
        %658 = vmatmul.mubr.bf16.gmra.mxu0 %v486
        %v659 = vpop.f32.mrf.mxu0
        %v660 = vadd.f32 %v215, %v659
        %v661 = vpop.f32.mrf.mxu0
        %v662 = vpop.f32.mrf.mxu0
        %v663 = vadd.f32 %v215, %v662
        %v664 = vpop.f32.mrf.mxu0
        %665 = vmatprep.mubr.bf16.mxu0 0
        %666 = vmatmul.mubr.bf16.gmra.mxu0 %v489
        %v667 = vpop.f32.mrf.mxu0
        %v668 = vadd.f32 %v215, %v667
        %v669 = vpop.f32.mrf.mxu0
        %v670 = vpop.f32.mrf.mxu0
        %v671 = vadd.f32 %v215, %v670
        %v672 = vpop.f32.mrf.mxu0
        %673 = vmatprep.mubr.bf16.mxu0 0
        %674 = vmatmul.mubr.bf16.gmra.mxu0 %v492
        %v675 = vpop.f32.mrf.mxu0
        %v676 = vadd.f32 %v215, %v675
        %v677 = vpop.f32.mrf.mxu0
        %v678 = vpop.f32.mrf.mxu0
        %v679 = vadd.f32 %v215, %v678
        %v680 = vpop.f32.mrf.mxu0
        %681 = vmatprep.mubr.bf16.mxu0 0
        %682 = vmatmul.mubr.bf16.gmra.mxu0 %v495
        %v683 = vpop.f32.mrf.mxu0
        %v684 = vadd.f32 %v215, %v683
        %v685 = vpop.f32.mrf.mxu0
        %v686 = vpop.f32.mrf.mxu0
        %v687 = vadd.f32 %v215, %v686
        %v688 = vpop.f32.mrf.mxu0
        %689 = vmatprep.mubr.bf16.mxu0 0
        %690 = vmatmul.mubr.bf16.gmra.mxu0 %v498
        %v691 = vpop.f32.mrf.mxu0
        %v692 = vadd.f32 %v215, %v691
        %v693 = vpop.f32.mrf.mxu0
        %v694 = vpop.f32.mrf.mxu0
        %v695 = vadd.f32 %v215, %v694
        %v696 = vpop.f32.mrf.mxu0
        %697 = vmatprep.mubr.bf16.mxu0 0
        %698 = vmatmul.mubr.bf16.gmra.mxu0 %v501
        %v699 = vpop.f32.mrf.mxu0
        %v700 = vadd.f32 %v215, %v699
        %v701 = vpop.f32.mrf.mxu0
        %v702 = vpop.f32.mrf.mxu0
        %v703 = vadd.f32 %v215, %v702
        %v704 = vpop.f32.mrf.mxu0
        %705 = vmatprep.mubr.bf16.mxu0 0
        %706 = vmatmul.mubr.bf16.gmra.mxu0 %v504
        %v707 = vpop.f32.mrf.mxu0
        %v708 = vadd.f32 %v215, %v707
        %v709 = vpop.f32.mrf.mxu0
        %v710 = vpop.f32.mrf.mxu0
        %v711 = vadd.f32 %v215, %v710
        %v712 = vpop.f32.mrf.mxu0
        %713 = vmatprep.mubr.bf16.mxu0 0
        %714 = vmatmul.mubr.bf16.gmra.mxu0 %v507
        %v715 = vpop.f32.mrf.mxu0
        %v716 = vadd.f32 %v215, %v715
        %v717 = vpop.f32.mrf.mxu0
        %v718 = vpop.f32.mrf.mxu0
        %v719 = vadd.f32 %v215, %v718
        %v720 = vpop.f32.mrf.mxu0
        %721 = vmatprep.mubr.bf16.mxu0 0
        %722 = vmatmul.mubr.bf16.gmra.mxu0 %v510
        %v723 = vpop.f32.mrf.mxu0
        %v724 = vadd.f32 %v215, %v723
        %v725 = vpop.f32.mrf.mxu0
        %v726 = vpop.f32.mrf.mxu0
        %v727 = vadd.f32 %v215, %v726
        %v728 = vpop.f32.mrf.mxu0
        %729 = vmatprep.mubr.bf16.mxu0 0
        %730 = vmatmul.mubr.bf16.gmra.mxu0 %v513
        %v731 = vpop.f32.mrf.mxu0
        %v732 = vadd.f32 %v215, %v731
        %v733 = vpop.f32.mrf.mxu0
        %v734 = vpop.f32.mrf.mxu0
        %v735 = vadd.f32 %v215, %v734
        %v736 = vpop.f32.mrf.mxu0
        %737 = vmatprep.mubr.bf16.mxu0 0
        %738 = vmatmul.mubr.bf16.gmra.mxu0 %v516
        %v739 = vpop.f32.mrf.mxu0
        %v740 = vadd.f32 %v215, %v739
        %v741 = vpop.f32.mrf.mxu0
        %v742 = vpop.f32.mrf.mxu0
        %v743 = vadd.f32 %v215, %v742
        %v744 = vpop.f32.mrf.mxu0
        %745 = vmatprep.mubr.bf16.mxu0 0
        %746 = vmatmul.mubr.bf16.gmra.mxu0 %v519
        %v747 = vpop.f32.mrf.mxu0
        %v748 = vadd.f32 %v215, %v747
        %v749 = vpop.f32.mrf.mxu0
        %v750 = vpop.f32.mrf.mxu0
        %v751 = vadd.f32 %v215, %v750
        %v752 = vpop.f32.mrf.mxu0
        %753 = vmatprep.mubr.bf16.mxu0 0
        %754 = vmatmul.mubr.bf16.gmra.mxu0 %v522
        %v755 = vpop.f32.mrf.mxu0
        %v756 = vadd.f32 %v215, %v755
        %v757 = vpop.f32.mrf.mxu0
        %v758 = vpop.f32.mrf.mxu0
        %v759 = vadd.f32 %v215, %v758
        %v760 = vpop.f32.mrf.mxu0
        %761 = vmatprep.mubr.bf16.mxu0 0
        %762 = vmatmul.mubr.bf16.gmra.mxu0 %v525
        %v763 = vpop.f32.mrf.mxu0
        %v764 = vadd.f32 %v215, %v763
        %v765 = vpop.f32.mrf.mxu0
        %v766 = vpop.f32.mrf.mxu0
        %v767 = vadd.f32 %v215, %v766
        %v768 = vpop.f32.mrf.mxu0
        %769 = vmatprep.mubr.bf16.mxu0 0
        %770 = vmatmul.mubr.bf16.gmra.mxu0 %v528
        %v771 = vpop.f32.mrf.mxu0
        %v772 = vadd.f32 %v215, %v771
        %v773 = vpop.f32.mrf.mxu0
        %v774 = vpop.f32.mrf.mxu0
        %v775 = vadd.f32 %v215, %v774
        %v776 = vpop.f32.mrf.mxu0
        %777 = vmatprep.mubr.bf16.mxu0 0
        %778 = vmatmul.mubr.bf16.gmra.mxu0 %v531
        %v779 = vpop.f32.mrf.mxu0
        %v780 = vadd.f32 %v215, %v779
        %v781 = vpop.f32.mrf.mxu0
        %v782 = vpop.f32.mrf.mxu0
        %v783 = vadd.f32 %v215, %v782
        %v784 = vpop.f32.mrf.mxu0
        %785 = vmatprep.mubr.bf16.mxu0 0
        %786 = vmatmul.mubr.bf16.gmra.mxu0 %v534
        %v787 = vpop.f32.mrf.mxu0
        %v788 = vadd.f32 %v215, %v787
        %v789 = vpop.f32.mrf.mxu0
        %v790 = vpop.f32.mrf.mxu0
        %v791 = vadd.f32 %v215, %v790
        %v792 = vpop.f32.mrf.mxu0
        %793 = vmatprep.mubr.bf16.mxu0 0
        %794 = vmatmul.mubr.bf16.gmra.mxu0 %v537
        %v795 = vpop.f32.mrf.mxu0
        %v796 = vadd.f32 %v215, %v795
        %v797 = vpop.f32.mrf.mxu0
        %v798 = vpop.f32.mrf.mxu0
        %v799 = vadd.f32 %v215, %v798
        %v800 = vpop.f32.mrf.mxu0
        %801 = vmatprep.mubr.bf16.mxu0 0
        %802 = vmatmul.mubr.bf16.gmra.mxu0 %v540
        %v803 = vpop.f32.mrf.mxu0
        %v804 = vadd.f32 %v215, %v803
        %v805 = vpop.f32.mrf.mxu0
        %v806 = vpop.f32.mrf.mxu0
        %v807 = vadd.f32 %v215, %v806
        %v808 = vpop.f32.mrf.mxu0
        %809 = vmatprep.mubr.bf16.mxu0 0
        %810 = vmatmul.mubr.bf16.gmra.mxu0 %v543
        %v811 = vpop.f32.mrf.mxu0
        %v812 = vadd.f32 %v215, %v811
        %v813 = vpop.f32.mrf.mxu0
        %v814 = vpop.f32.mrf.mxu0
        %v815 = vadd.f32 %v215, %v814
        %v816 = vpop.f32.mrf.mxu0
        %817 = vmatprep.mubr.bf16.mxu0 0
        %818 = vmatmul.mubr.bf16.gmra.mxu0 %v546
        %v819 = vpop.f32.mrf.mxu0
        %v820 = vadd.f32 %v215, %v819
        %v821 = vpop.f32.mrf.mxu0
        %v822 = vpop.f32.mrf.mxu0
        %v823 = vadd.f32 %v215, %v822
        %v824 = vpop.f32.mrf.mxu0
        %825 = vmatprep.mubr.bf16.mxu0 0
        %826 = vmatmul.mubr.bf16.gmra.mxu0 %v549
        %v827 = vpop.f32.mrf.mxu0
        %v828 = vadd.f32 %v215, %v827
        %v829 = vpop.f32.mrf.mxu0
        %v830 = vpop.f32.mrf.mxu0
        %v831 = vadd.f32 %v215, %v830
        %v832 = vpop.f32.mrf.mxu0
        %833 = vmatprep.mubr.bf16.mxu0 0
        %834 = vmatmul.mubr.bf16.gmra.mxu0 %v552
        %v835 = vpop.f32.mrf.mxu0
        %v836 = vadd.f32 %v215, %v835
        %v837 = vpop.f32.mrf.mxu0
        %v838 = vpop.f32.mrf.mxu0
        %v839 = vadd.f32 %v215, %v838
        %v840 = vpop.f32.mrf.mxu0
        %841 = vmatprep.mubr.bf16.mxu0 0
        %842 = vmatmul.mubr.bf16.gmra.mxu0 %v555
        %v843 = vpop.f32.mrf.mxu0
        %v844 = vadd.f32 %v215, %v843
        %v845 = vpop.f32.mrf.mxu0
        %v846 = vpop.f32.mrf.mxu0
        %v847 = vadd.f32 %v215, %v846
        %v848 = vpop.f32.mrf.mxu0
        %849 = vdwg.mxu0
        %v850 = vmax.f32 %v596, 0.0
        %v851 = vmax.f32 %v599, 0.0
        %v852 = vmax.f32 %v604, 0.0
        %v853 = vmax.f32 %v607, 0.0
        %v854 = vmax.f32 %v612, 0.0
        %v855 = vmax.f32 %v615, 0.0
        %v856 = vmax.f32 %v620, 0.0
        %v857 = vmax.f32 %v623, 0.0
        %v858 = vmax.f32 %v628, 0.0
        %v859 = vmax.f32 %v631, 0.0
        %v860 = vmax.f32 %v636, 0.0
        %v861 = vmax.f32 %v639, 0.0
        %v862 = vmax.f32 %v644, 0.0
        %v863 = vmax.f32 %v647, 0.0
        %v864 = vmax.f32 %v652, 0.0
        %v865 = vmax.f32 %v655, 0.0
        %v866 = vmax.f32 %v660, 0.0
        %v867 = vmax.f32 %v663, 0.0
        %v868 = vmax.f32 %v668, 0.0
        %v869 = vmax.f32 %v671, 0.0
        %v870 = vmax.f32 %v676, 0.0
        %v871 = vmax.f32 %v679, 0.0
        %v872 = vmax.f32 %v684, 0.0
        %v873 = vmax.f32 %v687, 0.0
        %v874 = vmax.f32 %v692, 0.0
        %v875 = vmax.f32 %v695, 0.0
        %v876 = vmax.f32 %v700, 0.0
        %v877 = vmax.f32 %v703, 0.0
        %v878 = vmax.f32 %v708, 0.0
        %v879 = vmax.f32 %v711, 0.0
        %v880 = vmax.f32 %v716, 0.0
        %v881 = vmax.f32 %v719, 0.0
        %v882 = vmax.f32 %v724, 0.0
        %v883 = vmax.f32 %v727, 0.0
        %v884 = vmax.f32 %v732, 0.0
        %v885 = vmax.f32 %v735, 0.0
        %v886 = vmax.f32 %v740, 0.0
        %v887 = vmax.f32 %v743, 0.0
        %v888 = vmax.f32 %v748, 0.0
        %v889 = vmax.f32 %v751, 0.0
        %v890 = vmax.f32 %v756, 0.0
        %v891 = vmax.f32 %v759, 0.0
        %v892 = vmax.f32 %v764, 0.0
        %v893 = vmax.f32 %v767, 0.0
        %v894 = vmax.f32 %v772, 0.0
        %v895 = vmax.f32 %v775, 0.0
        %v896 = vmax.f32 %v780, 0.0
        %v897 = vmax.f32 %v783, 0.0
        %v898 = vmax.f32 %v788, 0.0
        %v899 = vmax.f32 %v791, 0.0
        %v900 = vmax.f32 %v796, 0.0
        %v901 = vmax.f32 %v799, 0.0
        %v902 = vmax.f32 %v804, 0.0
        %v903 = vmax.f32 %v807, 0.0
        %v904 = vmax.f32 %v812, 0.0
        %v905 = vmax.f32 %v815, 0.0
        %v906 = vmax.f32 %v820, 0.0
        %v907 = vmax.f32 %v823, 0.0
        %v908 = vmax.f32 %v828, 0.0
        %v909 = vmax.f32 %v831, 0.0
        %v910 = vmax.f32 %v836, 0.0
        %v911 = vmax.f32 %v839, 0.0
        %v912 = vmax.f32 %v844, 0.0
        %v913 = vmax.f32 %v847, 0.0
        %v914 = vpack.c.bf16 %v851, %v850
        %v915 = vpack.c.bf16 %v853, %v852
        %v916 = vpack.c.bf16 %v855, %v854
        %v917 = vpack.c.bf16 %v857, %v856
        %v918 = vpack.c.bf16 %v859, %v858
        %v919 = vpack.c.bf16 %v861, %v860
        %v920 = vpack.c.bf16 %v863, %v862
        %v921 = vpack.c.bf16 %v865, %v864
        %v922 = vpack.c.bf16 %v867, %v866
        %v923 = vpack.c.bf16 %v869, %v868
        %v924 = vpack.c.bf16 %v871, %v870
        %v925 = vpack.c.bf16 %v873, %v872
        %v926 = vpack.c.bf16 %v875, %v874
        %v927 = vpack.c.bf16 %v877, %v876
        %v928 = vpack.c.bf16 %v879, %v878
        %v929 = vpack.c.bf16 %v881, %v880
        %v930 = vpack.c.bf16 %v883, %v882
        %v931 = vpack.c.bf16 %v885, %v884
        %v932 = vpack.c.bf16 %v887, %v886
        %v933 = vpack.c.bf16 %v889, %v888
        %v934 = vpack.c.bf16 %v891, %v890
        %v935 = vpack.c.bf16 %v893, %v892
        %v936 = vpack.c.bf16 %v895, %v894
        %v937 = vpack.c.bf16 %v897, %v896
        %v938 = vpack.c.bf16 %v899, %v898
        %v939 = vpack.c.bf16 %v901, %v900
        %v940 = vpack.c.bf16 %v903, %v902
        %v941 = vpack.c.bf16 %v905, %v904
        %v942 = vpack.c.bf16 %v907, %v906
        %v943 = vpack.c.bf16 %v909, %v908
        %v944 = vpack.c.bf16 %v911, %v910
        %v945 = vpack.c.bf16 %v913, %v912
        %vm946 = vcmask 257024
        %947 = vst.msk [vmem:[#allocation2] sm:$0xf] %vm946, 0
        %948 = vst.msk [vmem:[#allocation2 + $0x4] sm:$0xf] %vm946, 0
        %949 = vst.msk [vmem:[#allocation2 + $0x8] sm:$0xf] %vm946, 0
        %950 = vst.msk [vmem:[#allocation2 + $0xc] sm:$0xf] %vm946, 0
        %951 = vst.msk [vmem:[#allocation2 + $0x10] sm:$0xf] %vm946, 0
        %952 = vst.msk [vmem:[#allocation2 + $0x14] sm:$0xf] %vm946, 0
        %953 = vst.msk [vmem:[#allocation2 + $0x18] sm:$0xf] %vm946, 0
        %954 = vst.msk [vmem:[#allocation2 + $0x1c] sm:$0xf] %vm946, 0
        %955 = vst.msk [vmem:[#allocation2 + $0x20] sm:$0xf] %vm946, 0
        %956 = vst.msk [vmem:[#allocation2 + $0x24] sm:$0xf] %vm946, 0
        %957 = vst.msk [vmem:[#allocation2 + $0x28] sm:$0xf] %vm946, 0
        %958 = vst.msk [vmem:[#allocation2 + $0x2c] sm:$0xf] %vm946, 0
        %959 = vst.msk [vmem:[#allocation2 + $0x30] sm:$0xf] %vm946, 0
        %960 = vst.msk [vmem:[#allocation2 + $0x34] sm:$0xf] %vm946, 0
        %961 = vst.msk [vmem:[#allocation2 + $0x38] sm:$0xf] %vm946, 0
        %962 = vst.msk [vmem:[#allocation2 + $0x3c] sm:$0xf] %vm946, 0
        %963 = vst.msk [vmem:[#allocation2 + $0x40] sm:$0xf] %vm946, 0
        %964 = vst.msk [vmem:[#allocation2 + $0x44] sm:$0xf] %vm946, 0
        %965 = vst.msk [vmem:[#allocation2 + $0x48] sm:$0xf] %vm946, 0
        %966 = vst.msk [vmem:[#allocation2 + $0x4c] sm:$0xf] %vm946, 0
        %967 = vst.msk [vmem:[#allocation2 + $0x50] sm:$0xf] %vm946, 0
        %968 = vst.msk [vmem:[#allocation2 + $0x54] sm:$0xf] %vm946, 0
        %969 = vst.msk [vmem:[#allocation2 + $0x58] sm:$0xf] %vm946, 0
        %970 = vst.msk [vmem:[#allocation2 + $0x5c] sm:$0xf] %vm946, 0
        %971 = vst.msk [vmem:[#allocation2 + $0x60] sm:$0xf] %vm946, 0
        %972 = vst.msk [vmem:[#allocation2 + $0x64] sm:$0xf] %vm946, 0
        %973 = vst.msk [vmem:[#allocation2 + $0x68] sm:$0xf] %vm946, 0
        %974 = vst.msk [vmem:[#allocation2 + $0x6c] sm:$0xf] %vm946, 0
        %975 = vst.msk [vmem:[#allocation2 + $0x70] sm:$0xf] %vm946, 0
        %976 = vst.msk [vmem:[#allocation2 + $0x74] sm:$0xf] %vm946, 0
        %977 = vst.msk [vmem:[#allocation2 + $0x78] sm:$0xf] %vm946, 0
        %978 = vst.msk [vmem:[#allocation2 + $0x7c] sm:$0xf] %vm946, 0
        %979 = vst.msk [vmem:[#allocation2 + $0x80] sm:$0xf] %vm946, 0
        %980 = vst.msk [vmem:[#allocation2 + $0x84] sm:$0xf] %vm946, 0
        %981 = vst.msk [vmem:[#allocation2 + $0x88] sm:$0xf] %vm946, 0
        %982 = vst.msk [vmem:[#allocation2 + $0x8c] sm:$0xf] %vm946, 0
        %983 = vst.msk [vmem:[#allocation2 + $0x90] sm:$0xf] %vm946, 0
        %984 = vst.msk [vmem:[#allocation2 + $0x94] sm:$0xf] %vm946, 0
        %985 = vst.msk [vmem:[#allocation2 + $0x98] sm:$0xf] %vm946, 0
        %986 = vst.msk [vmem:[#allocation2 + $0x9c] sm:$0xf] %vm946, 0
        %987 = vst.msk [vmem:[#allocation2 + $0xa0] sm:$0xf] %vm946, 0
        %988 = vst.msk [vmem:[#allocation2 + $0xa4] sm:$0xf] %vm946, 0
        %989 = vst.msk [vmem:[#allocation2 + $0xa8] sm:$0xf] %vm946, 0
        %990 = vst.msk [vmem:[#allocation2 + $0xac] sm:$0xf] %vm946, 0
        %991 = vst.msk [vmem:[#allocation2 + $0xb0] sm:$0xf] %vm946, 0
        %992 = vst.msk [vmem:[#allocation2 + $0xb4] sm:$0xf] %vm946, 0
        %993 = vst.msk [vmem:[#allocation2 + $0xb8] sm:$0xf] %vm946, 0
        %994 = vst.msk [vmem:[#allocation2 + $0xbc] sm:$0xf] %vm946, 0
        %995 = vst.msk [vmem:[#allocation2 + $0xc0] sm:$0xf] %vm946, 0
        %996 = vst.msk [vmem:[#allocation2 + $0xc4] sm:$0xf] %vm946, 0
        %997 = vst.msk [vmem:[#allocation2 + $0xc8] sm:$0xf] %vm946, 0
        %998 = vst.msk [vmem:[#allocation2 + $0xcc] sm:$0xf] %vm946, 0
        %999 = vst.msk [vmem:[#allocation2 + $0xd0] sm:$0xf] %vm946, 0
        %1000 = vst.msk [vmem:[#allocation2 + $0xd4] sm:$0xf] %vm946, 0
        %1001 = vst.msk [vmem:[#allocation2 + $0xd8] sm:$0xf] %vm946, 0
        %1002 = vst.msk [vmem:[#allocation2 + $0xdc] sm:$0xf] %vm946, 0
        %1003 = vst.msk [vmem:[#allocation2 + $0xe0] sm:$0xf] %vm946, 0
        %1004 = vst.msk [vmem:[#allocation2 + $0xe4] sm:$0xf] %vm946, 0
        %1005 = vst.msk [vmem:[#allocation2 + $0xe8] sm:$0xf] %vm946, 0
        %1006 = vst.msk [vmem:[#allocation2 + $0xec] sm:$0xf] %vm946, 0
        %1007 = vst.msk [vmem:[#allocation2 + $0xf0] sm:$0xf] %vm946, 0
        %1008 = vst.msk [vmem:[#allocation2 + $0xf4] sm:$0xf] %vm946, 0
        %1009 = vst.msk [vmem:[#allocation2 + $0xf8] sm:$0xf] %vm946, 0
        %1010 = vst.msk [vmem:[#allocation2 + $0xfc] sm:$0xf] %vm946, 0
        %1011 = vst.msk [vmem:[#allocation2 + $0x100] sm:$0xf] %vm946, 0
        %1012 = vst.msk [vmem:[#allocation2 + $0x104] sm:$0xf] %vm946, 0
        %1013 = vst.msk [vmem:[#allocation2 + $0x108] sm:$0xf] %vm946, 0
        %1014 = vst.msk [vmem:[#allocation2 + $0x10c] sm:$0xf] %vm946, 0
        %1015 = vst.msk [vmem:[#allocation2 + $0x110] sm:$0xf] %vm946, 0
        %1016 = vst.msk [vmem:[#allocation2 + $0x114] sm:$0xf] %vm946, 0
        %1017 = vst.msk [vmem:[#allocation2 + $0x118] sm:$0xf] %vm946, 0
        %1018 = vst.msk [vmem:[#allocation2 + $0x11c] sm:$0xf] %vm946, 0
        %1019 = vst.msk [vmem:[#allocation2 + $0x120] sm:$0xf] %vm946, 0
        %1020 = vst.msk [vmem:[#allocation2 + $0x124] sm:$0xf] %vm946, 0
        %1021 = vst.msk [vmem:[#allocation2 + $0x128] sm:$0xf] %vm946, 0
        %1022 = vst.msk [vmem:[#allocation2 + $0x12c] sm:$0xf] %vm946, 0
        %1023 = vst.msk [vmem:[#allocation2 + $0x130] sm:$0xf] %vm946, 0
        %1024 = vst.msk [vmem:[#allocation2 + $0x134] sm:$0xf] %vm946, 0
        %1025 = vst.msk [vmem:[#allocation2 + $0x138] sm:$0xf] %vm946, 0
        %1026 = vst.msk [vmem:[#allocation2 + $0x13c] sm:$0xf] %vm946, 0
        %1027 = vst.msk [vmem:[#allocation2 + $0x140] sm:$0xf] %vm946, 0
        %1028 = vst.msk [vmem:[#allocation2 + $0x144] sm:$0xf] %vm946, 0
        %1029 = vst.msk [vmem:[#allocation2 + $0x148] sm:$0xf] %vm946, 0
        %1030 = vst.msk [vmem:[#allocation2 + $0x14c] sm:$0xf] %vm946, 0
        %1031 = vst.msk [vmem:[#allocation2 + $0x150] sm:$0xf] %vm946, 0
        %1032 = vst.msk [vmem:[#allocation2 + $0x154] sm:$0xf] %vm946, 0
        %1033 = vst.msk [vmem:[#allocation2 + $0x158] sm:$0xf] %vm946, 0
        %1034 = vst.msk [vmem:[#allocation2 + $0x15c] sm:$0xf] %vm946, 0
        %1035 = vst.msk [vmem:[#allocation2 + $0x160] sm:$0xf] %vm946, 0
        %1036 = vst.msk [vmem:[#allocation2 + $0x164] sm:$0xf] %vm946, 0
        %1037 = vst.msk [vmem:[#allocation2 + $0x168] sm:$0xf] %vm946, 0
        %1038 = vst.msk [vmem:[#allocation2 + $0x16c] sm:$0xf] %vm946, 0
        %1039 = vst.msk [vmem:[#allocation2 + $0x170] sm:$0xf] %vm946, 0
        %1040 = vst.msk [vmem:[#allocation2 + $0x174] sm:$0xf] %vm946, 0
        %1041 = vst.msk [vmem:[#allocation2 + $0x178] sm:$0xf] %vm946, 0
        %1042 = vst.msk [vmem:[#allocation2 + $0x17c] sm:$0xf] %vm946, 0
        %1043 = vst.msk [vmem:[#allocation2 + $0x180] sm:$0xf] %vm946, 0
        %1044 = vst.msk [vmem:[#allocation2 + $0x184] sm:$0xf] %vm946, 0
        %1045 = vst.msk [vmem:[#allocation2 + $0x188] sm:$0xf] %vm946, 0
        %1046 = vst.msk [vmem:[#allocation2 + $0x18c] sm:$0xf] %vm946, 0
        %1047 = vst.msk [vmem:[#allocation2 + $0x190] sm:$0xf] %vm946, 0
        %1048 = vst.msk [vmem:[#allocation2 + $0x194] sm:$0xf] %vm946, 0
        %v1053 = vunpack.c.l.b16 %v914
        %v1054 = vunpack.c.h.b16 %v914
        %v1055 = vunpack.c.l.b16 %v915
        %v1056 = vunpack.c.h.b16 %v915
        %v1057 = vunpack.c.l.b16 %v916
        %v1058 = vunpack.c.h.b16 %v916
        %v1059 = vunpack.c.l.b16 %v917
        %v1060 = vunpack.c.h.b16 %v917
        %v1061 = vpack.c.b16 %v1053, %v1053
        %v1062 = vpack.c.b16 %v1054, %v1054
        %v1063 = vpack.c.b16 %v1055, %v1055
        %v1064 = vpack.c.b16 %v1056, %v1056
        %v1065 = vpack.c.b16 %v1057, %v1057
        %v1066 = vpack.c.b16 %v1058, %v1058
        %v1067 = vpack.c.b16 %v1059, %v1059
        %v1068 = vpack.c.b16 %v1060, %v1060
        %1077 = vst.msk [vmem:[#allocation2 + $0x30] sm:$0xf] %vm946, %v1061
        %1078 = vst.msk [vmem:[#allocation2 + $0x34] sm:$0xf] %vm946, %v1062
        %1079 = vst.msk [vmem:[#allocation2 + $0x38] sm:$0xf] %vm946, %v1063
        %1080 = vst.msk [vmem:[#allocation2 + $0x3c] sm:$0xf] %vm946, %v1064
        %1081 = vst.msk [vmem:[#allocation2 + $0x40] sm:$0xf] %vm946, %v1065
        %1082 = vst.msk [vmem:[#allocation2 + $0x44] sm:$0xf] %vm946, %v1066
        %1083 = vst.msk [vmem:[#allocation2 + $0x48] sm:$0xf] %vm946, %v1067
        %1084 = vst.msk [vmem:[#allocation2 + $0x4c] sm:$0xf] %vm946, %v1068
        %v1089 = vunpack.c.l.b16 %v918
        %v1090 = vunpack.c.h.b16 %v918
        %v1091 = vunpack.c.l.b16 %v919
        %v1092 = vunpack.c.h.b16 %v919
        %v1093 = vunpack.c.l.b16 %v920
        %v1094 = vunpack.c.h.b16 %v920
        %v1095 = vunpack.c.l.b16 %v921
        %v1096 = vunpack.c.h.b16 %v921
        %v1097 = vpack.c.b16 %v1089, %v1089
        %v1098 = vpack.c.b16 %v1090, %v1090
        %v1099 = vpack.c.b16 %v1091, %v1091
        %v1100 = vpack.c.b16 %v1092, %v1092
        %v1101 = vpack.c.b16 %v1093, %v1093
        %v1102 = vpack.c.b16 %v1094, %v1094
        %v1103 = vpack.c.b16 %v1095, %v1095
        %v1104 = vpack.c.b16 %v1096, %v1096
        %1113 = vst.msk [vmem:[#allocation2 + $0x58] sm:$0xf] %vm946, %v1097
        %1114 = vst.msk [vmem:[#allocation2 + $0x5c] sm:$0xf] %vm946, %v1098
        %1115 = vst.msk [vmem:[#allocation2 + $0x60] sm:$0xf] %vm946, %v1099
        %1116 = vst.msk [vmem:[#allocation2 + $0x64] sm:$0xf] %vm946, %v1100
        %1117 = vst.msk [vmem:[#allocation2 + $0x68] sm:$0xf] %vm946, %v1101
        %1118 = vst.msk [vmem:[#allocation2 + $0x6c] sm:$0xf] %vm946, %v1102
        %1119 = vst.msk [vmem:[#allocation2 + $0x70] sm:$0xf] %vm946, %v1103
        %1120 = vst.msk [vmem:[#allocation2 + $0x74] sm:$0xf] %vm946, %v1104
        %v1125 = vunpack.c.l.b16 %v922
        %v1126 = vunpack.c.h.b16 %v922
        %v1127 = vunpack.c.l.b16 %v923
        %v1128 = vunpack.c.h.b16 %v923
        %v1129 = vunpack.c.l.b16 %v924
        %v1130 = vunpack.c.h.b16 %v924
        %v1131 = vunpack.c.l.b16 %v925
        %v1132 = vunpack.c.h.b16 %v925
        %v1133 = vpack.c.b16 %v1125, %v1125
        %v1134 = vpack.c.b16 %v1126, %v1126
        %v1135 = vpack.c.b16 %v1127, %v1127
        %v1136 = vpack.c.b16 %v1128, %v1128
        %v1137 = vpack.c.b16 %v1129, %v1129
        %v1138 = vpack.c.b16 %v1130, %v1130
        %v1139 = vpack.c.b16 %v1131, %v1131
        %v1140 = vpack.c.b16 %v1132, %v1132
        %1149 = vst.msk [vmem:[#allocation2 + $0x80] sm:$0xf] %vm946, %v1133
        %1150 = vst.msk [vmem:[#allocation2 + $0x84] sm:$0xf] %vm946, %v1134
        %1151 = vst.msk [vmem:[#allocation2 + $0x88] sm:$0xf] %vm946, %v1135
        %1152 = vst.msk [vmem:[#allocation2 + $0x8c] sm:$0xf] %vm946, %v1136
        %1153 = vst.msk [vmem:[#allocation2 + $0x90] sm:$0xf] %vm946, %v1137
        %1154 = vst.msk [vmem:[#allocation2 + $0x94] sm:$0xf] %vm946, %v1138
        %1155 = vst.msk [vmem:[#allocation2 + $0x98] sm:$0xf] %vm946, %v1139
        %1156 = vst.msk [vmem:[#allocation2 + $0x9c] sm:$0xf] %vm946, %v1140
        %v1161 = vunpack.c.l.b16 %v926
        %v1162 = vunpack.c.h.b16 %v926
        %v1163 = vunpack.c.l.b16 %v927
        %v1164 = vunpack.c.h.b16 %v927
        %v1165 = vunpack.c.l.b16 %v928
        %v1166 = vunpack.c.h.b16 %v928
        %v1167 = vunpack.c.l.b16 %v929
        %v1168 = vunpack.c.h.b16 %v929
        %v1169 = vpack.c.b16 %v1161, %v1161
        %v1170 = vpack.c.b16 %v1162, %v1162
        %v1171 = vpack.c.b16 %v1163, %v1163
        %v1172 = vpack.c.b16 %v1164, %v1164
        %v1173 = vpack.c.b16 %v1165, %v1165
        %v1174 = vpack.c.b16 %v1166, %v1166
        %v1175 = vpack.c.b16 %v1167, %v1167
        %v1176 = vpack.c.b16 %v1168, %v1168
        %1185 = vst.msk [vmem:[#allocation2 + $0xa8] sm:$0xf] %vm946, %v1169
        %1186 = vst.msk [vmem:[#allocation2 + $0xac] sm:$0xf] %vm946, %v1170
        %1187 = vst.msk [vmem:[#allocation2 + $0xb0] sm:$0xf] %vm946, %v1171
        %1188 = vst.msk [vmem:[#allocation2 + $0xb4] sm:$0xf] %vm946, %v1172
        %1189 = vst.msk [vmem:[#allocation2 + $0xb8] sm:$0xf] %vm946, %v1173
        %1190 = vst.msk [vmem:[#allocation2 + $0xbc] sm:$0xf] %vm946, %v1174
        %1191 = vst.msk [vmem:[#allocation2 + $0xc0] sm:$0xf] %vm946, %v1175
        %1192 = vst.msk [vmem:[#allocation2 + $0xc4] sm:$0xf] %vm946, %v1176
        %v1197 = vunpack.c.l.b16 %v930
        %v1198 = vunpack.c.h.b16 %v930
        %v1199 = vunpack.c.l.b16 %v931
        %v1200 = vunpack.c.h.b16 %v931
        %v1201 = vunpack.c.l.b16 %v932
        %v1202 = vunpack.c.h.b16 %v932
        %v1203 = vunpack.c.l.b16 %v933
        %v1204 = vunpack.c.h.b16 %v933
        %v1205 = vpack.c.b16 %v1197, %v1197
        %v1206 = vpack.c.b16 %v1198, %v1198
        %v1207 = vpack.c.b16 %v1199, %v1199
        %v1208 = vpack.c.b16 %v1200, %v1200
        %v1209 = vpack.c.b16 %v1201, %v1201
        %v1210 = vpack.c.b16 %v1202, %v1202
        %v1211 = vpack.c.b16 %v1203, %v1203
        %v1212 = vpack.c.b16 %v1204, %v1204
        %1221 = vst.msk [vmem:[#allocation2 + $0xd0] sm:$0xf] %vm946, %v1205
        %1222 = vst.msk [vmem:[#allocation2 + $0xd4] sm:$0xf] %vm946, %v1206
        %1223 = vst.msk [vmem:[#allocation2 + $0xd8] sm:$0xf] %vm946, %v1207
        %1224 = vst.msk [vmem:[#allocation2 + $0xdc] sm:$0xf] %vm946, %v1208
        %1225 = vst.msk [vmem:[#allocation2 + $0xe0] sm:$0xf] %vm946, %v1209
        %1226 = vst.msk [vmem:[#allocation2 + $0xe4] sm:$0xf] %vm946, %v1210
        %1227 = vst.msk [vmem:[#allocation2 + $0xe8] sm:$0xf] %vm946, %v1211
        %1228 = vst.msk [vmem:[#allocation2 + $0xec] sm:$0xf] %vm946, %v1212
        %v1233 = vunpack.c.l.b16 %v934
        %v1234 = vunpack.c.h.b16 %v934
        %v1235 = vunpack.c.l.b16 %v935
        %v1236 = vunpack.c.h.b16 %v935
        %v1237 = vunpack.c.l.b16 %v936
        %v1238 = vunpack.c.h.b16 %v936
        %v1239 = vunpack.c.l.b16 %v937
        %v1240 = vunpack.c.h.b16 %v937
        %v1241 = vpack.c.b16 %v1233, %v1233
        %v1242 = vpack.c.b16 %v1234, %v1234
        %v1243 = vpack.c.b16 %v1235, %v1235
        %v1244 = vpack.c.b16 %v1236, %v1236
        %v1245 = vpack.c.b16 %v1237, %v1237
        %v1246 = vpack.c.b16 %v1238, %v1238
        %v1247 = vpack.c.b16 %v1239, %v1239
        %v1248 = vpack.c.b16 %v1240, %v1240
        %1257 = vst.msk [vmem:[#allocation2 + $0xf8] sm:$0xf] %vm946, %v1241
        %1258 = vst.msk [vmem:[#allocation2 + $0xfc] sm:$0xf] %vm946, %v1242
        %1259 = vst.msk [vmem:[#allocation2 + $0x100] sm:$0xf] %vm946, %v1243
        %1260 = vst.msk [vmem:[#allocation2 + $0x104] sm:$0xf] %vm946, %v1244
        %1261 = vst.msk [vmem:[#allocation2 + $0x108] sm:$0xf] %vm946, %v1245
        %1262 = vst.msk [vmem:[#allocation2 + $0x10c] sm:$0xf] %vm946, %v1246
        %1263 = vst.msk [vmem:[#allocation2 + $0x110] sm:$0xf] %vm946, %v1247
        %1264 = vst.msk [vmem:[#allocation2 + $0x114] sm:$0xf] %vm946, %v1248
        %v1269 = vunpack.c.l.b16 %v938
        %v1270 = vunpack.c.h.b16 %v938
        %v1271 = vunpack.c.l.b16 %v939
        %v1272 = vunpack.c.h.b16 %v939
        %v1273 = vunpack.c.l.b16 %v940
        %v1274 = vunpack.c.h.b16 %v940
        %v1275 = vunpack.c.l.b16 %v941
        %v1276 = vunpack.c.h.b16 %v941
        %v1277 = vpack.c.b16 %v1269, %v1269
        %v1278 = vpack.c.b16 %v1270, %v1270
        %v1279 = vpack.c.b16 %v1271, %v1271
        %v1280 = vpack.c.b16 %v1272, %v1272
        %v1281 = vpack.c.b16 %v1273, %v1273
        %v1282 = vpack.c.b16 %v1274, %v1274
        %v1283 = vpack.c.b16 %v1275, %v1275
        %v1284 = vpack.c.b16 %v1276, %v1276
        %1293 = vst.msk [vmem:[#allocation2 + $0x120] sm:$0xf] %vm946, %v1277
        %1294 = vst.msk [vmem:[#allocation2 + $0x124] sm:$0xf] %vm946, %v1278
        %1295 = vst.msk [vmem:[#allocation2 + $0x128] sm:$0xf] %vm946, %v1279
        %1296 = vst.msk [vmem:[#allocation2 + $0x12c] sm:$0xf] %vm946, %v1280
        %1297 = vst.msk [vmem:[#allocation2 + $0x130] sm:$0xf] %vm946, %v1281
        %1298 = vst.msk [vmem:[#allocation2 + $0x134] sm:$0xf] %vm946, %v1282
        %1299 = vst.msk [vmem:[#allocation2 + $0x138] sm:$0xf] %vm946, %v1283
        %1300 = vst.msk [vmem:[#allocation2 + $0x13c] sm:$0xf] %vm946, %v1284
        %v1305 = vunpack.c.l.b16 %v942
        %v1306 = vunpack.c.h.b16 %v942
        %v1307 = vunpack.c.l.b16 %v943
        %v1308 = vunpack.c.h.b16 %v943
        %v1309 = vunpack.c.l.b16 %v944
        %v1310 = vunpack.c.h.b16 %v944
        %v1311 = vunpack.c.l.b16 %v945
        %v1312 = vunpack.c.h.b16 %v945
        %v1313 = vpack.c.b16 %v1305, %v1305
        %v1314 = vpack.c.b16 %v1306, %v1306
        %v1315 = vpack.c.b16 %v1307, %v1307
        %v1316 = vpack.c.b16 %v1308, %v1308
        %v1317 = vpack.c.b16 %v1309, %v1309
        %v1318 = vpack.c.b16 %v1310, %v1310
        %v1319 = vpack.c.b16 %v1311, %v1311
        %v1320 = vpack.c.b16 %v1312, %v1312
        %1329 = vst.msk [vmem:[#allocation2 + $0x148] sm:$0xf] %vm946, %v1313
        %1330 = vst.msk [vmem:[#allocation2 + $0x14c] sm:$0xf] %vm946, %v1314
        %1331 = vst.msk [vmem:[#allocation2 + $0x150] sm:$0xf] %vm946, %v1315
        %1332 = vst.msk [vmem:[#allocation2 + $0x154] sm:$0xf] %vm946, %v1316
        %1333 = vst.msk [vmem:[#allocation2 + $0x158] sm:$0xf] %vm946, %v1317
        %1334 = vst.msk [vmem:[#allocation2 + $0x15c] sm:$0xf] %vm946, %v1318
        %1335 = vst.msk [vmem:[#allocation2 + $0x160] sm:$0xf] %vm946, %v1319
        %1336 = vst.msk [vmem:[#allocation2 + $0x164] sm:$0xf] %vm946, %v1320
        %v1337 = vld [vmem:[%s3 + $0x1] ss:$0 sm:$0xff]
        %v1338 = vld [vmem:[#allocation2] sm:$0xf]
        %v1339 = vld [vmem:[#allocation2 + $0x4] sm:$0xf]
        %v1340 = vld [vmem:[#allocation2 + $0x8] sm:$0xf]
        %v1341 = vld [vmem:[#allocation2 + $0xc] sm:$0xf]
        %v1342 = vld [vmem:[#allocation2 + $0x10] sm:$0xf]
        %v1343 = vld [vmem:[#allocation2 + $0x14] sm:$0xf]
        %v1344 = vld [vmem:[#allocation2 + $0x18] sm:$0xf]
        %v1345 = vld [vmem:[#allocation2 + $0x1c] sm:$0xf]
        %v1346 = vld [vmem:[#allocation2 + $0x20] sm:$0xf]
        %v1347 = vld [vmem:[#allocation2 + $0x24] sm:$0xf]
        %v1348 = vld [vmem:[#allocation2 + $0x28] sm:$0xf]
        %v1349 = vld [vmem:[#allocation2 + $0x2c] sm:$0xf]
        %v1350 = vld [vmem:[#allocation2 + $0x30] sm:$0xf]
        %v1351 = vld [vmem:[#allocation2 + $0x34] sm:$0xf]
        %v1352 = vld [vmem:[#allocation2 + $0x38] sm:$0xf]
        %v1353 = vld [vmem:[#allocation2 + $0x3c] sm:$0xf]
        %v1354 = vld [vmem:[#allocation2 + $0x40] sm:$0xf]
        %v1355 = vld [vmem:[#allocation2 + $0x44] sm:$0xf]
        %v1356 = vld [vmem:[#allocation2 + $0x48] sm:$0xf]
        %v1357 = vld [vmem:[#allocation2 + $0x4c] sm:$0xf]
        %v1358 = vld [vmem:[#allocation2 + $0x50] sm:$0xf]
        %v1359 = vld [vmem:[#allocation2 + $0x54] sm:$0xf]
        %v1360 = vld [vmem:[#allocation2 + $0x58] sm:$0xf]
        %v1361 = vld [vmem:[#allocation2 + $0x5c] sm:$0xf]
        %v1362 = vld [vmem:[#allocation2 + $0x60] sm:$0xf]
        %v1363 = vld [vmem:[#allocation2 + $0x64] sm:$0xf]
        %v1364 = vld [vmem:[#allocation2 + $0x68] sm:$0xf]
        %v1365 = vld [vmem:[#allocation2 + $0x6c] sm:$0xf]
        %v1366 = vld [vmem:[#allocation2 + $0x70] sm:$0xf]
        %v1367 = vld [vmem:[#allocation2 + $0x74] sm:$0xf]
        %v1368 = vld [vmem:[#allocation2 + $0x78] sm:$0xf]
        %v1369 = vld [vmem:[#allocation2 + $0x7c] sm:$0xf]
        %v1370 = vld [vmem:[#allocation2 + $0x80] sm:$0xf]
        %v1371 = vld [vmem:[#allocation2 + $0x84] sm:$0xf]
        %v1372 = vld [vmem:[#allocation2 + $0x88] sm:$0xf]
        %v1373 = vld [vmem:[#allocation2 + $0x8c] sm:$0xf]
        %v1374 = vld [vmem:[#allocation2 + $0x90] sm:$0xf]
        %v1375 = vld [vmem:[#allocation2 + $0x94] sm:$0xf]
        %v1376 = vld [vmem:[#allocation2 + $0x98] sm:$0xf]
        %v1377 = vld [vmem:[#allocation2 + $0x9c] sm:$0xf]
        %v1378 = vld [vmem:[#allocation2 + $0xa0] sm:$0xf]
        %v1379 = vld [vmem:[#allocation2 + $0xa4] sm:$0xf]
        %v1380 = vld [vmem:[#allocation2 + $0xa8] sm:$0xf]
        %v1381 = vld [vmem:[#allocation2 + $0xac] sm:$0xf]
        %v1382 = vld [vmem:[#allocation2 + $0xb0] sm:$0xf]
        %v1383 = vld [vmem:[#allocation2 + $0xb4] sm:$0xf]
        %v1384 = vld [vmem:[#allocation2 + $0xb8] sm:$0xf]
        %v1385 = vld [vmem:[#allocation2 + $0xbc] sm:$0xf]
        %v1386 = vld [vmem:[#allocation2 + $0xc0] sm:$0xf]
        %v1387 = vld [vmem:[#allocation2 + $0xc4] sm:$0xf]
        %v1388 = vld [vmem:[#allocation2 + $0xc8] sm:$0xf]
        %v1389 = vld [vmem:[#allocation2 + $0xcc] sm:$0xf]
        %v1390 = vld [vmem:[#allocation2 + $0xd0] sm:$0xf]
        %v1391 = vld [vmem:[#allocation2 + $0xd4] sm:$0xf]
        %v1392 = vld [vmem:[#allocation2 + $0xd8] sm:$0xf]
        %v1393 = vld [vmem:[#allocation2 + $0xdc] sm:$0xf]
        %v1394 = vld [vmem:[#allocation2 + $0xe0] sm:$0xf]
        %v1395 = vld [vmem:[#allocation2 + $0xe4] sm:$0xf]
        %v1396 = vld [vmem:[#allocation2 + $0xe8] sm:$0xf]
        %v1397 = vld [vmem:[#allocation2 + $0xec] sm:$0xf]
        %v1398 = vld [vmem:[#allocation2 + $0xf0] sm:$0xf]
        %v1399 = vld [vmem:[#allocation2 + $0xf4] sm:$0xf]
        %v1400 = vld [vmem:[#allocation2 + $0xf8] sm:$0xf]
        %v1401 = vld [vmem:[#allocation2 + $0xfc] sm:$0xf]
        %v1402 = vld [vmem:[#allocation2 + $0x100] sm:$0xf]
        %v1403 = vld [vmem:[#allocation2 + $0x104] sm:$0xf]
        %v1404 = vld [vmem:[#allocation2 + $0x108] sm:$0xf]
        %v1405 = vld [vmem:[#allocation2 + $0x10c] sm:$0xf]
        %v1406 = vld [vmem:[#allocation2 + $0x110] sm:$0xf]
        %v1407 = vld [vmem:[#allocation2 + $0x114] sm:$0xf]
        %v1408 = vld [vmem:[#allocation2 + $0x118] sm:$0xf]
        %v1409 = vld [vmem:[#allocation2 + $0x11c] sm:$0xf]
        %v1410 = vld [vmem:[#allocation2 + $0x120] sm:$0xf]
        %v1411 = vld [vmem:[#allocation2 + $0x124] sm:$0xf]
        %v1412 = vld [vmem:[#allocation2 + $0x128] sm:$0xf]
        %v1413 = vld [vmem:[#allocation2 + $0x12c] sm:$0xf]
        %v1414 = vld [vmem:[#allocation2 + $0x130] sm:$0xf]
        %v1415 = vld [vmem:[#allocation2 + $0x134] sm:$0xf]
        %v1416 = vld [vmem:[#allocation2 + $0x138] sm:$0xf]
        %v1417 = vld [vmem:[#allocation2 + $0x13c] sm:$0xf]
        %v1418 = vld [vmem:[%s2] sm:$0xf]
        %v1419 = vld [vmem:[%s2 + $0x4] sm:$0xf]
        %v1420 = vld [vmem:[%s2 + $0x8] sm:$0xf]
        %v1421 = vld [vmem:[%s2 + $0xc] sm:$0xf]
        %v1422 = vld [vmem:[#allocation2 + $0x140] sm:$0xf]
        %s1423 = scalar_lea.vmem %s2, 16
        %v1424 = vld [vmem:[%s1423] sm:$0xf]
        %v1425 = vld [vmem:[%s1423 + $0x4] sm:$0xf]
        %v1426 = vld [vmem:[%s1423 + $0x8] sm:$0xf]
        %v1427 = vld [vmem:[%s1423 + $0xc] sm:$0xf]
        %v1508 = vunpack.c.l.b16 %v1339
        %v1509 = vunpack.c.l.b16 %v1340
        %v1510 = vunpack.c.l.b16 %v1341
        %v1511 = vunpack.c.l.b16 %v1342
        %v1512 = vunpack.c.l.b16 %v1343
        %v1513 = vunpack.c.l.b16 %v1344
        %v1514 = vunpack.c.l.b16 %v1345
        %v1515 = vunpack.c.l.b16 %v1346
        %v1516 = vunpack.c.l.b16 %v1347
        %v1517 = vunpack.c.l.b16 %v1348
        %v1518 = vunpack.c.l.b16 %v1349
        %v1519 = vunpack.c.l.b16 %v1350
        %v1520 = vunpack.c.l.b16 %v1351
        %v1521 = vunpack.c.l.b16 %v1352
        %v1522 = vunpack.c.l.b16 %v1353
        %v1523 = vunpack.c.l.b16 %v1354
        %v1524 = vunpack.c.l.b16 %v1355
        %v1525 = vunpack.c.l.b16 %v1356
        %v1526 = vunpack.c.l.b16 %v1357
        %v1527 = vunpack.c.l.b16 %v1358
        %v1528 = vunpack.c.l.b16 %v1359
        %v1529 = vunpack.c.l.b16 %v1360
        %v1530 = vunpack.c.l.b16 %v1361
        %v1531 = vunpack.c.l.b16 %v1362
        %v1532 = vunpack.c.l.b16 %v1363
        %v1533 = vunpack.c.l.b16 %v1364
        %v1534 = vunpack.c.l.b16 %v1365
        %v1535 = vunpack.c.l.b16 %v1366
        %v1536 = vunpack.c.l.b16 %v1367
        %v1537 = vunpack.c.l.b16 %v1368
        %v1538 = vunpack.c.l.b16 %v1369
        %v1539 = vunpack.c.l.b16 %v1370
        %v1540 = vunpack.c.l.b16 %v1371
        %v1541 = vunpack.c.l.b16 %v1372
        %v1542 = vunpack.c.l.b16 %v1373
        %v1543 = vunpack.c.l.b16 %v1374
        %v1544 = vunpack.c.l.b16 %v1375
        %v1545 = vunpack.c.l.b16 %v1376
        %v1546 = vunpack.c.l.b16 %v1377
        %v1547 = vunpack.c.l.b16 %v1378
        %v1548 = vunpack.c.l.b16 %v1379
        %v1549 = vunpack.c.l.b16 %v1380
        %v1550 = vunpack.c.l.b16 %v1381
        %v1551 = vunpack.c.l.b16 %v1382
        %v1552 = vunpack.c.l.b16 %v1383
        %v1553 = vunpack.c.l.b16 %v1384
        %v1554 = vunpack.c.l.b16 %v1385
        %v1555 = vunpack.c.l.b16 %v1386
        %v1556 = vunpack.c.l.b16 %v1387
        %v1557 = vunpack.c.l.b16 %v1388
        %v1558 = vunpack.c.l.b16 %v1389
        %v1559 = vunpack.c.l.b16 %v1390
        %v1560 = vunpack.c.l.b16 %v1391
        %v1561 = vunpack.c.l.b16 %v1392
        %v1562 = vunpack.c.l.b16 %v1393
        %v1563 = vunpack.c.l.b16 %v1394
        %v1564 = vunpack.c.l.b16 %v1395
        %v1565 = vunpack.c.l.b16 %v1396
        %v1566 = vunpack.c.l.b16 %v1397
        %v1567 = vunpack.c.l.b16 %v1398
        %v1568 = vunpack.c.l.b16 %v1399
        %v1569 = vunpack.c.l.b16 %v1400
        %v1570 = vunpack.c.l.b16 %v1401
        %v1571 = vunpack.c.l.b16 %v1402
        %v1572 = vunpack.c.l.b16 %v1403
        %v1573 = vunpack.c.l.b16 %v1404
        %v1574 = vunpack.c.l.b16 %v1405
        %v1575 = vunpack.c.l.b16 %v1406
        %v1576 = vunpack.c.l.b16 %v1407
        %v1577 = vunpack.c.l.b16 %v1408
        %v1578 = vunpack.c.l.b16 %v1409
        %v1579 = vunpack.c.l.b16 %v1410
        %v1580 = vunpack.c.l.b16 %v1411
        %v1581 = vunpack.c.l.b16 %v1412
        %v1582 = vunpack.c.l.b16 %v1413
        %v1583 = vunpack.c.l.b16 %v1414
        %v1584 = vunpack.c.l.b16 %v1415
        %v1585 = vunpack.c.l.b16 %v1416
        %v1586 = vunpack.c.l.b16 %v1417
        %v1587 = vunpack.c.l.b16 %v1422
        %v1588 = vpack.c.b16 %v1509, %v1508
        %v1589 = vpack.c.b16 %v1511, %v1510
        %v1590 = vpack.c.b16 %v1513, %v1512
        %v1591 = vpack.c.b16 %v1515, %v1514
        %v1592 = vpack.c.b16 %v1517, %v1516
        %v1593 = vpack.c.b16 %v1519, %v1518
        %v1594 = vpack.c.b16 %v1521, %v1520
        %v1595 = vpack.c.b16 %v1523, %v1522
        %v1596 = vpack.c.b16 %v1525, %v1524
        %v1597 = vpack.c.b16 %v1527, %v1526
        %v1598 = vpack.c.b16 %v1529, %v1528
        %v1599 = vpack.c.b16 %v1531, %v1530
        %v1600 = vpack.c.b16 %v1533, %v1532
        %v1601 = vpack.c.b16 %v1535, %v1534
        %v1602 = vpack.c.b16 %v1537, %v1536
        %v1603 = vpack.c.b16 %v1539, %v1538
        %v1604 = vpack.c.b16 %v1541, %v1540
        %v1605 = vpack.c.b16 %v1543, %v1542
        %v1606 = vpack.c.b16 %v1545, %v1544
        %v1607 = vpack.c.b16 %v1547, %v1546
        %v1608 = vpack.c.b16 %v1549, %v1548
        %v1609 = vpack.c.b16 %v1551, %v1550
        %v1610 = vpack.c.b16 %v1553, %v1552
        %v1611 = vpack.c.b16 %v1555, %v1554
        %v1612 = vpack.c.b16 %v1557, %v1556
        %v1613 = vpack.c.b16 %v1559, %v1558
        %v1614 = vpack.c.b16 %v1561, %v1560
        %v1615 = vpack.c.b16 %v1563, %v1562
        %v1616 = vpack.c.b16 %v1565, %v1564
        %v1617 = vpack.c.b16 %v1567, %v1566
        %v1618 = vpack.c.b16 %v1569, %v1568
        %v1619 = vpack.c.b16 %v1571, %v1570
        %v1620 = vpack.c.b16 %v1573, %v1572
        %v1621 = vpack.c.b16 %v1575, %v1574
        %v1622 = vpack.c.b16 %v1577, %v1576
        %v1623 = vpack.c.b16 %v1579, %v1578
        %v1624 = vpack.c.b16 %v1581, %v1580
        %v1625 = vpack.c.b16 %v1583, %v1582
        %v1626 = vpack.c.b16 %v1585, %v1584
        %v1627 = vpack.c.b16 %v1587, %v1586
        %v1632 = vunpack.c.l.b16 %v1424
        %v1633 = vunpack.c.l.b16 %v1425
        %v1634 = vunpack.c.l.b16 %v1426
        %v1635 = vunpack.c.l.b16 %v1427
        %v1636 = vpack.c.b16 %v1633, %v1632
        %v1637 = vpack.c.b16 %v1635, %v1634
        %vm1640 = vcmask 261120
        %v1642 = vsel %vm1640, %v1588, 0
        %v1645 = vsel %vm1640, %v1589, 0
        %v1648 = vsel %vm1640, %v1590, 0
        %v1651 = vsel %vm1640, %v1591, 0
        %v1654 = vsel %vm1640, %v1592, 0
        %v1657 = vsel %vm1640, %v1593, 0
        %v1660 = vsel %vm1640, %v1594, 0
        %v1663 = vsel %vm1640, %v1595, 0
        %v1666 = vsel %vm1640, %v1596, 0
        %v1669 = vsel %vm1640, %v1597, 0
        %v1672 = vsel %vm1640, %v1598, 0
        %v1675 = vsel %vm1640, %v1599, 0
        %v1678 = vsel %vm1640, %v1600, 0
        %v1681 = vsel %vm1640, %v1601, 0
        %v1684 = vsel %vm1640, %v1602, 0
        %v1687 = vsel %vm1640, %v1603, 0
        %v1690 = vsel %vm1640, %v1604, 0
        %v1693 = vsel %vm1640, %v1605, 0
        %v1696 = vsel %vm1640, %v1606, 0
        %v1699 = vsel %vm1640, %v1607, 0
        %v1702 = vsel %vm1640, %v1608, 0
        %v1705 = vsel %vm1640, %v1609, 0
        %v1708 = vsel %vm1640, %v1610, 0
        %v1711 = vsel %vm1640, %v1611, 0
        %v1714 = vsel %vm1640, %v1612, 0
        %v1717 = vsel %vm1640, %v1613, 0
        %v1720 = vsel %vm1640, %v1614, 0
        %v1723 = vsel %vm1640, %v1615, 0
        %v1726 = vsel %vm1640, %v1616, 0
        %v1729 = vsel %vm1640, %v1617, 0
        %v1732 = vsel %vm1640, %v1618, 0
        %v1735 = vsel %vm1640, %v1619, 0
        %v1738 = vsel %vm1640, %v1620, 0
        %v1741 = vsel %vm1640, %v1621, 0
        %v1744 = vsel %vm1640, %v1622, 0
        %v1747 = vsel %vm1640, %v1623, 0
        %v1750 = vsel %vm1640, %v1624, 0
        %v1753 = vsel %vm1640, %v1625, 0
        %v1756 = vsel %vm1640, %v1626, 0
        %v1759 = vsel %vm1640, %v1627, 0
        %1761 = vmatprep.subr.bf16.mxu0 0
        %1762 = vmatpush1.bf16.msra.mxu0 0
        %1763 = vmatprep.subr.bf16.mxu0 0
        %1764 = vmatpush1.bf16.msra.mxu0 0
        %1765 = vmatprep.subr.bf16.mxu0 0
        %1766 = vmatpush1.bf16.msra.mxu0 0
        %1767 = vmatprep.subr.bf16.mxu0 0
        %1768 = vmatpush1.bf16.msra.mxu0 0
        %1769 = vmatprep.subr.bf16.mxu0 0
        %1770 = vmatpush1.bf16.msra.mxu0 0
        %1771 = vmatprep.subr.bf16.mxu0 0
        %1772 = vmatpush1.bf16.msra.mxu0 0
        %1773 = vmatprep.subr.bf16.mxu0 0
        %1774 = vmatpush1.bf16.msra.mxu0 %v1637
        %1775 = vmatprep.subr.bf16.mxu0 0
        %1776 = vmatpush1.bf16.msra.mxu0 %v1636
        %1777 = vmatprep.subr.bf16.mxu0 0
        %1778 = vmatpush2.bf16.msra.mxu0 0
        %1779 = vmatprep.subr.bf16.mxu0 0
        %1780 = vmatpush2.bf16.msra.mxu0 0
        %1781 = vmatprep.subr.bf16.mxu0 0
        %1782 = vmatpush2.bf16.msra.mxu0 0
        %1783 = vmatprep.subr.bf16.mxu0 0
        %1784 = vmatpush2.bf16.msra.mxu0 0
        %1785 = vmatprep.subr.bf16.mxu0 0
        %1786 = vmatpush2.bf16.msra.mxu0 0
        %1787 = vmatprep.subr.bf16.mxu0 0
        %1788 = vmatpush2.bf16.msra.mxu0 0
        %1789 = vmatprep.subr.bf16.mxu0 0
        %1790 = vmatpush2.bf16.msra.mxu0 0
        %1791 = vmatprep.subr.bf16.mxu0 0
        %1792 = vmatpush2.bf16.msra.mxu0 0
        %1793 = vmatprep.mubr.bf16.mxu0 0
        %1794 = vmatmul.mubr.bf16.gmra.mxu0 %v1642
        %v1795 = vpop.f32.mrf.mxu0
        %v1796 = vpop.f32.mrf.mxu0
        %v1797 = vpop.f32.mrf.mxu0
        %v1798 = vadd.f32 0.0, %v1797
        %v1799 = vpop.f32.mrf.mxu0
        %1800 = vmatprep.mubr.bf16.mxu0 0
        %1801 = vmatmul.mubr.bf16.gmra.mxu0 %v1645
        %v1802 = vpop.f32.mrf.mxu0
        %v1803 = vadd.f32 0.0, %v1802
        %v1804 = vpop.f32.mrf.mxu0
        %v1805 = vpop.f32.mrf.mxu0
        %v1806 = vadd.f32 0.0, %v1805
        %v1807 = vpop.f32.mrf.mxu0
        %1808 = vmatprep.mubr.bf16.mxu0 0
        %1809 = vmatmul.mubr.bf16.gmra.mxu0 %v1648
        %v1810 = vpop.f32.mrf.mxu0
        %v1811 = vadd.f32 0.0, %v1810
        %v1812 = vpop.f32.mrf.mxu0
        %v1813 = vpop.f32.mrf.mxu0
        %v1814 = vadd.f32 0.0, %v1813
        %v1815 = vpop.f32.mrf.mxu0
        %1816 = vmatprep.mubr.bf16.mxu0 0
        %1817 = vmatmul.mubr.bf16.gmra.mxu0 %v1651
        %v1818 = vpop.f32.mrf.mxu0
        %v1819 = vadd.f32 0.0, %v1818
        %v1820 = vpop.f32.mrf.mxu0
        %v1821 = vpop.f32.mrf.mxu0
        %v1822 = vadd.f32 0.0, %v1821
        %v1823 = vpop.f32.mrf.mxu0
        %1824 = vmatprep.mubr.bf16.mxu0 0
        %1825 = vmatmul.mubr.bf16.gmra.mxu0 %v1654
        %v1826 = vpop.f32.mrf.mxu0
        %v1827 = vadd.f32 0.0, %v1826
        %v1828 = vpop.f32.mrf.mxu0
        %v1829 = vpop.f32.mrf.mxu0
        %v1830 = vpop.f32.mrf.mxu0
        %1831 = vmatprep.mubr.bf16.mxu0 0
        %1832 = vmatmul.mubr.bf16.gmra.mxu0 %v1657
        %v1833 = vpop.f32.mrf.mxu0
        %v1834 = vpop.f32.mrf.mxu0
        %v1835 = vpop.f32.mrf.mxu0
        %v1836 = vadd.f32 0.0, %v1835
        %v1837 = vpop.f32.mrf.mxu0
        %1838 = vmatprep.mubr.bf16.mxu0 0
        %1839 = vmatmul.mubr.bf16.gmra.mxu0 %v1660
        %v1840 = vpop.f32.mrf.mxu0
        %v1841 = vadd.f32 0.0, %v1840
        %v1842 = vpop.f32.mrf.mxu0
        %v1843 = vpop.f32.mrf.mxu0
        %v1844 = vadd.f32 0.0, %v1843
        %v1845 = vpop.f32.mrf.mxu0
        %1846 = vmatprep.mubr.bf16.mxu0 0
        %1847 = vmatmul.mubr.bf16.gmra.mxu0 %v1663
        %v1848 = vpop.f32.mrf.mxu0
        %v1849 = vadd.f32 0.0, %v1848
        %v1850 = vpop.f32.mrf.mxu0
        %v1851 = vpop.f32.mrf.mxu0
        %v1852 = vadd.f32 0.0, %v1851
        %v1853 = vpop.f32.mrf.mxu0
        %1854 = vmatprep.mubr.bf16.mxu0 0
        %1855 = vmatmul.mubr.bf16.gmra.mxu0 %v1666
        %v1856 = vpop.f32.mrf.mxu0
        %v1857 = vadd.f32 0.0, %v1856
        %v1858 = vpop.f32.mrf.mxu0
        %v1859 = vpop.f32.mrf.mxu0
        %v1860 = vadd.f32 0.0, %v1859
        %v1861 = vpop.f32.mrf.mxu0
        %1862 = vmatprep.mubr.bf16.mxu0 0
        %1863 = vmatmul.mubr.bf16.gmra.mxu0 %v1669
        %v1864 = vpop.f32.mrf.mxu0
        %v1865 = vadd.f32 0.0, %v1864
        %v1866 = vpop.f32.mrf.mxu0
        %v1867 = vpop.f32.mrf.mxu0
        %v1868 = vpop.f32.mrf.mxu0
        %1869 = vmatprep.mubr.bf16.mxu0 0
        %1870 = vmatmul.mubr.bf16.gmra.mxu0 %v1672
        %v1871 = vpop.f32.mrf.mxu0
        %v1872 = vpop.f32.mrf.mxu0
        %v1873 = vpop.f32.mrf.mxu0
        %v1874 = vadd.f32 0.0, %v1873
        %v1875 = vpop.f32.mrf.mxu0
        %1876 = vmatprep.mubr.bf16.mxu0 0
        %1877 = vmatmul.mubr.bf16.gmra.mxu0 %v1675
        %v1878 = vpop.f32.mrf.mxu0
        %v1879 = vadd.f32 0.0, %v1878
        %v1880 = vpop.f32.mrf.mxu0
        %v1881 = vpop.f32.mrf.mxu0
        %v1882 = vadd.f32 0.0, %v1881
        %v1883 = vpop.f32.mrf.mxu0
        %1884 = vmatprep.mubr.bf16.mxu0 0
        %1885 = vmatmul.mubr.bf16.gmra.mxu0 %v1678
        %v1886 = vpop.f32.mrf.mxu0
        %v1887 = vadd.f32 0.0, %v1886
        %v1888 = vpop.f32.mrf.mxu0
        %v1889 = vpop.f32.mrf.mxu0
        %v1890 = vadd.f32 0.0, %v1889
        %v1891 = vpop.f32.mrf.mxu0
        %1892 = vmatprep.mubr.bf16.mxu0 0
        %1893 = vmatmul.mubr.bf16.gmra.mxu0 %v1681
        %v1894 = vpop.f32.mrf.mxu0
        %v1895 = vadd.f32 0.0, %v1894
        %v1896 = vpop.f32.mrf.mxu0
        %v1897 = vpop.f32.mrf.mxu0
        %v1898 = vadd.f32 0.0, %v1897
        %v1899 = vpop.f32.mrf.mxu0
        %1900 = vmatprep.mubr.bf16.mxu0 0
        %1901 = vmatmul.mubr.bf16.gmra.mxu0 %v1684
        %v1902 = vpop.f32.mrf.mxu0
        %v1903 = vadd.f32 0.0, %v1902
        %v1904 = vpop.f32.mrf.mxu0
        %v1905 = vpop.f32.mrf.mxu0
        %v1906 = vpop.f32.mrf.mxu0
        %1907 = vmatprep.mubr.bf16.mxu0 0
        %1908 = vmatmul.mubr.bf16.gmra.mxu0 %v1687
        %v1909 = vpop.f32.mrf.mxu0
        %v1910 = vpop.f32.mrf.mxu0
        %v1911 = vpop.f32.mrf.mxu0
        %v1912 = vadd.f32 0.0, %v1911
        %v1913 = vpop.f32.mrf.mxu0
        %1914 = vmatprep.mubr.bf16.mxu0 0
        %1915 = vmatmul.mubr.bf16.gmra.mxu0 %v1690
        %v1916 = vpop.f32.mrf.mxu0
        %v1917 = vadd.f32 0.0, %v1916
        %v1918 = vpop.f32.mrf.mxu0
        %v1919 = vpop.f32.mrf.mxu0
        %v1920 = vadd.f32 0.0, %v1919
        %v1921 = vpop.f32.mrf.mxu0
        %1922 = vmatprep.mubr.bf16.mxu0 0
        %1923 = vmatmul.mubr.bf16.gmra.mxu0 %v1693
        %v1924 = vpop.f32.mrf.mxu0
        %v1925 = vadd.f32 0.0, %v1924
        %v1926 = vpop.f32.mrf.mxu0
        %v1927 = vpop.f32.mrf.mxu0
        %v1928 = vadd.f32 0.0, %v1927
        %v1929 = vpop.f32.mrf.mxu0
        %1930 = vmatprep.mubr.bf16.mxu0 0
        %1931 = vmatmul.mubr.bf16.gmra.mxu0 %v1696
        %v1932 = vpop.f32.mrf.mxu0
        %v1933 = vadd.f32 0.0, %v1932
        %v1934 = vpop.f32.mrf.mxu0
        %v1935 = vpop.f32.mrf.mxu0
        %v1936 = vadd.f32 0.0, %v1935
        %v1937 = vpop.f32.mrf.mxu0
        %1938 = vmatprep.mubr.bf16.mxu0 0
        %1939 = vmatmul.mubr.bf16.gmra.mxu0 %v1699
        %v1940 = vpop.f32.mrf.mxu0
        %v1941 = vadd.f32 0.0, %v1940
        %v1942 = vpop.f32.mrf.mxu0
        %v1943 = vpop.f32.mrf.mxu0
        %v1944 = vpop.f32.mrf.mxu0
        %1945 = vmatprep.mubr.bf16.mxu0 0
        %1946 = vmatmul.mubr.bf16.gmra.mxu0 %v1702
        %v1947 = vpop.f32.mrf.mxu0
        %v1948 = vpop.f32.mrf.mxu0
        %v1949 = vpop.f32.mrf.mxu0
        %v1950 = vadd.f32 0.0, %v1949
        %v1951 = vpop.f32.mrf.mxu0
        %1952 = vmatprep.mubr.bf16.mxu0 0
        %1953 = vmatmul.mubr.bf16.gmra.mxu0 %v1705
        %v1954 = vpop.f32.mrf.mxu0
        %v1955 = vadd.f32 0.0, %v1954
        %v1956 = vpop.f32.mrf.mxu0
        %v1957 = vpop.f32.mrf.mxu0
        %v1958 = vadd.f32 0.0, %v1957
        %v1959 = vpop.f32.mrf.mxu0
        %1960 = vmatprep.mubr.bf16.mxu0 0
        %1961 = vmatmul.mubr.bf16.gmra.mxu0 %v1708
        %v1962 = vpop.f32.mrf.mxu0
        %v1963 = vadd.f32 0.0, %v1962
        %v1964 = vpop.f32.mrf.mxu0
        %v1965 = vpop.f32.mrf.mxu0
        %v1966 = vadd.f32 0.0, %v1965
        %v1967 = vpop.f32.mrf.mxu0
        %1968 = vmatprep.mubr.bf16.mxu0 0
        %1969 = vmatmul.mubr.bf16.gmra.mxu0 %v1711
        %v1970 = vpop.f32.mrf.mxu0
        %v1971 = vadd.f32 0.0, %v1970
        %v1972 = vpop.f32.mrf.mxu0
        %v1973 = vpop.f32.mrf.mxu0
        %v1974 = vadd.f32 0.0, %v1973
        %v1975 = vpop.f32.mrf.mxu0
        %1976 = vmatprep.mubr.bf16.mxu0 0
        %1977 = vmatmul.mubr.bf16.gmra.mxu0 %v1714
        %v1978 = vpop.f32.mrf.mxu0
        %v1979 = vadd.f32 0.0, %v1978
        %v1980 = vpop.f32.mrf.mxu0
        %v1981 = vpop.f32.mrf.mxu0
        %v1982 = vpop.f32.mrf.mxu0
        %1983 = vmatprep.mubr.bf16.mxu0 0
        %1984 = vmatmul.mubr.bf16.gmra.mxu0 %v1717
        %v1985 = vpop.f32.mrf.mxu0
        %v1986 = vpop.f32.mrf.mxu0
        %v1987 = vpop.f32.mrf.mxu0
        %v1988 = vadd.f32 0.0, %v1987
        %v1989 = vpop.f32.mrf.mxu0
        %1990 = vmatprep.mubr.bf16.mxu0 0
        %1991 = vmatmul.mubr.bf16.gmra.mxu0 %v1720
        %v1992 = vpop.f32.mrf.mxu0
        %v1993 = vadd.f32 0.0, %v1992
        %v1994 = vpop.f32.mrf.mxu0
        %v1995 = vpop.f32.mrf.mxu0
        %v1996 = vadd.f32 0.0, %v1995
        %v1997 = vpop.f32.mrf.mxu0
        %1998 = vmatprep.mubr.bf16.mxu0 0
        %1999 = vmatmul.mubr.bf16.gmra.mxu0 %v1723
        %v2000 = vpop.f32.mrf.mxu0
        %v2001 = vadd.f32 0.0, %v2000
        %v2002 = vpop.f32.mrf.mxu0
        %v2003 = vpop.f32.mrf.mxu0
        %v2004 = vadd.f32 0.0, %v2003
        %v2005 = vpop.f32.mrf.mxu0
        %2006 = vmatprep.mubr.bf16.mxu0 0
        %2007 = vmatmul.mubr.bf16.gmra.mxu0 %v1726
        %v2008 = vpop.f32.mrf.mxu0
        %v2009 = vadd.f32 0.0, %v2008
        %v2010 = vpop.f32.mrf.mxu0
        %v2011 = vpop.f32.mrf.mxu0
        %v2012 = vadd.f32 0.0, %v2011
        %v2013 = vpop.f32.mrf.mxu0
        %2014 = vmatprep.mubr.bf16.mxu0 0
        %2015 = vmatmul.mubr.bf16.gmra.mxu0 %v1729
        %v2016 = vpop.f32.mrf.mxu0
        %v2017 = vadd.f32 0.0, %v2016
        %v2018 = vpop.f32.mrf.mxu0
        %v2019 = vpop.f32.mrf.mxu0
        %v2020 = vpop.f32.mrf.mxu0
        %2021 = vmatprep.mubr.bf16.mxu0 0
        %2022 = vmatmul.mubr.bf16.gmra.mxu0 %v1732
        %v2023 = vpop.f32.mrf.mxu0
        %v2024 = vpop.f32.mrf.mxu0
        %v2025 = vpop.f32.mrf.mxu0
        %v2026 = vadd.f32 0.0, %v2025
        %v2027 = vpop.f32.mrf.mxu0
        %2028 = vmatprep.mubr.bf16.mxu0 0
        %2029 = vmatmul.mubr.bf16.gmra.mxu0 %v1735
        %v2030 = vpop.f32.mrf.mxu0
        %v2031 = vadd.f32 0.0, %v2030
        %v2032 = vpop.f32.mrf.mxu0
        %v2033 = vpop.f32.mrf.mxu0
        %v2034 = vadd.f32 0.0, %v2033
        %v2035 = vpop.f32.mrf.mxu0
        %2036 = vmatprep.mubr.bf16.mxu0 0
        %2037 = vmatmul.mubr.bf16.gmra.mxu0 %v1738
        %v2038 = vpop.f32.mrf.mxu0
        %v2039 = vadd.f32 0.0, %v2038
        %v2040 = vpop.f32.mrf.mxu0
        %v2041 = vpop.f32.mrf.mxu0
        %v2042 = vadd.f32 0.0, %v2041
        %v2043 = vpop.f32.mrf.mxu0
        %2044 = vmatprep.mubr.bf16.mxu0 0
        %2045 = vmatmul.mubr.bf16.gmra.mxu0 %v1741
        %v2046 = vpop.f32.mrf.mxu0
        %v2047 = vadd.f32 0.0, %v2046
        %v2048 = vpop.f32.mrf.mxu0
        %v2049 = vpop.f32.mrf.mxu0
        %v2050 = vadd.f32 0.0, %v2049
        %v2051 = vpop.f32.mrf.mxu0
        %2052 = vmatprep.mubr.bf16.mxu0 0
        %2053 = vmatmul.mubr.bf16.gmra.mxu0 %v1744
        %v2054 = vpop.f32.mrf.mxu0
        %v2055 = vadd.f32 0.0, %v2054
        %v2056 = vpop.f32.mrf.mxu0
        %v2057 = vpop.f32.mrf.mxu0
        %v2058 = vpop.f32.mrf.mxu0
        %2059 = vmatprep.mubr.bf16.mxu0 0
        %2060 = vmatmul.mubr.bf16.gmra.mxu0 %v1747
        %v2061 = vpop.f32.mrf.mxu0
        %v2062 = vpop.f32.mrf.mxu0
        %v2063 = vpop.f32.mrf.mxu0
        %v2064 = vadd.f32 0.0, %v2063
        %v2065 = vpop.f32.mrf.mxu0
        %2066 = vmatprep.mubr.bf16.mxu0 0
        %2067 = vmatmul.mubr.bf16.gmra.mxu0 %v1750
        %v2068 = vpop.f32.mrf.mxu0
        %v2069 = vadd.f32 0.0, %v2068
        %v2070 = vpop.f32.mrf.mxu0
        %v2071 = vpop.f32.mrf.mxu0
        %v2072 = vadd.f32 0.0, %v2071
        %v2073 = vpop.f32.mrf.mxu0
        %2074 = vmatprep.mubr.bf16.mxu0 0
        %2075 = vmatmul.mubr.bf16.gmra.mxu0 %v1753
        %v2076 = vpop.f32.mrf.mxu0
        %v2077 = vadd.f32 0.0, %v2076
        %v2078 = vpop.f32.mrf.mxu0
        %v2079 = vpop.f32.mrf.mxu0
        %v2080 = vadd.f32 0.0, %v2079
        %v2081 = vpop.f32.mrf.mxu0
        %2082 = vmatprep.mubr.bf16.mxu0 0
        %2083 = vmatmul.mubr.bf16.gmra.mxu0 %v1756
        %v2084 = vpop.f32.mrf.mxu0
        %v2085 = vadd.f32 0.0, %v2084
        %v2086 = vpop.f32.mrf.mxu0
        %v2087 = vpop.f32.mrf.mxu0
        %v2088 = vadd.f32 0.0, %v2087
        %v2089 = vpop.f32.mrf.mxu0
        %2090 = vmatprep.mubr.bf16.mxu0 0
        %2091 = vmatmul.mubr.bf16.gmra.mxu0 %v1759
        %v2092 = vpop.f32.mrf.mxu0
        %v2093 = vadd.f32 0.0, %v2092
        %v2094 = vpop.f32.mrf.mxu0
        %v2095 = vpop.f32.mrf.mxu0
        %v2096 = vpop.f32.mrf.mxu0
        %2097 = vdwg.mxu0
        %v2099 = vunpack.c.l.b16 %v1338
        %v2100 = vpack.c.b16 %v1508, %v2099
        %v2101 = vpack.c.b16 %v1510, %v1509
        %v2102 = vpack.c.b16 %v1512, %v1511
        %v2103 = vpack.c.b16 %v1514, %v1513
        %v2104 = vpack.c.b16 %v1516, %v1515
        %v2105 = vpack.c.b16 %v1518, %v1517
        %v2106 = vpack.c.b16 %v1520, %v1519
        %v2107 = vpack.c.b16 %v1522, %v1521
        %v2108 = vpack.c.b16 %v1524, %v1523
        %v2109 = vpack.c.b16 %v1526, %v1525
        %v2110 = vpack.c.b16 %v1528, %v1527
        %v2111 = vpack.c.b16 %v1530, %v1529
        %v2112 = vpack.c.b16 %v1532, %v1531
        %v2113 = vpack.c.b16 %v1534, %v1533
        %v2114 = vpack.c.b16 %v1536, %v1535
        %v2115 = vpack.c.b16 %v1538, %v1537
        %v2116 = vpack.c.b16 %v1540, %v1539
        %v2117 = vpack.c.b16 %v1542, %v1541
        %v2118 = vpack.c.b16 %v1544, %v1543
        %v2119 = vpack.c.b16 %v1546, %v1545
        %v2120 = vpack.c.b16 %v1548, %v1547
        %v2121 = vpack.c.b16 %v1550, %v1549
        %v2122 = vpack.c.b16 %v1552, %v1551
        %v2123 = vpack.c.b16 %v1554, %v1553
        %v2124 = vpack.c.b16 %v1556, %v1555
        %v2125 = vpack.c.b16 %v1558, %v1557
        %v2126 = vpack.c.b16 %v1560, %v1559
        %v2127 = vpack.c.b16 %v1562, %v1561
        %v2128 = vpack.c.b16 %v1564, %v1563
        %v2129 = vpack.c.b16 %v1566, %v1565
        %v2130 = vpack.c.b16 %v1568, %v1567
        %v2131 = vpack.c.b16 %v1570, %v1569
        %v2132 = vpack.c.b16 %v1572, %v1571
        %v2133 = vpack.c.b16 %v1574, %v1573
        %v2134 = vpack.c.b16 %v1576, %v1575
        %v2135 = vpack.c.b16 %v1578, %v1577
        %v2136 = vpack.c.b16 %v1580, %v1579
        %v2137 = vpack.c.b16 %v1582, %v1581
        %v2138 = vpack.c.b16 %v1584, %v1583
        %v2139 = vpack.c.b16 %v1586, %v1585
        %v2144 = vunpack.c.l.b16 %v1418
        %v2145 = vunpack.c.l.b16 %v1419
        %v2146 = vunpack.c.l.b16 %v1420
        %v2147 = vunpack.c.l.b16 %v1421
        %v2148 = vpack.c.b16 %v2145, %v2144
        %v2149 = vpack.c.b16 %v2147, %v2146
        %v2153 = vsel %vm1640, %v2100, 0
        %v2156 = vsel %vm1640, %v2101, 0
        %v2159 = vsel %vm1640, %v2102, 0
        %v2162 = vsel %vm1640, %v2103, 0
        %v2165 = vsel %vm1640, %v2104, 0
        %v2168 = vsel %vm1640, %v2105, 0
        %v2171 = vsel %vm1640, %v2106, 0
        %v2174 = vsel %vm1640, %v2107, 0
        %v2177 = vsel %vm1640, %v2108, 0
        %v2180 = vsel %vm1640, %v2109, 0
        %v2183 = vsel %vm1640, %v2110, 0
        %v2186 = vsel %vm1640, %v2111, 0
        %v2189 = vsel %vm1640, %v2112, 0
        %v2192 = vsel %vm1640, %v2113, 0
        %v2195 = vsel %vm1640, %v2114, 0
        %v2198 = vsel %vm1640, %v2115, 0
        %v2201 = vsel %vm1640, %v2116, 0
        %v2204 = vsel %vm1640, %v2117, 0
        %v2207 = vsel %vm1640, %v2118, 0
        %v2210 = vsel %vm1640, %v2119, 0
        %v2213 = vsel %vm1640, %v2120, 0
        %v2216 = vsel %vm1640, %v2121, 0
        %v2219 = vsel %vm1640, %v2122, 0
        %v2222 = vsel %vm1640, %v2123, 0
        %v2225 = vsel %vm1640, %v2124, 0
        %v2228 = vsel %vm1640, %v2125, 0
        %v2231 = vsel %vm1640, %v2126, 0
        %v2234 = vsel %vm1640, %v2127, 0
        %v2237 = vsel %vm1640, %v2128, 0
        %v2240 = vsel %vm1640, %v2129, 0
        %v2243 = vsel %vm1640, %v2130, 0
        %v2246 = vsel %vm1640, %v2131, 0
        %v2249 = vsel %vm1640, %v2132, 0
        %v2252 = vsel %vm1640, %v2133, 0
        %v2255 = vsel %vm1640, %v2134, 0
        %v2258 = vsel %vm1640, %v2135, 0
        %v2261 = vsel %vm1640, %v2136, 0
        %v2264 = vsel %vm1640, %v2137, 0
        %v2267 = vsel %vm1640, %v2138, 0
        %v2270 = vsel %vm1640, %v2139, 0
        %2272 = vmatprep.subr.bf16.mxu0 0
        %2273 = vmatpush1.bf16.msra.mxu0 0
        %2274 = vmatprep.subr.bf16.mxu0 0
        %2275 = vmatpush1.bf16.msra.mxu0 0
        %2276 = vmatprep.subr.bf16.mxu0 0
        %2277 = vmatpush1.bf16.msra.mxu0 0
        %2278 = vmatprep.subr.bf16.mxu0 0
        %2279 = vmatpush1.bf16.msra.mxu0 0
        %2280 = vmatprep.subr.bf16.mxu0 0
        %2281 = vmatpush1.bf16.msra.mxu0 0
        %2282 = vmatprep.subr.bf16.mxu0 0
        %2283 = vmatpush1.bf16.msra.mxu0 0
        %2284 = vmatprep.subr.bf16.mxu0 0
        %2285 = vmatpush1.bf16.msra.mxu0 %v2149
        %2286 = vmatprep.subr.bf16.mxu0 0
        %2287 = vmatpush1.bf16.msra.mxu0 %v2148
        %2288 = vmatprep.subr.bf16.mxu0 0
        %2289 = vmatpush2.bf16.msra.mxu0 0
        %2290 = vmatprep.subr.bf16.mxu0 0
        %2291 = vmatpush2.bf16.msra.mxu0 0
        %2292 = vmatprep.subr.bf16.mxu0 0
        %2293 = vmatpush2.bf16.msra.mxu0 0
        %2294 = vmatprep.subr.bf16.mxu0 0
        %2295 = vmatpush2.bf16.msra.mxu0 0
        %2296 = vmatprep.subr.bf16.mxu0 0
        %2297 = vmatpush2.bf16.msra.mxu0 0
        %2298 = vmatprep.subr.bf16.mxu0 0
        %2299 = vmatpush2.bf16.msra.mxu0 0
        %2300 = vmatprep.subr.bf16.mxu0 0
        %2301 = vmatpush2.bf16.msra.mxu0 0
        %2302 = vmatprep.subr.bf16.mxu0 0
        %2303 = vmatpush2.bf16.msra.mxu0 0
        %2304 = vmatprep.mubr.bf16.mxu0 0
        %2305 = vmatmul.mubr.bf16.gmra.mxu0 %v2153
        %v2306 = vpop.f32.mrf.mxu0
        %v2307 = vpop.f32.mrf.mxu0
        %v2308 = vpop.f32.mrf.mxu0
        %v2309 = vadd.f32 %v1798, %v2308
        %v2310 = vpop.f32.mrf.mxu0
        %2311 = vmatprep.mubr.bf16.mxu0 0
        %2312 = vmatmul.mubr.bf16.gmra.mxu0 %v2156
        %v2313 = vpop.f32.mrf.mxu0
        %v2314 = vadd.f32 %v1803, %v2313
        %v2315 = vpop.f32.mrf.mxu0
        %v2316 = vpop.f32.mrf.mxu0
        %v2317 = vadd.f32 %v1806, %v2316
        %v2318 = vpop.f32.mrf.mxu0
        %2319 = vmatprep.mubr.bf16.mxu0 0
        %2320 = vmatmul.mubr.bf16.gmra.mxu0 %v2159
        %v2321 = vpop.f32.mrf.mxu0
        %v2322 = vadd.f32 %v1811, %v2321
        %v2323 = vpop.f32.mrf.mxu0
        %v2324 = vpop.f32.mrf.mxu0
        %v2325 = vadd.f32 %v1814, %v2324
        %v2326 = vpop.f32.mrf.mxu0
        %2327 = vmatprep.mubr.bf16.mxu0 0
        %2328 = vmatmul.mubr.bf16.gmra.mxu0 %v2162
        %v2329 = vpop.f32.mrf.mxu0
        %v2330 = vadd.f32 %v1819, %v2329
        %v2331 = vpop.f32.mrf.mxu0
        %v2332 = vpop.f32.mrf.mxu0
        %v2333 = vadd.f32 %v1822, %v2332
        %v2334 = vpop.f32.mrf.mxu0
        %2335 = vmatprep.mubr.bf16.mxu0 0
        %2336 = vmatmul.mubr.bf16.gmra.mxu0 %v2165
        %v2337 = vpop.f32.mrf.mxu0
        %v2338 = vadd.f32 %v1827, %v2337
        %v2339 = vpop.f32.mrf.mxu0
        %v2340 = vpop.f32.mrf.mxu0
        %v2341 = vpop.f32.mrf.mxu0
        %2342 = vmatprep.mubr.bf16.mxu0 0
        %2343 = vmatmul.mubr.bf16.gmra.mxu0 %v2168
        %v2344 = vpop.f32.mrf.mxu0
        %v2345 = vpop.f32.mrf.mxu0
        %v2346 = vpop.f32.mrf.mxu0
        %v2347 = vadd.f32 %v1836, %v2346
        %v2348 = vpop.f32.mrf.mxu0
        %2349 = vmatprep.mubr.bf16.mxu0 0
        %2350 = vmatmul.mubr.bf16.gmra.mxu0 %v2171
        %v2351 = vpop.f32.mrf.mxu0
        %v2352 = vadd.f32 %v1841, %v2351
        %v2353 = vpop.f32.mrf.mxu0
        %v2354 = vpop.f32.mrf.mxu0
        %v2355 = vadd.f32 %v1844, %v2354
        %v2356 = vpop.f32.mrf.mxu0
        %2357 = vmatprep.mubr.bf16.mxu0 0
        %2358 = vmatmul.mubr.bf16.gmra.mxu0 %v2174
        %v2359 = vpop.f32.mrf.mxu0
        %v2360 = vadd.f32 %v1849, %v2359
        %v2361 = vpop.f32.mrf.mxu0
        %v2362 = vpop.f32.mrf.mxu0
        %v2363 = vadd.f32 %v1852, %v2362
        %v2364 = vpop.f32.mrf.mxu0
        %2365 = vmatprep.mubr.bf16.mxu0 0
        %2366 = vmatmul.mubr.bf16.gmra.mxu0 %v2177
        %v2367 = vpop.f32.mrf.mxu0
        %v2368 = vadd.f32 %v1857, %v2367
        %v2369 = vpop.f32.mrf.mxu0
        %v2370 = vpop.f32.mrf.mxu0
        %v2371 = vadd.f32 %v1860, %v2370
        %v2372 = vpop.f32.mrf.mxu0
        %2373 = vmatprep.mubr.bf16.mxu0 0
        %2374 = vmatmul.mubr.bf16.gmra.mxu0 %v2180
        %v2375 = vpop.f32.mrf.mxu0
        %v2376 = vadd.f32 %v1865, %v2375
        %v2377 = vpop.f32.mrf.mxu0
        %v2378 = vpop.f32.mrf.mxu0
        %v2379 = vpop.f32.mrf.mxu0
        %2380 = vmatprep.mubr.bf16.mxu0 0
        %2381 = vmatmul.mubr.bf16.gmra.mxu0 %v2183
        %v2382 = vpop.f32.mrf.mxu0
        %v2383 = vpop.f32.mrf.mxu0
        %v2384 = vpop.f32.mrf.mxu0
        %v2385 = vadd.f32 %v1874, %v2384
        %v2386 = vpop.f32.mrf.mxu0
        %2387 = vmatprep.mubr.bf16.mxu0 0
        %2388 = vmatmul.mubr.bf16.gmra.mxu0 %v2186
        %v2389 = vpop.f32.mrf.mxu0
        %v2390 = vadd.f32 %v1879, %v2389
        %v2391 = vpop.f32.mrf.mxu0
        %v2392 = vpop.f32.mrf.mxu0
        %v2393 = vadd.f32 %v1882, %v2392
        %v2394 = vpop.f32.mrf.mxu0
        %2395 = vmatprep.mubr.bf16.mxu0 0
        %2396 = vmatmul.mubr.bf16.gmra.mxu0 %v2189
        %v2397 = vpop.f32.mrf.mxu0
        %v2398 = vadd.f32 %v1887, %v2397
        %v2399 = vpop.f32.mrf.mxu0
        %v2400 = vpop.f32.mrf.mxu0
        %v2401 = vadd.f32 %v1890, %v2400
        %v2402 = vpop.f32.mrf.mxu0
        %2403 = vmatprep.mubr.bf16.mxu0 0
        %2404 = vmatmul.mubr.bf16.gmra.mxu0 %v2192
        %v2405 = vpop.f32.mrf.mxu0
        %v2406 = vadd.f32 %v1895, %v2405
        %v2407 = vpop.f32.mrf.mxu0
        %v2408 = vpop.f32.mrf.mxu0
        %v2409 = vadd.f32 %v1898, %v2408
        %v2410 = vpop.f32.mrf.mxu0
        %2411 = vmatprep.mubr.bf16.mxu0 0
        %2412 = vmatmul.mubr.bf16.gmra.mxu0 %v2195
        %v2413 = vpop.f32.mrf.mxu0
        %v2414 = vadd.f32 %v1903, %v2413
        %v2415 = vpop.f32.mrf.mxu0
        %v2416 = vpop.f32.mrf.mxu0
        %v2417 = vpop.f32.mrf.mxu0
        %2418 = vmatprep.mubr.bf16.mxu0 0
        %2419 = vmatmul.mubr.bf16.gmra.mxu0 %v2198
        %v2420 = vpop.f32.mrf.mxu0
        %v2421 = vpop.f32.mrf.mxu0
        %v2422 = vpop.f32.mrf.mxu0
        %v2423 = vadd.f32 %v1912, %v2422
        %v2424 = vpop.f32.mrf.mxu0
        %2425 = vmatprep.mubr.bf16.mxu0 0
        %2426 = vmatmul.mubr.bf16.gmra.mxu0 %v2201
        %v2427 = vpop.f32.mrf.mxu0
        %v2428 = vadd.f32 %v1917, %v2427
        %v2429 = vpop.f32.mrf.mxu0
        %v2430 = vpop.f32.mrf.mxu0
        %v2431 = vadd.f32 %v1920, %v2430
        %v2432 = vpop.f32.mrf.mxu0
        %2433 = vmatprep.mubr.bf16.mxu0 0
        %2434 = vmatmul.mubr.bf16.gmra.mxu0 %v2204
        %v2435 = vpop.f32.mrf.mxu0
        %v2436 = vadd.f32 %v1925, %v2435
        %v2437 = vpop.f32.mrf.mxu0
        %v2438 = vpop.f32.mrf.mxu0
        %v2439 = vadd.f32 %v1928, %v2438
        %v2440 = vpop.f32.mrf.mxu0
        %2441 = vmatprep.mubr.bf16.mxu0 0
        %2442 = vmatmul.mubr.bf16.gmra.mxu0 %v2207
        %v2443 = vpop.f32.mrf.mxu0
        %v2444 = vadd.f32 %v1933, %v2443
        %v2445 = vpop.f32.mrf.mxu0
        %v2446 = vpop.f32.mrf.mxu0
        %v2447 = vadd.f32 %v1936, %v2446
        %v2448 = vpop.f32.mrf.mxu0
        %2449 = vmatprep.mubr.bf16.mxu0 0
        %2450 = vmatmul.mubr.bf16.gmra.mxu0 %v2210
        %v2451 = vpop.f32.mrf.mxu0
        %v2452 = vadd.f32 %v1941, %v2451
        %v2453 = vpop.f32.mrf.mxu0
        %v2454 = vpop.f32.mrf.mxu0
        %v2455 = vpop.f32.mrf.mxu0
        %2456 = vmatprep.mubr.bf16.mxu0 0
        %2457 = vmatmul.mubr.bf16.gmra.mxu0 %v2213
        %v2458 = vpop.f32.mrf.mxu0
        %v2459 = vpop.f32.mrf.mxu0
        %v2460 = vpop.f32.mrf.mxu0
        %v2461 = vadd.f32 %v1950, %v2460
        %v2462 = vpop.f32.mrf.mxu0
        %2463 = vmatprep.mubr.bf16.mxu0 0
        %2464 = vmatmul.mubr.bf16.gmra.mxu0 %v2216
        %v2465 = vpop.f32.mrf.mxu0
        %v2466 = vadd.f32 %v1955, %v2465
        %v2467 = vpop.f32.mrf.mxu0
        %v2468 = vpop.f32.mrf.mxu0
        %v2469 = vadd.f32 %v1958, %v2468
        %v2470 = vpop.f32.mrf.mxu0
        %2471 = vmatprep.mubr.bf16.mxu0 0
        %2472 = vmatmul.mubr.bf16.gmra.mxu0 %v2219
        %v2473 = vpop.f32.mrf.mxu0
        %v2474 = vadd.f32 %v1963, %v2473
        %v2475 = vpop.f32.mrf.mxu0
        %v2476 = vpop.f32.mrf.mxu0
        %v2477 = vadd.f32 %v1966, %v2476
        %v2478 = vpop.f32.mrf.mxu0
        %2479 = vmatprep.mubr.bf16.mxu0 0
        %2480 = vmatmul.mubr.bf16.gmra.mxu0 %v2222
        %v2481 = vpop.f32.mrf.mxu0
        %v2482 = vadd.f32 %v1971, %v2481
        %v2483 = vpop.f32.mrf.mxu0
        %v2484 = vpop.f32.mrf.mxu0
        %v2485 = vadd.f32 %v1974, %v2484
        %v2486 = vpop.f32.mrf.mxu0
        %2487 = vmatprep.mubr.bf16.mxu0 0
        %2488 = vmatmul.mubr.bf16.gmra.mxu0 %v2225
        %v2489 = vpop.f32.mrf.mxu0
        %v2490 = vadd.f32 %v1979, %v2489
        %v2491 = vpop.f32.mrf.mxu0
        %v2492 = vpop.f32.mrf.mxu0
        %v2493 = vpop.f32.mrf.mxu0
        %2494 = vmatprep.mubr.bf16.mxu0 0
        %2495 = vmatmul.mubr.bf16.gmra.mxu0 %v2228
        %v2496 = vpop.f32.mrf.mxu0
        %v2497 = vpop.f32.mrf.mxu0
        %v2498 = vpop.f32.mrf.mxu0
        %v2499 = vadd.f32 %v1988, %v2498
        %v2500 = vpop.f32.mrf.mxu0
        %2501 = vmatprep.mubr.bf16.mxu0 0
        %2502 = vmatmul.mubr.bf16.gmra.mxu0 %v2231
        %v2503 = vpop.f32.mrf.mxu0
        %v2504 = vadd.f32 %v1993, %v2503
        %v2505 = vpop.f32.mrf.mxu0
        %v2506 = vpop.f32.mrf.mxu0
        %v2507 = vadd.f32 %v1996, %v2506
        %v2508 = vpop.f32.mrf.mxu0
        %2509 = vmatprep.mubr.bf16.mxu0 0
        %2510 = vmatmul.mubr.bf16.gmra.mxu0 %v2234
        %v2511 = vpop.f32.mrf.mxu0
        %v2512 = vadd.f32 %v2001, %v2511
        %v2513 = vpop.f32.mrf.mxu0
        %v2514 = vpop.f32.mrf.mxu0
        %v2515 = vadd.f32 %v2004, %v2514
        %v2516 = vpop.f32.mrf.mxu0
        %2517 = vmatprep.mubr.bf16.mxu0 0
        %2518 = vmatmul.mubr.bf16.gmra.mxu0 %v2237
        %v2519 = vpop.f32.mrf.mxu0
        %v2520 = vadd.f32 %v2009, %v2519
        %v2521 = vpop.f32.mrf.mxu0
        %v2522 = vpop.f32.mrf.mxu0
        %v2523 = vadd.f32 %v2012, %v2522
        %v2524 = vpop.f32.mrf.mxu0
        %2525 = vmatprep.mubr.bf16.mxu0 0
        %2526 = vmatmul.mubr.bf16.gmra.mxu0 %v2240
        %v2527 = vpop.f32.mrf.mxu0
        %v2528 = vadd.f32 %v2017, %v2527
        %v2529 = vpop.f32.mrf.mxu0
        %v2530 = vpop.f32.mrf.mxu0
        %v2531 = vpop.f32.mrf.mxu0
        %2532 = vmatprep.mubr.bf16.mxu0 0
        %2533 = vmatmul.mubr.bf16.gmra.mxu0 %v2243
        %v2534 = vpop.f32.mrf.mxu0
        %v2535 = vpop.f32.mrf.mxu0
        %v2536 = vpop.f32.mrf.mxu0
        %v2537 = vadd.f32 %v2026, %v2536
        %v2538 = vpop.f32.mrf.mxu0
        %2539 = vmatprep.mubr.bf16.mxu0 0
        %2540 = vmatmul.mubr.bf16.gmra.mxu0 %v2246
        %v2541 = vpop.f32.mrf.mxu0
        %v2542 = vadd.f32 %v2031, %v2541
        %v2543 = vpop.f32.mrf.mxu0
        %v2544 = vpop.f32.mrf.mxu0
        %v2545 = vadd.f32 %v2034, %v2544
        %v2546 = vpop.f32.mrf.mxu0
        %2547 = vmatprep.mubr.bf16.mxu0 0
        %2548 = vmatmul.mubr.bf16.gmra.mxu0 %v2249
        %v2549 = vpop.f32.mrf.mxu0
        %v2550 = vadd.f32 %v2039, %v2549
        %v2551 = vpop.f32.mrf.mxu0
        %v2552 = vpop.f32.mrf.mxu0
        %v2553 = vadd.f32 %v2042, %v2552
        %v2554 = vpop.f32.mrf.mxu0
        %2555 = vmatprep.mubr.bf16.mxu0 0
        %2556 = vmatmul.mubr.bf16.gmra.mxu0 %v2252
        %v2557 = vpop.f32.mrf.mxu0
        %v2558 = vadd.f32 %v2047, %v2557
        %v2559 = vpop.f32.mrf.mxu0
        %v2560 = vpop.f32.mrf.mxu0
        %v2561 = vadd.f32 %v2050, %v2560
        %v2562 = vpop.f32.mrf.mxu0
        %2563 = vmatprep.mubr.bf16.mxu0 0
        %2564 = vmatmul.mubr.bf16.gmra.mxu0 %v2255
        %v2565 = vpop.f32.mrf.mxu0
        %v2566 = vadd.f32 %v2055, %v2565
        %v2567 = vpop.f32.mrf.mxu0
        %v2568 = vpop.f32.mrf.mxu0
        %v2569 = vpop.f32.mrf.mxu0
        %2570 = vmatprep.mubr.bf16.mxu0 0
        %2571 = vmatmul.mubr.bf16.gmra.mxu0 %v2258
        %v2572 = vpop.f32.mrf.mxu0
        %v2573 = vpop.f32.mrf.mxu0
        %v2574 = vpop.f32.mrf.mxu0
        %v2575 = vadd.f32 %v2064, %v2574
        %v2576 = vpop.f32.mrf.mxu0
        %2577 = vmatprep.mubr.bf16.mxu0 0
        %2578 = vmatmul.mubr.bf16.gmra.mxu0 %v2261
        %v2579 = vpop.f32.mrf.mxu0
        %v2580 = vadd.f32 %v2069, %v2579
        %v2581 = vpop.f32.mrf.mxu0
        %v2582 = vpop.f32.mrf.mxu0
        %v2583 = vadd.f32 %v2072, %v2582
        %v2584 = vpop.f32.mrf.mxu0
        %2585 = vmatprep.mubr.bf16.mxu0 0
        %2586 = vmatmul.mubr.bf16.gmra.mxu0 %v2264
        %v2587 = vpop.f32.mrf.mxu0
        %v2588 = vadd.f32 %v2077, %v2587
        %v2589 = vpop.f32.mrf.mxu0
        %v2590 = vpop.f32.mrf.mxu0
        %v2591 = vadd.f32 %v2080, %v2590
        %v2592 = vpop.f32.mrf.mxu0
        %2593 = vmatprep.mubr.bf16.mxu0 0
        %2594 = vmatmul.mubr.bf16.gmra.mxu0 %v2267
        %v2595 = vpop.f32.mrf.mxu0
        %v2596 = vadd.f32 %v2085, %v2595
        %v2597 = vpop.f32.mrf.mxu0
        %v2598 = vpop.f32.mrf.mxu0
        %v2599 = vadd.f32 %v2088, %v2598
        %v2600 = vpop.f32.mrf.mxu0
        %2601 = vmatprep.mubr.bf16.mxu0 0
        %2602 = vmatmul.mubr.bf16.gmra.mxu0 %v2270
        %v2603 = vpop.f32.mrf.mxu0
        %v2604 = vadd.f32 %v2093, %v2603
        %v2605 = vpop.f32.mrf.mxu0
        %v2606 = vpop.f32.mrf.mxu0
        %v2607 = vpop.f32.mrf.mxu0
        %2608 = vdwg.mxu0
        %v2609 = vld [vmem:[#allocation2 + $0x8] sm:$0xf]
        %v2610 = vld [vmem:[#allocation2 + $0xc] sm:$0xf]
        %v2611 = vld [vmem:[#allocation2 + $0x10] sm:$0xf]
        %v2612 = vld [vmem:[#allocation2 + $0x14] sm:$0xf]
        %v2613 = vld [vmem:[#allocation2 + $0x18] sm:$0xf]
        %v2614 = vld [vmem:[#allocation2 + $0x1c] sm:$0xf]
        %v2615 = vld [vmem:[#allocation2 + $0x20] sm:$0xf]
        %v2616 = vld [vmem:[#allocation2 + $0x24] sm:$0xf]
        %v2617 = vld [vmem:[#allocation2 + $0x28] sm:$0xf]
        %v2618 = vld [vmem:[#allocation2 + $0x2c] sm:$0xf]
        %v2619 = vld [vmem:[#allocation2 + $0x30] sm:$0xf]
        %v2620 = vld [vmem:[#allocation2 + $0x34] sm:$0xf]
        %v2621 = vld [vmem:[#allocation2 + $0x38] sm:$0xf]
        %v2622 = vld [vmem:[#allocation2 + $0x3c] sm:$0xf]
        %v2623 = vld [vmem:[#allocation2 + $0x40] sm:$0xf]
        %v2624 = vld [vmem:[#allocation2 + $0x44] sm:$0xf]
        %v2625 = vld [vmem:[#allocation2 + $0x48] sm:$0xf]
        %v2626 = vld [vmem:[#allocation2 + $0x4c] sm:$0xf]
        %v2627 = vld [vmem:[#allocation2 + $0x50] sm:$0xf]
        %v2628 = vld [vmem:[#allocation2 + $0x54] sm:$0xf]
        %v2629 = vld [vmem:[#allocation2 + $0x58] sm:$0xf]
        %v2630 = vld [vmem:[#allocation2 + $0x5c] sm:$0xf]
        %v2631 = vld [vmem:[#allocation2 + $0x60] sm:$0xf]
        %v2632 = vld [vmem:[#allocation2 + $0x64] sm:$0xf]
        %v2633 = vld [vmem:[#allocation2 + $0x68] sm:$0xf]
        %v2634 = vld [vmem:[#allocation2 + $0x6c] sm:$0xf]
        %v2635 = vld [vmem:[#allocation2 + $0x70] sm:$0xf]
        %v2636 = vld [vmem:[#allocation2 + $0x74] sm:$0xf]
        %v2637 = vld [vmem:[#allocation2 + $0x78] sm:$0xf]
        %v2638 = vld [vmem:[#allocation2 + $0x7c] sm:$0xf]
        %v2639 = vld [vmem:[#allocation2 + $0x80] sm:$0xf]
        %v2640 = vld [vmem:[#allocation2 + $0x84] sm:$0xf]
        %v2641 = vld [vmem:[#allocation2 + $0x88] sm:$0xf]
        %v2642 = vld [vmem:[#allocation2 + $0x8c] sm:$0xf]
        %v2643 = vld [vmem:[#allocation2 + $0x90] sm:$0xf]
        %v2644 = vld [vmem:[#allocation2 + $0x94] sm:$0xf]
        %v2645 = vld [vmem:[#allocation2 + $0x98] sm:$0xf]
        %v2646 = vld [vmem:[#allocation2 + $0x9c] sm:$0xf]
        %v2647 = vld [vmem:[#allocation2 + $0xa0] sm:$0xf]
        %v2648 = vld [vmem:[#allocation2 + $0xa4] sm:$0xf]
        %v2649 = vld [vmem:[#allocation2 + $0xa8] sm:$0xf]
        %v2650 = vld [vmem:[#allocation2 + $0xac] sm:$0xf]
        %v2651 = vld [vmem:[#allocation2 + $0xb0] sm:$0xf]
        %v2652 = vld [vmem:[#allocation2 + $0xb4] sm:$0xf]
        %v2653 = vld [vmem:[#allocation2 + $0xb8] sm:$0xf]
        %v2654 = vld [vmem:[#allocation2 + $0xbc] sm:$0xf]
        %v2655 = vld [vmem:[#allocation2 + $0xc0] sm:$0xf]
        %v2656 = vld [vmem:[#allocation2 + $0xc4] sm:$0xf]
        %v2657 = vld [vmem:[#allocation2 + $0xc8] sm:$0xf]
        %v2658 = vld [vmem:[#allocation2 + $0xcc] sm:$0xf]
        %v2659 = vld [vmem:[#allocation2 + $0xd0] sm:$0xf]
        %v2660 = vld [vmem:[#allocation2 + $0xd4] sm:$0xf]
        %v2661 = vld [vmem:[#allocation2 + $0xd8] sm:$0xf]
        %v2662 = vld [vmem:[#allocation2 + $0xdc] sm:$0xf]
        %v2663 = vld [vmem:[#allocation2 + $0xe0] sm:$0xf]
        %v2664 = vld [vmem:[#allocation2 + $0xe4] sm:$0xf]
        %v2665 = vld [vmem:[#allocation2 + $0xe8] sm:$0xf]
        %v2666 = vld [vmem:[#allocation2 + $0xec] sm:$0xf]
        %v2667 = vld [vmem:[#allocation2 + $0xf0] sm:$0xf]
        %v2668 = vld [vmem:[#allocation2 + $0xf4] sm:$0xf]
        %v2669 = vld [vmem:[#allocation2 + $0xf8] sm:$0xf]
        %v2670 = vld [vmem:[#allocation2 + $0xfc] sm:$0xf]
        %v2671 = vld [vmem:[#allocation2 + $0x100] sm:$0xf]
        %v2672 = vld [vmem:[#allocation2 + $0x104] sm:$0xf]
        %v2673 = vld [vmem:[#allocation2 + $0x108] sm:$0xf]
        %v2674 = vld [vmem:[#allocation2 + $0x10c] sm:$0xf]
        %v2675 = vld [vmem:[#allocation2 + $0x110] sm:$0xf]
        %v2676 = vld [vmem:[#allocation2 + $0x114] sm:$0xf]
        %v2677 = vld [vmem:[#allocation2 + $0x118] sm:$0xf]
        %v2678 = vld [vmem:[#allocation2 + $0x11c] sm:$0xf]
        %v2679 = vld [vmem:[#allocation2 + $0x120] sm:$0xf]
        %v2680 = vld [vmem:[#allocation2 + $0x124] sm:$0xf]
        %v2681 = vld [vmem:[#allocation2 + $0x128] sm:$0xf]
        %v2682 = vld [vmem:[#allocation2 + $0x12c] sm:$0xf]
        %v2683 = vld [vmem:[#allocation2 + $0x130] sm:$0xf]
        %v2684 = vld [vmem:[#allocation2 + $0x134] sm:$0xf]
        %v2685 = vld [vmem:[#allocation2 + $0x138] sm:$0xf]
        %v2686 = vld [vmem:[#allocation2 + $0x13c] sm:$0xf]
        %v2687 = vld [vmem:[#allocation2 + $0x140] sm:$0xf]
        %v2688 = vld [vmem:[#allocation2 + $0x144] sm:$0xf]
        %s2689 = scalar_lea.vmem %s2, 32
        %v2690 = vld [vmem:[%s2689] sm:$0xf]
        %v2691 = vld [vmem:[%s2689 + $0x4] sm:$0xf]
        %v2692 = vld [vmem:[%s2689 + $0x8] sm:$0xf]
        %v2693 = vld [vmem:[%s2689 + $0xc] sm:$0xf]
        %v2774 = vunpack.c.l.b16 %v2609
        %v2775 = vunpack.c.l.b16 %v2610
        %v2776 = vunpack.c.l.b16 %v2611
        %v2777 = vunpack.c.l.b16 %v2612
        %v2778 = vunpack.c.l.b16 %v2613
        %v2779 = vunpack.c.l.b16 %v2614
        %v2780 = vunpack.c.l.b16 %v2615
        %v2781 = vunpack.c.l.b16 %v2616
        %v2782 = vunpack.c.l.b16 %v2617
        %v2783 = vunpack.c.l.b16 %v2618
        %v2784 = vunpack.c.l.b16 %v2619
        %v2785 = vunpack.c.l.b16 %v2620
        %v2786 = vunpack.c.l.b16 %v2621
        %v2787 = vunpack.c.l.b16 %v2622
        %v2788 = vunpack.c.l.b16 %v2623
        %v2789 = vunpack.c.l.b16 %v2624
        %v2790 = vunpack.c.l.b16 %v2625
        %v2791 = vunpack.c.l.b16 %v2626
        %v2792 = vunpack.c.l.b16 %v2627
        %v2793 = vunpack.c.l.b16 %v2628
        %v2794 = vunpack.c.l.b16 %v2629
        %v2795 = vunpack.c.l.b16 %v2630
        %v2796 = vunpack.c.l.b16 %v2631
        %v2797 = vunpack.c.l.b16 %v2632
        %v2798 = vunpack.c.l.b16 %v2633
        %v2799 = vunpack.c.l.b16 %v2634
        %v2800 = vunpack.c.l.b16 %v2635
        %v2801 = vunpack.c.l.b16 %v2636
        %v2802 = vunpack.c.l.b16 %v2637
        %v2803 = vunpack.c.l.b16 %v2638
        %v2804 = vunpack.c.l.b16 %v2639
        %v2805 = vunpack.c.l.b16 %v2640
        %v2806 = vunpack.c.l.b16 %v2641
        %v2807 = vunpack.c.l.b16 %v2642
        %v2808 = vunpack.c.l.b16 %v2643
        %v2809 = vunpack.c.l.b16 %v2644
        %v2810 = vunpack.c.l.b16 %v2645
        %v2811 = vunpack.c.l.b16 %v2646
        %v2812 = vunpack.c.l.b16 %v2647
        %v2813 = vunpack.c.l.b16 %v2648
        %v2814 = vunpack.c.l.b16 %v2649
        %v2815 = vunpack.c.l.b16 %v2650
        %v2816 = vunpack.c.l.b16 %v2651
        %v2817 = vunpack.c.l.b16 %v2652
        %v2818 = vunpack.c.l.b16 %v2653
        %v2819 = vunpack.c.l.b16 %v2654
        %v2820 = vunpack.c.l.b16 %v2655
        %v2821 = vunpack.c.l.b16 %v2656
        %v2822 = vunpack.c.l.b16 %v2657
        %v2823 = vunpack.c.l.b16 %v2658
        %v2824 = vunpack.c.l.b16 %v2659
        %v2825 = vunpack.c.l.b16 %v2660
        %v2826 = vunpack.c.l.b16 %v2661
        %v2827 = vunpack.c.l.b16 %v2662
        %v2828 = vunpack.c.l.b16 %v2663
        %v2829 = vunpack.c.l.b16 %v2664
        %v2830 = vunpack.c.l.b16 %v2665
        %v2831 = vunpack.c.l.b16 %v2666
        %v2832 = vunpack.c.l.b16 %v2667
        %v2833 = vunpack.c.l.b16 %v2668
        %v2834 = vunpack.c.l.b16 %v2669
        %v2835 = vunpack.c.l.b16 %v2670
        %v2836 = vunpack.c.l.b16 %v2671
        %v2837 = vunpack.c.l.b16 %v2672
        %v2838 = vunpack.c.l.b16 %v2673
        %v2839 = vunpack.c.l.b16 %v2674
        %v2840 = vunpack.c.l.b16 %v2675
        %v2841 = vunpack.c.l.b16 %v2676
        %v2842 = vunpack.c.l.b16 %v2677
        %v2843 = vunpack.c.l.b16 %v2678
        %v2844 = vunpack.c.l.b16 %v2679
        %v2845 = vunpack.c.l.b16 %v2680
        %v2846 = vunpack.c.l.b16 %v2681
        %v2847 = vunpack.c.l.b16 %v2682
        %v2848 = vunpack.c.l.b16 %v2683
        %v2849 = vunpack.c.l.b16 %v2684
        %v2850 = vunpack.c.l.b16 %v2685
        %v2851 = vunpack.c.l.b16 %v2686
        %v2852 = vunpack.c.l.b16 %v2687
        %v2853 = vunpack.c.l.b16 %v2688
        %v2854 = vpack.c.b16 %v2775, %v2774
        %v2855 = vpack.c.b16 %v2777, %v2776
        %v2856 = vpack.c.b16 %v2779, %v2778
        %v2857 = vpack.c.b16 %v2781, %v2780
        %v2858 = vpack.c.b16 %v2783, %v2782
        %v2859 = vpack.c.b16 %v2785, %v2784
        %v2860 = vpack.c.b16 %v2787, %v2786
        %v2861 = vpack.c.b16 %v2789, %v2788
        %v2862 = vpack.c.b16 %v2791, %v2790
        %v2863 = vpack.c.b16 %v2793, %v2792
        %v2864 = vpack.c.b16 %v2795, %v2794
        %v2865 = vpack.c.b16 %v2797, %v2796
        %v2866 = vpack.c.b16 %v2799, %v2798
        %v2867 = vpack.c.b16 %v2801, %v2800
        %v2868 = vpack.c.b16 %v2803, %v2802
        %v2869 = vpack.c.b16 %v2805, %v2804
        %v2870 = vpack.c.b16 %v2807, %v2806
        %v2871 = vpack.c.b16 %v2809, %v2808
        %v2872 = vpack.c.b16 %v2811, %v2810
        %v2873 = vpack.c.b16 %v2813, %v2812
        %v2874 = vpack.c.b16 %v2815, %v2814
        %v2875 = vpack.c.b16 %v2817, %v2816
        %v2876 = vpack.c.b16 %v2819, %v2818
        %v2877 = vpack.c.b16 %v2821, %v2820
        %v2878 = vpack.c.b16 %v2823, %v2822
        %v2879 = vpack.c.b16 %v2825, %v2824
        %v2880 = vpack.c.b16 %v2827, %v2826
        %v2881 = vpack.c.b16 %v2829, %v2828
        %v2882 = vpack.c.b16 %v2831, %v2830
        %v2883 = vpack.c.b16 %v2833, %v2832
        %v2884 = vpack.c.b16 %v2835, %v2834
        %v2885 = vpack.c.b16 %v2837, %v2836
        %v2886 = vpack.c.b16 %v2839, %v2838
        %v2887 = vpack.c.b16 %v2841, %v2840
        %v2888 = vpack.c.b16 %v2843, %v2842
        %v2889 = vpack.c.b16 %v2845, %v2844
        %v2890 = vpack.c.b16 %v2847, %v2846
        %v2891 = vpack.c.b16 %v2849, %v2848
        %v2892 = vpack.c.b16 %v2851, %v2850
        %v2893 = vpack.c.b16 %v2853, %v2852
        %v2898 = vunpack.c.l.b16 %v2690
        %v2899 = vunpack.c.l.b16 %v2691
        %v2900 = vunpack.c.l.b16 %v2692
        %v2901 = vunpack.c.l.b16 %v2693
        %v2902 = vpack.c.b16 %v2899, %v2898
        %v2903 = vpack.c.b16 %v2901, %v2900
        %v2907 = vsel %vm1640, %v2854, 0
        %v2910 = vsel %vm1640, %v2855, 0
        %v2913 = vsel %vm1640, %v2856, 0
        %v2916 = vsel %vm1640, %v2857, 0
        %v2919 = vsel %vm1640, %v2858, 0
        %v2922 = vsel %vm1640, %v2859, 0
        %v2925 = vsel %vm1640, %v2860, 0
        %v2928 = vsel %vm1640, %v2861, 0
        %v2931 = vsel %vm1640, %v2862, 0
        %v2934 = vsel %vm1640, %v2863, 0
        %v2937 = vsel %vm1640, %v2864, 0
        %v2940 = vsel %vm1640, %v2865, 0
        %v2943 = vsel %vm1640, %v2866, 0
        %v2946 = vsel %vm1640, %v2867, 0
        %v2949 = vsel %vm1640, %v2868, 0
        %v2952 = vsel %vm1640, %v2869, 0
        %v2955 = vsel %vm1640, %v2870, 0
        %v2958 = vsel %vm1640, %v2871, 0
        %v2961 = vsel %vm1640, %v2872, 0
        %v2964 = vsel %vm1640, %v2873, 0
        %v2967 = vsel %vm1640, %v2874, 0
        %v2970 = vsel %vm1640, %v2875, 0
        %v2973 = vsel %vm1640, %v2876, 0
        %v2976 = vsel %vm1640, %v2877, 0
        %v2979 = vsel %vm1640, %v2878, 0
        %v2982 = vsel %vm1640, %v2879, 0
        %v2985 = vsel %vm1640, %v2880, 0
        %v2988 = vsel %vm1640, %v2881, 0
        %v2991 = vsel %vm1640, %v2882, 0
        %v2994 = vsel %vm1640, %v2883, 0
        %v2997 = vsel %vm1640, %v2884, 0
        %v3000 = vsel %vm1640, %v2885, 0
        %v3003 = vsel %vm1640, %v2886, 0
        %v3006 = vsel %vm1640, %v2887, 0
        %v3009 = vsel %vm1640, %v2888, 0
        %v3012 = vsel %vm1640, %v2889, 0
        %v3015 = vsel %vm1640, %v2890, 0
        %v3018 = vsel %vm1640, %v2891, 0
        %v3021 = vsel %vm1640, %v2892, 0
        %v3024 = vsel %vm1640, %v2893, 0
        %3026 = vmatprep.subr.bf16.mxu0 0
        %3027 = vmatpush1.bf16.msra.mxu0 0
        %3028 = vmatprep.subr.bf16.mxu0 0
        %3029 = vmatpush1.bf16.msra.mxu0 0
        %3030 = vmatprep.subr.bf16.mxu0 0
        %3031 = vmatpush1.bf16.msra.mxu0 0
        %3032 = vmatprep.subr.bf16.mxu0 0
        %3033 = vmatpush1.bf16.msra.mxu0 0
        %3034 = vmatprep.subr.bf16.mxu0 0
        %3035 = vmatpush1.bf16.msra.mxu0 0
        %3036 = vmatprep.subr.bf16.mxu0 0
        %3037 = vmatpush1.bf16.msra.mxu0 0
        %3038 = vmatprep.subr.bf16.mxu0 0
        %3039 = vmatpush1.bf16.msra.mxu0 %v2903
        %3040 = vmatprep.subr.bf16.mxu0 0
        %3041 = vmatpush1.bf16.msra.mxu0 %v2902
        %3042 = vmatprep.subr.bf16.mxu0 0
        %3043 = vmatpush2.bf16.msra.mxu0 0
        %3044 = vmatprep.subr.bf16.mxu0 0
        %3045 = vmatpush2.bf16.msra.mxu0 0
        %3046 = vmatprep.subr.bf16.mxu0 0
        %3047 = vmatpush2.bf16.msra.mxu0 0
        %3048 = vmatprep.subr.bf16.mxu0 0
        %3049 = vmatpush2.bf16.msra.mxu0 0
        %3050 = vmatprep.subr.bf16.mxu0 0
        %3051 = vmatpush2.bf16.msra.mxu0 0
        %3052 = vmatprep.subr.bf16.mxu0 0
        %3053 = vmatpush2.bf16.msra.mxu0 0
        %3054 = vmatprep.subr.bf16.mxu0 0
        %3055 = vmatpush2.bf16.msra.mxu0 0
        %3056 = vmatprep.subr.bf16.mxu0 0
        %3057 = vmatpush2.bf16.msra.mxu0 0
        %3058 = vmatprep.mubr.bf16.mxu0 0
        %3059 = vmatmul.mubr.bf16.gmra.mxu0 %v2907
        %v3060 = vpop.f32.mrf.mxu0
        %v3061 = vpop.f32.mrf.mxu0
        %v3062 = vpop.f32.mrf.mxu0
        %v3063 = vadd.f32 0.0, %v3062
        %v3064 = vpop.f32.mrf.mxu0
        %3065 = vmatprep.mubr.bf16.mxu0 0
        %3066 = vmatmul.mubr.bf16.gmra.mxu0 %v2910
        %v3067 = vpop.f32.mrf.mxu0
        %v3068 = vadd.f32 0.0, %v3067
        %v3069 = vpop.f32.mrf.mxu0
        %v3070 = vpop.f32.mrf.mxu0
        %v3071 = vadd.f32 0.0, %v3070
        %v3072 = vpop.f32.mrf.mxu0
        %3073 = vmatprep.mubr.bf16.mxu0 0
        %3074 = vmatmul.mubr.bf16.gmra.mxu0 %v2913
        %v3075 = vpop.f32.mrf.mxu0
        %v3076 = vadd.f32 0.0, %v3075
        %v3077 = vpop.f32.mrf.mxu0
        %v3078 = vpop.f32.mrf.mxu0
        %v3079 = vadd.f32 0.0, %v3078
        %v3080 = vpop.f32.mrf.mxu0
        %3081 = vmatprep.mubr.bf16.mxu0 0
        %3082 = vmatmul.mubr.bf16.gmra.mxu0 %v2916
        %v3083 = vpop.f32.mrf.mxu0
        %v3084 = vadd.f32 0.0, %v3083
        %v3085 = vpop.f32.mrf.mxu0
        %v3086 = vpop.f32.mrf.mxu0
        %v3087 = vadd.f32 0.0, %v3086
        %v3088 = vpop.f32.mrf.mxu0
        %3089 = vmatprep.mubr.bf16.mxu0 0
        %3090 = vmatmul.mubr.bf16.gmra.mxu0 %v2919
        %v3091 = vpop.f32.mrf.mxu0
        %v3092 = vadd.f32 0.0, %v3091
        %v3093 = vpop.f32.mrf.mxu0
        %v3094 = vpop.f32.mrf.mxu0
        %v3095 = vpop.f32.mrf.mxu0
        %3096 = vmatprep.mubr.bf16.mxu0 0
        %3097 = vmatmul.mubr.bf16.gmra.mxu0 %v2922
        %v3098 = vpop.f32.mrf.mxu0
        %v3099 = vpop.f32.mrf.mxu0
        %v3100 = vpop.f32.mrf.mxu0
        %v3101 = vadd.f32 0.0, %v3100
        %v3102 = vpop.f32.mrf.mxu0
        %3103 = vmatprep.mubr.bf16.mxu0 0
        %3104 = vmatmul.mubr.bf16.gmra.mxu0 %v2925
        %v3105 = vpop.f32.mrf.mxu0
        %v3106 = vadd.f32 0.0, %v3105
        %v3107 = vpop.f32.mrf.mxu0
        %v3108 = vpop.f32.mrf.mxu0
        %v3109 = vadd.f32 0.0, %v3108
        %v3110 = vpop.f32.mrf.mxu0
        %3111 = vmatprep.mubr.bf16.mxu0 0
        %3112 = vmatmul.mubr.bf16.gmra.mxu0 %v2928
        %v3113 = vpop.f32.mrf.mxu0
        %v3114 = vadd.f32 0.0, %v3113
        %v3115 = vpop.f32.mrf.mxu0
        %v3116 = vpop.f32.mrf.mxu0
        %v3117 = vadd.f32 0.0, %v3116
        %v3118 = vpop.f32.mrf.mxu0
        %3119 = vmatprep.mubr.bf16.mxu0 0
        %3120 = vmatmul.mubr.bf16.gmra.mxu0 %v2931
        %v3121 = vpop.f32.mrf.mxu0
        %v3122 = vadd.f32 0.0, %v3121
        %v3123 = vpop.f32.mrf.mxu0
        %v3124 = vpop.f32.mrf.mxu0
        %v3125 = vadd.f32 0.0, %v3124
        %v3126 = vpop.f32.mrf.mxu0
        %3127 = vmatprep.mubr.bf16.mxu0 0
        %3128 = vmatmul.mubr.bf16.gmra.mxu0 %v2934
        %v3129 = vpop.f32.mrf.mxu0
        %v3130 = vadd.f32 0.0, %v3129
        %v3131 = vpop.f32.mrf.mxu0
        %v3132 = vpop.f32.mrf.mxu0
        %v3133 = vpop.f32.mrf.mxu0
        %3134 = vmatprep.mubr.bf16.mxu0 0
        %3135 = vmatmul.mubr.bf16.gmra.mxu0 %v2937
        %v3136 = vpop.f32.mrf.mxu0
        %v3137 = vpop.f32.mrf.mxu0
        %v3138 = vpop.f32.mrf.mxu0
        %v3139 = vadd.f32 0.0, %v3138
        %v3140 = vpop.f32.mrf.mxu0
        %3141 = vmatprep.mubr.bf16.mxu0 0
        %3142 = vmatmul.mubr.bf16.gmra.mxu0 %v2940
        %v3143 = vpop.f32.mrf.mxu0
        %v3144 = vadd.f32 0.0, %v3143
        %v3145 = vpop.f32.mrf.mxu0
        %v3146 = vpop.f32.mrf.mxu0
        %v3147 = vadd.f32 0.0, %v3146
        %v3148 = vpop.f32.mrf.mxu0
        %3149 = vmatprep.mubr.bf16.mxu0 0
        %3150 = vmatmul.mubr.bf16.gmra.mxu0 %v2943
        %v3151 = vpop.f32.mrf.mxu0
        %v3152 = vadd.f32 0.0, %v3151
        %v3153 = vpop.f32.mrf.mxu0
        %v3154 = vpop.f32.mrf.mxu0
        %v3155 = vadd.f32 0.0, %v3154
        %v3156 = vpop.f32.mrf.mxu0
        %3157 = vmatprep.mubr.bf16.mxu0 0
        %3158 = vmatmul.mubr.bf16.gmra.mxu0 %v2946
        %v3159 = vpop.f32.mrf.mxu0
        %v3160 = vadd.f32 0.0, %v3159
        %v3161 = vpop.f32.mrf.mxu0
        %v3162 = vpop.f32.mrf.mxu0
        %v3163 = vadd.f32 0.0, %v3162
        %v3164 = vpop.f32.mrf.mxu0
        %3165 = vmatprep.mubr.bf16.mxu0 0
        %3166 = vmatmul.mubr.bf16.gmra.mxu0 %v2949
        %v3167 = vpop.f32.mrf.mxu0
        %v3168 = vadd.f32 0.0, %v3167
        %v3169 = vpop.f32.mrf.mxu0
        %v3170 = vpop.f32.mrf.mxu0
        %v3171 = vpop.f32.mrf.mxu0
        %3172 = vmatprep.mubr.bf16.mxu0 0
        %3173 = vmatmul.mubr.bf16.gmra.mxu0 %v2952
        %v3174 = vpop.f32.mrf.mxu0
        %v3175 = vpop.f32.mrf.mxu0
        %v3176 = vpop.f32.mrf.mxu0
        %v3177 = vadd.f32 0.0, %v3176
        %v3178 = vpop.f32.mrf.mxu0
        %3179 = vmatprep.mubr.bf16.mxu0 0
        %3180 = vmatmul.mubr.bf16.gmra.mxu0 %v2955
        %v3181 = vpop.f32.mrf.mxu0
        %v3182 = vadd.f32 0.0, %v3181
        %v3183 = vpop.f32.mrf.mxu0
        %v3184 = vpop.f32.mrf.mxu0
        %v3185 = vadd.f32 0.0, %v3184
        %v3186 = vpop.f32.mrf.mxu0
        %3187 = vmatprep.mubr.bf16.mxu0 0
        %3188 = vmatmul.mubr.bf16.gmra.mxu0 %v2958
        %v3189 = vpop.f32.mrf.mxu0
        %v3190 = vadd.f32 0.0, %v3189
        %v3191 = vpop.f32.mrf.mxu0
        %v3192 = vpop.f32.mrf.mxu0
        %v3193 = vadd.f32 0.0, %v3192
        %v3194 = vpop.f32.mrf.mxu0
        %3195 = vmatprep.mubr.bf16.mxu0 0
        %3196 = vmatmul.mubr.bf16.gmra.mxu0 %v2961
        %v3197 = vpop.f32.mrf.mxu0
        %v3198 = vadd.f32 0.0, %v3197
        %v3199 = vpop.f32.mrf.mxu0
        %v3200 = vpop.f32.mrf.mxu0
        %v3201 = vadd.f32 0.0, %v3200
        %v3202 = vpop.f32.mrf.mxu0
        %3203 = vmatprep.mubr.bf16.mxu0 0
        %3204 = vmatmul.mubr.bf16.gmra.mxu0 %v2964
        %v3205 = vpop.f32.mrf.mxu0
        %v3206 = vadd.f32 0.0, %v3205
        %v3207 = vpop.f32.mrf.mxu0
        %v3208 = vpop.f32.mrf.mxu0
        %v3209 = vpop.f32.mrf.mxu0
        %3210 = vmatprep.mubr.bf16.mxu0 0
        %3211 = vmatmul.mubr.bf16.gmra.mxu0 %v2967
        %v3212 = vpop.f32.mrf.mxu0
        %v3213 = vpop.f32.mrf.mxu0
        %v3214 = vpop.f32.mrf.mxu0
        %v3215 = vadd.f32 0.0, %v3214
        %v3216 = vpop.f32.mrf.mxu0
        %3217 = vmatprep.mubr.bf16.mxu0 0
        %3218 = vmatmul.mubr.bf16.gmra.mxu0 %v2970
        %v3219 = vpop.f32.mrf.mxu0
        %v3220 = vadd.f32 0.0, %v3219
        %v3221 = vpop.f32.mrf.mxu0
        %v3222 = vpop.f32.mrf.mxu0
        %v3223 = vadd.f32 0.0, %v3222
        %v3224 = vpop.f32.mrf.mxu0
        %3225 = vmatprep.mubr.bf16.mxu0 0
        %3226 = vmatmul.mubr.bf16.gmra.mxu0 %v2973
        %v3227 = vpop.f32.mrf.mxu0
        %v3228 = vadd.f32 0.0, %v3227
        %v3229 = vpop.f32.mrf.mxu0
        %v3230 = vpop.f32.mrf.mxu0
        %v3231 = vadd.f32 0.0, %v3230
        %v3232 = vpop.f32.mrf.mxu0
        %3233 = vmatprep.mubr.bf16.mxu0 0
        %3234 = vmatmul.mubr.bf16.gmra.mxu0 %v2976
        %v3235 = vpop.f32.mrf.mxu0
        %v3236 = vadd.f32 0.0, %v3235
        %v3237 = vpop.f32.mrf.mxu0
        %v3238 = vpop.f32.mrf.mxu0
        %v3239 = vadd.f32 0.0, %v3238
        %v3240 = vpop.f32.mrf.mxu0
        %3241 = vmatprep.mubr.bf16.mxu0 0
        %3242 = vmatmul.mubr.bf16.gmra.mxu0 %v2979
        %v3243 = vpop.f32.mrf.mxu0
        %v3244 = vadd.f32 0.0, %v3243
        %v3245 = vpop.f32.mrf.mxu0
        %v3246 = vpop.f32.mrf.mxu0
        %v3247 = vpop.f32.mrf.mxu0
        %3248 = vmatprep.mubr.bf16.mxu0 0
        %3249 = vmatmul.mubr.bf16.gmra.mxu0 %v2982
        %v3250 = vpop.f32.mrf.mxu0
        %v3251 = vpop.f32.mrf.mxu0
        %v3252 = vpop.f32.mrf.mxu0
        %v3253 = vadd.f32 0.0, %v3252
        %v3254 = vpop.f32.mrf.mxu0
        %3255 = vmatprep.mubr.bf16.mxu0 0
        %3256 = vmatmul.mubr.bf16.gmra.mxu0 %v2985
        %v3257 = vpop.f32.mrf.mxu0
        %v3258 = vadd.f32 0.0, %v3257
        %v3259 = vpop.f32.mrf.mxu0
        %v3260 = vpop.f32.mrf.mxu0
        %v3261 = vadd.f32 0.0, %v3260
        %v3262 = vpop.f32.mrf.mxu0
        %3263 = vmatprep.mubr.bf16.mxu0 0
        %3264 = vmatmul.mubr.bf16.gmra.mxu0 %v2988
        %v3265 = vpop.f32.mrf.mxu0
        %v3266 = vadd.f32 0.0, %v3265
        %v3267 = vpop.f32.mrf.mxu0
        %v3268 = vpop.f32.mrf.mxu0
        %v3269 = vadd.f32 0.0, %v3268
        %v3270 = vpop.f32.mrf.mxu0
        %3271 = vmatprep.mubr.bf16.mxu0 0
        %3272 = vmatmul.mubr.bf16.gmra.mxu0 %v2991
        %v3273 = vpop.f32.mrf.mxu0
        %v3274 = vadd.f32 0.0, %v3273
        %v3275 = vpop.f32.mrf.mxu0
        %v3276 = vpop.f32.mrf.mxu0
        %v3277 = vadd.f32 0.0, %v3276
        %v3278 = vpop.f32.mrf.mxu0
        %3279 = vmatprep.mubr.bf16.mxu0 0
        %3280 = vmatmul.mubr.bf16.gmra.mxu0 %v2994
        %v3281 = vpop.f32.mrf.mxu0
        %v3282 = vadd.f32 0.0, %v3281
        %v3283 = vpop.f32.mrf.mxu0
        %v3284 = vpop.f32.mrf.mxu0
        %v3285 = vpop.f32.mrf.mxu0
        %3286 = vmatprep.mubr.bf16.mxu0 0
        %3287 = vmatmul.mubr.bf16.gmra.mxu0 %v2997
        %v3288 = vpop.f32.mrf.mxu0
        %v3289 = vpop.f32.mrf.mxu0
        %v3290 = vpop.f32.mrf.mxu0
        %v3291 = vadd.f32 0.0, %v3290
        %v3292 = vpop.f32.mrf.mxu0
        %3293 = vmatprep.mubr.bf16.mxu0 0
        %3294 = vmatmul.mubr.bf16.gmra.mxu0 %v3000
        %v3295 = vpop.f32.mrf.mxu0
        %v3296 = vadd.f32 0.0, %v3295
        %v3297 = vpop.f32.mrf.mxu0
        %v3298 = vpop.f32.mrf.mxu0
        %v3299 = vadd.f32 0.0, %v3298
        %v3300 = vpop.f32.mrf.mxu0
        %3301 = vmatprep.mubr.bf16.mxu0 0
        %3302 = vmatmul.mubr.bf16.gmra.mxu0 %v3003
        %v3303 = vpop.f32.mrf.mxu0
        %v3304 = vadd.f32 0.0, %v3303
        %v3305 = vpop.f32.mrf.mxu0
        %v3306 = vpop.f32.mrf.mxu0
        %v3307 = vadd.f32 0.0, %v3306
        %v3308 = vpop.f32.mrf.mxu0
        %3309 = vmatprep.mubr.bf16.mxu0 0
        %3310 = vmatmul.mubr.bf16.gmra.mxu0 %v3006
        %v3311 = vpop.f32.mrf.mxu0
        %v3312 = vadd.f32 0.0, %v3311
        %v3313 = vpop.f32.mrf.mxu0
        %v3314 = vpop.f32.mrf.mxu0
        %v3315 = vadd.f32 0.0, %v3314
        %v3316 = vpop.f32.mrf.mxu0
        %3317 = vmatprep.mubr.bf16.mxu0 0
        %3318 = vmatmul.mubr.bf16.gmra.mxu0 %v3009
        %v3319 = vpop.f32.mrf.mxu0
        %v3320 = vadd.f32 0.0, %v3319
        %v3321 = vpop.f32.mrf.mxu0
        %v3322 = vpop.f32.mrf.mxu0
        %v3323 = vpop.f32.mrf.mxu0
        %3324 = vmatprep.mubr.bf16.mxu0 0
        %3325 = vmatmul.mubr.bf16.gmra.mxu0 %v3012
        %v3326 = vpop.f32.mrf.mxu0
        %v3327 = vpop.f32.mrf.mxu0
        %v3328 = vpop.f32.mrf.mxu0
        %v3329 = vadd.f32 0.0, %v3328
        %v3330 = vpop.f32.mrf.mxu0
        %3331 = vmatprep.mubr.bf16.mxu0 0
        %3332 = vmatmul.mubr.bf16.gmra.mxu0 %v3015
        %v3333 = vpop.f32.mrf.mxu0
        %v3334 = vadd.f32 0.0, %v3333
        %v3335 = vpop.f32.mrf.mxu0
        %v3336 = vpop.f32.mrf.mxu0
        %v3337 = vadd.f32 0.0, %v3336
        %v3338 = vpop.f32.mrf.mxu0
        %3339 = vmatprep.mubr.bf16.mxu0 0
        %3340 = vmatmul.mubr.bf16.gmra.mxu0 %v3018
        %v3341 = vpop.f32.mrf.mxu0
        %v3342 = vadd.f32 0.0, %v3341
        %v3343 = vpop.f32.mrf.mxu0
        %v3344 = vpop.f32.mrf.mxu0
        %v3345 = vadd.f32 0.0, %v3344
        %v3346 = vpop.f32.mrf.mxu0
        %3347 = vmatprep.mubr.bf16.mxu0 0
        %3348 = vmatmul.mubr.bf16.gmra.mxu0 %v3021
        %v3349 = vpop.f32.mrf.mxu0
        %v3350 = vadd.f32 0.0, %v3349
        %v3351 = vpop.f32.mrf.mxu0
        %v3352 = vpop.f32.mrf.mxu0
        %v3353 = vadd.f32 0.0, %v3352
        %v3354 = vpop.f32.mrf.mxu0
        %3355 = vmatprep.mubr.bf16.mxu0 0
        %3356 = vmatmul.mubr.bf16.gmra.mxu0 %v3024
        %v3357 = vpop.f32.mrf.mxu0
        %v3358 = vadd.f32 0.0, %v3357
        %v3359 = vpop.f32.mrf.mxu0
        %v3360 = vpop.f32.mrf.mxu0
        %v3361 = vpop.f32.mrf.mxu0
        %3362 = vdwg.mxu0
        %v3363 = vadd.f32 %v2309, %v3063
        %v3364 = vadd.f32 %v2314, %v3068
        %v3365 = vadd.f32 %v2317, %v3071
        %v3366 = vadd.f32 %v2322, %v3076
        %v3367 = vadd.f32 %v2325, %v3079
        %v3368 = vadd.f32 %v2330, %v3084
        %v3369 = vadd.f32 %v2333, %v3087
        %v3370 = vadd.f32 %v2338, %v3092
        %v3371 = vadd.f32 %v2347, %v3101
        %v3372 = vadd.f32 %v2352, %v3106
        %v3373 = vadd.f32 %v2355, %v3109
        %v3374 = vadd.f32 %v2360, %v3114
        %v3375 = vadd.f32 %v2363, %v3117
        %v3376 = vadd.f32 %v2368, %v3122
        %v3377 = vadd.f32 %v2371, %v3125
        %v3378 = vadd.f32 %v2376, %v3130
        %v3379 = vadd.f32 %v2385, %v3139
        %v3380 = vadd.f32 %v2390, %v3144
        %v3381 = vadd.f32 %v2393, %v3147
        %v3382 = vadd.f32 %v2398, %v3152
        %v3383 = vadd.f32 %v2401, %v3155
        %v3384 = vadd.f32 %v2406, %v3160
        %v3385 = vadd.f32 %v2409, %v3163
        %v3386 = vadd.f32 %v2414, %v3168
        %v3387 = vadd.f32 %v2423, %v3177
        %v3388 = vadd.f32 %v2428, %v3182
        %v3389 = vadd.f32 %v2431, %v3185
        %v3390 = vadd.f32 %v2436, %v3190
        %v3391 = vadd.f32 %v2439, %v3193
        %v3392 = vadd.f32 %v2444, %v3198
        %v3393 = vadd.f32 %v2447, %v3201
        %v3394 = vadd.f32 %v2452, %v3206
        %v3395 = vadd.f32 %v2461, %v3215
        %v3396 = vadd.f32 %v2466, %v3220
        %v3397 = vadd.f32 %v2469, %v3223
        %v3398 = vadd.f32 %v2474, %v3228
        %v3399 = vadd.f32 %v2477, %v3231
        %v3400 = vadd.f32 %v2482, %v3236
        %v3401 = vadd.f32 %v2485, %v3239
        %v3402 = vadd.f32 %v2490, %v3244
        %v3403 = vadd.f32 %v2499, %v3253
        %v3404 = vadd.f32 %v2504, %v3258
        %v3405 = vadd.f32 %v2507, %v3261
        %v3406 = vadd.f32 %v2512, %v3266
        %v3407 = vadd.f32 %v2515, %v3269
        %v3408 = vadd.f32 %v2520, %v3274
        %v3409 = vadd.f32 %v2523, %v3277
        %v3410 = vadd.f32 %v2528, %v3282
        %v3411 = vadd.f32 %v2537, %v3291
        %v3412 = vadd.f32 %v2542, %v3296
        %v3413 = vadd.f32 %v2545, %v3299
        %v3414 = vadd.f32 %v2550, %v3304
        %v3415 = vadd.f32 %v2553, %v3307
        %v3416 = vadd.f32 %v2558, %v3312
        %v3417 = vadd.f32 %v2561, %v3315
        %v3418 = vadd.f32 %v2566, %v3320
        %v3419 = vadd.f32 %v2575, %v3329
        %v3420 = vadd.f32 %v2580, %v3334
        %v3421 = vadd.f32 %v2583, %v3337
        %v3422 = vadd.f32 %v2588, %v3342
        %v3423 = vadd.f32 %v2591, %v3345
        %v3424 = vadd.f32 %v2596, %v3350
        %v3425 = vadd.f32 %v2599, %v3353
        %v3426 = vadd.f32 %v2604, %v3358
        %v3427 = vld [vmem:[#allocation2 + $0x28] sm:$0xf]
        %v3428 = vld [vmem:[#allocation2 + $0x2c] sm:$0xf]
        %v3429 = vld [vmem:[#allocation2 + $0x30] sm:$0xf]
        %v3430 = vld [vmem:[#allocation2 + $0x34] sm:$0xf]
        %v3431 = vld [vmem:[#allocation2 + $0x38] sm:$0xf]
        %v3432 = vld [vmem:[#allocation2 + $0x3c] sm:$0xf]
        %v3433 = vld [vmem:[#allocation2 + $0x40] sm:$0xf]
        %v3434 = vld [vmem:[#allocation2 + $0x44] sm:$0xf]
        %v3435 = vld [vmem:[#allocation2 + $0x48] sm:$0xf]
        %v3436 = vld [vmem:[#allocation2 + $0x4c] sm:$0xf]
        %v3437 = vld [vmem:[#allocation2 + $0x50] sm:$0xf]
        %v3438 = vld [vmem:[#allocation2 + $0x54] sm:$0xf]
        %v3439 = vld [vmem:[#allocation2 + $0x58] sm:$0xf]
        %v3440 = vld [vmem:[#allocation2 + $0x5c] sm:$0xf]
        %v3441 = vld [vmem:[#allocation2 + $0x60] sm:$0xf]
        %v3442 = vld [vmem:[#allocation2 + $0x64] sm:$0xf]
        %v3443 = vld [vmem:[#allocation2 + $0x68] sm:$0xf]
        %v3444 = vld [vmem:[#allocation2 + $0x6c] sm:$0xf]
        %v3445 = vld [vmem:[#allocation2 + $0x70] sm:$0xf]
        %v3446 = vld [vmem:[#allocation2 + $0x74] sm:$0xf]
        %v3447 = vld [vmem:[#allocation2 + $0x78] sm:$0xf]
        %v3448 = vld [vmem:[#allocation2 + $0x7c] sm:$0xf]
        %v3449 = vld [vmem:[#allocation2 + $0x80] sm:$0xf]
        %v3450 = vld [vmem:[#allocation2 + $0x84] sm:$0xf]
        %v3451 = vld [vmem:[#allocation2 + $0x88] sm:$0xf]
        %v3452 = vld [vmem:[#allocation2 + $0x8c] sm:$0xf]
        %v3453 = vld [vmem:[#allocation2 + $0x90] sm:$0xf]
        %v3454 = vld [vmem:[#allocation2 + $0x94] sm:$0xf]
        %v3455 = vld [vmem:[#allocation2 + $0x98] sm:$0xf]
        %v3456 = vld [vmem:[#allocation2 + $0x9c] sm:$0xf]
        %v3457 = vld [vmem:[#allocation2 + $0xa0] sm:$0xf]
        %v3458 = vld [vmem:[#allocation2 + $0xa4] sm:$0xf]
        %v3459 = vld [vmem:[#allocation2 + $0xa8] sm:$0xf]
        %v3460 = vld [vmem:[#allocation2 + $0xac] sm:$0xf]
        %v3461 = vld [vmem:[#allocation2 + $0xb0] sm:$0xf]
        %v3462 = vld [vmem:[#allocation2 + $0xb4] sm:$0xf]
        %v3463 = vld [vmem:[#allocation2 + $0xb8] sm:$0xf]
        %v3464 = vld [vmem:[#allocation2 + $0xbc] sm:$0xf]
        %v3465 = vld [vmem:[#allocation2 + $0xc0] sm:$0xf]
        %v3466 = vld [vmem:[#allocation2 + $0xc4] sm:$0xf]
        %v3467 = vld [vmem:[#allocation2 + $0xc8] sm:$0xf]
        %v3468 = vld [vmem:[#allocation2 + $0xcc] sm:$0xf]
        %v3469 = vld [vmem:[#allocation2 + $0xd0] sm:$0xf]
        %v3470 = vld [vmem:[#allocation2 + $0xd4] sm:$0xf]
        %v3471 = vld [vmem:[#allocation2 + $0xd8] sm:$0xf]
        %v3472 = vld [vmem:[#allocation2 + $0xdc] sm:$0xf]
        %v3473 = vld [vmem:[#allocation2 + $0xe0] sm:$0xf]
        %v3474 = vld [vmem:[#allocation2 + $0xe4] sm:$0xf]
        %v3475 = vld [vmem:[#allocation2 + $0xe8] sm:$0xf]
        %v3476 = vld [vmem:[#allocation2 + $0xec] sm:$0xf]
        %v3477 = vld [vmem:[#allocation2 + $0xf0] sm:$0xf]
        %v3478 = vld [vmem:[#allocation2 + $0xf4] sm:$0xf]
        %v3479 = vld [vmem:[#allocation2 + $0xf8] sm:$0xf]
        %v3480 = vld [vmem:[#allocation2 + $0xfc] sm:$0xf]
        %v3481 = vld [vmem:[#allocation2 + $0x100] sm:$0xf]
        %v3482 = vld [vmem:[#allocation2 + $0x104] sm:$0xf]
        %v3483 = vld [vmem:[#allocation2 + $0x108] sm:$0xf]
        %v3484 = vld [vmem:[#allocation2 + $0x10c] sm:$0xf]
        %v3485 = vld [vmem:[#allocation2 + $0x110] sm:$0xf]
        %v3486 = vld [vmem:[#allocation2 + $0x114] sm:$0xf]
        %v3487 = vld [vmem:[#allocation2 + $0x118] sm:$0xf]
        %v3488 = vld [vmem:[#allocation2 + $0x11c] sm:$0xf]
        %v3489 = vld [vmem:[#allocation2 + $0x120] sm:$0xf]
        %v3490 = vld [vmem:[#allocation2 + $0x124] sm:$0xf]
        %v3491 = vld [vmem:[#allocation2 + $0x128] sm:$0xf]
        %v3492 = vld [vmem:[#allocation2 + $0x12c] sm:$0xf]
        %v3493 = vld [vmem:[#allocation2 + $0x130] sm:$0xf]
        %v3494 = vld [vmem:[#allocation2 + $0x134] sm:$0xf]
        %v3495 = vld [vmem:[#allocation2 + $0x138] sm:$0xf]
        %v3496 = vld [vmem:[#allocation2 + $0x13c] sm:$0xf]
        %v3497 = vld [vmem:[#allocation2 + $0x140] sm:$0xf]
        %v3498 = vld [vmem:[#allocation2 + $0x144] sm:$0xf]
        %v3499 = vld [vmem:[#allocation2 + $0x148] sm:$0xf]
        %v3500 = vld [vmem:[#allocation2 + $0x14c] sm:$0xf]
        %v3501 = vld [vmem:[#allocation2 + $0x150] sm:$0xf]
        %v3502 = vld [vmem:[#allocation2 + $0x154] sm:$0xf]
        %v3503 = vld [vmem:[#allocation2 + $0x158] sm:$0xf]
        %v3504 = vld [vmem:[#allocation2 + $0x15c] sm:$0xf]
        %v3505 = vld [vmem:[#allocation2 + $0x160] sm:$0xf]
        %v3506 = vld [vmem:[#allocation2 + $0x164] sm:$0xf]
        %s3507 = scalar_lea.vmem %s2, 48
        %v3508 = vld [vmem:[%s3507] sm:$0xf]
        %v3509 = vld [vmem:[%s3507 + $0x4] sm:$0xf]
        %v3510 = vld [vmem:[%s3507 + $0x8] sm:$0xf]
        %v3511 = vld [vmem:[%s3507 + $0xc] sm:$0xf]
        %v3592 = vunpack.c.l.b16 %v3427
        %v3593 = vunpack.c.l.b16 %v3428
        %v3594 = vunpack.c.l.b16 %v3429
        %v3595 = vunpack.c.l.b16 %v3430
        %v3596 = vunpack.c.l.b16 %v3431
        %v3597 = vunpack.c.l.b16 %v3432
        %v3598 = vunpack.c.l.b16 %v3433
        %v3599 = vunpack.c.l.b16 %v3434
        %v3600 = vunpack.c.l.b16 %v3435
        %v3601 = vunpack.c.l.b16 %v3436
        %v3602 = vunpack.c.l.b16 %v3437
        %v3603 = vunpack.c.l.b16 %v3438
        %v3604 = vunpack.c.l.b16 %v3439
        %v3605 = vunpack.c.l.b16 %v3440
        %v3606 = vunpack.c.l.b16 %v3441
        %v3607 = vunpack.c.l.b16 %v3442
        %v3608 = vunpack.c.l.b16 %v3443
        %v3609 = vunpack.c.l.b16 %v3444
        %v3610 = vunpack.c.l.b16 %v3445
        %v3611 = vunpack.c.l.b16 %v3446
        %v3612 = vunpack.c.l.b16 %v3447
        %v3613 = vunpack.c.l.b16 %v3448
        %v3614 = vunpack.c.l.b16 %v3449
        %v3615 = vunpack.c.l.b16 %v3450
        %v3616 = vunpack.c.l.b16 %v3451
        %v3617 = vunpack.c.l.b16 %v3452
        %v3618 = vunpack.c.l.b16 %v3453
        %v3619 = vunpack.c.l.b16 %v3454
        %v3620 = vunpack.c.l.b16 %v3455
        %v3621 = vunpack.c.l.b16 %v3456
        %v3622 = vunpack.c.l.b16 %v3457
        %v3623 = vunpack.c.l.b16 %v3458
        %v3624 = vunpack.c.l.b16 %v3459
        %v3625 = vunpack.c.l.b16 %v3460
        %v3626 = vunpack.c.l.b16 %v3461
        %v3627 = vunpack.c.l.b16 %v3462
        %v3628 = vunpack.c.l.b16 %v3463
        %v3629 = vunpack.c.l.b16 %v3464
        %v3630 = vunpack.c.l.b16 %v3465
        %v3631 = vunpack.c.l.b16 %v3466
        %v3632 = vunpack.c.l.b16 %v3467
        %v3633 = vunpack.c.l.b16 %v3468
        %v3634 = vunpack.c.l.b16 %v3469
        %v3635 = vunpack.c.l.b16 %v3470
        %v3636 = vunpack.c.l.b16 %v3471
        %v3637 = vunpack.c.l.b16 %v3472
        %v3638 = vunpack.c.l.b16 %v3473
        %v3639 = vunpack.c.l.b16 %v3474
        %v3640 = vunpack.c.l.b16 %v3475
        %v3641 = vunpack.c.l.b16 %v3476
        %v3642 = vunpack.c.l.b16 %v3477
        %v3643 = vunpack.c.l.b16 %v3478
        %v3644 = vunpack.c.l.b16 %v3479
        %v3645 = vunpack.c.l.b16 %v3480
        %v3646 = vunpack.c.l.b16 %v3481
        %v3647 = vunpack.c.l.b16 %v3482
        %v3648 = vunpack.c.l.b16 %v3483
        %v3649 = vunpack.c.l.b16 %v3484
        %v3650 = vunpack.c.l.b16 %v3485
        %v3651 = vunpack.c.l.b16 %v3486
        %v3652 = vunpack.c.l.b16 %v3487
        %v3653 = vunpack.c.l.b16 %v3488
        %v3654 = vunpack.c.l.b16 %v3489
        %v3655 = vunpack.c.l.b16 %v3490
        %v3656 = vunpack.c.l.b16 %v3491
        %v3657 = vunpack.c.l.b16 %v3492
        %v3658 = vunpack.c.l.b16 %v3493
        %v3659 = vunpack.c.l.b16 %v3494
        %v3660 = vunpack.c.l.b16 %v3495
        %v3661 = vunpack.c.l.b16 %v3496
        %v3662 = vunpack.c.l.b16 %v3497
        %v3663 = vunpack.c.l.b16 %v3498
        %v3664 = vunpack.c.l.b16 %v3499
        %v3665 = vunpack.c.l.b16 %v3500
        %v3666 = vunpack.c.l.b16 %v3501
        %v3667 = vunpack.c.l.b16 %v3502
        %v3668 = vunpack.c.l.b16 %v3503
        %v3669 = vunpack.c.l.b16 %v3504
        %v3670 = vunpack.c.l.b16 %v3505
        %v3671 = vunpack.c.l.b16 %v3506
        %v3672 = vpack.c.b16 %v3593, %v3592
        %v3673 = vpack.c.b16 %v3595, %v3594
        %v3674 = vpack.c.b16 %v3597, %v3596
        %v3675 = vpack.c.b16 %v3599, %v3598
        %v3676 = vpack.c.b16 %v3601, %v3600
        %v3677 = vpack.c.b16 %v3603, %v3602
        %v3678 = vpack.c.b16 %v3605, %v3604
        %v3679 = vpack.c.b16 %v3607, %v3606
        %v3680 = vpack.c.b16 %v3609, %v3608
        %v3681 = vpack.c.b16 %v3611, %v3610
        %v3682 = vpack.c.b16 %v3613, %v3612
        %v3683 = vpack.c.b16 %v3615, %v3614
        %v3684 = vpack.c.b16 %v3617, %v3616
        %v3685 = vpack.c.b16 %v3619, %v3618
        %v3686 = vpack.c.b16 %v3621, %v3620
        %v3687 = vpack.c.b16 %v3623, %v3622
        %v3688 = vpack.c.b16 %v3625, %v3624
        %v3689 = vpack.c.b16 %v3627, %v3626
        %v3690 = vpack.c.b16 %v3629, %v3628
        %v3691 = vpack.c.b16 %v3631, %v3630
        %v3692 = vpack.c.b16 %v3633, %v3632
        %v3693 = vpack.c.b16 %v3635, %v3634
        %v3694 = vpack.c.b16 %v3637, %v3636
        %v3695 = vpack.c.b16 %v3639, %v3638
        %v3696 = vpack.c.b16 %v3641, %v3640
        %v3697 = vpack.c.b16 %v3643, %v3642
        %v3698 = vpack.c.b16 %v3645, %v3644
        %v3699 = vpack.c.b16 %v3647, %v3646
        %v3700 = vpack.c.b16 %v3649, %v3648
        %v3701 = vpack.c.b16 %v3651, %v3650
        %v3702 = vpack.c.b16 %v3653, %v3652
        %v3703 = vpack.c.b16 %v3655, %v3654
        %v3704 = vpack.c.b16 %v3657, %v3656
        %v3705 = vpack.c.b16 %v3659, %v3658
        %v3706 = vpack.c.b16 %v3661, %v3660
        %v3707 = vpack.c.b16 %v3663, %v3662
        %v3708 = vpack.c.b16 %v3665, %v3664
        %v3709 = vpack.c.b16 %v3667, %v3666
        %v3710 = vpack.c.b16 %v3669, %v3668
        %v3711 = vpack.c.b16 %v3671, %v3670
        %v3716 = vunpack.c.l.b16 %v3508
        %v3717 = vunpack.c.l.b16 %v3509
        %v3718 = vunpack.c.l.b16 %v3510
        %v3719 = vunpack.c.l.b16 %v3511
        %v3720 = vpack.c.b16 %v3717, %v3716
        %v3721 = vpack.c.b16 %v3719, %v3718
        %v3725 = vsel %vm1640, %v3672, 0
        %v3728 = vsel %vm1640, %v3673, 0
        %v3731 = vsel %vm1640, %v3674, 0
        %v3734 = vsel %vm1640, %v3675, 0
        %v3737 = vsel %vm1640, %v3676, 0
        %v3740 = vsel %vm1640, %v3677, 0
        %v3743 = vsel %vm1640, %v3678, 0
        %v3746 = vsel %vm1640, %v3679, 0
        %v3749 = vsel %vm1640, %v3680, 0
        %v3752 = vsel %vm1640, %v3681, 0
        %v3755 = vsel %vm1640, %v3682, 0
        %v3758 = vsel %vm1640, %v3683, 0
        %v3761 = vsel %vm1640, %v3684, 0
        %v3764 = vsel %vm1640, %v3685, 0
        %v3767 = vsel %vm1640, %v3686, 0
        %v3770 = vsel %vm1640, %v3687, 0
        %v3773 = vsel %vm1640, %v3688, 0
        %v3776 = vsel %vm1640, %v3689, 0
        %v3779 = vsel %vm1640, %v3690, 0
        %v3782 = vsel %vm1640, %v3691, 0
        %v3785 = vsel %vm1640, %v3692, 0
        %v3788 = vsel %vm1640, %v3693, 0
        %v3791 = vsel %vm1640, %v3694, 0
        %v3794 = vsel %vm1640, %v3695, 0
        %v3797 = vsel %vm1640, %v3696, 0
        %v3800 = vsel %vm1640, %v3697, 0
        %v3803 = vsel %vm1640, %v3698, 0
        %v3806 = vsel %vm1640, %v3699, 0
        %v3809 = vsel %vm1640, %v3700, 0
        %v3812 = vsel %vm1640, %v3701, 0
        %v3815 = vsel %vm1640, %v3702, 0
        %v3818 = vsel %vm1640, %v3703, 0
        %v3821 = vsel %vm1640, %v3704, 0
        %v3824 = vsel %vm1640, %v3705, 0
        %v3827 = vsel %vm1640, %v3706, 0
        %v3830 = vsel %vm1640, %v3707, 0
        %v3833 = vsel %vm1640, %v3708, 0
        %v3836 = vsel %vm1640, %v3709, 0
        %v3839 = vsel %vm1640, %v3710, 0
        %v3842 = vsel %vm1640, %v3711, 0
        %3844 = vmatprep.subr.bf16.mxu0 0
        %3845 = vmatpush1.bf16.msra.mxu0 0
        %3846 = vmatprep.subr.bf16.mxu0 0
        %3847 = vmatpush1.bf16.msra.mxu0 0
        %3848 = vmatprep.subr.bf16.mxu0 0
        %3849 = vmatpush1.bf16.msra.mxu0 0
        %3850 = vmatprep.subr.bf16.mxu0 0
        %3851 = vmatpush1.bf16.msra.mxu0 0
        %3852 = vmatprep.subr.bf16.mxu0 0
        %3853 = vmatpush1.bf16.msra.mxu0 0
        %3854 = vmatprep.subr.bf16.mxu0 0
        %3855 = vmatpush1.bf16.msra.mxu0 0
        %3856 = vmatprep.subr.bf16.mxu0 0
        %3857 = vmatpush1.bf16.msra.mxu0 %v3721
        %3858 = vmatprep.subr.bf16.mxu0 0
        %3859 = vmatpush1.bf16.msra.mxu0 %v3720
        %3860 = vmatprep.subr.bf16.mxu0 0
        %3861 = vmatpush2.bf16.msra.mxu0 0
        %3862 = vmatprep.subr.bf16.mxu0 0
        %3863 = vmatpush2.bf16.msra.mxu0 0
        %3864 = vmatprep.subr.bf16.mxu0 0
        %3865 = vmatpush2.bf16.msra.mxu0 0
        %3866 = vmatprep.subr.bf16.mxu0 0
        %3867 = vmatpush2.bf16.msra.mxu0 0
        %3868 = vmatprep.subr.bf16.mxu0 0
        %3869 = vmatpush2.bf16.msra.mxu0 0
        %3870 = vmatprep.subr.bf16.mxu0 0
        %3871 = vmatpush2.bf16.msra.mxu0 0
        %3872 = vmatprep.subr.bf16.mxu0 0
        %3873 = vmatpush2.bf16.msra.mxu0 0
        %3874 = vmatprep.subr.bf16.mxu0 0
        %3875 = vmatpush2.bf16.msra.mxu0 0
        %3876 = vmatprep.mubr.bf16.mxu0 0
        %3877 = vmatmul.mubr.bf16.gmra.mxu0 %v3725
        %v3878 = vpop.f32.mrf.mxu0
        %v3879 = vpop.f32.mrf.mxu0
        %v3880 = vpop.f32.mrf.mxu0
        %v3881 = vadd.f32 0.0, %v3880
        %v3882 = vpop.f32.mrf.mxu0
        %3883 = vmatprep.mubr.bf16.mxu0 0
        %3884 = vmatmul.mubr.bf16.gmra.mxu0 %v3728
        %v3885 = vpop.f32.mrf.mxu0
        %v3886 = vadd.f32 0.0, %v3885
        %v3887 = vpop.f32.mrf.mxu0
        %v3888 = vpop.f32.mrf.mxu0
        %v3889 = vadd.f32 0.0, %v3888
        %v3890 = vpop.f32.mrf.mxu0
        %3891 = vmatprep.mubr.bf16.mxu0 0
        %3892 = vmatmul.mubr.bf16.gmra.mxu0 %v3731
        %v3893 = vpop.f32.mrf.mxu0
        %v3894 = vadd.f32 0.0, %v3893
        %v3895 = vpop.f32.mrf.mxu0
        %v3896 = vpop.f32.mrf.mxu0
        %v3897 = vadd.f32 0.0, %v3896
        %v3898 = vpop.f32.mrf.mxu0
        %3899 = vmatprep.mubr.bf16.mxu0 0
        %3900 = vmatmul.mubr.bf16.gmra.mxu0 %v3734
        %v3901 = vpop.f32.mrf.mxu0
        %v3902 = vadd.f32 0.0, %v3901
        %v3903 = vpop.f32.mrf.mxu0
        %v3904 = vpop.f32.mrf.mxu0
        %v3905 = vadd.f32 0.0, %v3904
        %v3906 = vpop.f32.mrf.mxu0
        %3907 = vmatprep.mubr.bf16.mxu0 0
        %3908 = vmatmul.mubr.bf16.gmra.mxu0 %v3737
        %v3909 = vpop.f32.mrf.mxu0
        %v3910 = vadd.f32 0.0, %v3909
        %v3911 = vpop.f32.mrf.mxu0
        %v3912 = vpop.f32.mrf.mxu0
        %v3913 = vpop.f32.mrf.mxu0
        %3914 = vmatprep.mubr.bf16.mxu0 0
        %3915 = vmatmul.mubr.bf16.gmra.mxu0 %v3740
        %v3916 = vpop.f32.mrf.mxu0
        %v3917 = vpop.f32.mrf.mxu0
        %v3918 = vpop.f32.mrf.mxu0
        %v3919 = vadd.f32 0.0, %v3918
        %v3920 = vpop.f32.mrf.mxu0
        %3921 = vmatprep.mubr.bf16.mxu0 0
        %3922 = vmatmul.mubr.bf16.gmra.mxu0 %v3743
        %v3923 = vpop.f32.mrf.mxu0
        %v3924 = vadd.f32 0.0, %v3923
        %v3925 = vpop.f32.mrf.mxu0
        %v3926 = vpop.f32.mrf.mxu0
        %v3927 = vadd.f32 0.0, %v3926
        %v3928 = vpop.f32.mrf.mxu0
        %3929 = vmatprep.mubr.bf16.mxu0 0
        %3930 = vmatmul.mubr.bf16.gmra.mxu0 %v3746
        %v3931 = vpop.f32.mrf.mxu0
        %v3932 = vadd.f32 0.0, %v3931
        %v3933 = vpop.f32.mrf.mxu0
        %v3934 = vpop.f32.mrf.mxu0
        %v3935 = vadd.f32 0.0, %v3934
        %v3936 = vpop.f32.mrf.mxu0
        %3937 = vmatprep.mubr.bf16.mxu0 0
        %3938 = vmatmul.mubr.bf16.gmra.mxu0 %v3749
        %v3939 = vpop.f32.mrf.mxu0
        %v3940 = vadd.f32 0.0, %v3939
        %v3941 = vpop.f32.mrf.mxu0
        %v3942 = vpop.f32.mrf.mxu0
        %v3943 = vadd.f32 0.0, %v3942
        %v3944 = vpop.f32.mrf.mxu0
        %3945 = vmatprep.mubr.bf16.mxu0 0
        %3946 = vmatmul.mubr.bf16.gmra.mxu0 %v3752
        %v3947 = vpop.f32.mrf.mxu0
        %v3948 = vadd.f32 0.0, %v3947
        %v3949 = vpop.f32.mrf.mxu0
        %v3950 = vpop.f32.mrf.mxu0
        %v3951 = vpop.f32.mrf.mxu0
        %3952 = vmatprep.mubr.bf16.mxu0 0
        %3953 = vmatmul.mubr.bf16.gmra.mxu0 %v3755
        %v3954 = vpop.f32.mrf.mxu0
        %v3955 = vpop.f32.mrf.mxu0
        %v3956 = vpop.f32.mrf.mxu0
        %v3957 = vadd.f32 0.0, %v3956
        %v3958 = vpop.f32.mrf.mxu0
        %3959 = vmatprep.mubr.bf16.mxu0 0
        %3960 = vmatmul.mubr.bf16.gmra.mxu0 %v3758
        %v3961 = vpop.f32.mrf.mxu0
        %v3962 = vadd.f32 0.0, %v3961
        %v3963 = vpop.f32.mrf.mxu0
        %v3964 = vpop.f32.mrf.mxu0
        %v3965 = vadd.f32 0.0, %v3964
        %v3966 = vpop.f32.mrf.mxu0
        %3967 = vmatprep.mubr.bf16.mxu0 0
        %3968 = vmatmul.mubr.bf16.gmra.mxu0 %v3761
        %v3969 = vpop.f32.mrf.mxu0
        %v3970 = vadd.f32 0.0, %v3969
        %v3971 = vpop.f32.mrf.mxu0
        %v3972 = vpop.f32.mrf.mxu0
        %v3973 = vadd.f32 0.0, %v3972
        %v3974 = vpop.f32.mrf.mxu0
        %3975 = vmatprep.mubr.bf16.mxu0 0
        %3976 = vmatmul.mubr.bf16.gmra.mxu0 %v3764
        %v3977 = vpop.f32.mrf.mxu0
        %v3978 = vadd.f32 0.0, %v3977
        %v3979 = vpop.f32.mrf.mxu0
        %v3980 = vpop.f32.mrf.mxu0
        %v3981 = vadd.f32 0.0, %v3980
        %v3982 = vpop.f32.mrf.mxu0
        %3983 = vmatprep.mubr.bf16.mxu0 0
        %3984 = vmatmul.mubr.bf16.gmra.mxu0 %v3767
        %v3985 = vpop.f32.mrf.mxu0
        %v3986 = vadd.f32 0.0, %v3985
        %v3987 = vpop.f32.mrf.mxu0
        %v3988 = vpop.f32.mrf.mxu0
        %v3989 = vpop.f32.mrf.mxu0
        %3990 = vmatprep.mubr.bf16.mxu0 0
        %3991 = vmatmul.mubr.bf16.gmra.mxu0 %v3770
        %v3992 = vpop.f32.mrf.mxu0
        %v3993 = vpop.f32.mrf.mxu0
        %v3994 = vpop.f32.mrf.mxu0
        %v3995 = vadd.f32 0.0, %v3994
        %v3996 = vpop.f32.mrf.mxu0
        %3997 = vmatprep.mubr.bf16.mxu0 0
        %3998 = vmatmul.mubr.bf16.gmra.mxu0 %v3773
        %v3999 = vpop.f32.mrf.mxu0
        %v4000 = vadd.f32 0.0, %v3999
        %v4001 = vpop.f32.mrf.mxu0
        %v4002 = vpop.f32.mrf.mxu0
        %v4003 = vadd.f32 0.0, %v4002
        %v4004 = vpop.f32.mrf.mxu0
        %4005 = vmatprep.mubr.bf16.mxu0 0
        %4006 = vmatmul.mubr.bf16.gmra.mxu0 %v3776
        %v4007 = vpop.f32.mrf.mxu0
        %v4008 = vadd.f32 0.0, %v4007
        %v4009 = vpop.f32.mrf.mxu0
        %v4010 = vpop.f32.mrf.mxu0
        %v4011 = vadd.f32 0.0, %v4010
        %v4012 = vpop.f32.mrf.mxu0
        %4013 = vmatprep.mubr.bf16.mxu0 0
        %4014 = vmatmul.mubr.bf16.gmra.mxu0 %v3779
        %v4015 = vpop.f32.mrf.mxu0
        %v4016 = vadd.f32 0.0, %v4015
        %v4017 = vpop.f32.mrf.mxu0
        %v4018 = vpop.f32.mrf.mxu0
        %v4019 = vadd.f32 0.0, %v4018
        %v4020 = vpop.f32.mrf.mxu0
        %4021 = vmatprep.mubr.bf16.mxu0 0
        %4022 = vmatmul.mubr.bf16.gmra.mxu0 %v3782
        %v4023 = vpop.f32.mrf.mxu0
        %v4024 = vadd.f32 0.0, %v4023
        %v4025 = vpop.f32.mrf.mxu0
        %v4026 = vpop.f32.mrf.mxu0
        %v4027 = vpop.f32.mrf.mxu0
        %4028 = vmatprep.mubr.bf16.mxu0 0
        %4029 = vmatmul.mubr.bf16.gmra.mxu0 %v3785
        %v4030 = vpop.f32.mrf.mxu0
        %v4031 = vpop.f32.mrf.mxu0
        %v4032 = vpop.f32.mrf.mxu0
        %v4033 = vadd.f32 0.0, %v4032
        %v4034 = vpop.f32.mrf.mxu0
        %4035 = vmatprep.mubr.bf16.mxu0 0
        %4036 = vmatmul.mubr.bf16.gmra.mxu0 %v3788
        %v4037 = vpop.f32.mrf.mxu0
        %v4038 = vadd.f32 0.0, %v4037
        %v4039 = vpop.f32.mrf.mxu0
        %v4040 = vpop.f32.mrf.mxu0
        %v4041 = vadd.f32 0.0, %v4040
        %v4042 = vpop.f32.mrf.mxu0
        %4043 = vmatprep.mubr.bf16.mxu0 0
        %4044 = vmatmul.mubr.bf16.gmra.mxu0 %v3791
        %v4045 = vpop.f32.mrf.mxu0
        %v4046 = vadd.f32 0.0, %v4045
        %v4047 = vpop.f32.mrf.mxu0
        %v4048 = vpop.f32.mrf.mxu0
        %v4049 = vadd.f32 0.0, %v4048
        %v4050 = vpop.f32.mrf.mxu0
        %4051 = vmatprep.mubr.bf16.mxu0 0
        %4052 = vmatmul.mubr.bf16.gmra.mxu0 %v3794
        %v4053 = vpop.f32.mrf.mxu0
        %v4054 = vadd.f32 0.0, %v4053
        %v4055 = vpop.f32.mrf.mxu0
        %v4056 = vpop.f32.mrf.mxu0
        %v4057 = vadd.f32 0.0, %v4056
        %v4058 = vpop.f32.mrf.mxu0
        %4059 = vmatprep.mubr.bf16.mxu0 0
        %4060 = vmatmul.mubr.bf16.gmra.mxu0 %v3797
        %v4061 = vpop.f32.mrf.mxu0
        %v4062 = vadd.f32 0.0, %v4061
        %v4063 = vpop.f32.mrf.mxu0
        %v4064 = vpop.f32.mrf.mxu0
        %v4065 = vpop.f32.mrf.mxu0
        %4066 = vmatprep.mubr.bf16.mxu0 0
        %4067 = vmatmul.mubr.bf16.gmra.mxu0 %v3800
        %v4068 = vpop.f32.mrf.mxu0
        %v4069 = vpop.f32.mrf.mxu0
        %v4070 = vpop.f32.mrf.mxu0
        %v4071 = vadd.f32 0.0, %v4070
        %v4072 = vpop.f32.mrf.mxu0
        %4073 = vmatprep.mubr.bf16.mxu0 0
        %4074 = vmatmul.mubr.bf16.gmra.mxu0 %v3803
        %v4075 = vpop.f32.mrf.mxu0
        %v4076 = vadd.f32 0.0, %v4075
        %v4077 = vpop.f32.mrf.mxu0
        %v4078 = vpop.f32.mrf.mxu0
        %v4079 = vadd.f32 0.0, %v4078
        %v4080 = vpop.f32.mrf.mxu0
        %4081 = vmatprep.mubr.bf16.mxu0 0
        %4082 = vmatmul.mubr.bf16.gmra.mxu0 %v3806
        %v4083 = vpop.f32.mrf.mxu0
        %v4084 = vadd.f32 0.0, %v4083
        %v4085 = vpop.f32.mrf.mxu0
        %v4086 = vpop.f32.mrf.mxu0
        %v4087 = vadd.f32 0.0, %v4086
        %v4088 = vpop.f32.mrf.mxu0
        %4089 = vmatprep.mubr.bf16.mxu0 0
        %4090 = vmatmul.mubr.bf16.gmra.mxu0 %v3809
        %v4091 = vpop.f32.mrf.mxu0
        %v4092 = vadd.f32 0.0, %v4091
        %v4093 = vpop.f32.mrf.mxu0
        %v4094 = vpop.f32.mrf.mxu0
        %v4095 = vadd.f32 0.0, %v4094
        %v4096 = vpop.f32.mrf.mxu0
        %4097 = vmatprep.mubr.bf16.mxu0 0
        %4098 = vmatmul.mubr.bf16.gmra.mxu0 %v3812
        %v4099 = vpop.f32.mrf.mxu0
        %v4100 = vadd.f32 0.0, %v4099
        %v4101 = vpop.f32.mrf.mxu0
        %v4102 = vpop.f32.mrf.mxu0
        %v4103 = vpop.f32.mrf.mxu0
        %4104 = vmatprep.mubr.bf16.mxu0 0
        %4105 = vmatmul.mubr.bf16.gmra.mxu0 %v3815
        %v4106 = vpop.f32.mrf.mxu0
        %v4107 = vpop.f32.mrf.mxu0
        %v4108 = vpop.f32.mrf.mxu0
        %v4109 = vadd.f32 0.0, %v4108
        %v4110 = vpop.f32.mrf.mxu0
        %4111 = vmatprep.mubr.bf16.mxu0 0
        %4112 = vmatmul.mubr.bf16.gmra.mxu0 %v3818
        %v4113 = vpop.f32.mrf.mxu0
        %v4114 = vadd.f32 0.0, %v4113
        %v4115 = vpop.f32.mrf.mxu0
        %v4116 = vpop.f32.mrf.mxu0
        %v4117 = vadd.f32 0.0, %v4116
        %v4118 = vpop.f32.mrf.mxu0
        %4119 = vmatprep.mubr.bf16.mxu0 0
        %4120 = vmatmul.mubr.bf16.gmra.mxu0 %v3821
        %v4121 = vpop.f32.mrf.mxu0
        %v4122 = vadd.f32 0.0, %v4121
        %v4123 = vpop.f32.mrf.mxu0
        %v4124 = vpop.f32.mrf.mxu0
        %v4125 = vadd.f32 0.0, %v4124
        %v4126 = vpop.f32.mrf.mxu0
        %4127 = vmatprep.mubr.bf16.mxu0 0
        %4128 = vmatmul.mubr.bf16.gmra.mxu0 %v3824
        %v4129 = vpop.f32.mrf.mxu0
        %v4130 = vadd.f32 0.0, %v4129
        %v4131 = vpop.f32.mrf.mxu0
        %v4132 = vpop.f32.mrf.mxu0
        %v4133 = vadd.f32 0.0, %v4132
        %v4134 = vpop.f32.mrf.mxu0
        %4135 = vmatprep.mubr.bf16.mxu0 0
        %4136 = vmatmul.mubr.bf16.gmra.mxu0 %v3827
        %v4137 = vpop.f32.mrf.mxu0
        %v4138 = vadd.f32 0.0, %v4137
        %v4139 = vpop.f32.mrf.mxu0
        %v4140 = vpop.f32.mrf.mxu0
        %v4141 = vpop.f32.mrf.mxu0
        %4142 = vmatprep.mubr.bf16.mxu0 0
        %4143 = vmatmul.mubr.bf16.gmra.mxu0 %v3830
        %v4144 = vpop.f32.mrf.mxu0
        %v4145 = vpop.f32.mrf.mxu0
        %v4146 = vpop.f32.mrf.mxu0
        %v4147 = vadd.f32 0.0, %v4146
        %v4148 = vpop.f32.mrf.mxu0
        %4149 = vmatprep.mubr.bf16.mxu0 0
        %4150 = vmatmul.mubr.bf16.gmra.mxu0 %v3833
        %v4151 = vpop.f32.mrf.mxu0
        %v4152 = vadd.f32 0.0, %v4151
        %v4153 = vpop.f32.mrf.mxu0
        %v4154 = vpop.f32.mrf.mxu0
        %v4155 = vadd.f32 0.0, %v4154
        %v4156 = vpop.f32.mrf.mxu0
        %4157 = vmatprep.mubr.bf16.mxu0 0
        %4158 = vmatmul.mubr.bf16.gmra.mxu0 %v3836
        %v4159 = vpop.f32.mrf.mxu0
        %v4160 = vadd.f32 0.0, %v4159
        %v4161 = vpop.f32.mrf.mxu0
        %v4162 = vpop.f32.mrf.mxu0
        %v4163 = vadd.f32 0.0, %v4162
        %v4164 = vpop.f32.mrf.mxu0
        %4165 = vmatprep.mubr.bf16.mxu0 0
        %4166 = vmatmul.mubr.bf16.gmra.mxu0 %v3839
        %v4167 = vpop.f32.mrf.mxu0
        %v4168 = vadd.f32 0.0, %v4167
        %v4169 = vpop.f32.mrf.mxu0
        %v4170 = vpop.f32.mrf.mxu0
        %v4171 = vadd.f32 0.0, %v4170
        %v4172 = vpop.f32.mrf.mxu0
        %4173 = vmatprep.mubr.bf16.mxu0 0
        %4174 = vmatmul.mubr.bf16.gmra.mxu0 %v3842
        %v4175 = vpop.f32.mrf.mxu0
        %v4176 = vadd.f32 0.0, %v4175
        %v4177 = vpop.f32.mrf.mxu0
        %v4178 = vpop.f32.mrf.mxu0
        %v4179 = vpop.f32.mrf.mxu0
        %4180 = vdwg.mxu0
        %v4181 = vadd.f32 %v3363, %v3881
        %v4182 = vadd.f32 %v3364, %v3886
        %v4183 = vadd.f32 %v3365, %v3889
        %v4184 = vadd.f32 %v3366, %v3894
        %v4185 = vadd.f32 %v3367, %v3897
        %v4186 = vadd.f32 %v3368, %v3902
        %v4187 = vadd.f32 %v3369, %v3905
        %v4188 = vadd.f32 %v3370, %v3910
        %v4189 = vadd.f32 %v3371, %v3919
        %v4190 = vadd.f32 %v3372, %v3924
        %v4191 = vadd.f32 %v3373, %v3927
        %v4192 = vadd.f32 %v3374, %v3932
        %v4193 = vadd.f32 %v3375, %v3935
        %v4194 = vadd.f32 %v3376, %v3940
        %v4195 = vadd.f32 %v3377, %v3943
        %v4196 = vadd.f32 %v3378, %v3948
        %v4197 = vadd.f32 %v3379, %v3957
        %v4198 = vadd.f32 %v3380, %v3962
        %v4199 = vadd.f32 %v3381, %v3965
        %v4200 = vadd.f32 %v3382, %v3970
        %v4201 = vadd.f32 %v3383, %v3973
        %v4202 = vadd.f32 %v3384, %v3978
        %v4203 = vadd.f32 %v3385, %v3981
        %v4204 = vadd.f32 %v3386, %v3986
        %v4205 = vadd.f32 %v3387, %v3995
        %v4206 = vadd.f32 %v3388, %v4000
        %v4207 = vadd.f32 %v3389, %v4003
        %v4208 = vadd.f32 %v3390, %v4008
        %v4209 = vadd.f32 %v3391, %v4011
        %v4210 = vadd.f32 %v3392, %v4016
        %v4211 = vadd.f32 %v3393, %v4019
        %v4212 = vadd.f32 %v3394, %v4024
        %v4213 = vadd.f32 %v3395, %v4033
        %v4214 = vadd.f32 %v3396, %v4038
        %v4215 = vadd.f32 %v3397, %v4041
        %v4216 = vadd.f32 %v3398, %v4046
        %v4217 = vadd.f32 %v3399, %v4049
        %v4218 = vadd.f32 %v3400, %v4054
        %v4219 = vadd.f32 %v3401, %v4057
        %v4220 = vadd.f32 %v3402, %v4062
        %v4221 = vadd.f32 %v3403, %v4071
        %v4222 = vadd.f32 %v3404, %v4076
        %v4223 = vadd.f32 %v3405, %v4079
        %v4224 = vadd.f32 %v3406, %v4084
        %v4225 = vadd.f32 %v3407, %v4087
        %v4226 = vadd.f32 %v3408, %v4092
        %v4227 = vadd.f32 %v3409, %v4095
        %v4228 = vadd.f32 %v3410, %v4100
        %v4229 = vadd.f32 %v3411, %v4109
        %v4230 = vadd.f32 %v3412, %v4114
        %v4231 = vadd.f32 %v3413, %v4117
        %v4232 = vadd.f32 %v3414, %v4122
        %v4233 = vadd.f32 %v3415, %v4125
        %v4234 = vadd.f32 %v3416, %v4130
        %v4235 = vadd.f32 %v3417, %v4133
        %v4236 = vadd.f32 %v3418, %v4138
        %v4237 = vadd.f32 %v3419, %v4147
        %v4238 = vadd.f32 %v3420, %v4152
        %v4239 = vadd.f32 %v3421, %v4155
        %v4240 = vadd.f32 %v3422, %v4160
        %v4241 = vadd.f32 %v3423, %v4163
        %v4242 = vadd.f32 %v3424, %v4168
        %v4243 = vadd.f32 %v3425, %v4171
        %v4244 = vadd.f32 %v3426, %v4176
        %v4245 = vld [vmem:[#allocation2 + $0x2c] sm:$0xf]
        %v4246 = vld [vmem:[#allocation2 + $0x30] sm:$0xf]
        %v4247 = vld [vmem:[#allocation2 + $0x34] sm:$0xf]
        %v4248 = vld [vmem:[#allocation2 + $0x38] sm:$0xf]
        %v4249 = vld [vmem:[#allocation2 + $0x3c] sm:$0xf]
        %v4250 = vld [vmem:[#allocation2 + $0x40] sm:$0xf]
        %v4251 = vld [vmem:[#allocation2 + $0x44] sm:$0xf]
        %v4252 = vld [vmem:[#allocation2 + $0x48] sm:$0xf]
        %v4253 = vld [vmem:[#allocation2 + $0x4c] sm:$0xf]
        %v4254 = vld [vmem:[#allocation2 + $0x50] sm:$0xf]
        %v4255 = vld [vmem:[#allocation2 + $0x54] sm:$0xf]
        %v4256 = vld [vmem:[#allocation2 + $0x58] sm:$0xf]
        %v4257 = vld [vmem:[#allocation2 + $0x5c] sm:$0xf]
        %v4258 = vld [vmem:[#allocation2 + $0x60] sm:$0xf]
        %v4259 = vld [vmem:[#allocation2 + $0x64] sm:$0xf]
        %v4260 = vld [vmem:[#allocation2 + $0x68] sm:$0xf]
        %v4261 = vld [vmem:[#allocation2 + $0x6c] sm:$0xf]
        %v4262 = vld [vmem:[#allocation2 + $0x70] sm:$0xf]
        %v4263 = vld [vmem:[#allocation2 + $0x74] sm:$0xf]
        %v4264 = vld [vmem:[#allocation2 + $0x78] sm:$0xf]
        %v4265 = vld [vmem:[#allocation2 + $0x7c] sm:$0xf]
        %v4266 = vld [vmem:[#allocation2 + $0x80] sm:$0xf]
        %v4267 = vld [vmem:[#allocation2 + $0x84] sm:$0xf]
        %v4268 = vld [vmem:[#allocation2 + $0x88] sm:$0xf]
        %v4269 = vld [vmem:[#allocation2 + $0x8c] sm:$0xf]
        %v4270 = vld [vmem:[#allocation2 + $0x90] sm:$0xf]
        %v4271 = vld [vmem:[#allocation2 + $0x94] sm:$0xf]
        %v4272 = vld [vmem:[#allocation2 + $0x98] sm:$0xf]
        %v4273 = vld [vmem:[#allocation2 + $0x9c] sm:$0xf]
        %v4274 = vld [vmem:[#allocation2 + $0xa0] sm:$0xf]
        %v4275 = vld [vmem:[#allocation2 + $0xa4] sm:$0xf]
        %v4276 = vld [vmem:[#allocation2 + $0xa8] sm:$0xf]
        %v4277 = vld [vmem:[#allocation2 + $0xac] sm:$0xf]
        %v4278 = vld [vmem:[#allocation2 + $0xb0] sm:$0xf]
        %v4279 = vld [vmem:[#allocation2 + $0xb4] sm:$0xf]
        %v4280 = vld [vmem:[#allocation2 + $0xb8] sm:$0xf]
        %v4281 = vld [vmem:[#allocation2 + $0xbc] sm:$0xf]
        %v4282 = vld [vmem:[#allocation2 + $0xc0] sm:$0xf]
        %v4283 = vld [vmem:[#allocation2 + $0xc4] sm:$0xf]
        %v4284 = vld [vmem:[#allocation2 + $0xc8] sm:$0xf]
        %v4285 = vld [vmem:[#allocation2 + $0xcc] sm:$0xf]
        %v4286 = vld [vmem:[#allocation2 + $0xd0] sm:$0xf]
        %v4287 = vld [vmem:[#allocation2 + $0xd4] sm:$0xf]
        %v4288 = vld [vmem:[#allocation2 + $0xd8] sm:$0xf]
        %v4289 = vld [vmem:[#allocation2 + $0xdc] sm:$0xf]
        %v4290 = vld [vmem:[#allocation2 + $0xe0] sm:$0xf]
        %v4291 = vld [vmem:[#allocation2 + $0xe4] sm:$0xf]
        %v4292 = vld [vmem:[#allocation2 + $0xe8] sm:$0xf]
        %v4293 = vld [vmem:[#allocation2 + $0xec] sm:$0xf]
        %v4294 = vld [vmem:[#allocation2 + $0xf0] sm:$0xf]
        %v4295 = vld [vmem:[#allocation2 + $0xf4] sm:$0xf]
        %v4296 = vld [vmem:[#allocation2 + $0xf8] sm:$0xf]
        %v4297 = vld [vmem:[#allocation2 + $0xfc] sm:$0xf]
        %v4298 = vld [vmem:[#allocation2 + $0x100] sm:$0xf]
        %v4299 = vld [vmem:[#allocation2 + $0x104] sm:$0xf]
        %v4300 = vld [vmem:[#allocation2 + $0x108] sm:$0xf]
        %v4301 = vld [vmem:[#allocation2 + $0x10c] sm:$0xf]
        %v4302 = vld [vmem:[#allocation2 + $0x110] sm:$0xf]
        %v4303 = vld [vmem:[#allocation2 + $0x114] sm:$0xf]
        %v4304 = vld [vmem:[#allocation2 + $0x118] sm:$0xf]
        %v4305 = vld [vmem:[#allocation2 + $0x11c] sm:$0xf]
        %v4306 = vld [vmem:[#allocation2 + $0x120] sm:$0xf]
        %v4307 = vld [vmem:[#allocation2 + $0x124] sm:$0xf]
        %v4308 = vld [vmem:[#allocation2 + $0x128] sm:$0xf]
        %v4309 = vld [vmem:[#allocation2 + $0x12c] sm:$0xf]
        %v4310 = vld [vmem:[#allocation2 + $0x130] sm:$0xf]
        %v4311 = vld [vmem:[#allocation2 + $0x134] sm:$0xf]
        %v4312 = vld [vmem:[#allocation2 + $0x138] sm:$0xf]
        %v4313 = vld [vmem:[#allocation2 + $0x13c] sm:$0xf]
        %v4314 = vld [vmem:[#allocation2 + $0x140] sm:$0xf]
        %v4315 = vld [vmem:[#allocation2 + $0x144] sm:$0xf]
        %v4316 = vld [vmem:[#allocation2 + $0x148] sm:$0xf]
        %v4317 = vld [vmem:[#allocation2 + $0x14c] sm:$0xf]
        %v4318 = vld [vmem:[#allocation2 + $0x150] sm:$0xf]
        %v4319 = vld [vmem:[#allocation2 + $0x154] sm:$0xf]
        %v4320 = vld [vmem:[#allocation2 + $0x158] sm:$0xf]
        %v4321 = vld [vmem:[#allocation2 + $0x15c] sm:$0xf]
        %v4322 = vld [vmem:[#allocation2 + $0x160] sm:$0xf]
        %v4323 = vld [vmem:[#allocation2 + $0x164] sm:$0xf]
        %v4324 = vld [vmem:[#allocation2 + $0x168] sm:$0xf]
        %s4325 = scalar_lea.vmem %s2, 64
        %v4326 = vld [vmem:[%s4325] sm:$0xf]
        %v4327 = vld [vmem:[%s4325 + $0x4] sm:$0xf]
        %v4328 = vld [vmem:[%s4325 + $0x8] sm:$0xf]
        %v4329 = vld [vmem:[%s4325 + $0xc] sm:$0xf]
        %v4410 = vunpack.c.l.b16 %v4245
        %v4411 = vunpack.c.l.b16 %v4246
        %v4412 = vunpack.c.l.b16 %v4247
        %v4413 = vunpack.c.l.b16 %v4248
        %v4414 = vunpack.c.l.b16 %v4249
        %v4415 = vunpack.c.l.b16 %v4250
        %v4416 = vunpack.c.l.b16 %v4251
        %v4417 = vunpack.c.l.b16 %v4252
        %v4418 = vunpack.c.l.b16 %v4253
        %v4419 = vunpack.c.l.b16 %v4254
        %v4420 = vunpack.c.l.b16 %v4255
        %v4421 = vunpack.c.l.b16 %v4256
        %v4422 = vunpack.c.l.b16 %v4257
        %v4423 = vunpack.c.l.b16 %v4258
        %v4424 = vunpack.c.l.b16 %v4259
        %v4425 = vunpack.c.l.b16 %v4260
        %v4426 = vunpack.c.l.b16 %v4261
        %v4427 = vunpack.c.l.b16 %v4262
        %v4428 = vunpack.c.l.b16 %v4263
        %v4429 = vunpack.c.l.b16 %v4264
        %v4430 = vunpack.c.l.b16 %v4265
        %v4431 = vunpack.c.l.b16 %v4266
        %v4432 = vunpack.c.l.b16 %v4267
        %v4433 = vunpack.c.l.b16 %v4268
        %v4434 = vunpack.c.l.b16 %v4269
        %v4435 = vunpack.c.l.b16 %v4270
        %v4436 = vunpack.c.l.b16 %v4271
        %v4437 = vunpack.c.l.b16 %v4272
        %v4438 = vunpack.c.l.b16 %v4273
        %v4439 = vunpack.c.l.b16 %v4274
        %v4440 = vunpack.c.l.b16 %v4275
        %v4441 = vunpack.c.l.b16 %v4276
        %v4442 = vunpack.c.l.b16 %v4277
        %v4443 = vunpack.c.l.b16 %v4278
        %v4444 = vunpack.c.l.b16 %v4279
        %v4445 = vunpack.c.l.b16 %v4280
        %v4446 = vunpack.c.l.b16 %v4281
        %v4447 = vunpack.c.l.b16 %v4282
        %v4448 = vunpack.c.l.b16 %v4283
        %v4449 = vunpack.c.l.b16 %v4284
        %v4450 = vunpack.c.l.b16 %v4285
        %v4451 = vunpack.c.l.b16 %v4286
        %v4452 = vunpack.c.l.b16 %v4287
        %v4453 = vunpack.c.l.b16 %v4288
        %v4454 = vunpack.c.l.b16 %v4289
        %v4455 = vunpack.c.l.b16 %v4290
        %v4456 = vunpack.c.l.b16 %v4291
        %v4457 = vunpack.c.l.b16 %v4292
        %v4458 = vunpack.c.l.b16 %v4293
        %v4459 = vunpack.c.l.b16 %v4294
        %v4460 = vunpack.c.l.b16 %v4295
        %v4461 = vunpack.c.l.b16 %v4296
        %v4462 = vunpack.c.l.b16 %v4297
        %v4463 = vunpack.c.l.b16 %v4298
        %v4464 = vunpack.c.l.b16 %v4299
        %v4465 = vunpack.c.l.b16 %v4300
        %v4466 = vunpack.c.l.b16 %v4301
        %v4467 = vunpack.c.l.b16 %v4302
        %v4468 = vunpack.c.l.b16 %v4303
        %v4469 = vunpack.c.l.b16 %v4304
        %v4470 = vunpack.c.l.b16 %v4305
        %v4471 = vunpack.c.l.b16 %v4306
        %v4472 = vunpack.c.l.b16 %v4307
        %v4473 = vunpack.c.l.b16 %v4308
        %v4474 = vunpack.c.l.b16 %v4309
        %v4475 = vunpack.c.l.b16 %v4310
        %v4476 = vunpack.c.l.b16 %v4311
        %v4477 = vunpack.c.l.b16 %v4312
        %v4478 = vunpack.c.l.b16 %v4313
        %v4479 = vunpack.c.l.b16 %v4314
        %v4480 = vunpack.c.l.b16 %v4315
        %v4481 = vunpack.c.l.b16 %v4316
        %v4482 = vunpack.c.l.b16 %v4317
        %v4483 = vunpack.c.l.b16 %v4318
        %v4484 = vunpack.c.l.b16 %v4319
        %v4485 = vunpack.c.l.b16 %v4320
        %v4486 = vunpack.c.l.b16 %v4321
        %v4487 = vunpack.c.l.b16 %v4322
        %v4488 = vunpack.c.l.b16 %v4323
        %v4489 = vunpack.c.l.b16 %v4324
        %v4490 = vpack.c.b16 %v4411, %v4410
        %v4491 = vpack.c.b16 %v4413, %v4412
        %v4492 = vpack.c.b16 %v4415, %v4414
        %v4493 = vpack.c.b16 %v4417, %v4416
        %v4494 = vpack.c.b16 %v4419, %v4418
        %v4495 = vpack.c.b16 %v4421, %v4420
        %v4496 = vpack.c.b16 %v4423, %v4422
        %v4497 = vpack.c.b16 %v4425, %v4424
        %v4498 = vpack.c.b16 %v4427, %v4426
        %v4499 = vpack.c.b16 %v4429, %v4428
        %v4500 = vpack.c.b16 %v4431, %v4430
        %v4501 = vpack.c.b16 %v4433, %v4432
        %v4502 = vpack.c.b16 %v4435, %v4434
        %v4503 = vpack.c.b16 %v4437, %v4436
        %v4504 = vpack.c.b16 %v4439, %v4438
        %v4505 = vpack.c.b16 %v4441, %v4440
        %v4506 = vpack.c.b16 %v4443, %v4442
        %v4507 = vpack.c.b16 %v4445, %v4444
        %v4508 = vpack.c.b16 %v4447, %v4446
        %v4509 = vpack.c.b16 %v4449, %v4448
        %v4510 = vpack.c.b16 %v4451, %v4450
        %v4511 = vpack.c.b16 %v4453, %v4452
        %v4512 = vpack.c.b16 %v4455, %v4454
        %v4513 = vpack.c.b16 %v4457, %v4456
        %v4514 = vpack.c.b16 %v4459, %v4458
        %v4515 = vpack.c.b16 %v4461, %v4460
        %v4516 = vpack.c.b16 %v4463, %v4462
        %v4517 = vpack.c.b16 %v4465, %v4464
        %v4518 = vpack.c.b16 %v4467, %v4466
        %v4519 = vpack.c.b16 %v4469, %v4468
        %v4520 = vpack.c.b16 %v4471, %v4470
        %v4521 = vpack.c.b16 %v4473, %v4472
        %v4522 = vpack.c.b16 %v4475, %v4474
        %v4523 = vpack.c.b16 %v4477, %v4476
        %v4524 = vpack.c.b16 %v4479, %v4478
        %v4525 = vpack.c.b16 %v4481, %v4480
        %v4526 = vpack.c.b16 %v4483, %v4482
        %v4527 = vpack.c.b16 %v4485, %v4484
        %v4528 = vpack.c.b16 %v4487, %v4486
        %v4529 = vpack.c.b16 %v4489, %v4488
        %v4534 = vunpack.c.l.b16 %v4326
        %v4535 = vunpack.c.l.b16 %v4327
        %v4536 = vunpack.c.l.b16 %v4328
        %v4537 = vunpack.c.l.b16 %v4329
        %v4538 = vpack.c.b16 %v4535, %v4534
        %v4539 = vpack.c.b16 %v4537, %v4536
        %v4543 = vsel %vm1640, %v4490, 0
        %v4546 = vsel %vm1640, %v4491, 0
        %v4549 = vsel %vm1640, %v4492, 0
        %v4552 = vsel %vm1640, %v4493, 0
        %v4555 = vsel %vm1640, %v4494, 0
        %v4558 = vsel %vm1640, %v4495, 0
        %v4561 = vsel %vm1640, %v4496, 0
        %v4564 = vsel %vm1640, %v4497, 0
        %v4567 = vsel %vm1640, %v4498, 0
        %v4570 = vsel %vm1640, %v4499, 0
        %v4573 = vsel %vm1640, %v4500, 0
        %v4576 = vsel %vm1640, %v4501, 0
        %v4579 = vsel %vm1640, %v4502, 0
        %v4582 = vsel %vm1640, %v4503, 0
        %v4585 = vsel %vm1640, %v4504, 0
        %v4588 = vsel %vm1640, %v4505, 0
        %v4591 = vsel %vm1640, %v4506, 0
        %v4594 = vsel %vm1640, %v4507, 0
        %v4597 = vsel %vm1640, %v4508, 0
        %v4600 = vsel %vm1640, %v4509, 0
        %v4603 = vsel %vm1640, %v4510, 0
        %v4606 = vsel %vm1640, %v4511, 0
        %v4609 = vsel %vm1640, %v4512, 0
        %v4612 = vsel %vm1640, %v4513, 0
        %v4615 = vsel %vm1640, %v4514, 0
        %v4618 = vsel %vm1640, %v4515, 0
        %v4621 = vsel %vm1640, %v4516, 0
        %v4624 = vsel %vm1640, %v4517, 0
        %v4627 = vsel %vm1640, %v4518, 0
        %v4630 = vsel %vm1640, %v4519, 0
        %v4633 = vsel %vm1640, %v4520, 0
        %v4636 = vsel %vm1640, %v4521, 0
        %v4639 = vsel %vm1640, %v4522, 0
        %v4642 = vsel %vm1640, %v4523, 0
        %v4645 = vsel %vm1640, %v4524, 0
        %v4648 = vsel %vm1640, %v4525, 0
        %v4651 = vsel %vm1640, %v4526, 0
        %v4654 = vsel %vm1640, %v4527, 0
        %v4657 = vsel %vm1640, %v4528, 0
        %v4660 = vsel %vm1640, %v4529, 0
        %4662 = vmatprep.subr.bf16.mxu0 0
        %4663 = vmatpush1.bf16.msra.mxu0 0
        %4664 = vmatprep.subr.bf16.mxu0 0
        %4665 = vmatpush1.bf16.msra.mxu0 0
        %4666 = vmatprep.subr.bf16.mxu0 0
        %4667 = vmatpush1.bf16.msra.mxu0 0
        %4668 = vmatprep.subr.bf16.mxu0 0
        %4669 = vmatpush1.bf16.msra.mxu0 0
        %4670 = vmatprep.subr.bf16.mxu0 0
        %4671 = vmatpush1.bf16.msra.mxu0 0
        %4672 = vmatprep.subr.bf16.mxu0 0
        %4673 = vmatpush1.bf16.msra.mxu0 0
        %4674 = vmatprep.subr.bf16.mxu0 0
        %4675 = vmatpush1.bf16.msra.mxu0 %v4539
        %4676 = vmatprep.subr.bf16.mxu0 0
        %4677 = vmatpush1.bf16.msra.mxu0 %v4538
        %4678 = vmatprep.subr.bf16.mxu0 0
        %4679 = vmatpush2.bf16.msra.mxu0 0
        %4680 = vmatprep.subr.bf16.mxu0 0
        %4681 = vmatpush2.bf16.msra.mxu0 0
        %4682 = vmatprep.subr.bf16.mxu0 0
        %4683 = vmatpush2.bf16.msra.mxu0 0
        %4684 = vmatprep.subr.bf16.mxu0 0
        %4685 = vmatpush2.bf16.msra.mxu0 0
        %4686 = vmatprep.subr.bf16.mxu0 0
        %4687 = vmatpush2.bf16.msra.mxu0 0
        %4688 = vmatprep.subr.bf16.mxu0 0
        %4689 = vmatpush2.bf16.msra.mxu0 0
        %4690 = vmatprep.subr.bf16.mxu0 0
        %4691 = vmatpush2.bf16.msra.mxu0 0
        %4692 = vmatprep.subr.bf16.mxu0 0
        %4693 = vmatpush2.bf16.msra.mxu0 0
        %4694 = vmatprep.mubr.bf16.mxu0 0
        %4695 = vmatmul.mubr.bf16.gmra.mxu0 %v4543
        %v4696 = vpop.f32.mrf.mxu0
        %v4697 = vpop.f32.mrf.mxu0
        %v4698 = vpop.f32.mrf.mxu0
        %v4699 = vadd.f32 0.0, %v4698
        %v4700 = vpop.f32.mrf.mxu0
        %4701 = vmatprep.mubr.bf16.mxu0 0
        %4702 = vmatmul.mubr.bf16.gmra.mxu0 %v4546
        %v4703 = vpop.f32.mrf.mxu0
        %v4704 = vadd.f32 0.0, %v4703
        %v4705 = vpop.f32.mrf.mxu0
        %v4706 = vpop.f32.mrf.mxu0
        %v4707 = vadd.f32 0.0, %v4706
        %v4708 = vpop.f32.mrf.mxu0
        %4709 = vmatprep.mubr.bf16.mxu0 0
        %4710 = vmatmul.mubr.bf16.gmra.mxu0 %v4549
        %v4711 = vpop.f32.mrf.mxu0
        %v4712 = vadd.f32 0.0, %v4711
        %v4713 = vpop.f32.mrf.mxu0
        %v4714 = vpop.f32.mrf.mxu0
        %v4715 = vadd.f32 0.0, %v4714
        %v4716 = vpop.f32.mrf.mxu0
        %4717 = vmatprep.mubr.bf16.mxu0 0
        %4718 = vmatmul.mubr.bf16.gmra.mxu0 %v4552
        %v4719 = vpop.f32.mrf.mxu0
        %v4720 = vadd.f32 0.0, %v4719
        %v4721 = vpop.f32.mrf.mxu0
        %v4722 = vpop.f32.mrf.mxu0
        %v4723 = vadd.f32 0.0, %v4722
        %v4724 = vpop.f32.mrf.mxu0
        %4725 = vmatprep.mubr.bf16.mxu0 0
        %4726 = vmatmul.mubr.bf16.gmra.mxu0 %v4555
        %v4727 = vpop.f32.mrf.mxu0
        %v4728 = vadd.f32 0.0, %v4727
        %v4729 = vpop.f32.mrf.mxu0
        %v4730 = vpop.f32.mrf.mxu0
        %v4731 = vpop.f32.mrf.mxu0
        %4732 = vmatprep.mubr.bf16.mxu0 0
        %4733 = vmatmul.mubr.bf16.gmra.mxu0 %v4558
        %v4734 = vpop.f32.mrf.mxu0
        %v4735 = vpop.f32.mrf.mxu0
        %v4736 = vpop.f32.mrf.mxu0
        %v4737 = vadd.f32 0.0, %v4736
        %v4738 = vpop.f32.mrf.mxu0
        %4739 = vmatprep.mubr.bf16.mxu0 0
        %4740 = vmatmul.mubr.bf16.gmra.mxu0 %v4561
        %v4741 = vpop.f32.mrf.mxu0
        %v4742 = vadd.f32 0.0, %v4741
        %v4743 = vpop.f32.mrf.mxu0
        %v4744 = vpop.f32.mrf.mxu0
        %v4745 = vadd.f32 0.0, %v4744
        %v4746 = vpop.f32.mrf.mxu0
        %4747 = vmatprep.mubr.bf16.mxu0 0
        %4748 = vmatmul.mubr.bf16.gmra.mxu0 %v4564
        %v4749 = vpop.f32.mrf.mxu0
        %v4750 = vadd.f32 0.0, %v4749
        %v4751 = vpop.f32.mrf.mxu0
        %v4752 = vpop.f32.mrf.mxu0
        %v4753 = vadd.f32 0.0, %v4752
        %v4754 = vpop.f32.mrf.mxu0
        %4755 = vmatprep.mubr.bf16.mxu0 0
        %4756 = vmatmul.mubr.bf16.gmra.mxu0 %v4567
        %v4757 = vpop.f32.mrf.mxu0
        %v4758 = vadd.f32 0.0, %v4757
        %v4759 = vpop.f32.mrf.mxu0
        %v4760 = vpop.f32.mrf.mxu0
        %v4761 = vadd.f32 0.0, %v4760
        %v4762 = vpop.f32.mrf.mxu0
        %4763 = vmatprep.mubr.bf16.mxu0 0
        %4764 = vmatmul.mubr.bf16.gmra.mxu0 %v4570
        %v4765 = vpop.f32.mrf.mxu0
        %v4766 = vadd.f32 0.0, %v4765
        %v4767 = vpop.f32.mrf.mxu0
        %v4768 = vpop.f32.mrf.mxu0
        %v4769 = vpop.f32.mrf.mxu0
        %4770 = vmatprep.mubr.bf16.mxu0 0
        %4771 = vmatmul.mubr.bf16.gmra.mxu0 %v4573
        %v4772 = vpop.f32.mrf.mxu0
        %v4773 = vpop.f32.mrf.mxu0
        %v4774 = vpop.f32.mrf.mxu0
        %v4775 = vadd.f32 0.0, %v4774
        %v4776 = vpop.f32.mrf.mxu0
        %4777 = vmatprep.mubr.bf16.mxu0 0
        %4778 = vmatmul.mubr.bf16.gmra.mxu0 %v4576
        %v4779 = vpop.f32.mrf.mxu0
        %v4780 = vadd.f32 0.0, %v4779
        %v4781 = vpop.f32.mrf.mxu0
        %v4782 = vpop.f32.mrf.mxu0
        %v4783 = vadd.f32 0.0, %v4782
        %v4784 = vpop.f32.mrf.mxu0
        %4785 = vmatprep.mubr.bf16.mxu0 0
        %4786 = vmatmul.mubr.bf16.gmra.mxu0 %v4579
        %v4787 = vpop.f32.mrf.mxu0
        %v4788 = vadd.f32 0.0, %v4787
        %v4789 = vpop.f32.mrf.mxu0
        %v4790 = vpop.f32.mrf.mxu0
        %v4791 = vadd.f32 0.0, %v4790
        %v4792 = vpop.f32.mrf.mxu0
        %4793 = vmatprep.mubr.bf16.mxu0 0
        %4794 = vmatmul.mubr.bf16.gmra.mxu0 %v4582
        %v4795 = vpop.f32.mrf.mxu0
        %v4796 = vadd.f32 0.0, %v4795
        %v4797 = vpop.f32.mrf.mxu0
        %v4798 = vpop.f32.mrf.mxu0
        %v4799 = vadd.f32 0.0, %v4798
        %v4800 = vpop.f32.mrf.mxu0
        %4801 = vmatprep.mubr.bf16.mxu0 0
        %4802 = vmatmul.mubr.bf16.gmra.mxu0 %v4585
        %v4803 = vpop.f32.mrf.mxu0
        %v4804 = vadd.f32 0.0, %v4803
        %v4805 = vpop.f32.mrf.mxu0
        %v4806 = vpop.f32.mrf.mxu0
        %v4807 = vpop.f32.mrf.mxu0
        %4808 = vmatprep.mubr.bf16.mxu0 0
        %4809 = vmatmul.mubr.bf16.gmra.mxu0 %v4588
        %v4810 = vpop.f32.mrf.mxu0
        %v4811 = vpop.f32.mrf.mxu0
        %v4812 = vpop.f32.mrf.mxu0
        %v4813 = vadd.f32 0.0, %v4812
        %v4814 = vpop.f32.mrf.mxu0
        %4815 = vmatprep.mubr.bf16.mxu0 0
        %4816 = vmatmul.mubr.bf16.gmra.mxu0 %v4591
        %v4817 = vpop.f32.mrf.mxu0
        %v4818 = vadd.f32 0.0, %v4817
        %v4819 = vpop.f32.mrf.mxu0
        %v4820 = vpop.f32.mrf.mxu0
        %v4821 = vadd.f32 0.0, %v4820
        %v4822 = vpop.f32.mrf.mxu0
        %4823 = vmatprep.mubr.bf16.mxu0 0
        %4824 = vmatmul.mubr.bf16.gmra.mxu0 %v4594
        %v4825 = vpop.f32.mrf.mxu0
        %v4826 = vadd.f32 0.0, %v4825
        %v4827 = vpop.f32.mrf.mxu0
        %v4828 = vpop.f32.mrf.mxu0
        %v4829 = vadd.f32 0.0, %v4828
        %v4830 = vpop.f32.mrf.mxu0
        %4831 = vmatprep.mubr.bf16.mxu0 0
        %4832 = vmatmul.mubr.bf16.gmra.mxu0 %v4597
        %v4833 = vpop.f32.mrf.mxu0
        %v4834 = vadd.f32 0.0, %v4833
        %v4835 = vpop.f32.mrf.mxu0
        %v4836 = vpop.f32.mrf.mxu0
        %v4837 = vadd.f32 0.0, %v4836
        %v4838 = vpop.f32.mrf.mxu0
        %4839 = vmatprep.mubr.bf16.mxu0 0
        %4840 = vmatmul.mubr.bf16.gmra.mxu0 %v4600
        %v4841 = vpop.f32.mrf.mxu0
        %v4842 = vadd.f32 0.0, %v4841
        %v4843 = vpop.f32.mrf.mxu0
        %v4844 = vpop.f32.mrf.mxu0
        %v4845 = vpop.f32.mrf.mxu0
        %4846 = vmatprep.mubr.bf16.mxu0 0
        %4847 = vmatmul.mubr.bf16.gmra.mxu0 %v4603
        %v4848 = vpop.f32.mrf.mxu0
        %v4849 = vpop.f32.mrf.mxu0
        %v4850 = vpop.f32.mrf.mxu0
        %v4851 = vadd.f32 0.0, %v4850
        %v4852 = vpop.f32.mrf.mxu0
        %4853 = vmatprep.mubr.bf16.mxu0 0
        %4854 = vmatmul.mubr.bf16.gmra.mxu0 %v4606
        %v4855 = vpop.f32.mrf.mxu0
        %v4856 = vadd.f32 0.0, %v4855
        %v4857 = vpop.f32.mrf.mxu0
        %v4858 = vpop.f32.mrf.mxu0
        %v4859 = vadd.f32 0.0, %v4858
        %v4860 = vpop.f32.mrf.mxu0
        %4861 = vmatprep.mubr.bf16.mxu0 0
        %4862 = vmatmul.mubr.bf16.gmra.mxu0 %v4609
        %v4863 = vpop.f32.mrf.mxu0
        %v4864 = vadd.f32 0.0, %v4863
        %v4865 = vpop.f32.mrf.mxu0
        %v4866 = vpop.f32.mrf.mxu0
        %v4867 = vadd.f32 0.0, %v4866
        %v4868 = vpop.f32.mrf.mxu0
        %4869 = vmatprep.mubr.bf16.mxu0 0
        %4870 = vmatmul.mubr.bf16.gmra.mxu0 %v4612
        %v4871 = vpop.f32.mrf.mxu0
        %v4872 = vadd.f32 0.0, %v4871
        %v4873 = vpop.f32.mrf.mxu0
        %v4874 = vpop.f32.mrf.mxu0
        %v4875 = vadd.f32 0.0, %v4874
        %v4876 = vpop.f32.mrf.mxu0
        %4877 = vmatprep.mubr.bf16.mxu0 0
        %4878 = vmatmul.mubr.bf16.gmra.mxu0 %v4615
        %v4879 = vpop.f32.mrf.mxu0
        %v4880 = vadd.f32 0.0, %v4879
        %v4881 = vpop.f32.mrf.mxu0
        %v4882 = vpop.f32.mrf.mxu0
        %v4883 = vpop.f32.mrf.mxu0
        %4884 = vmatprep.mubr.bf16.mxu0 0
        %4885 = vmatmul.mubr.bf16.gmra.mxu0 %v4618
        %v4886 = vpop.f32.mrf.mxu0
        %v4887 = vpop.f32.mrf.mxu0
        %v4888 = vpop.f32.mrf.mxu0
        %v4889 = vadd.f32 0.0, %v4888
        %v4890 = vpop.f32.mrf.mxu0
        %4891 = vmatprep.mubr.bf16.mxu0 0
        %4892 = vmatmul.mubr.bf16.gmra.mxu0 %v4621
        %v4893 = vpop.f32.mrf.mxu0
        %v4894 = vadd.f32 0.0, %v4893
        %v4895 = vpop.f32.mrf.mxu0
        %v4896 = vpop.f32.mrf.mxu0
        %v4897 = vadd.f32 0.0, %v4896
        %v4898 = vpop.f32.mrf.mxu0
        %4899 = vmatprep.mubr.bf16.mxu0 0
        %4900 = vmatmul.mubr.bf16.gmra.mxu0 %v4624
        %v4901 = vpop.f32.mrf.mxu0
        %v4902 = vadd.f32 0.0, %v4901
        %v4903 = vpop.f32.mrf.mxu0
        %v4904 = vpop.f32.mrf.mxu0
        %v4905 = vadd.f32 0.0, %v4904
        %v4906 = vpop.f32.mrf.mxu0
        %4907 = vmatprep.mubr.bf16.mxu0 0
        %4908 = vmatmul.mubr.bf16.gmra.mxu0 %v4627
        %v4909 = vpop.f32.mrf.mxu0
        %v4910 = vadd.f32 0.0, %v4909
        %v4911 = vpop.f32.mrf.mxu0
        %v4912 = vpop.f32.mrf.mxu0
        %v4913 = vadd.f32 0.0, %v4912
        %v4914 = vpop.f32.mrf.mxu0
        %4915 = vmatprep.mubr.bf16.mxu0 0
        %4916 = vmatmul.mubr.bf16.gmra.mxu0 %v4630
        %v4917 = vpop.f32.mrf.mxu0
        %v4918 = vadd.f32 0.0, %v4917
        %v4919 = vpop.f32.mrf.mxu0
        %v4920 = vpop.f32.mrf.mxu0
        %v4921 = vpop.f32.mrf.mxu0
        %4922 = vmatprep.mubr.bf16.mxu0 0
        %4923 = vmatmul.mubr.bf16.gmra.mxu0 %v4633
        %v4924 = vpop.f32.mrf.mxu0
        %v4925 = vpop.f32.mrf.mxu0
        %v4926 = vpop.f32.mrf.mxu0
        %v4927 = vadd.f32 0.0, %v4926
        %v4928 = vpop.f32.mrf.mxu0
        %4929 = vmatprep.mubr.bf16.mxu0 0
        %4930 = vmatmul.mubr.bf16.gmra.mxu0 %v4636
        %v4931 = vpop.f32.mrf.mxu0
        %v4932 = vadd.f32 0.0, %v4931
        %v4933 = vpop.f32.mrf.mxu0
        %v4934 = vpop.f32.mrf.mxu0
        %v4935 = vadd.f32 0.0, %v4934
        %v4936 = vpop.f32.mrf.mxu0
        %4937 = vmatprep.mubr.bf16.mxu0 0
        %4938 = vmatmul.mubr.bf16.gmra.mxu0 %v4639
        %v4939 = vpop.f32.mrf.mxu0
        %v4940 = vadd.f32 0.0, %v4939
        %v4941 = vpop.f32.mrf.mxu0
        %v4942 = vpop.f32.mrf.mxu0
        %v4943 = vadd.f32 0.0, %v4942
        %v4944 = vpop.f32.mrf.mxu0
        %4945 = vmatprep.mubr.bf16.mxu0 0
        %4946 = vmatmul.mubr.bf16.gmra.mxu0 %v4642
        %v4947 = vpop.f32.mrf.mxu0
        %v4948 = vadd.f32 0.0, %v4947
        %v4949 = vpop.f32.mrf.mxu0
        %v4950 = vpop.f32.mrf.mxu0
        %v4951 = vadd.f32 0.0, %v4950
        %v4952 = vpop.f32.mrf.mxu0
        %4953 = vmatprep.mubr.bf16.mxu0 0
        %4954 = vmatmul.mubr.bf16.gmra.mxu0 %v4645
        %v4955 = vpop.f32.mrf.mxu0
        %v4956 = vadd.f32 0.0, %v4955
        %v4957 = vpop.f32.mrf.mxu0
        %v4958 = vpop.f32.mrf.mxu0
        %v4959 = vpop.f32.mrf.mxu0
        %4960 = vmatprep.mubr.bf16.mxu0 0
        %4961 = vmatmul.mubr.bf16.gmra.mxu0 %v4648
        %v4962 = vpop.f32.mrf.mxu0
        %v4963 = vpop.f32.mrf.mxu0
        %v4964 = vpop.f32.mrf.mxu0
        %v4965 = vadd.f32 0.0, %v4964
        %v4966 = vpop.f32.mrf.mxu0
        %4967 = vmatprep.mubr.bf16.mxu0 0
        %4968 = vmatmul.mubr.bf16.gmra.mxu0 %v4651
        %v4969 = vpop.f32.mrf.mxu0
        %v4970 = vadd.f32 0.0, %v4969
        %v4971 = vpop.f32.mrf.mxu0
        %v4972 = vpop.f32.mrf.mxu0
        %v4973 = vadd.f32 0.0, %v4972
        %v4974 = vpop.f32.mrf.mxu0
        %4975 = vmatprep.mubr.bf16.mxu0 0
        %4976 = vmatmul.mubr.bf16.gmra.mxu0 %v4654
        %v4977 = vpop.f32.mrf.mxu0
        %v4978 = vadd.f32 0.0, %v4977
        %v4979 = vpop.f32.mrf.mxu0
        %v4980 = vpop.f32.mrf.mxu0
        %v4981 = vadd.f32 0.0, %v4980
        %v4982 = vpop.f32.mrf.mxu0
        %4983 = vmatprep.mubr.bf16.mxu0 0
        %4984 = vmatmul.mubr.bf16.gmra.mxu0 %v4657
        %v4985 = vpop.f32.mrf.mxu0
        %v4986 = vadd.f32 0.0, %v4985
        %v4987 = vpop.f32.mrf.mxu0
        %v4988 = vpop.f32.mrf.mxu0
        %v4989 = vadd.f32 0.0, %v4988
        %v4990 = vpop.f32.mrf.mxu0
        %4991 = vmatprep.mubr.bf16.mxu0 0
        %4992 = vmatmul.mubr.bf16.gmra.mxu0 %v4660
        %v4993 = vpop.f32.mrf.mxu0
        %v4994 = vadd.f32 0.0, %v4993
        %v4995 = vpop.f32.mrf.mxu0
        %v4996 = vpop.f32.mrf.mxu0
        %v4997 = vpop.f32.mrf.mxu0
        %4998 = vdwg.mxu0
        %v4999 = vadd.f32 %v4181, %v4699
        %v5000 = vadd.f32 %v4182, %v4704
        %v5001 = vadd.f32 %v4183, %v4707
        %v5002 = vadd.f32 %v4184, %v4712
        %v5003 = vadd.f32 %v4185, %v4715
        %v5004 = vadd.f32 %v4186, %v4720
        %v5005 = vadd.f32 %v4187, %v4723
        %v5006 = vadd.f32 %v4188, %v4728
        %v5007 = vadd.f32 %v4189, %v4737
        %v5008 = vadd.f32 %v4190, %v4742
        %v5009 = vadd.f32 %v4191, %v4745
        %v5010 = vadd.f32 %v4192, %v4750
        %v5011 = vadd.f32 %v4193, %v4753
        %v5012 = vadd.f32 %v4194, %v4758
        %v5013 = vadd.f32 %v4195, %v4761
        %v5014 = vadd.f32 %v4196, %v4766
        %v5015 = vadd.f32 %v4197, %v4775
        %v5016 = vadd.f32 %v4198, %v4780
        %v5017 = vadd.f32 %v4199, %v4783
        %v5018 = vadd.f32 %v4200, %v4788
        %v5019 = vadd.f32 %v4201, %v4791
        %v5020 = vadd.f32 %v4202, %v4796
        %v5021 = vadd.f32 %v4203, %v4799
        %v5022 = vadd.f32 %v4204, %v4804
        %v5023 = vadd.f32 %v4205, %v4813
        %v5024 = vadd.f32 %v4206, %v4818
        %v5025 = vadd.f32 %v4207, %v4821
        %v5026 = vadd.f32 %v4208, %v4826
        %v5027 = vadd.f32 %v4209, %v4829
        %v5028 = vadd.f32 %v4210, %v4834
        %v5029 = vadd.f32 %v4211, %v4837
        %v5030 = vadd.f32 %v4212, %v4842
        %v5031 = vadd.f32 %v4213, %v4851
        %v5032 = vadd.f32 %v4214, %v4856
        %v5033 = vadd.f32 %v4215, %v4859
        %v5034 = vadd.f32 %v4216, %v4864
        %v5035 = vadd.f32 %v4217, %v4867
        %v5036 = vadd.f32 %v4218, %v4872
        %v5037 = vadd.f32 %v4219, %v4875
        %v5038 = vadd.f32 %v4220, %v4880
        %v5039 = vadd.f32 %v4221, %v4889
        %v5040 = vadd.f32 %v4222, %v4894
        %v5041 = vadd.f32 %v4223, %v4897
        %v5042 = vadd.f32 %v4224, %v4902
        %v5043 = vadd.f32 %v4225, %v4905
        %v5044 = vadd.f32 %v4226, %v4910
        %v5045 = vadd.f32 %v4227, %v4913
        %v5046 = vadd.f32 %v4228, %v4918
        %v5047 = vadd.f32 %v4229, %v4927
        %v5048 = vadd.f32 %v4230, %v4932
        %v5049 = vadd.f32 %v4231, %v4935
        %v5050 = vadd.f32 %v4232, %v4940
        %v5051 = vadd.f32 %v4233, %v4943
        %v5052 = vadd.f32 %v4234, %v4948
        %v5053 = vadd.f32 %v4235, %v4951
        %v5054 = vadd.f32 %v4236, %v4956
        %v5055 = vadd.f32 %v4237, %v4965
        %v5056 = vadd.f32 %v4238, %v4970
        %v5057 = vadd.f32 %v4239, %v4973
        %v5058 = vadd.f32 %v4240, %v4978
        %v5059 = vadd.f32 %v4241, %v4981
        %v5060 = vadd.f32 %v4242, %v4986
        %v5061 = vadd.f32 %v4243, %v4989
        %v5062 = vadd.f32 %v4244, %v4994
        %v5063 = vld [vmem:[#allocation2 + $0x30] sm:$0xf]
        %v5064 = vld [vmem:[#allocation2 + $0x34] sm:$0xf]
        %v5065 = vld [vmem:[#allocation2 + $0x38] sm:$0xf]
        %v5066 = vld [vmem:[#allocation2 + $0x3c] sm:$0xf]
        %v5067 = vld [vmem:[#allocation2 + $0x40] sm:$0xf]
        %v5068 = vld [vmem:[#allocation2 + $0x44] sm:$0xf]
        %v5069 = vld [vmem:[#allocation2 + $0x48] sm:$0xf]
        %v5070 = vld [vmem:[#allocation2 + $0x4c] sm:$0xf]
        %v5071 = vld [vmem:[#allocation2 + $0x50] sm:$0xf]
        %v5072 = vld [vmem:[#allocation2 + $0x54] sm:$0xf]
        %v5073 = vld [vmem:[#allocation2 + $0x58] sm:$0xf]
        %v5074 = vld [vmem:[#allocation2 + $0x5c] sm:$0xf]
        %v5075 = vld [vmem:[#allocation2 + $0x60] sm:$0xf]
        %v5076 = vld [vmem:[#allocation2 + $0x64] sm:$0xf]
        %v5077 = vld [vmem:[#allocation2 + $0x68] sm:$0xf]
        %v5078 = vld [vmem:[#allocation2 + $0x6c] sm:$0xf]
        %v5079 = vld [vmem:[#allocation2 + $0x70] sm:$0xf]
        %v5080 = vld [vmem:[#allocation2 + $0x74] sm:$0xf]
        %v5081 = vld [vmem:[#allocation2 + $0x78] sm:$0xf]
        %v5082 = vld [vmem:[#allocation2 + $0x7c] sm:$0xf]
        %v5083 = vld [vmem:[#allocation2 + $0x80] sm:$0xf]
        %v5084 = vld [vmem:[#allocation2 + $0x84] sm:$0xf]
        %v5085 = vld [vmem:[#allocation2 + $0x88] sm:$0xf]
        %v5086 = vld [vmem:[#allocation2 + $0x8c] sm:$0xf]
        %v5087 = vld [vmem:[#allocation2 + $0x90] sm:$0xf]
        %v5088 = vld [vmem:[#allocation2 + $0x94] sm:$0xf]
        %v5089 = vld [vmem:[#allocation2 + $0x98] sm:$0xf]
        %v5090 = vld [vmem:[#allocation2 + $0x9c] sm:$0xf]
        %v5091 = vld [vmem:[#allocation2 + $0xa0] sm:$0xf]
        %v5092 = vld [vmem:[#allocation2 + $0xa4] sm:$0xf]
        %v5093 = vld [vmem:[#allocation2 + $0xa8] sm:$0xf]
        %v5094 = vld [vmem:[#allocation2 + $0xac] sm:$0xf]
        %v5095 = vld [vmem:[#allocation2 + $0xb0] sm:$0xf]
        %v5096 = vld [vmem:[#allocation2 + $0xb4] sm:$0xf]
        %v5097 = vld [vmem:[#allocation2 + $0xb8] sm:$0xf]
        %v5098 = vld [vmem:[#allocation2 + $0xbc] sm:$0xf]
        %v5099 = vld [vmem:[#allocation2 + $0xc0] sm:$0xf]
        %v5100 = vld [vmem:[#allocation2 + $0xc4] sm:$0xf]
        %v5101 = vld [vmem:[#allocation2 + $0xc8] sm:$0xf]
        %v5102 = vld [vmem:[#allocation2 + $0xcc] sm:$0xf]
        %v5103 = vld [vmem:[#allocation2 + $0xd0] sm:$0xf]
        %v5104 = vld [vmem:[#allocation2 + $0xd4] sm:$0xf]
        %v5105 = vld [vmem:[#allocation2 + $0xd8] sm:$0xf]
        %v5106 = vld [vmem:[#allocation2 + $0xdc] sm:$0xf]
        %v5107 = vld [vmem:[#allocation2 + $0xe0] sm:$0xf]
        %v5108 = vld [vmem:[#allocation2 + $0xe4] sm:$0xf]
        %v5109 = vld [vmem:[#allocation2 + $0xe8] sm:$0xf]
        %v5110 = vld [vmem:[#allocation2 + $0xec] sm:$0xf]
        %v5111 = vld [vmem:[#allocation2 + $0xf0] sm:$0xf]
        %v5112 = vld [vmem:[#allocation2 + $0xf4] sm:$0xf]
        %v5113 = vld [vmem:[#allocation2 + $0xf8] sm:$0xf]
        %v5114 = vld [vmem:[#allocation2 + $0xfc] sm:$0xf]
        %v5115 = vld [vmem:[#allocation2 + $0x100] sm:$0xf]
        %v5116 = vld [vmem:[#allocation2 + $0x104] sm:$0xf]
        %v5117 = vld [vmem:[#allocation2 + $0x108] sm:$0xf]
        %v5118 = vld [vmem:[#allocation2 + $0x10c] sm:$0xf]
        %v5119 = vld [vmem:[#allocation2 + $0x110] sm:$0xf]
        %v5120 = vld [vmem:[#allocation2 + $0x114] sm:$0xf]
        %v5121 = vld [vmem:[#allocation2 + $0x118] sm:$0xf]
        %v5122 = vld [vmem:[#allocation2 + $0x11c] sm:$0xf]
        %v5123 = vld [vmem:[#allocation2 + $0x120] sm:$0xf]
        %v5124 = vld [vmem:[#allocation2 + $0x124] sm:$0xf]
        %v5125 = vld [vmem:[#allocation2 + $0x128] sm:$0xf]
        %v5126 = vld [vmem:[#allocation2 + $0x12c] sm:$0xf]
        %v5127 = vld [vmem:[#allocation2 + $0x130] sm:$0xf]
        %v5128 = vld [vmem:[#allocation2 + $0x134] sm:$0xf]
        %v5129 = vld [vmem:[#allocation2 + $0x138] sm:$0xf]
        %v5130 = vld [vmem:[#allocation2 + $0x13c] sm:$0xf]
        %v5131 = vld [vmem:[#allocation2 + $0x140] sm:$0xf]
        %v5132 = vld [vmem:[#allocation2 + $0x144] sm:$0xf]
        %v5133 = vld [vmem:[#allocation2 + $0x148] sm:$0xf]
        %v5134 = vld [vmem:[#allocation2 + $0x14c] sm:$0xf]
        %v5135 = vld [vmem:[#allocation2 + $0x150] sm:$0xf]
        %v5136 = vld [vmem:[#allocation2 + $0x154] sm:$0xf]
        %v5137 = vld [vmem:[#allocation2 + $0x158] sm:$0xf]
        %v5138 = vld [vmem:[#allocation2 + $0x15c] sm:$0xf]
        %v5139 = vld [vmem:[#allocation2 + $0x160] sm:$0xf]
        %v5140 = vld [vmem:[#allocation2 + $0x164] sm:$0xf]
        %v5141 = vld [vmem:[#allocation2 + $0x168] sm:$0xf]
        %v5142 = vld [vmem:[#allocation2 + $0x16c] sm:$0xf]
        %s5143 = scalar_lea.vmem %s2, 80
        %v5144 = vld [vmem:[%s5143] sm:$0xf]
        %v5145 = vld [vmem:[%s5143 + $0x4] sm:$0xf]
        %v5146 = vld [vmem:[%s5143 + $0x8] sm:$0xf]
        %v5147 = vld [vmem:[%s5143 + $0xc] sm:$0xf]
        %v5228 = vunpack.c.l.b16 %v5063
        %v5229 = vunpack.c.l.b16 %v5064
        %v5230 = vunpack.c.l.b16 %v5065
        %v5231 = vunpack.c.l.b16 %v5066
        %v5232 = vunpack.c.l.b16 %v5067
        %v5233 = vunpack.c.l.b16 %v5068
        %v5234 = vunpack.c.l.b16 %v5069
        %v5235 = vunpack.c.l.b16 %v5070
        %v5236 = vunpack.c.l.b16 %v5071
        %v5237 = vunpack.c.l.b16 %v5072
        %v5238 = vunpack.c.l.b16 %v5073
        %v5239 = vunpack.c.l.b16 %v5074
        %v5240 = vunpack.c.l.b16 %v5075
        %v5241 = vunpack.c.l.b16 %v5076
        %v5242 = vunpack.c.l.b16 %v5077
        %v5243 = vunpack.c.l.b16 %v5078
        %v5244 = vunpack.c.l.b16 %v5079
        %v5245 = vunpack.c.l.b16 %v5080
        %v5246 = vunpack.c.l.b16 %v5081
        %v5247 = vunpack.c.l.b16 %v5082
        %v5248 = vunpack.c.l.b16 %v5083
        %v5249 = vunpack.c.l.b16 %v5084
        %v5250 = vunpack.c.l.b16 %v5085
        %v5251 = vunpack.c.l.b16 %v5086
        %v5252 = vunpack.c.l.b16 %v5087
        %v5253 = vunpack.c.l.b16 %v5088
        %v5254 = vunpack.c.l.b16 %v5089
        %v5255 = vunpack.c.l.b16 %v5090
        %v5256 = vunpack.c.l.b16 %v5091
        %v5257 = vunpack.c.l.b16 %v5092
        %v5258 = vunpack.c.l.b16 %v5093
        %v5259 = vunpack.c.l.b16 %v5094
        %v5260 = vunpack.c.l.b16 %v5095
        %v5261 = vunpack.c.l.b16 %v5096
        %v5262 = vunpack.c.l.b16 %v5097
        %v5263 = vunpack.c.l.b16 %v5098
        %v5264 = vunpack.c.l.b16 %v5099
        %v5265 = vunpack.c.l.b16 %v5100
        %v5266 = vunpack.c.l.b16 %v5101
        %v5267 = vunpack.c.l.b16 %v5102
        %v5268 = vunpack.c.l.b16 %v5103
        %v5269 = vunpack.c.l.b16 %v5104
        %v5270 = vunpack.c.l.b16 %v5105
        %v5271 = vunpack.c.l.b16 %v5106
        %v5272 = vunpack.c.l.b16 %v5107
        %v5273 = vunpack.c.l.b16 %v5108
        %v5274 = vunpack.c.l.b16 %v5109
        %v5275 = vunpack.c.l.b16 %v5110
        %v5276 = vunpack.c.l.b16 %v5111
        %v5277 = vunpack.c.l.b16 %v5112
        %v5278 = vunpack.c.l.b16 %v5113
        %v5279 = vunpack.c.l.b16 %v5114
        %v5280 = vunpack.c.l.b16 %v5115
        %v5281 = vunpack.c.l.b16 %v5116
        %v5282 = vunpack.c.l.b16 %v5117
        %v5283 = vunpack.c.l.b16 %v5118
        %v5284 = vunpack.c.l.b16 %v5119
        %v5285 = vunpack.c.l.b16 %v5120
        %v5286 = vunpack.c.l.b16 %v5121
        %v5287 = vunpack.c.l.b16 %v5122
        %v5288 = vunpack.c.l.b16 %v5123
        %v5289 = vunpack.c.l.b16 %v5124
        %v5290 = vunpack.c.l.b16 %v5125
        %v5291 = vunpack.c.l.b16 %v5126
        %v5292 = vunpack.c.l.b16 %v5127
        %v5293 = vunpack.c.l.b16 %v5128
        %v5294 = vunpack.c.l.b16 %v5129
        %v5295 = vunpack.c.l.b16 %v5130
        %v5296 = vunpack.c.l.b16 %v5131
        %v5297 = vunpack.c.l.b16 %v5132
        %v5298 = vunpack.c.l.b16 %v5133
        %v5299 = vunpack.c.l.b16 %v5134
        %v5300 = vunpack.c.l.b16 %v5135
        %v5301 = vunpack.c.l.b16 %v5136
        %v5302 = vunpack.c.l.b16 %v5137
        %v5303 = vunpack.c.l.b16 %v5138
        %v5304 = vunpack.c.l.b16 %v5139
        %v5305 = vunpack.c.l.b16 %v5140
        %v5306 = vunpack.c.l.b16 %v5141
        %v5307 = vunpack.c.l.b16 %v5142
        %v5308 = vpack.c.b16 %v5229, %v5228
        %v5309 = vpack.c.b16 %v5231, %v5230
        %v5310 = vpack.c.b16 %v5233, %v5232
        %v5311 = vpack.c.b16 %v5235, %v5234
        %v5312 = vpack.c.b16 %v5237, %v5236
        %v5313 = vpack.c.b16 %v5239, %v5238
        %v5314 = vpack.c.b16 %v5241, %v5240
        %v5315 = vpack.c.b16 %v5243, %v5242
        %v5316 = vpack.c.b16 %v5245, %v5244
        %v5317 = vpack.c.b16 %v5247, %v5246
        %v5318 = vpack.c.b16 %v5249, %v5248
        %v5319 = vpack.c.b16 %v5251, %v5250
        %v5320 = vpack.c.b16 %v5253, %v5252
        %v5321 = vpack.c.b16 %v5255, %v5254
        %v5322 = vpack.c.b16 %v5257, %v5256
        %v5323 = vpack.c.b16 %v5259, %v5258
        %v5324 = vpack.c.b16 %v5261, %v5260
        %v5325 = vpack.c.b16 %v5263, %v5262
        %v5326 = vpack.c.b16 %v5265, %v5264
        %v5327 = vpack.c.b16 %v5267, %v5266
        %v5328 = vpack.c.b16 %v5269, %v5268
        %v5329 = vpack.c.b16 %v5271, %v5270
        %v5330 = vpack.c.b16 %v5273, %v5272
        %v5331 = vpack.c.b16 %v5275, %v5274
        %v5332 = vpack.c.b16 %v5277, %v5276
        %v5333 = vpack.c.b16 %v5279, %v5278
        %v5334 = vpack.c.b16 %v5281, %v5280
        %v5335 = vpack.c.b16 %v5283, %v5282
        %v5336 = vpack.c.b16 %v5285, %v5284
        %v5337 = vpack.c.b16 %v5287, %v5286
        %v5338 = vpack.c.b16 %v5289, %v5288
        %v5339 = vpack.c.b16 %v5291, %v5290
        %v5340 = vpack.c.b16 %v5293, %v5292
        %v5341 = vpack.c.b16 %v5295, %v5294
        %v5342 = vpack.c.b16 %v5297, %v5296
        %v5343 = vpack.c.b16 %v5299, %v5298
        %v5344 = vpack.c.b16 %v5301, %v5300
        %v5345 = vpack.c.b16 %v5303, %v5302
        %v5346 = vpack.c.b16 %v5305, %v5304
        %v5347 = vpack.c.b16 %v5307, %v5306
        %v5352 = vunpack.c.l.b16 %v5144
        %v5353 = vunpack.c.l.b16 %v5145
        %v5354 = vunpack.c.l.b16 %v5146
        %v5355 = vunpack.c.l.b16 %v5147
        %v5356 = vpack.c.b16 %v5353, %v5352
        %v5357 = vpack.c.b16 %v5355, %v5354
        %v5361 = vsel %vm1640, %v5308, 0
        %v5364 = vsel %vm1640, %v5309, 0
        %v5367 = vsel %vm1640, %v5310, 0
        %v5370 = vsel %vm1640, %v5311, 0
        %v5373 = vsel %vm1640, %v5312, 0
        %v5376 = vsel %vm1640, %v5313, 0
        %v5379 = vsel %vm1640, %v5314, 0
        %v5382 = vsel %vm1640, %v5315, 0
        %v5385 = vsel %vm1640, %v5316, 0
        %v5388 = vsel %vm1640, %v5317, 0
        %v5391 = vsel %vm1640, %v5318, 0
        %v5394 = vsel %vm1640, %v5319, 0
        %v5397 = vsel %vm1640, %v5320, 0
        %v5400 = vsel %vm1640, %v5321, 0
        %v5403 = vsel %vm1640, %v5322, 0
        %v5406 = vsel %vm1640, %v5323, 0
        %v5409 = vsel %vm1640, %v5324, 0
        %v5412 = vsel %vm1640, %v5325, 0
        %v5415 = vsel %vm1640, %v5326, 0
        %v5418 = vsel %vm1640, %v5327, 0
        %v5421 = vsel %vm1640, %v5328, 0
        %v5424 = vsel %vm1640, %v5329, 0
        %v5427 = vsel %vm1640, %v5330, 0
        %v5430 = vsel %vm1640, %v5331, 0
        %v5433 = vsel %vm1640, %v5332, 0
        %v5436 = vsel %vm1640, %v5333, 0
        %v5439 = vsel %vm1640, %v5334, 0
        %v5442 = vsel %vm1640, %v5335, 0
        %v5445 = vsel %vm1640, %v5336, 0
        %v5448 = vsel %vm1640, %v5337, 0
        %v5451 = vsel %vm1640, %v5338, 0
        %v5454 = vsel %vm1640, %v5339, 0
        %v5457 = vsel %vm1640, %v5340, 0
        %v5460 = vsel %vm1640, %v5341, 0
        %v5463 = vsel %vm1640, %v5342, 0
        %v5466 = vsel %vm1640, %v5343, 0
        %v5469 = vsel %vm1640, %v5344, 0
        %v5472 = vsel %vm1640, %v5345, 0
        %v5475 = vsel %vm1640, %v5346, 0
        %v5478 = vsel %vm1640, %v5347, 0
        %5480 = vmatprep.subr.bf16.mxu0 0
        %5481 = vmatpush1.bf16.msra.mxu0 0
        %5482 = vmatprep.subr.bf16.mxu0 0
        %5483 = vmatpush1.bf16.msra.mxu0 0
        %5484 = vmatprep.subr.bf16.mxu0 0
        %5485 = vmatpush1.bf16.msra.mxu0 0
        %5486 = vmatprep.subr.bf16.mxu0 0
        %5487 = vmatpush1.bf16.msra.mxu0 0
        %5488 = vmatprep.subr.bf16.mxu0 0
        %5489 = vmatpush1.bf16.msra.mxu0 0
        %5490 = vmatprep.subr.bf16.mxu0 0
        %5491 = vmatpush1.bf16.msra.mxu0 0
        %5492 = vmatprep.subr.bf16.mxu0 0
        %5493 = vmatpush1.bf16.msra.mxu0 %v5357
        %5494 = vmatprep.subr.bf16.mxu0 0
        %5495 = vmatpush1.bf16.msra.mxu0 %v5356
        %5496 = vmatprep.subr.bf16.mxu0 0
        %5497 = vmatpush2.bf16.msra.mxu0 0
        %5498 = vmatprep.subr.bf16.mxu0 0
        %5499 = vmatpush2.bf16.msra.mxu0 0
        %5500 = vmatprep.subr.bf16.mxu0 0
        %5501 = vmatpush2.bf16.msra.mxu0 0
        %5502 = vmatprep.subr.bf16.mxu0 0
        %5503 = vmatpush2.bf16.msra.mxu0 0
        %5504 = vmatprep.subr.bf16.mxu0 0
        %5505 = vmatpush2.bf16.msra.mxu0 0
        %5506 = vmatprep.subr.bf16.mxu0 0
        %5507 = vmatpush2.bf16.msra.mxu0 0
        %5508 = vmatprep.subr.bf16.mxu0 0
        %5509 = vmatpush2.bf16.msra.mxu0 0
        %5510 = vmatprep.subr.bf16.mxu0 0
        %5511 = vmatpush2.bf16.msra.mxu0 0
        %5512 = vmatprep.mubr.bf16.mxu0 0
        %5513 = vmatmul.mubr.bf16.gmra.mxu0 %v5361
        %v5514 = vpop.f32.mrf.mxu0
        %v5515 = vpop.f32.mrf.mxu0
        %v5516 = vpop.f32.mrf.mxu0
        %v5517 = vadd.f32 0.0, %v5516
        %v5518 = vpop.f32.mrf.mxu0
        %5519 = vmatprep.mubr.bf16.mxu0 0
        %5520 = vmatmul.mubr.bf16.gmra.mxu0 %v5364
        %v5521 = vpop.f32.mrf.mxu0
        %v5522 = vadd.f32 0.0, %v5521
        %v5523 = vpop.f32.mrf.mxu0
        %v5524 = vpop.f32.mrf.mxu0
        %v5525 = vadd.f32 0.0, %v5524
        %v5526 = vpop.f32.mrf.mxu0
        %5527 = vmatprep.mubr.bf16.mxu0 0
        %5528 = vmatmul.mubr.bf16.gmra.mxu0 %v5367
        %v5529 = vpop.f32.mrf.mxu0
        %v5530 = vadd.f32 0.0, %v5529
        %v5531 = vpop.f32.mrf.mxu0
        %v5532 = vpop.f32.mrf.mxu0
        %v5533 = vadd.f32 0.0, %v5532
        %v5534 = vpop.f32.mrf.mxu0
        %5535 = vmatprep.mubr.bf16.mxu0 0
        %5536 = vmatmul.mubr.bf16.gmra.mxu0 %v5370
        %v5537 = vpop.f32.mrf.mxu0
        %v5538 = vadd.f32 0.0, %v5537
        %v5539 = vpop.f32.mrf.mxu0
        %v5540 = vpop.f32.mrf.mxu0
        %v5541 = vadd.f32 0.0, %v5540
        %v5542 = vpop.f32.mrf.mxu0
        %5543 = vmatprep.mubr.bf16.mxu0 0
        %5544 = vmatmul.mubr.bf16.gmra.mxu0 %v5373
        %v5545 = vpop.f32.mrf.mxu0
        %v5546 = vadd.f32 0.0, %v5545
        %v5547 = vpop.f32.mrf.mxu0
        %v5548 = vpop.f32.mrf.mxu0
        %v5549 = vpop.f32.mrf.mxu0
        %5550 = vmatprep.mubr.bf16.mxu0 0
        %5551 = vmatmul.mubr.bf16.gmra.mxu0 %v5376
        %v5552 = vpop.f32.mrf.mxu0
        %v5553 = vpop.f32.mrf.mxu0
        %v5554 = vpop.f32.mrf.mxu0
        %v5555 = vadd.f32 0.0, %v5554
        %v5556 = vpop.f32.mrf.mxu0
        %5557 = vmatprep.mubr.bf16.mxu0 0
        %5558 = vmatmul.mubr.bf16.gmra.mxu0 %v5379
        %v5559 = vpop.f32.mrf.mxu0
        %v5560 = vadd.f32 0.0, %v5559
        %v5561 = vpop.f32.mrf.mxu0
        %v5562 = vpop.f32.mrf.mxu0
        %v5563 = vadd.f32 0.0, %v5562
        %v5564 = vpop.f32.mrf.mxu0
        %5565 = vmatprep.mubr.bf16.mxu0 0
        %5566 = vmatmul.mubr.bf16.gmra.mxu0 %v5382
        %v5567 = vpop.f32.mrf.mxu0
        %v5568 = vadd.f32 0.0, %v5567
        %v5569 = vpop.f32.mrf.mxu0
        %v5570 = vpop.f32.mrf.mxu0
        %v5571 = vadd.f32 0.0, %v5570
        %v5572 = vpop.f32.mrf.mxu0
        %5573 = vmatprep.mubr.bf16.mxu0 0
        %5574 = vmatmul.mubr.bf16.gmra.mxu0 %v5385
        %v5575 = vpop.f32.mrf.mxu0
        %v5576 = vadd.f32 0.0, %v5575
        %v5577 = vpop.f32.mrf.mxu0
        %v5578 = vpop.f32.mrf.mxu0
        %v5579 = vadd.f32 0.0, %v5578
        %v5580 = vpop.f32.mrf.mxu0
        %5581 = vmatprep.mubr.bf16.mxu0 0
        %5582 = vmatmul.mubr.bf16.gmra.mxu0 %v5388
        %v5583 = vpop.f32.mrf.mxu0
        %v5584 = vadd.f32 0.0, %v5583
        %v5585 = vpop.f32.mrf.mxu0
        %v5586 = vpop.f32.mrf.mxu0
        %v5587 = vpop.f32.mrf.mxu0
        %5588 = vmatprep.mubr.bf16.mxu0 0
        %5589 = vmatmul.mubr.bf16.gmra.mxu0 %v5391
        %v5590 = vpop.f32.mrf.mxu0
        %v5591 = vpop.f32.mrf.mxu0
        %v5592 = vpop.f32.mrf.mxu0
        %v5593 = vadd.f32 0.0, %v5592
        %v5594 = vpop.f32.mrf.mxu0
        %5595 = vmatprep.mubr.bf16.mxu0 0
        %5596 = vmatmul.mubr.bf16.gmra.mxu0 %v5394
        %v5597 = vpop.f32.mrf.mxu0
        %v5598 = vadd.f32 0.0, %v5597
        %v5599 = vpop.f32.mrf.mxu0
        %v5600 = vpop.f32.mrf.mxu0
        %v5601 = vadd.f32 0.0, %v5600
        %v5602 = vpop.f32.mrf.mxu0
        %5603 = vmatprep.mubr.bf16.mxu0 0
        %5604 = vmatmul.mubr.bf16.gmra.mxu0 %v5397
        %v5605 = vpop.f32.mrf.mxu0
        %v5606 = vadd.f32 0.0, %v5605
        %v5607 = vpop.f32.mrf.mxu0
        %v5608 = vpop.f32.mrf.mxu0
        %v5609 = vadd.f32 0.0, %v5608
        %v5610 = vpop.f32.mrf.mxu0
        %5611 = vmatprep.mubr.bf16.mxu0 0
        %5612 = vmatmul.mubr.bf16.gmra.mxu0 %v5400
        %v5613 = vpop.f32.mrf.mxu0
        %v5614 = vadd.f32 0.0, %v5613
        %v5615 = vpop.f32.mrf.mxu0
        %v5616 = vpop.f32.mrf.mxu0
        %v5617 = vadd.f32 0.0, %v5616
        %v5618 = vpop.f32.mrf.mxu0
        %5619 = vmatprep.mubr.bf16.mxu0 0
        %5620 = vmatmul.mubr.bf16.gmra.mxu0 %v5403
        %v5621 = vpop.f32.mrf.mxu0
        %v5622 = vadd.f32 0.0, %v5621
        %v5623 = vpop.f32.mrf.mxu0
        %v5624 = vpop.f32.mrf.mxu0
        %v5625 = vpop.f32.mrf.mxu0
        %5626 = vmatprep.mubr.bf16.mxu0 0
        %5627 = vmatmul.mubr.bf16.gmra.mxu0 %v5406
        %v5628 = vpop.f32.mrf.mxu0
        %v5629 = vpop.f32.mrf.mxu0
        %v5630 = vpop.f32.mrf.mxu0
        %v5631 = vadd.f32 0.0, %v5630
        %v5632 = vpop.f32.mrf.mxu0
        %5633 = vmatprep.mubr.bf16.mxu0 0
        %5634 = vmatmul.mubr.bf16.gmra.mxu0 %v5409
        %v5635 = vpop.f32.mrf.mxu0
        %v5636 = vadd.f32 0.0, %v5635
        %v5637 = vpop.f32.mrf.mxu0
        %v5638 = vpop.f32.mrf.mxu0
        %v5639 = vadd.f32 0.0, %v5638
        %v5640 = vpop.f32.mrf.mxu0
        %5641 = vmatprep.mubr.bf16.mxu0 0
        %5642 = vmatmul.mubr.bf16.gmra.mxu0 %v5412
        %v5643 = vpop.f32.mrf.mxu0
        %v5644 = vadd.f32 0.0, %v5643
        %v5645 = vpop.f32.mrf.mxu0
        %v5646 = vpop.f32.mrf.mxu0
        %v5647 = vadd.f32 0.0, %v5646
        %v5648 = vpop.f32.mrf.mxu0
        %5649 = vmatprep.mubr.bf16.mxu0 0
        %5650 = vmatmul.mubr.bf16.gmra.mxu0 %v5415
        %v5651 = vpop.f32.mrf.mxu0
        %v5652 = vadd.f32 0.0, %v5651
        %v5653 = vpop.f32.mrf.mxu0
        %v5654 = vpop.f32.mrf.mxu0
        %v5655 = vadd.f32 0.0, %v5654
        %v5656 = vpop.f32.mrf.mxu0
        %5657 = vmatprep.mubr.bf16.mxu0 0
        %5658 = vmatmul.mubr.bf16.gmra.mxu0 %v5418
        %v5659 = vpop.f32.mrf.mxu0
        %v5660 = vadd.f32 0.0, %v5659
        %v5661 = vpop.f32.mrf.mxu0
        %v5662 = vpop.f32.mrf.mxu0
        %v5663 = vpop.f32.mrf.mxu0
        %5664 = vmatprep.mubr.bf16.mxu0 0
        %5665 = vmatmul.mubr.bf16.gmra.mxu0 %v5421
        %v5666 = vpop.f32.mrf.mxu0
        %v5667 = vpop.f32.mrf.mxu0
        %v5668 = vpop.f32.mrf.mxu0
        %v5669 = vadd.f32 0.0, %v5668
        %v5670 = vpop.f32.mrf.mxu0
        %5671 = vmatprep.mubr.bf16.mxu0 0
        %5672 = vmatmul.mubr.bf16.gmra.mxu0 %v5424
        %v5673 = vpop.f32.mrf.mxu0
        %v5674 = vadd.f32 0.0, %v5673
        %v5675 = vpop.f32.mrf.mxu0
        %v5676 = vpop.f32.mrf.mxu0
        %v5677 = vadd.f32 0.0, %v5676
        %v5678 = vpop.f32.mrf.mxu0
        %5679 = vmatprep.mubr.bf16.mxu0 0
        %5680 = vmatmul.mubr.bf16.gmra.mxu0 %v5427
        %v5681 = vpop.f32.mrf.mxu0
        %v5682 = vadd.f32 0.0, %v5681
        %v5683 = vpop.f32.mrf.mxu0
        %v5684 = vpop.f32.mrf.mxu0
        %v5685 = vadd.f32 0.0, %v5684
        %v5686 = vpop.f32.mrf.mxu0
        %5687 = vmatprep.mubr.bf16.mxu0 0
        %5688 = vmatmul.mubr.bf16.gmra.mxu0 %v5430
        %v5689 = vpop.f32.mrf.mxu0
        %v5690 = vadd.f32 0.0, %v5689
        %v5691 = vpop.f32.mrf.mxu0
        %v5692 = vpop.f32.mrf.mxu0
        %v5693 = vadd.f32 0.0, %v5692
        %v5694 = vpop.f32.mrf.mxu0
        %5695 = vmatprep.mubr.bf16.mxu0 0
        %5696 = vmatmul.mubr.bf16.gmra.mxu0 %v5433
        %v5697 = vpop.f32.mrf.mxu0
        %v5698 = vadd.f32 0.0, %v5697
        %v5699 = vpop.f32.mrf.mxu0
        %v5700 = vpop.f32.mrf.mxu0
        %v5701 = vpop.f32.mrf.mxu0
        %5702 = vmatprep.mubr.bf16.mxu0 0
        %5703 = vmatmul.mubr.bf16.gmra.mxu0 %v5436
        %v5704 = vpop.f32.mrf.mxu0
        %v5705 = vpop.f32.mrf.mxu0
        %v5706 = vpop.f32.mrf.mxu0
        %v5707 = vadd.f32 0.0, %v5706
        %v5708 = vpop.f32.mrf.mxu0
        %5709 = vmatprep.mubr.bf16.mxu0 0
        %5710 = vmatmul.mubr.bf16.gmra.mxu0 %v5439
        %v5711 = vpop.f32.mrf.mxu0
        %v5712 = vadd.f32 0.0, %v5711
        %v5713 = vpop.f32.mrf.mxu0
        %v5714 = vpop.f32.mrf.mxu0
        %v5715 = vadd.f32 0.0, %v5714
        %v5716 = vpop.f32.mrf.mxu0
        %5717 = vmatprep.mubr.bf16.mxu0 0
        %5718 = vmatmul.mubr.bf16.gmra.mxu0 %v5442
        %v5719 = vpop.f32.mrf.mxu0
        %v5720 = vadd.f32 0.0, %v5719
        %v5721 = vpop.f32.mrf.mxu0
        %v5722 = vpop.f32.mrf.mxu0
        %v5723 = vadd.f32 0.0, %v5722
        %v5724 = vpop.f32.mrf.mxu0
        %5725 = vmatprep.mubr.bf16.mxu0 0
        %5726 = vmatmul.mubr.bf16.gmra.mxu0 %v5445
        %v5727 = vpop.f32.mrf.mxu0
        %v5728 = vadd.f32 0.0, %v5727
        %v5729 = vpop.f32.mrf.mxu0
        %v5730 = vpop.f32.mrf.mxu0
        %v5731 = vadd.f32 0.0, %v5730
        %v5732 = vpop.f32.mrf.mxu0
        %5733 = vmatprep.mubr.bf16.mxu0 0
        %5734 = vmatmul.mubr.bf16.gmra.mxu0 %v5448
        %v5735 = vpop.f32.mrf.mxu0
        %v5736 = vadd.f32 0.0, %v5735
        %v5737 = vpop.f32.mrf.mxu0
        %v5738 = vpop.f32.mrf.mxu0
        %v5739 = vpop.f32.mrf.mxu0
        %5740 = vmatprep.mubr.bf16.mxu0 0
        %5741 = vmatmul.mubr.bf16.gmra.mxu0 %v5451
        %v5742 = vpop.f32.mrf.mxu0
        %v5743 = vpop.f32.mrf.mxu0
        %v5744 = vpop.f32.mrf.mxu0
        %v5745 = vadd.f32 0.0, %v5744
        %v5746 = vpop.f32.mrf.mxu0
        %5747 = vmatprep.mubr.bf16.mxu0 0
        %5748 = vmatmul.mubr.bf16.gmra.mxu0 %v5454
        %v5749 = vpop.f32.mrf.mxu0
        %v5750 = vadd.f32 0.0, %v5749
        %v5751 = vpop.f32.mrf.mxu0
        %v5752 = vpop.f32.mrf.mxu0
        %v5753 = vadd.f32 0.0, %v5752
        %v5754 = vpop.f32.mrf.mxu0
        %5755 = vmatprep.mubr.bf16.mxu0 0
        %5756 = vmatmul.mubr.bf16.gmra.mxu0 %v5457
        %v5757 = vpop.f32.mrf.mxu0
        %v5758 = vadd.f32 0.0, %v5757
        %v5759 = vpop.f32.mrf.mxu0
        %v5760 = vpop.f32.mrf.mxu0
        %v5761 = vadd.f32 0.0, %v5760
        %v5762 = vpop.f32.mrf.mxu0
        %5763 = vmatprep.mubr.bf16.mxu0 0
        %5764 = vmatmul.mubr.bf16.gmra.mxu0 %v5460
        %v5765 = vpop.f32.mrf.mxu0
        %v5766 = vadd.f32 0.0, %v5765
        %v5767 = vpop.f32.mrf.mxu0
        %v5768 = vpop.f32.mrf.mxu0
        %v5769 = vadd.f32 0.0, %v5768
        %v5770 = vpop.f32.mrf.mxu0
        %5771 = vmatprep.mubr.bf16.mxu0 0
        %5772 = vmatmul.mubr.bf16.gmra.mxu0 %v5463
        %v5773 = vpop.f32.mrf.mxu0
        %v5774 = vadd.f32 0.0, %v5773
        %v5775 = vpop.f32.mrf.mxu0
        %v5776 = vpop.f32.mrf.mxu0
        %v5777 = vpop.f32.mrf.mxu0
        %5778 = vmatprep.mubr.bf16.mxu0 0
        %5779 = vmatmul.mubr.bf16.gmra.mxu0 %v5466
        %v5780 = vpop.f32.mrf.mxu0
        %v5781 = vpop.f32.mrf.mxu0
        %v5782 = vpop.f32.mrf.mxu0
        %v5783 = vadd.f32 0.0, %v5782
        %v5784 = vpop.f32.mrf.mxu0
        %5785 = vmatprep.mubr.bf16.mxu0 0
        %5786 = vmatmul.mubr.bf16.gmra.mxu0 %v5469
        %v5787 = vpop.f32.mrf.mxu0
        %v5788 = vadd.f32 0.0, %v5787
        %v5789 = vpop.f32.mrf.mxu0
        %v5790 = vpop.f32.mrf.mxu0
        %v5791 = vadd.f32 0.0, %v5790
        %v5792 = vpop.f32.mrf.mxu0
        %5793 = vmatprep.mubr.bf16.mxu0 0
        %5794 = vmatmul.mubr.bf16.gmra.mxu0 %v5472
        %v5795 = vpop.f32.mrf.mxu0
        %v5796 = vadd.f32 0.0, %v5795
        %v5797 = vpop.f32.mrf.mxu0
        %v5798 = vpop.f32.mrf.mxu0
        %v5799 = vadd.f32 0.0, %v5798
        %v5800 = vpop.f32.mrf.mxu0
        %5801 = vmatprep.mubr.bf16.mxu0 0
        %5802 = vmatmul.mubr.bf16.gmra.mxu0 %v5475
        %v5803 = vpop.f32.mrf.mxu0
        %v5804 = vadd.f32 0.0, %v5803
        %v5805 = vpop.f32.mrf.mxu0
        %v5806 = vpop.f32.mrf.mxu0
        %v5807 = vadd.f32 0.0, %v5806
        %v5808 = vpop.f32.mrf.mxu0
        %5809 = vmatprep.mubr.bf16.mxu0 0
        %5810 = vmatmul.mubr.bf16.gmra.mxu0 %v5478
        %v5811 = vpop.f32.mrf.mxu0
        %v5812 = vadd.f32 0.0, %v5811
        %v5813 = vpop.f32.mrf.mxu0
        %v5814 = vpop.f32.mrf.mxu0
        %v5815 = vpop.f32.mrf.mxu0
        %5816 = vdwg.mxu0
        %v5817 = vadd.f32 %v4999, %v5517
        %v5818 = vadd.f32 %v5000, %v5522
        %v5819 = vadd.f32 %v5001, %v5525
        %v5820 = vadd.f32 %v5002, %v5530
        %v5821 = vadd.f32 %v5003, %v5533
        %v5822 = vadd.f32 %v5004, %v5538
        %v5823 = vadd.f32 %v5005, %v5541
        %v5824 = vadd.f32 %v5006, %v5546
        %v5825 = vadd.f32 %v5007, %v5555
        %v5826 = vadd.f32 %v5008, %v5560
        %v5827 = vadd.f32 %v5009, %v5563
        %v5828 = vadd.f32 %v5010, %v5568
        %v5829 = vadd.f32 %v5011, %v5571
        %v5830 = vadd.f32 %v5012, %v5576
        %v5831 = vadd.f32 %v5013, %v5579
        %v5832 = vadd.f32 %v5014, %v5584
        %v5833 = vadd.f32 %v5015, %v5593
        %v5834 = vadd.f32 %v5016, %v5598
        %v5835 = vadd.f32 %v5017, %v5601
        %v5836 = vadd.f32 %v5018, %v5606
        %v5837 = vadd.f32 %v5019, %v5609
        %v5838 = vadd.f32 %v5020, %v5614
        %v5839 = vadd.f32 %v5021, %v5617
        %v5840 = vadd.f32 %v5022, %v5622
        %v5841 = vadd.f32 %v5023, %v5631
        %v5842 = vadd.f32 %v5024, %v5636
        %v5843 = vadd.f32 %v5025, %v5639
        %v5844 = vadd.f32 %v5026, %v5644
        %v5845 = vadd.f32 %v5027, %v5647
        %v5846 = vadd.f32 %v5028, %v5652
        %v5847 = vadd.f32 %v5029, %v5655
        %v5848 = vadd.f32 %v5030, %v5660
        %v5849 = vadd.f32 %v5031, %v5669
        %v5850 = vadd.f32 %v5032, %v5674
        %v5851 = vadd.f32 %v5033, %v5677
        %v5852 = vadd.f32 %v5034, %v5682
        %v5853 = vadd.f32 %v5035, %v5685
        %v5854 = vadd.f32 %v5036, %v5690
        %v5855 = vadd.f32 %v5037, %v5693
        %v5856 = vadd.f32 %v5038, %v5698
        %v5857 = vadd.f32 %v5039, %v5707
        %v5858 = vadd.f32 %v5040, %v5712
        %v5859 = vadd.f32 %v5041, %v5715
        %v5860 = vadd.f32 %v5042, %v5720
        %v5861 = vadd.f32 %v5043, %v5723
        %v5862 = vadd.f32 %v5044, %v5728
        %v5863 = vadd.f32 %v5045, %v5731
        %v5864 = vadd.f32 %v5046, %v5736
        %v5865 = vadd.f32 %v5047, %v5745
        %v5866 = vadd.f32 %v5048, %v5750
        %v5867 = vadd.f32 %v5049, %v5753
        %v5868 = vadd.f32 %v5050, %v5758
        %v5869 = vadd.f32 %v5051, %v5761
        %v5870 = vadd.f32 %v5052, %v5766
        %v5871 = vadd.f32 %v5053, %v5769
        %v5872 = vadd.f32 %v5054, %v5774
        %v5873 = vadd.f32 %v5055, %v5783
        %v5874 = vadd.f32 %v5056, %v5788
        %v5875 = vadd.f32 %v5057, %v5791
        %v5876 = vadd.f32 %v5058, %v5796
        %v5877 = vadd.f32 %v5059, %v5799
        %v5878 = vadd.f32 %v5060, %v5804
        %v5879 = vadd.f32 %v5061, %v5807
        %v5880 = vadd.f32 %v5062, %v5812
        %v5881 = vld [vmem:[#allocation2 + $0x50] sm:$0xf]
        %v5882 = vld [vmem:[#allocation2 + $0x54] sm:$0xf]
        %v5883 = vld [vmem:[#allocation2 + $0x58] sm:$0xf]
        %v5884 = vld [vmem:[#allocation2 + $0x5c] sm:$0xf]
        %v5885 = vld [vmem:[#allocation2 + $0x60] sm:$0xf]
        %v5886 = vld [vmem:[#allocation2 + $0x64] sm:$0xf]
        %v5887 = vld [vmem:[#allocation2 + $0x68] sm:$0xf]
        %v5888 = vld [vmem:[#allocation2 + $0x6c] sm:$0xf]
        %v5889 = vld [vmem:[#allocation2 + $0x70] sm:$0xf]
        %v5890 = vld [vmem:[#allocation2 + $0x74] sm:$0xf]
        %v5891 = vld [vmem:[#allocation2 + $0x78] sm:$0xf]
        %v5892 = vld [vmem:[#allocation2 + $0x7c] sm:$0xf]
        %v5893 = vld [vmem:[#allocation2 + $0x80] sm:$0xf]
        %v5894 = vld [vmem:[#allocation2 + $0x84] sm:$0xf]
        %v5895 = vld [vmem:[#allocation2 + $0x88] sm:$0xf]
        %v5896 = vld [vmem:[#allocation2 + $0x8c] sm:$0xf]
        %v5897 = vld [vmem:[#allocation2 + $0x90] sm:$0xf]
        %v5898 = vld [vmem:[#allocation2 + $0x94] sm:$0xf]
        %v5899 = vld [vmem:[#allocation2 + $0x98] sm:$0xf]
        %v5900 = vld [vmem:[#allocation2 + $0x9c] sm:$0xf]
        %v5901 = vld [vmem:[#allocation2 + $0xa0] sm:$0xf]
        %v5902 = vld [vmem:[#allocation2 + $0xa4] sm:$0xf]
        %v5903 = vld [vmem:[#allocation2 + $0xa8] sm:$0xf]
        %v5904 = vld [vmem:[#allocation2 + $0xac] sm:$0xf]
        %v5905 = vld [vmem:[#allocation2 + $0xb0] sm:$0xf]
        %v5906 = vld [vmem:[#allocation2 + $0xb4] sm:$0xf]
        %v5907 = vld [vmem:[#allocation2 + $0xb8] sm:$0xf]
        %v5908 = vld [vmem:[#allocation2 + $0xbc] sm:$0xf]
        %v5909 = vld [vmem:[#allocation2 + $0xc0] sm:$0xf]
        %v5910 = vld [vmem:[#allocation2 + $0xc4] sm:$0xf]
        %v5911 = vld [vmem:[#allocation2 + $0xc8] sm:$0xf]
        %v5912 = vld [vmem:[#allocation2 + $0xcc] sm:$0xf]
        %v5913 = vld [vmem:[#allocation2 + $0xd0] sm:$0xf]
        %v5914 = vld [vmem:[#allocation2 + $0xd4] sm:$0xf]
        %v5915 = vld [vmem:[#allocation2 + $0xd8] sm:$0xf]
        %v5916 = vld [vmem:[#allocation2 + $0xdc] sm:$0xf]
        %v5917 = vld [vmem:[#allocation2 + $0xe0] sm:$0xf]
        %v5918 = vld [vmem:[#allocation2 + $0xe4] sm:$0xf]
        %v5919 = vld [vmem:[#allocation2 + $0xe8] sm:$0xf]
        %v5920 = vld [vmem:[#allocation2 + $0xec] sm:$0xf]
        %v5921 = vld [vmem:[#allocation2 + $0xf0] sm:$0xf]
        %v5922 = vld [vmem:[#allocation2 + $0xf4] sm:$0xf]
        %v5923 = vld [vmem:[#allocation2 + $0xf8] sm:$0xf]
        %v5924 = vld [vmem:[#allocation2 + $0xfc] sm:$0xf]
        %v5925 = vld [vmem:[#allocation2 + $0x100] sm:$0xf]
        %v5926 = vld [vmem:[#allocation2 + $0x104] sm:$0xf]
        %v5927 = vld [vmem:[#allocation2 + $0x108] sm:$0xf]
        %v5928 = vld [vmem:[#allocation2 + $0x10c] sm:$0xf]
        %v5929 = vld [vmem:[#allocation2 + $0x110] sm:$0xf]
        %v5930 = vld [vmem:[#allocation2 + $0x114] sm:$0xf]
        %v5931 = vld [vmem:[#allocation2 + $0x118] sm:$0xf]
        %v5932 = vld [vmem:[#allocation2 + $0x11c] sm:$0xf]
        %v5933 = vld [vmem:[#allocation2 + $0x120] sm:$0xf]
        %v5934 = vld [vmem:[#allocation2 + $0x124] sm:$0xf]
        %v5935 = vld [vmem:[#allocation2 + $0x128] sm:$0xf]
        %v5936 = vld [vmem:[#allocation2 + $0x12c] sm:$0xf]
        %v5937 = vld [vmem:[#allocation2 + $0x130] sm:$0xf]
        %v5938 = vld [vmem:[#allocation2 + $0x134] sm:$0xf]
        %v5939 = vld [vmem:[#allocation2 + $0x138] sm:$0xf]
        %v5940 = vld [vmem:[#allocation2 + $0x13c] sm:$0xf]
        %v5941 = vld [vmem:[#allocation2 + $0x140] sm:$0xf]
        %v5942 = vld [vmem:[#allocation2 + $0x144] sm:$0xf]
        %v5943 = vld [vmem:[#allocation2 + $0x148] sm:$0xf]
        %v5944 = vld [vmem:[#allocation2 + $0x14c] sm:$0xf]
        %v5945 = vld [vmem:[#allocation2 + $0x150] sm:$0xf]
        %v5946 = vld [vmem:[#allocation2 + $0x154] sm:$0xf]
        %v5947 = vld [vmem:[#allocation2 + $0x158] sm:$0xf]
        %v5948 = vld [vmem:[#allocation2 + $0x15c] sm:$0xf]
        %v5949 = vld [vmem:[#allocation2 + $0x160] sm:$0xf]
        %v5950 = vld [vmem:[#allocation2 + $0x164] sm:$0xf]
        %v5951 = vld [vmem:[#allocation2 + $0x168] sm:$0xf]
        %v5952 = vld [vmem:[#allocation2 + $0x16c] sm:$0xf]
        %v5953 = vld [vmem:[#allocation2 + $0x170] sm:$0xf]
        %v5954 = vld [vmem:[#allocation2 + $0x174] sm:$0xf]
        %v5955 = vld [vmem:[#allocation2 + $0x178] sm:$0xf]
        %v5956 = vld [vmem:[#allocation2 + $0x17c] sm:$0xf]
        %v5957 = vld [vmem:[#allocation2 + $0x180] sm:$0xf]
        %v5958 = vld [vmem:[#allocation2 + $0x184] sm:$0xf]
        %v5959 = vld [vmem:[#allocation2 + $0x188] sm:$0xf]
        %v5960 = vld [vmem:[#allocation2 + $0x18c] sm:$0xf]
        %s5961 = scalar_lea.vmem %s2, 96
        %v5962 = vld [vmem:[%s5961] sm:$0xf]
        %v5963 = vld [vmem:[%s5961 + $0x4] sm:$0xf]
        %v5964 = vld [vmem:[%s5961 + $0x8] sm:$0xf]
        %v5965 = vld [vmem:[%s5961 + $0xc] sm:$0xf]
        %v6046 = vunpack.c.l.b16 %v5881
        %v6047 = vunpack.c.l.b16 %v5882
        %v6048 = vunpack.c.l.b16 %v5883
        %v6049 = vunpack.c.l.b16 %v5884
        %v6050 = vunpack.c.l.b16 %v5885
        %v6051 = vunpack.c.l.b16 %v5886
        %v6052 = vunpack.c.l.b16 %v5887
        %v6053 = vunpack.c.l.b16 %v5888
        %v6054 = vunpack.c.l.b16 %v5889
        %v6055 = vunpack.c.l.b16 %v5890
        %v6056 = vunpack.c.l.b16 %v5891
        %v6057 = vunpack.c.l.b16 %v5892
        %v6058 = vunpack.c.l.b16 %v5893
        %v6059 = vunpack.c.l.b16 %v5894
        %v6060 = vunpack.c.l.b16 %v5895
        %v6061 = vunpack.c.l.b16 %v5896
        %v6062 = vunpack.c.l.b16 %v5897
        %v6063 = vunpack.c.l.b16 %v5898
        %v6064 = vunpack.c.l.b16 %v5899
        %v6065 = vunpack.c.l.b16 %v5900
        %v6066 = vunpack.c.l.b16 %v5901
        %v6067 = vunpack.c.l.b16 %v5902
        %v6068 = vunpack.c.l.b16 %v5903
        %v6069 = vunpack.c.l.b16 %v5904
        %v6070 = vunpack.c.l.b16 %v5905
        %v6071 = vunpack.c.l.b16 %v5906
        %v6072 = vunpack.c.l.b16 %v5907
        %v6073 = vunpack.c.l.b16 %v5908
        %v6074 = vunpack.c.l.b16 %v5909
        %v6075 = vunpack.c.l.b16 %v5910
        %v6076 = vunpack.c.l.b16 %v5911
        %v6077 = vunpack.c.l.b16 %v5912
        %v6078 = vunpack.c.l.b16 %v5913
        %v6079 = vunpack.c.l.b16 %v5914
        %v6080 = vunpack.c.l.b16 %v5915
        %v6081 = vunpack.c.l.b16 %v5916
        %v6082 = vunpack.c.l.b16 %v5917
        %v6083 = vunpack.c.l.b16 %v5918
        %v6084 = vunpack.c.l.b16 %v5919
        %v6085 = vunpack.c.l.b16 %v5920
        %v6086 = vunpack.c.l.b16 %v5921
        %v6087 = vunpack.c.l.b16 %v5922
        %v6088 = vunpack.c.l.b16 %v5923
        %v6089 = vunpack.c.l.b16 %v5924
        %v6090 = vunpack.c.l.b16 %v5925
        %v6091 = vunpack.c.l.b16 %v5926
        %v6092 = vunpack.c.l.b16 %v5927
        %v6093 = vunpack.c.l.b16 %v5928
        %v6094 = vunpack.c.l.b16 %v5929
        %v6095 = vunpack.c.l.b16 %v5930
        %v6096 = vunpack.c.l.b16 %v5931
        %v6097 = vunpack.c.l.b16 %v5932
        %v6098 = vunpack.c.l.b16 %v5933
        %v6099 = vunpack.c.l.b16 %v5934
        %v6100 = vunpack.c.l.b16 %v5935
        %v6101 = vunpack.c.l.b16 %v5936
        %v6102 = vunpack.c.l.b16 %v5937
        %v6103 = vunpack.c.l.b16 %v5938
        %v6104 = vunpack.c.l.b16 %v5939
        %v6105 = vunpack.c.l.b16 %v5940
        %v6106 = vunpack.c.l.b16 %v5941
        %v6107 = vunpack.c.l.b16 %v5942
        %v6108 = vunpack.c.l.b16 %v5943
        %v6109 = vunpack.c.l.b16 %v5944
        %v6110 = vunpack.c.l.b16 %v5945
        %v6111 = vunpack.c.l.b16 %v5946
        %v6112 = vunpack.c.l.b16 %v5947
        %v6113 = vunpack.c.l.b16 %v5948
        %v6114 = vunpack.c.l.b16 %v5949
        %v6115 = vunpack.c.l.b16 %v5950
        %v6116 = vunpack.c.l.b16 %v5951
        %v6117 = vunpack.c.l.b16 %v5952
        %v6118 = vunpack.c.l.b16 %v5953
        %v6119 = vunpack.c.l.b16 %v5954
        %v6120 = vunpack.c.l.b16 %v5955
        %v6121 = vunpack.c.l.b16 %v5956
        %v6122 = vunpack.c.l.b16 %v5957
        %v6123 = vunpack.c.l.b16 %v5958
        %v6124 = vunpack.c.l.b16 %v5959
        %v6125 = vunpack.c.l.b16 %v5960
        %v6126 = vpack.c.b16 %v6047, %v6046
        %v6127 = vpack.c.b16 %v6049, %v6048
        %v6128 = vpack.c.b16 %v6051, %v6050
        %v6129 = vpack.c.b16 %v6053, %v6052
        %v6130 = vpack.c.b16 %v6055, %v6054
        %v6131 = vpack.c.b16 %v6057, %v6056
        %v6132 = vpack.c.b16 %v6059, %v6058
        %v6133 = vpack.c.b16 %v6061, %v6060
        %v6134 = vpack.c.b16 %v6063, %v6062
        %v6135 = vpack.c.b16 %v6065, %v6064
        %v6136 = vpack.c.b16 %v6067, %v6066
        %v6137 = vpack.c.b16 %v6069, %v6068
        %v6138 = vpack.c.b16 %v6071, %v6070
        %v6139 = vpack.c.b16 %v6073, %v6072
        %v6140 = vpack.c.b16 %v6075, %v6074
        %v6141 = vpack.c.b16 %v6077, %v6076
        %v6142 = vpack.c.b16 %v6079, %v6078
        %v6143 = vpack.c.b16 %v6081, %v6080
        %v6144 = vpack.c.b16 %v6083, %v6082
        %v6145 = vpack.c.b16 %v6085, %v6084
        %v6146 = vpack.c.b16 %v6087, %v6086
        %v6147 = vpack.c.b16 %v6089, %v6088
        %v6148 = vpack.c.b16 %v6091, %v6090
        %v6149 = vpack.c.b16 %v6093, %v6092
        %v6150 = vpack.c.b16 %v6095, %v6094
        %v6151 = vpack.c.b16 %v6097, %v6096
        %v6152 = vpack.c.b16 %v6099, %v6098
        %v6153 = vpack.c.b16 %v6101, %v6100
        %v6154 = vpack.c.b16 %v6103, %v6102
        %v6155 = vpack.c.b16 %v6105, %v6104
        %v6156 = vpack.c.b16 %v6107, %v6106
        %v6157 = vpack.c.b16 %v6109, %v6108
        %v6158 = vpack.c.b16 %v6111, %v6110
        %v6159 = vpack.c.b16 %v6113, %v6112
        %v6160 = vpack.c.b16 %v6115, %v6114
        %v6161 = vpack.c.b16 %v6117, %v6116
        %v6162 = vpack.c.b16 %v6119, %v6118
        %v6163 = vpack.c.b16 %v6121, %v6120
        %v6164 = vpack.c.b16 %v6123, %v6122
        %v6165 = vpack.c.b16 %v6125, %v6124
        %v6170 = vunpack.c.l.b16 %v5962
        %v6171 = vunpack.c.l.b16 %v5963
        %v6172 = vunpack.c.l.b16 %v5964
        %v6173 = vunpack.c.l.b16 %v5965
        %v6174 = vpack.c.b16 %v6171, %v6170
        %v6175 = vpack.c.b16 %v6173, %v6172
        %v6179 = vsel %vm1640, %v6126, 0
        %v6182 = vsel %vm1640, %v6127, 0
        %v6185 = vsel %vm1640, %v6128, 0
        %v6188 = vsel %vm1640, %v6129, 0
        %v6191 = vsel %vm1640, %v6130, 0
        %v6194 = vsel %vm1640, %v6131, 0
        %v6197 = vsel %vm1640, %v6132, 0
        %v6200 = vsel %vm1640, %v6133, 0
        %v6203 = vsel %vm1640, %v6134, 0
        %v6206 = vsel %vm1640, %v6135, 0
        %v6209 = vsel %vm1640, %v6136, 0
        %v6212 = vsel %vm1640, %v6137, 0
        %v6215 = vsel %vm1640, %v6138, 0
        %v6218 = vsel %vm1640, %v6139, 0
        %v6221 = vsel %vm1640, %v6140, 0
        %v6224 = vsel %vm1640, %v6141, 0
        %v6227 = vsel %vm1640, %v6142, 0
        %v6230 = vsel %vm1640, %v6143, 0
        %v6233 = vsel %vm1640, %v6144, 0
        %v6236 = vsel %vm1640, %v6145, 0
        %v6239 = vsel %vm1640, %v6146, 0
        %v6242 = vsel %vm1640, %v6147, 0
        %v6245 = vsel %vm1640, %v6148, 0
        %v6248 = vsel %vm1640, %v6149, 0
        %v6251 = vsel %vm1640, %v6150, 0
        %v6254 = vsel %vm1640, %v6151, 0
        %v6257 = vsel %vm1640, %v6152, 0
        %v6260 = vsel %vm1640, %v6153, 0
        %v6263 = vsel %vm1640, %v6154, 0
        %v6266 = vsel %vm1640, %v6155, 0
        %v6269 = vsel %vm1640, %v6156, 0
        %v6272 = vsel %vm1640, %v6157, 0
        %v6275 = vsel %vm1640, %v6158, 0
        %v6278 = vsel %vm1640, %v6159, 0
        %v6281 = vsel %vm1640, %v6160, 0
        %v6284 = vsel %vm1640, %v6161, 0
        %v6287 = vsel %vm1640, %v6162, 0
        %v6290 = vsel %vm1640, %v6163, 0
        %v6293 = vsel %vm1640, %v6164, 0
        %v6296 = vsel %vm1640, %v6165, 0
        %6298 = vmatprep.subr.bf16.mxu0 0
        %6299 = vmatpush1.bf16.msra.mxu0 0
        %6300 = vmatprep.subr.bf16.mxu0 0
        %6301 = vmatpush1.bf16.msra.mxu0 0
        %6302 = vmatprep.subr.bf16.mxu0 0
        %6303 = vmatpush1.bf16.msra.mxu0 0
        %6304 = vmatprep.subr.bf16.mxu0 0
        %6305 = vmatpush1.bf16.msra.mxu0 0
        %6306 = vmatprep.subr.bf16.mxu0 0
        %6307 = vmatpush1.bf16.msra.mxu0 0
        %6308 = vmatprep.subr.bf16.mxu0 0
        %6309 = vmatpush1.bf16.msra.mxu0 0
        %6310 = vmatprep.subr.bf16.mxu0 0
        %6311 = vmatpush1.bf16.msra.mxu0 %v6175
        %6312 = vmatprep.subr.bf16.mxu0 0
        %6313 = vmatpush1.bf16.msra.mxu0 %v6174
        %6314 = vmatprep.subr.bf16.mxu0 0
        %6315 = vmatpush2.bf16.msra.mxu0 0
        %6316 = vmatprep.subr.bf16.mxu0 0
        %6317 = vmatpush2.bf16.msra.mxu0 0
        %6318 = vmatprep.subr.bf16.mxu0 0
        %6319 = vmatpush2.bf16.msra.mxu0 0
        %6320 = vmatprep.subr.bf16.mxu0 0
        %6321 = vmatpush2.bf16.msra.mxu0 0
        %6322 = vmatprep.subr.bf16.mxu0 0
        %6323 = vmatpush2.bf16.msra.mxu0 0
        %6324 = vmatprep.subr.bf16.mxu0 0
        %6325 = vmatpush2.bf16.msra.mxu0 0
        %6326 = vmatprep.subr.bf16.mxu0 0
        %6327 = vmatpush2.bf16.msra.mxu0 0
        %6328 = vmatprep.subr.bf16.mxu0 0
        %6329 = vmatpush2.bf16.msra.mxu0 0
        %6330 = vmatprep.mubr.bf16.mxu0 0
        %6331 = vmatmul.mubr.bf16.gmra.mxu0 %v6179
        %v6332 = vpop.f32.mrf.mxu0
        %v6333 = vpop.f32.mrf.mxu0
        %v6334 = vpop.f32.mrf.mxu0
        %v6335 = vadd.f32 0.0, %v6334
        %v6336 = vpop.f32.mrf.mxu0
        %6337 = vmatprep.mubr.bf16.mxu0 0
        %6338 = vmatmul.mubr.bf16.gmra.mxu0 %v6182
        %v6339 = vpop.f32.mrf.mxu0
        %v6340 = vadd.f32 0.0, %v6339
        %v6341 = vpop.f32.mrf.mxu0
        %v6342 = vpop.f32.mrf.mxu0
        %v6343 = vadd.f32 0.0, %v6342
        %v6344 = vpop.f32.mrf.mxu0
        %6345 = vmatprep.mubr.bf16.mxu0 0
        %6346 = vmatmul.mubr.bf16.gmra.mxu0 %v6185
        %v6347 = vpop.f32.mrf.mxu0
        %v6348 = vadd.f32 0.0, %v6347
        %v6349 = vpop.f32.mrf.mxu0
        %v6350 = vpop.f32.mrf.mxu0
        %v6351 = vadd.f32 0.0, %v6350
        %v6352 = vpop.f32.mrf.mxu0
        %6353 = vmatprep.mubr.bf16.mxu0 0
        %6354 = vmatmul.mubr.bf16.gmra.mxu0 %v6188
        %v6355 = vpop.f32.mrf.mxu0
        %v6356 = vadd.f32 0.0, %v6355
        %v6357 = vpop.f32.mrf.mxu0
        %v6358 = vpop.f32.mrf.mxu0
        %v6359 = vadd.f32 0.0, %v6358
        %v6360 = vpop.f32.mrf.mxu0
        %6361 = vmatprep.mubr.bf16.mxu0 0
        %6362 = vmatmul.mubr.bf16.gmra.mxu0 %v6191
        %v6363 = vpop.f32.mrf.mxu0
        %v6364 = vadd.f32 0.0, %v6363
        %v6365 = vpop.f32.mrf.mxu0
        %v6366 = vpop.f32.mrf.mxu0
        %v6367 = vpop.f32.mrf.mxu0
        %6368 = vmatprep.mubr.bf16.mxu0 0
        %6369 = vmatmul.mubr.bf16.gmra.mxu0 %v6194
        %v6370 = vpop.f32.mrf.mxu0
        %v6371 = vpop.f32.mrf.mxu0
        %v6372 = vpop.f32.mrf.mxu0
        %v6373 = vadd.f32 0.0, %v6372
        %v6374 = vpop.f32.mrf.mxu0
        %6375 = vmatprep.mubr.bf16.mxu0 0
        %6376 = vmatmul.mubr.bf16.gmra.mxu0 %v6197
        %v6377 = vpop.f32.mrf.mxu0
        %v6378 = vadd.f32 0.0, %v6377
        %v6379 = vpop.f32.mrf.mxu0
        %v6380 = vpop.f32.mrf.mxu0
        %v6381 = vadd.f32 0.0, %v6380
        %v6382 = vpop.f32.mrf.mxu0
        %6383 = vmatprep.mubr.bf16.mxu0 0
        %6384 = vmatmul.mubr.bf16.gmra.mxu0 %v6200
        %v6385 = vpop.f32.mrf.mxu0
        %v6386 = vadd.f32 0.0, %v6385
        %v6387 = vpop.f32.mrf.mxu0
        %v6388 = vpop.f32.mrf.mxu0
        %v6389 = vadd.f32 0.0, %v6388
        %v6390 = vpop.f32.mrf.mxu0
        %6391 = vmatprep.mubr.bf16.mxu0 0
        %6392 = vmatmul.mubr.bf16.gmra.mxu0 %v6203
        %v6393 = vpop.f32.mrf.mxu0
        %v6394 = vadd.f32 0.0, %v6393
        %v6395 = vpop.f32.mrf.mxu0
        %v6396 = vpop.f32.mrf.mxu0
        %v6397 = vadd.f32 0.0, %v6396
        %v6398 = vpop.f32.mrf.mxu0
        %6399 = vmatprep.mubr.bf16.mxu0 0
        %6400 = vmatmul.mubr.bf16.gmra.mxu0 %v6206
        %v6401 = vpop.f32.mrf.mxu0
        %v6402 = vadd.f32 0.0, %v6401
        %v6403 = vpop.f32.mrf.mxu0
        %v6404 = vpop.f32.mrf.mxu0
        %v6405 = vpop.f32.mrf.mxu0
        %6406 = vmatprep.mubr.bf16.mxu0 0
        %6407 = vmatmul.mubr.bf16.gmra.mxu0 %v6209
        %v6408 = vpop.f32.mrf.mxu0
        %v6409 = vpop.f32.mrf.mxu0
        %v6410 = vpop.f32.mrf.mxu0
        %v6411 = vadd.f32 0.0, %v6410
        %v6412 = vpop.f32.mrf.mxu0
        %6413 = vmatprep.mubr.bf16.mxu0 0
        %6414 = vmatmul.mubr.bf16.gmra.mxu0 %v6212
        %v6415 = vpop.f32.mrf.mxu0
        %v6416 = vadd.f32 0.0, %v6415
        %v6417 = vpop.f32.mrf.mxu0
        %v6418 = vpop.f32.mrf.mxu0
        %v6419 = vadd.f32 0.0, %v6418
        %v6420 = vpop.f32.mrf.mxu0
        %6421 = vmatprep.mubr.bf16.mxu0 0
        %6422 = vmatmul.mubr.bf16.gmra.mxu0 %v6215
        %v6423 = vpop.f32.mrf.mxu0
        %v6424 = vadd.f32 0.0, %v6423
        %v6425 = vpop.f32.mrf.mxu0
        %v6426 = vpop.f32.mrf.mxu0
        %v6427 = vadd.f32 0.0, %v6426
        %v6428 = vpop.f32.mrf.mxu0
        %6429 = vmatprep.mubr.bf16.mxu0 0
        %6430 = vmatmul.mubr.bf16.gmra.mxu0 %v6218
        %v6431 = vpop.f32.mrf.mxu0
        %v6432 = vadd.f32 0.0, %v6431
        %v6433 = vpop.f32.mrf.mxu0
        %v6434 = vpop.f32.mrf.mxu0
        %v6435 = vadd.f32 0.0, %v6434
        %v6436 = vpop.f32.mrf.mxu0
        %6437 = vmatprep.mubr.bf16.mxu0 0
        %6438 = vmatmul.mubr.bf16.gmra.mxu0 %v6221
        %v6439 = vpop.f32.mrf.mxu0
        %v6440 = vadd.f32 0.0, %v6439
        %v6441 = vpop.f32.mrf.mxu0
        %v6442 = vpop.f32.mrf.mxu0
        %v6443 = vpop.f32.mrf.mxu0
        %6444 = vmatprep.mubr.bf16.mxu0 0
        %6445 = vmatmul.mubr.bf16.gmra.mxu0 %v6224
        %v6446 = vpop.f32.mrf.mxu0
        %v6447 = vpop.f32.mrf.mxu0
        %v6448 = vpop.f32.mrf.mxu0
        %v6449 = vadd.f32 0.0, %v6448
        %v6450 = vpop.f32.mrf.mxu0
        %6451 = vmatprep.mubr.bf16.mxu0 0
        %6452 = vmatmul.mubr.bf16.gmra.mxu0 %v6227
        %v6453 = vpop.f32.mrf.mxu0
        %v6454 = vadd.f32 0.0, %v6453
        %v6455 = vpop.f32.mrf.mxu0
        %v6456 = vpop.f32.mrf.mxu0
        %v6457 = vadd.f32 0.0, %v6456
        %v6458 = vpop.f32.mrf.mxu0
        %6459 = vmatprep.mubr.bf16.mxu0 0
        %6460 = vmatmul.mubr.bf16.gmra.mxu0 %v6230
        %v6461 = vpop.f32.mrf.mxu0
        %v6462 = vadd.f32 0.0, %v6461
        %v6463 = vpop.f32.mrf.mxu0
        %v6464 = vpop.f32.mrf.mxu0
        %v6465 = vadd.f32 0.0, %v6464
        %v6466 = vpop.f32.mrf.mxu0
        %6467 = vmatprep.mubr.bf16.mxu0 0
        %6468 = vmatmul.mubr.bf16.gmra.mxu0 %v6233
        %v6469 = vpop.f32.mrf.mxu0
        %v6470 = vadd.f32 0.0, %v6469
        %v6471 = vpop.f32.mrf.mxu0
        %v6472 = vpop.f32.mrf.mxu0
        %v6473 = vadd.f32 0.0, %v6472
        %v6474 = vpop.f32.mrf.mxu0
        %6475 = vmatprep.mubr.bf16.mxu0 0
        %6476 = vmatmul.mubr.bf16.gmra.mxu0 %v6236
        %v6477 = vpop.f32.mrf.mxu0
        %v6478 = vadd.f32 0.0, %v6477
        %v6479 = vpop.f32.mrf.mxu0
        %v6480 = vpop.f32.mrf.mxu0
        %v6481 = vpop.f32.mrf.mxu0
        %6482 = vmatprep.mubr.bf16.mxu0 0
        %6483 = vmatmul.mubr.bf16.gmra.mxu0 %v6239
        %v6484 = vpop.f32.mrf.mxu0
        %v6485 = vpop.f32.mrf.mxu0
        %v6486 = vpop.f32.mrf.mxu0
        %v6487 = vadd.f32 0.0, %v6486
        %v6488 = vpop.f32.mrf.mxu0
        %6489 = vmatprep.mubr.bf16.mxu0 0
        %6490 = vmatmul.mubr.bf16.gmra.mxu0 %v6242
        %v6491 = vpop.f32.mrf.mxu0
        %v6492 = vadd.f32 0.0, %v6491
        %v6493 = vpop.f32.mrf.mxu0
        %v6494 = vpop.f32.mrf.mxu0
        %v6495 = vadd.f32 0.0, %v6494
        %v6496 = vpop.f32.mrf.mxu0
        %6497 = vmatprep.mubr.bf16.mxu0 0
        %6498 = vmatmul.mubr.bf16.gmra.mxu0 %v6245
        %v6499 = vpop.f32.mrf.mxu0
        %v6500 = vadd.f32 0.0, %v6499
        %v6501 = vpop.f32.mrf.mxu0
        %v6502 = vpop.f32.mrf.mxu0
        %v6503 = vadd.f32 0.0, %v6502
        %v6504 = vpop.f32.mrf.mxu0
        %6505 = vmatprep.mubr.bf16.mxu0 0
        %6506 = vmatmul.mubr.bf16.gmra.mxu0 %v6248
        %v6507 = vpop.f32.mrf.mxu0
        %v6508 = vadd.f32 0.0, %v6507
        %v6509 = vpop.f32.mrf.mxu0
        %v6510 = vpop.f32.mrf.mxu0
        %v6511 = vadd.f32 0.0, %v6510
        %v6512 = vpop.f32.mrf.mxu0
        %6513 = vmatprep.mubr.bf16.mxu0 0
        %6514 = vmatmul.mubr.bf16.gmra.mxu0 %v6251
        %v6515 = vpop.f32.mrf.mxu0
        %v6516 = vadd.f32 0.0, %v6515
        %v6517 = vpop.f32.mrf.mxu0
        %v6518 = vpop.f32.mrf.mxu0
        %v6519 = vpop.f32.mrf.mxu0
        %6520 = vmatprep.mubr.bf16.mxu0 0
        %6521 = vmatmul.mubr.bf16.gmra.mxu0 %v6254
        %v6522 = vpop.f32.mrf.mxu0
        %v6523 = vpop.f32.mrf.mxu0
        %v6524 = vpop.f32.mrf.mxu0
        %v6525 = vadd.f32 0.0, %v6524
        %v6526 = vpop.f32.mrf.mxu0
        %6527 = vmatprep.mubr.bf16.mxu0 0
        %6528 = vmatmul.mubr.bf16.gmra.mxu0 %v6257
        %v6529 = vpop.f32.mrf.mxu0
        %v6530 = vadd.f32 0.0, %v6529
        %v6531 = vpop.f32.mrf.mxu0
        %v6532 = vpop.f32.mrf.mxu0
        %v6533 = vadd.f32 0.0, %v6532
        %v6534 = vpop.f32.mrf.mxu0
        %6535 = vmatprep.mubr.bf16.mxu0 0
        %6536 = vmatmul.mubr.bf16.gmra.mxu0 %v6260
        %v6537 = vpop.f32.mrf.mxu0
        %v6538 = vadd.f32 0.0, %v6537
        %v6539 = vpop.f32.mrf.mxu0
        %v6540 = vpop.f32.mrf.mxu0
        %v6541 = vadd.f32 0.0, %v6540
        %v6542 = vpop.f32.mrf.mxu0
        %6543 = vmatprep.mubr.bf16.mxu0 0
        %6544 = vmatmul.mubr.bf16.gmra.mxu0 %v6263
        %v6545 = vpop.f32.mrf.mxu0
        %v6546 = vadd.f32 0.0, %v6545
        %v6547 = vpop.f32.mrf.mxu0
        %v6548 = vpop.f32.mrf.mxu0
        %v6549 = vadd.f32 0.0, %v6548
        %v6550 = vpop.f32.mrf.mxu0
        %6551 = vmatprep.mubr.bf16.mxu0 0
        %6552 = vmatmul.mubr.bf16.gmra.mxu0 %v6266
        %v6553 = vpop.f32.mrf.mxu0
        %v6554 = vadd.f32 0.0, %v6553
        %v6555 = vpop.f32.mrf.mxu0
        %v6556 = vpop.f32.mrf.mxu0
        %v6557 = vpop.f32.mrf.mxu0
        %6558 = vmatprep.mubr.bf16.mxu0 0
        %6559 = vmatmul.mubr.bf16.gmra.mxu0 %v6269
        %v6560 = vpop.f32.mrf.mxu0
        %v6561 = vpop.f32.mrf.mxu0
        %v6562 = vpop.f32.mrf.mxu0
        %v6563 = vadd.f32 0.0, %v6562
        %v6564 = vpop.f32.mrf.mxu0
        %6565 = vmatprep.mubr.bf16.mxu0 0
        %6566 = vmatmul.mubr.bf16.gmra.mxu0 %v6272
        %v6567 = vpop.f32.mrf.mxu0
        %v6568 = vadd.f32 0.0, %v6567
        %v6569 = vpop.f32.mrf.mxu0
        %v6570 = vpop.f32.mrf.mxu0
        %v6571 = vadd.f32 0.0, %v6570
        %v6572 = vpop.f32.mrf.mxu0
        %6573 = vmatprep.mubr.bf16.mxu0 0
        %6574 = vmatmul.mubr.bf16.gmra.mxu0 %v6275
        %v6575 = vpop.f32.mrf.mxu0
        %v6576 = vadd.f32 0.0, %v6575
        %v6577 = vpop.f32.mrf.mxu0
        %v6578 = vpop.f32.mrf.mxu0
        %v6579 = vadd.f32 0.0, %v6578
        %v6580 = vpop.f32.mrf.mxu0
        %6581 = vmatprep.mubr.bf16.mxu0 0
        %6582 = vmatmul.mubr.bf16.gmra.mxu0 %v6278
        %v6583 = vpop.f32.mrf.mxu0
        %v6584 = vadd.f32 0.0, %v6583
        %v6585 = vpop.f32.mrf.mxu0
        %v6586 = vpop.f32.mrf.mxu0
        %v6587 = vadd.f32 0.0, %v6586
        %v6588 = vpop.f32.mrf.mxu0
        %6589 = vmatprep.mubr.bf16.mxu0 0
        %6590 = vmatmul.mubr.bf16.gmra.mxu0 %v6281
        %v6591 = vpop.f32.mrf.mxu0
        %v6592 = vadd.f32 0.0, %v6591
        %v6593 = vpop.f32.mrf.mxu0
        %v6594 = vpop.f32.mrf.mxu0
        %v6595 = vpop.f32.mrf.mxu0
        %6596 = vmatprep.mubr.bf16.mxu0 0
        %6597 = vmatmul.mubr.bf16.gmra.mxu0 %v6284
        %v6598 = vpop.f32.mrf.mxu0
        %v6599 = vpop.f32.mrf.mxu0
        %v6600 = vpop.f32.mrf.mxu0
        %v6601 = vadd.f32 0.0, %v6600
        %v6602 = vpop.f32.mrf.mxu0
        %6603 = vmatprep.mubr.bf16.mxu0 0
        %6604 = vmatmul.mubr.bf16.gmra.mxu0 %v6287
        %v6605 = vpop.f32.mrf.mxu0
        %v6606 = vadd.f32 0.0, %v6605
        %v6607 = vpop.f32.mrf.mxu0
        %v6608 = vpop.f32.mrf.mxu0
        %v6609 = vadd.f32 0.0, %v6608
        %v6610 = vpop.f32.mrf.mxu0
        %6611 = vmatprep.mubr.bf16.mxu0 0
        %6612 = vmatmul.mubr.bf16.gmra.mxu0 %v6290
        %v6613 = vpop.f32.mrf.mxu0
        %v6614 = vadd.f32 0.0, %v6613
        %v6615 = vpop.f32.mrf.mxu0
        %v6616 = vpop.f32.mrf.mxu0
        %v6617 = vadd.f32 0.0, %v6616
        %v6618 = vpop.f32.mrf.mxu0
        %6619 = vmatprep.mubr.bf16.mxu0 0
        %6620 = vmatmul.mubr.bf16.gmra.mxu0 %v6293
        %v6621 = vpop.f32.mrf.mxu0
        %v6622 = vadd.f32 0.0, %v6621
        %v6623 = vpop.f32.mrf.mxu0
        %v6624 = vpop.f32.mrf.mxu0
        %v6625 = vadd.f32 0.0, %v6624
        %v6626 = vpop.f32.mrf.mxu0
        %6627 = vmatprep.mubr.bf16.mxu0 0
        %6628 = vmatmul.mubr.bf16.gmra.mxu0 %v6296
        %v6629 = vpop.f32.mrf.mxu0
        %v6630 = vadd.f32 0.0, %v6629
        %v6631 = vpop.f32.mrf.mxu0
        %v6632 = vpop.f32.mrf.mxu0
        %v6633 = vpop.f32.mrf.mxu0
        %6634 = vdwg.mxu0
        %v6635 = vadd.f32 %v5817, %v6335
        %v6636 = vadd.f32 %v5818, %v6340
        %v6637 = vadd.f32 %v5819, %v6343
        %v6638 = vadd.f32 %v5820, %v6348
        %v6639 = vadd.f32 %v5821, %v6351
        %v6640 = vadd.f32 %v5822, %v6356
        %v6641 = vadd.f32 %v5823, %v6359
        %v6642 = vadd.f32 %v5824, %v6364
        %v6643 = vadd.f32 %v5825, %v6373
        %v6644 = vadd.f32 %v5826, %v6378
        %v6645 = vadd.f32 %v5827, %v6381
        %v6646 = vadd.f32 %v5828, %v6386
        %v6647 = vadd.f32 %v5829, %v6389
        %v6648 = vadd.f32 %v5830, %v6394
        %v6649 = vadd.f32 %v5831, %v6397
        %v6650 = vadd.f32 %v5832, %v6402
        %v6651 = vadd.f32 %v5833, %v6411
        %v6652 = vadd.f32 %v5834, %v6416
        %v6653 = vadd.f32 %v5835, %v6419
        %v6654 = vadd.f32 %v5836, %v6424
        %v6655 = vadd.f32 %v5837, %v6427
        %v6656 = vadd.f32 %v5838, %v6432
        %v6657 = vadd.f32 %v5839, %v6435
        %v6658 = vadd.f32 %v5840, %v6440
        %v6659 = vadd.f32 %v5841, %v6449
        %v6660 = vadd.f32 %v5842, %v6454
        %v6661 = vadd.f32 %v5843, %v6457
        %v6662 = vadd.f32 %v5844, %v6462
        %v6663 = vadd.f32 %v5845, %v6465
        %v6664 = vadd.f32 %v5846, %v6470
        %v6665 = vadd.f32 %v5847, %v6473
        %v6666 = vadd.f32 %v5848, %v6478
        %v6667 = vadd.f32 %v5849, %v6487
        %v6668 = vadd.f32 %v5850, %v6492
        %v6669 = vadd.f32 %v5851, %v6495
        %v6670 = vadd.f32 %v5852, %v6500
        %v6671 = vadd.f32 %v5853, %v6503
        %v6672 = vadd.f32 %v5854, %v6508
        %v6673 = vadd.f32 %v5855, %v6511
        %v6674 = vadd.f32 %v5856, %v6516
        %v6675 = vadd.f32 %v5857, %v6525
        %v6676 = vadd.f32 %v5858, %v6530
        %v6677 = vadd.f32 %v5859, %v6533
        %v6678 = vadd.f32 %v5860, %v6538
        %v6679 = vadd.f32 %v5861, %v6541
        %v6680 = vadd.f32 %v5862, %v6546
        %v6681 = vadd.f32 %v5863, %v6549
        %v6682 = vadd.f32 %v5864, %v6554
        %v6683 = vadd.f32 %v5865, %v6563
        %v6684 = vadd.f32 %v5866, %v6568
        %v6685 = vadd.f32 %v5867, %v6571
        %v6686 = vadd.f32 %v5868, %v6576
        %v6687 = vadd.f32 %v5869, %v6579
        %v6688 = vadd.f32 %v5870, %v6584
        %v6689 = vadd.f32 %v5871, %v6587
        %v6690 = vadd.f32 %v5872, %v6592
        %v6691 = vadd.f32 %v5873, %v6601
        %v6692 = vadd.f32 %v5874, %v6606
        %v6693 = vadd.f32 %v5875, %v6609
        %v6694 = vadd.f32 %v5876, %v6614
        %v6695 = vadd.f32 %v5877, %v6617
        %v6696 = vadd.f32 %v5878, %v6622
        %v6697 = vadd.f32 %v5879, %v6625
        %v6698 = vadd.f32 %v5880, %v6630
        %v6699 = vld [vmem:[#allocation2 + $0x54] sm:$0xf]
        %v6700 = vld [vmem:[#allocation2 + $0x58] sm:$0xf]
        %v6701 = vld [vmem:[#allocation2 + $0x5c] sm:$0xf]
        %v6702 = vld [vmem:[#allocation2 + $0x60] sm:$0xf]
        %v6703 = vld [vmem:[#allocation2 + $0x64] sm:$0xf]
        %v6704 = vld [vmem:[#allocation2 + $0x68] sm:$0xf]
        %v6705 = vld [vmem:[#allocation2 + $0x6c] sm:$0xf]
        %v6706 = vld [vmem:[#allocation2 + $0x70] sm:$0xf]
        %v6707 = vld [vmem:[#allocation2 + $0x74] sm:$0xf]
        %v6708 = vld [vmem:[#allocation2 + $0x78] sm:$0xf]
        %v6709 = vld [vmem:[#allocation2 + $0x7c] sm:$0xf]
        %v6710 = vld [vmem:[#allocation2 + $0x80] sm:$0xf]
        %v6711 = vld [vmem:[#allocation2 + $0x84] sm:$0xf]
        %v6712 = vld [vmem:[#allocation2 + $0x88] sm:$0xf]
        %v6713 = vld [vmem:[#allocation2 + $0x8c] sm:$0xf]
        %v6714 = vld [vmem:[#allocation2 + $0x90] sm:$0xf]
        %v6715 = vld [vmem:[#allocation2 + $0x94] sm:$0xf]
        %v6716 = vld [vmem:[#allocation2 + $0x98] sm:$0xf]
        %v6717 = vld [vmem:[#allocation2 + $0x9c] sm:$0xf]
        %v6718 = vld [vmem:[#allocation2 + $0xa0] sm:$0xf]
        %v6719 = vld [vmem:[#allocation2 + $0xa4] sm:$0xf]
        %v6720 = vld [vmem:[#allocation2 + $0xa8] sm:$0xf]
        %v6721 = vld [vmem:[#allocation2 + $0xac] sm:$0xf]
        %v6722 = vld [vmem:[#allocation2 + $0xb0] sm:$0xf]
        %v6723 = vld [vmem:[#allocation2 + $0xb4] sm:$0xf]
        %v6724 = vld [vmem:[#allocation2 + $0xb8] sm:$0xf]
        %v6725 = vld [vmem:[#allocation2 + $0xbc] sm:$0xf]
        %v6726 = vld [vmem:[#allocation2 + $0xc0] sm:$0xf]
        %v6727 = vld [vmem:[#allocation2 + $0xc4] sm:$0xf]
        %v6728 = vld [vmem:[#allocation2 + $0xc8] sm:$0xf]
        %v6729 = vld [vmem:[#allocation2 + $0xcc] sm:$0xf]
        %v6730 = vld [vmem:[#allocation2 + $0xd0] sm:$0xf]
        %v6731 = vld [vmem:[#allocation2 + $0xd4] sm:$0xf]
        %v6732 = vld [vmem:[#allocation2 + $0xd8] sm:$0xf]
        %v6733 = vld [vmem:[#allocation2 + $0xdc] sm:$0xf]
        %v6734 = vld [vmem:[#allocation2 + $0xe0] sm:$0xf]
        %v6735 = vld [vmem:[#allocation2 + $0xe4] sm:$0xf]
        %v6736 = vld [vmem:[#allocation2 + $0xe8] sm:$0xf]
        %v6737 = vld [vmem:[#allocation2 + $0xec] sm:$0xf]
        %v6738 = vld [vmem:[#allocation2 + $0xf0] sm:$0xf]
        %v6739 = vld [vmem:[#allocation2 + $0xf4] sm:$0xf]
        %v6740 = vld [vmem:[#allocation2 + $0xf8] sm:$0xf]
        %v6741 = vld [vmem:[#allocation2 + $0xfc] sm:$0xf]
        %v6742 = vld [vmem:[#allocation2 + $0x100] sm:$0xf]
        %v6743 = vld [vmem:[#allocation2 + $0x104] sm:$0xf]
        %v6744 = vld [vmem:[#allocation2 + $0x108] sm:$0xf]
        %v6745 = vld [vmem:[#allocation2 + $0x10c] sm:$0xf]
        %v6746 = vld [vmem:[#allocation2 + $0x110] sm:$0xf]
        %v6747 = vld [vmem:[#allocation2 + $0x114] sm:$0xf]
        %v6748 = vld [vmem:[#allocation2 + $0x118] sm:$0xf]
        %v6749 = vld [vmem:[#allocation2 + $0x11c] sm:$0xf]
        %v6750 = vld [vmem:[#allocation2 + $0x120] sm:$0xf]
        %v6751 = vld [vmem:[#allocation2 + $0x124] sm:$0xf]
        %v6752 = vld [vmem:[#allocation2 + $0x128] sm:$0xf]
        %v6753 = vld [vmem:[#allocation2 + $0x12c] sm:$0xf]
        %v6754 = vld [vmem:[#allocation2 + $0x130] sm:$0xf]
        %v6755 = vld [vmem:[#allocation2 + $0x134] sm:$0xf]
        %v6756 = vld [vmem:[#allocation2 + $0x138] sm:$0xf]
        %v6757 = vld [vmem:[#allocation2 + $0x13c] sm:$0xf]
        %v6758 = vld [vmem:[#allocation2 + $0x140] sm:$0xf]
        %v6759 = vld [vmem:[#allocation2 + $0x144] sm:$0xf]
        %v6760 = vld [vmem:[#allocation2 + $0x148] sm:$0xf]
        %v6761 = vld [vmem:[#allocation2 + $0x14c] sm:$0xf]
        %v6762 = vld [vmem:[#allocation2 + $0x150] sm:$0xf]
        %v6763 = vld [vmem:[#allocation2 + $0x154] sm:$0xf]
        %v6764 = vld [vmem:[#allocation2 + $0x158] sm:$0xf]
        %v6765 = vld [vmem:[#allocation2 + $0x15c] sm:$0xf]
        %v6766 = vld [vmem:[#allocation2 + $0x160] sm:$0xf]
        %v6767 = vld [vmem:[#allocation2 + $0x164] sm:$0xf]
        %v6768 = vld [vmem:[#allocation2 + $0x168] sm:$0xf]
        %v6769 = vld [vmem:[#allocation2 + $0x16c] sm:$0xf]
        %v6770 = vld [vmem:[#allocation2 + $0x170] sm:$0xf]
        %v6771 = vld [vmem:[#allocation2 + $0x174] sm:$0xf]
        %v6772 = vld [vmem:[#allocation2 + $0x178] sm:$0xf]
        %v6773 = vld [vmem:[#allocation2 + $0x17c] sm:$0xf]
        %v6774 = vld [vmem:[#allocation2 + $0x180] sm:$0xf]
        %v6775 = vld [vmem:[#allocation2 + $0x184] sm:$0xf]
        %v6776 = vld [vmem:[#allocation2 + $0x188] sm:$0xf]
        %v6777 = vld [vmem:[#allocation2 + $0x18c] sm:$0xf]
        %v6778 = vld [vmem:[#allocation2 + $0x190] sm:$0xf]
        %s6779 = scalar_lea.vmem %s2, 112
        %v6780 = vld [vmem:[%s6779] sm:$0xf]
        %v6781 = vld [vmem:[%s6779 + $0x4] sm:$0xf]
        %v6782 = vld [vmem:[%s6779 + $0x8] sm:$0xf]
        %v6783 = vld [vmem:[%s6779 + $0xc] sm:$0xf]
        %v6864 = vunpack.c.l.b16 %v6699
        %v6865 = vunpack.c.l.b16 %v6700
        %v6866 = vunpack.c.l.b16 %v6701
        %v6867 = vunpack.c.l.b16 %v6702
        %v6868 = vunpack.c.l.b16 %v6703
        %v6869 = vunpack.c.l.b16 %v6704
        %v6870 = vunpack.c.l.b16 %v6705
        %v6871 = vunpack.c.l.b16 %v6706
        %v6872 = vunpack.c.l.b16 %v6707
        %v6873 = vunpack.c.l.b16 %v6708
        %v6874 = vunpack.c.l.b16 %v6709
        %v6875 = vunpack.c.l.b16 %v6710
        %v6876 = vunpack.c.l.b16 %v6711
        %v6877 = vunpack.c.l.b16 %v6712
        %v6878 = vunpack.c.l.b16 %v6713
        %v6879 = vunpack.c.l.b16 %v6714
        %v6880 = vunpack.c.l.b16 %v6715
        %v6881 = vunpack.c.l.b16 %v6716
        %v6882 = vunpack.c.l.b16 %v6717
        %v6883 = vunpack.c.l.b16 %v6718
        %v6884 = vunpack.c.l.b16 %v6719
        %v6885 = vunpack.c.l.b16 %v6720
        %v6886 = vunpack.c.l.b16 %v6721
        %v6887 = vunpack.c.l.b16 %v6722
        %v6888 = vunpack.c.l.b16 %v6723
        %v6889 = vunpack.c.l.b16 %v6724
        %v6890 = vunpack.c.l.b16 %v6725
        %v6891 = vunpack.c.l.b16 %v6726
        %v6892 = vunpack.c.l.b16 %v6727
        %v6893 = vunpack.c.l.b16 %v6728
        %v6894 = vunpack.c.l.b16 %v6729
        %v6895 = vunpack.c.l.b16 %v6730
        %v6896 = vunpack.c.l.b16 %v6731
        %v6897 = vunpack.c.l.b16 %v6732
        %v6898 = vunpack.c.l.b16 %v6733
        %v6899 = vunpack.c.l.b16 %v6734
        %v6900 = vunpack.c.l.b16 %v6735
        %v6901 = vunpack.c.l.b16 %v6736
        %v6902 = vunpack.c.l.b16 %v6737
        %v6903 = vunpack.c.l.b16 %v6738
        %v6904 = vunpack.c.l.b16 %v6739
        %v6905 = vunpack.c.l.b16 %v6740
        %v6906 = vunpack.c.l.b16 %v6741
        %v6907 = vunpack.c.l.b16 %v6742
        %v6908 = vunpack.c.l.b16 %v6743
        %v6909 = vunpack.c.l.b16 %v6744
        %v6910 = vunpack.c.l.b16 %v6745
        %v6911 = vunpack.c.l.b16 %v6746
        %v6912 = vunpack.c.l.b16 %v6747
        %v6913 = vunpack.c.l.b16 %v6748
        %v6914 = vunpack.c.l.b16 %v6749
        %v6915 = vunpack.c.l.b16 %v6750
        %v6916 = vunpack.c.l.b16 %v6751
        %v6917 = vunpack.c.l.b16 %v6752
        %v6918 = vunpack.c.l.b16 %v6753
        %v6919 = vunpack.c.l.b16 %v6754
        %v6920 = vunpack.c.l.b16 %v6755
        %v6921 = vunpack.c.l.b16 %v6756
        %v6922 = vunpack.c.l.b16 %v6757
        %v6923 = vunpack.c.l.b16 %v6758
        %v6924 = vunpack.c.l.b16 %v6759
        %v6925 = vunpack.c.l.b16 %v6760
        %v6926 = vunpack.c.l.b16 %v6761
        %v6927 = vunpack.c.l.b16 %v6762
        %v6928 = vunpack.c.l.b16 %v6763
        %v6929 = vunpack.c.l.b16 %v6764
        %v6930 = vunpack.c.l.b16 %v6765
        %v6931 = vunpack.c.l.b16 %v6766
        %v6932 = vunpack.c.l.b16 %v6767
        %v6933 = vunpack.c.l.b16 %v6768
        %v6934 = vunpack.c.l.b16 %v6769
        %v6935 = vunpack.c.l.b16 %v6770
        %v6936 = vunpack.c.l.b16 %v6771
        %v6937 = vunpack.c.l.b16 %v6772
        %v6938 = vunpack.c.l.b16 %v6773
        %v6939 = vunpack.c.l.b16 %v6774
        %v6940 = vunpack.c.l.b16 %v6775
        %v6941 = vunpack.c.l.b16 %v6776
        %v6942 = vunpack.c.l.b16 %v6777
        %v6943 = vunpack.c.l.b16 %v6778
        %v6944 = vpack.c.b16 %v6865, %v6864
        %v6945 = vpack.c.b16 %v6867, %v6866
        %v6946 = vpack.c.b16 %v6869, %v6868
        %v6947 = vpack.c.b16 %v6871, %v6870
        %v6948 = vpack.c.b16 %v6873, %v6872
        %v6949 = vpack.c.b16 %v6875, %v6874
        %v6950 = vpack.c.b16 %v6877, %v6876
        %v6951 = vpack.c.b16 %v6879, %v6878
        %v6952 = vpack.c.b16 %v6881, %v6880
        %v6953 = vpack.c.b16 %v6883, %v6882
        %v6954 = vpack.c.b16 %v6885, %v6884
        %v6955 = vpack.c.b16 %v6887, %v6886
        %v6956 = vpack.c.b16 %v6889, %v6888
        %v6957 = vpack.c.b16 %v6891, %v6890
        %v6958 = vpack.c.b16 %v6893, %v6892
        %v6959 = vpack.c.b16 %v6895, %v6894
        %v6960 = vpack.c.b16 %v6897, %v6896
        %v6961 = vpack.c.b16 %v6899, %v6898
        %v6962 = vpack.c.b16 %v6901, %v6900
        %v6963 = vpack.c.b16 %v6903, %v6902
        %v6964 = vpack.c.b16 %v6905, %v6904
        %v6965 = vpack.c.b16 %v6907, %v6906
        %v6966 = vpack.c.b16 %v6909, %v6908
        %v6967 = vpack.c.b16 %v6911, %v6910
        %v6968 = vpack.c.b16 %v6913, %v6912
        %v6969 = vpack.c.b16 %v6915, %v6914
        %v6970 = vpack.c.b16 %v6917, %v6916
        %v6971 = vpack.c.b16 %v6919, %v6918
        %v6972 = vpack.c.b16 %v6921, %v6920
        %v6973 = vpack.c.b16 %v6923, %v6922
        %v6974 = vpack.c.b16 %v6925, %v6924
        %v6975 = vpack.c.b16 %v6927, %v6926
        %v6976 = vpack.c.b16 %v6929, %v6928
        %v6977 = vpack.c.b16 %v6931, %v6930
        %v6978 = vpack.c.b16 %v6933, %v6932
        %v6979 = vpack.c.b16 %v6935, %v6934
        %v6980 = vpack.c.b16 %v6937, %v6936
        %v6981 = vpack.c.b16 %v6939, %v6938
        %v6982 = vpack.c.b16 %v6941, %v6940
        %v6983 = vpack.c.b16 %v6943, %v6942
        %v6988 = vunpack.c.l.b16 %v6780
        %v6989 = vunpack.c.l.b16 %v6781
        %v6990 = vunpack.c.l.b16 %v6782
        %v6991 = vunpack.c.l.b16 %v6783
        %v6992 = vpack.c.b16 %v6989, %v6988
        %v6993 = vpack.c.b16 %v6991, %v6990
        %v6997 = vsel %vm1640, %v6944, 0
        %v7000 = vsel %vm1640, %v6945, 0
        %v7003 = vsel %vm1640, %v6946, 0
        %v7006 = vsel %vm1640, %v6947, 0
        %v7009 = vsel %vm1640, %v6948, 0
        %v7012 = vsel %vm1640, %v6949, 0
        %v7015 = vsel %vm1640, %v6950, 0
        %v7018 = vsel %vm1640, %v6951, 0
        %v7021 = vsel %vm1640, %v6952, 0
        %v7024 = vsel %vm1640, %v6953, 0
        %v7027 = vsel %vm1640, %v6954, 0
        %v7030 = vsel %vm1640, %v6955, 0
        %v7033 = vsel %vm1640, %v6956, 0
        %v7036 = vsel %vm1640, %v6957, 0
        %v7039 = vsel %vm1640, %v6958, 0
        %v7042 = vsel %vm1640, %v6959, 0
        %v7045 = vsel %vm1640, %v6960, 0
        %v7048 = vsel %vm1640, %v6961, 0
        %v7051 = vsel %vm1640, %v6962, 0
        %v7054 = vsel %vm1640, %v6963, 0
        %v7057 = vsel %vm1640, %v6964, 0
        %v7060 = vsel %vm1640, %v6965, 0
        %v7063 = vsel %vm1640, %v6966, 0
        %v7066 = vsel %vm1640, %v6967, 0
        %v7069 = vsel %vm1640, %v6968, 0
        %v7072 = vsel %vm1640, %v6969, 0
        %v7075 = vsel %vm1640, %v6970, 0
        %v7078 = vsel %vm1640, %v6971, 0
        %v7081 = vsel %vm1640, %v6972, 0
        %v7084 = vsel %vm1640, %v6973, 0
        %v7087 = vsel %vm1640, %v6974, 0
        %v7090 = vsel %vm1640, %v6975, 0
        %v7093 = vsel %vm1640, %v6976, 0
        %v7096 = vsel %vm1640, %v6977, 0
        %v7099 = vsel %vm1640, %v6978, 0
        %v7102 = vsel %vm1640, %v6979, 0
        %v7105 = vsel %vm1640, %v6980, 0
        %v7108 = vsel %vm1640, %v6981, 0
        %v7111 = vsel %vm1640, %v6982, 0
        %v7114 = vsel %vm1640, %v6983, 0
        %7116 = vmatprep.subr.bf16.mxu0 0
        %7117 = vmatpush1.bf16.msra.mxu0 0
        %7118 = vmatprep.subr.bf16.mxu0 0
        %7119 = vmatpush1.bf16.msra.mxu0 0
        %7120 = vmatprep.subr.bf16.mxu0 0
        %7121 = vmatpush1.bf16.msra.mxu0 0
        %7122 = vmatprep.subr.bf16.mxu0 0
        %7123 = vmatpush1.bf16.msra.mxu0 0
        %7124 = vmatprep.subr.bf16.mxu0 0
        %7125 = vmatpush1.bf16.msra.mxu0 0
        %7126 = vmatprep.subr.bf16.mxu0 0
        %7127 = vmatpush1.bf16.msra.mxu0 0
        %7128 = vmatprep.subr.bf16.mxu0 0
        %7129 = vmatpush1.bf16.msra.mxu0 %v6993
        %7130 = vmatprep.subr.bf16.mxu0 0
        %7131 = vmatpush1.bf16.msra.mxu0 %v6992
        %7132 = vmatprep.subr.bf16.mxu0 0
        %7133 = vmatpush2.bf16.msra.mxu0 0
        %7134 = vmatprep.subr.bf16.mxu0 0
        %7135 = vmatpush2.bf16.msra.mxu0 0
        %7136 = vmatprep.subr.bf16.mxu0 0
        %7137 = vmatpush2.bf16.msra.mxu0 0
        %7138 = vmatprep.subr.bf16.mxu0 0
        %7139 = vmatpush2.bf16.msra.mxu0 0
        %7140 = vmatprep.subr.bf16.mxu0 0
        %7141 = vmatpush2.bf16.msra.mxu0 0
        %7142 = vmatprep.subr.bf16.mxu0 0
        %7143 = vmatpush2.bf16.msra.mxu0 0
        %7144 = vmatprep.subr.bf16.mxu0 0
        %7145 = vmatpush2.bf16.msra.mxu0 0
        %7146 = vmatprep.subr.bf16.mxu0 0
        %7147 = vmatpush2.bf16.msra.mxu0 0
        %7148 = vmatprep.mubr.bf16.mxu0 0
        %7149 = vmatmul.mubr.bf16.gmra.mxu0 %v6997
        %v7150 = vpop.f32.mrf.mxu0
        %v7151 = vpop.f32.mrf.mxu0
        %v7152 = vpop.f32.mrf.mxu0
        %v7153 = vadd.f32 0.0, %v7152
        %v7154 = vpop.f32.mrf.mxu0
        %7155 = vmatprep.mubr.bf16.mxu0 0
        %7156 = vmatmul.mubr.bf16.gmra.mxu0 %v7000
        %v7157 = vpop.f32.mrf.mxu0
        %v7158 = vadd.f32 0.0, %v7157
        %v7159 = vpop.f32.mrf.mxu0
        %v7160 = vpop.f32.mrf.mxu0
        %v7161 = vadd.f32 0.0, %v7160
        %v7162 = vpop.f32.mrf.mxu0
        %7163 = vmatprep.mubr.bf16.mxu0 0
        %7164 = vmatmul.mubr.bf16.gmra.mxu0 %v7003
        %v7165 = vpop.f32.mrf.mxu0
        %v7166 = vadd.f32 0.0, %v7165
        %v7167 = vpop.f32.mrf.mxu0
        %v7168 = vpop.f32.mrf.mxu0
        %v7169 = vadd.f32 0.0, %v7168
        %v7170 = vpop.f32.mrf.mxu0
        %7171 = vmatprep.mubr.bf16.mxu0 0
        %7172 = vmatmul.mubr.bf16.gmra.mxu0 %v7006
        %v7173 = vpop.f32.mrf.mxu0
        %v7174 = vadd.f32 0.0, %v7173
        %v7175 = vpop.f32.mrf.mxu0
        %v7176 = vpop.f32.mrf.mxu0
        %v7177 = vadd.f32 0.0, %v7176
        %v7178 = vpop.f32.mrf.mxu0
        %7179 = vmatprep.mubr.bf16.mxu0 0
        %7180 = vmatmul.mubr.bf16.gmra.mxu0 %v7009
        %v7181 = vpop.f32.mrf.mxu0
        %v7182 = vadd.f32 0.0, %v7181
        %v7183 = vpop.f32.mrf.mxu0
        %v7184 = vpop.f32.mrf.mxu0
        %v7185 = vpop.f32.mrf.mxu0
        %7186 = vmatprep.mubr.bf16.mxu0 0
        %7187 = vmatmul.mubr.bf16.gmra.mxu0 %v7012
        %v7188 = vpop.f32.mrf.mxu0
        %v7189 = vpop.f32.mrf.mxu0
        %v7190 = vpop.f32.mrf.mxu0
        %v7191 = vadd.f32 0.0, %v7190
        %v7192 = vpop.f32.mrf.mxu0
        %7193 = vmatprep.mubr.bf16.mxu0 0
        %7194 = vmatmul.mubr.bf16.gmra.mxu0 %v7015
        %v7195 = vpop.f32.mrf.mxu0
        %v7196 = vadd.f32 0.0, %v7195
        %v7197 = vpop.f32.mrf.mxu0
        %v7198 = vpop.f32.mrf.mxu0
        %v7199 = vadd.f32 0.0, %v7198
        %v7200 = vpop.f32.mrf.mxu0
        %7201 = vmatprep.mubr.bf16.mxu0 0
        %7202 = vmatmul.mubr.bf16.gmra.mxu0 %v7018
        %v7203 = vpop.f32.mrf.mxu0
        %v7204 = vadd.f32 0.0, %v7203
        %v7205 = vpop.f32.mrf.mxu0
        %v7206 = vpop.f32.mrf.mxu0
        %v7207 = vadd.f32 0.0, %v7206
        %v7208 = vpop.f32.mrf.mxu0
        %7209 = vmatprep.mubr.bf16.mxu0 0
        %7210 = vmatmul.mubr.bf16.gmra.mxu0 %v7021
        %v7211 = vpop.f32.mrf.mxu0
        %v7212 = vadd.f32 0.0, %v7211
        %v7213 = vpop.f32.mrf.mxu0
        %v7214 = vpop.f32.mrf.mxu0
        %v7215 = vadd.f32 0.0, %v7214
        %v7216 = vpop.f32.mrf.mxu0
        %7217 = vmatprep.mubr.bf16.mxu0 0
        %7218 = vmatmul.mubr.bf16.gmra.mxu0 %v7024
        %v7219 = vpop.f32.mrf.mxu0
        %v7220 = vadd.f32 0.0, %v7219
        %v7221 = vpop.f32.mrf.mxu0
        %v7222 = vpop.f32.mrf.mxu0
        %v7223 = vpop.f32.mrf.mxu0
        %7224 = vmatprep.mubr.bf16.mxu0 0
        %7225 = vmatmul.mubr.bf16.gmra.mxu0 %v7027
        %v7226 = vpop.f32.mrf.mxu0
        %v7227 = vpop.f32.mrf.mxu0
        %v7228 = vpop.f32.mrf.mxu0
        %v7229 = vadd.f32 0.0, %v7228
        %v7230 = vpop.f32.mrf.mxu0
        %7231 = vmatprep.mubr.bf16.mxu0 0
        %7232 = vmatmul.mubr.bf16.gmra.mxu0 %v7030
        %v7233 = vpop.f32.mrf.mxu0
        %v7234 = vadd.f32 0.0, %v7233
        %v7235 = vpop.f32.mrf.mxu0
        %v7236 = vpop.f32.mrf.mxu0
        %v7237 = vadd.f32 0.0, %v7236
        %v7238 = vpop.f32.mrf.mxu0
        %7239 = vmatprep.mubr.bf16.mxu0 0
        %7240 = vmatmul.mubr.bf16.gmra.mxu0 %v7033
        %v7241 = vpop.f32.mrf.mxu0
        %v7242 = vadd.f32 0.0, %v7241
        %v7243 = vpop.f32.mrf.mxu0
        %v7244 = vpop.f32.mrf.mxu0
        %v7245 = vadd.f32 0.0, %v7244
        %v7246 = vpop.f32.mrf.mxu0
        %7247 = vmatprep.mubr.bf16.mxu0 0
        %7248 = vmatmul.mubr.bf16.gmra.mxu0 %v7036
        %v7249 = vpop.f32.mrf.mxu0
        %v7250 = vadd.f32 0.0, %v7249
        %v7251 = vpop.f32.mrf.mxu0
        %v7252 = vpop.f32.mrf.mxu0
        %v7253 = vadd.f32 0.0, %v7252
        %v7254 = vpop.f32.mrf.mxu0
        %7255 = vmatprep.mubr.bf16.mxu0 0
        %7256 = vmatmul.mubr.bf16.gmra.mxu0 %v7039
        %v7257 = vpop.f32.mrf.mxu0
        %v7258 = vadd.f32 0.0, %v7257
        %v7259 = vpop.f32.mrf.mxu0
        %v7260 = vpop.f32.mrf.mxu0
        %v7261 = vpop.f32.mrf.mxu0
        %7262 = vmatprep.mubr.bf16.mxu0 0
        %7263 = vmatmul.mubr.bf16.gmra.mxu0 %v7042
        %v7264 = vpop.f32.mrf.mxu0
        %v7265 = vpop.f32.mrf.mxu0
        %v7266 = vpop.f32.mrf.mxu0
        %v7267 = vadd.f32 0.0, %v7266
        %v7268 = vpop.f32.mrf.mxu0
        %7269 = vmatprep.mubr.bf16.mxu0 0
        %7270 = vmatmul.mubr.bf16.gmra.mxu0 %v7045
        %v7271 = vpop.f32.mrf.mxu0
        %v7272 = vadd.f32 0.0, %v7271
        %v7273 = vpop.f32.mrf.mxu0
        %v7274 = vpop.f32.mrf.mxu0
        %v7275 = vadd.f32 0.0, %v7274
        %v7276 = vpop.f32.mrf.mxu0
        %7277 = vmatprep.mubr.bf16.mxu0 0
        %7278 = vmatmul.mubr.bf16.gmra.mxu0 %v7048
        %v7279 = vpop.f32.mrf.mxu0
        %v7280 = vadd.f32 0.0, %v7279
        %v7281 = vpop.f32.mrf.mxu0
        %v7282 = vpop.f32.mrf.mxu0
        %v7283 = vadd.f32 0.0, %v7282
        %v7284 = vpop.f32.mrf.mxu0
        %7285 = vmatprep.mubr.bf16.mxu0 0
        %7286 = vmatmul.mubr.bf16.gmra.mxu0 %v7051
        %v7287 = vpop.f32.mrf.mxu0
        %v7288 = vadd.f32 0.0, %v7287
        %v7289 = vpop.f32.mrf.mxu0
        %v7290 = vpop.f32.mrf.mxu0
        %v7291 = vadd.f32 0.0, %v7290
        %v7292 = vpop.f32.mrf.mxu0
        %7293 = vmatprep.mubr.bf16.mxu0 0
        %7294 = vmatmul.mubr.bf16.gmra.mxu0 %v7054
        %v7295 = vpop.f32.mrf.mxu0
        %v7296 = vadd.f32 0.0, %v7295
        %v7297 = vpop.f32.mrf.mxu0
        %v7298 = vpop.f32.mrf.mxu0
        %v7299 = vpop.f32.mrf.mxu0
        %7300 = vmatprep.mubr.bf16.mxu0 0
        %7301 = vmatmul.mubr.bf16.gmra.mxu0 %v7057
        %v7302 = vpop.f32.mrf.mxu0
        %v7303 = vpop.f32.mrf.mxu0
        %v7304 = vpop.f32.mrf.mxu0
        %v7305 = vadd.f32 0.0, %v7304
        %v7306 = vpop.f32.mrf.mxu0
        %7307 = vmatprep.mubr.bf16.mxu0 0
        %7308 = vmatmul.mubr.bf16.gmra.mxu0 %v7060
        %v7309 = vpop.f32.mrf.mxu0
        %v7310 = vadd.f32 0.0, %v7309
        %v7311 = vpop.f32.mrf.mxu0
        %v7312 = vpop.f32.mrf.mxu0
        %v7313 = vadd.f32 0.0, %v7312
        %v7314 = vpop.f32.mrf.mxu0
        %7315 = vmatprep.mubr.bf16.mxu0 0
        %7316 = vmatmul.mubr.bf16.gmra.mxu0 %v7063
        %v7317 = vpop.f32.mrf.mxu0
        %v7318 = vadd.f32 0.0, %v7317
        %v7319 = vpop.f32.mrf.mxu0
        %v7320 = vpop.f32.mrf.mxu0
        %v7321 = vadd.f32 0.0, %v7320
        %v7322 = vpop.f32.mrf.mxu0
        %7323 = vmatprep.mubr.bf16.mxu0 0
        %7324 = vmatmul.mubr.bf16.gmra.mxu0 %v7066
        %v7325 = vpop.f32.mrf.mxu0
        %v7326 = vadd.f32 0.0, %v7325
        %v7327 = vpop.f32.mrf.mxu0
        %v7328 = vpop.f32.mrf.mxu0
        %v7329 = vadd.f32 0.0, %v7328
        %v7330 = vpop.f32.mrf.mxu0
        %7331 = vmatprep.mubr.bf16.mxu0 0
        %7332 = vmatmul.mubr.bf16.gmra.mxu0 %v7069
        %v7333 = vpop.f32.mrf.mxu0
        %v7334 = vadd.f32 0.0, %v7333
        %v7335 = vpop.f32.mrf.mxu0
        %v7336 = vpop.f32.mrf.mxu0
        %v7337 = vpop.f32.mrf.mxu0
        %7338 = vmatprep.mubr.bf16.mxu0 0
        %7339 = vmatmul.mubr.bf16.gmra.mxu0 %v7072
        %v7340 = vpop.f32.mrf.mxu0
        %v7341 = vpop.f32.mrf.mxu0
        %v7342 = vpop.f32.mrf.mxu0
        %v7343 = vadd.f32 0.0, %v7342
        %v7344 = vpop.f32.mrf.mxu0
        %7345 = vmatprep.mubr.bf16.mxu0 0
        %7346 = vmatmul.mubr.bf16.gmra.mxu0 %v7075
        %v7347 = vpop.f32.mrf.mxu0
        %v7348 = vadd.f32 0.0, %v7347
        %v7349 = vpop.f32.mrf.mxu0
        %v7350 = vpop.f32.mrf.mxu0
        %v7351 = vadd.f32 0.0, %v7350
        %v7352 = vpop.f32.mrf.mxu0
        %7353 = vmatprep.mubr.bf16.mxu0 0
        %7354 = vmatmul.mubr.bf16.gmra.mxu0 %v7078
        %v7355 = vpop.f32.mrf.mxu0
        %v7356 = vadd.f32 0.0, %v7355
        %v7357 = vpop.f32.mrf.mxu0
        %v7358 = vpop.f32.mrf.mxu0
        %v7359 = vadd.f32 0.0, %v7358
        %v7360 = vpop.f32.mrf.mxu0
        %7361 = vmatprep.mubr.bf16.mxu0 0
        %7362 = vmatmul.mubr.bf16.gmra.mxu0 %v7081
        %v7363 = vpop.f32.mrf.mxu0
        %v7364 = vadd.f32 0.0, %v7363
        %v7365 = vpop.f32.mrf.mxu0
        %v7366 = vpop.f32.mrf.mxu0
        %v7367 = vadd.f32 0.0, %v7366
        %v7368 = vpop.f32.mrf.mxu0
        %7369 = vmatprep.mubr.bf16.mxu0 0
        %7370 = vmatmul.mubr.bf16.gmra.mxu0 %v7084
        %v7371 = vpop.f32.mrf.mxu0
        %v7372 = vadd.f32 0.0, %v7371
        %v7373 = vpop.f32.mrf.mxu0
        %v7374 = vpop.f32.mrf.mxu0
        %v7375 = vpop.f32.mrf.mxu0
        %7376 = vmatprep.mubr.bf16.mxu0 0
        %7377 = vmatmul.mubr.bf16.gmra.mxu0 %v7087
        %v7378 = vpop.f32.mrf.mxu0
        %v7379 = vpop.f32.mrf.mxu0
        %v7380 = vpop.f32.mrf.mxu0
        %v7381 = vadd.f32 0.0, %v7380
        %v7382 = vpop.f32.mrf.mxu0
        %7383 = vmatprep.mubr.bf16.mxu0 0
        %7384 = vmatmul.mubr.bf16.gmra.mxu0 %v7090
        %v7385 = vpop.f32.mrf.mxu0
        %v7386 = vadd.f32 0.0, %v7385
        %v7387 = vpop.f32.mrf.mxu0
        %v7388 = vpop.f32.mrf.mxu0
        %v7389 = vadd.f32 0.0, %v7388
        %v7390 = vpop.f32.mrf.mxu0
        %7391 = vmatprep.mubr.bf16.mxu0 0
        %7392 = vmatmul.mubr.bf16.gmra.mxu0 %v7093
        %v7393 = vpop.f32.mrf.mxu0
        %v7394 = vadd.f32 0.0, %v7393
        %v7395 = vpop.f32.mrf.mxu0
        %v7396 = vpop.f32.mrf.mxu0
        %v7397 = vadd.f32 0.0, %v7396
        %v7398 = vpop.f32.mrf.mxu0
        %7399 = vmatprep.mubr.bf16.mxu0 0
        %7400 = vmatmul.mubr.bf16.gmra.mxu0 %v7096
        %v7401 = vpop.f32.mrf.mxu0
        %v7402 = vadd.f32 0.0, %v7401
        %v7403 = vpop.f32.mrf.mxu0
        %v7404 = vpop.f32.mrf.mxu0
        %v7405 = vadd.f32 0.0, %v7404
        %v7406 = vpop.f32.mrf.mxu0
        %7407 = vmatprep.mubr.bf16.mxu0 0
        %7408 = vmatmul.mubr.bf16.gmra.mxu0 %v7099
        %v7409 = vpop.f32.mrf.mxu0
        %v7410 = vadd.f32 0.0, %v7409
        %v7411 = vpop.f32.mrf.mxu0
        %v7412 = vpop.f32.mrf.mxu0
        %v7413 = vpop.f32.mrf.mxu0
        %7414 = vmatprep.mubr.bf16.mxu0 0
        %7415 = vmatmul.mubr.bf16.gmra.mxu0 %v7102
        %v7416 = vpop.f32.mrf.mxu0
        %v7417 = vpop.f32.mrf.mxu0
        %v7418 = vpop.f32.mrf.mxu0
        %v7419 = vadd.f32 0.0, %v7418
        %v7420 = vpop.f32.mrf.mxu0
        %7421 = vmatprep.mubr.bf16.mxu0 0
        %7422 = vmatmul.mubr.bf16.gmra.mxu0 %v7105
        %v7423 = vpop.f32.mrf.mxu0
        %v7424 = vadd.f32 0.0, %v7423
        %v7425 = vpop.f32.mrf.mxu0
        %v7426 = vpop.f32.mrf.mxu0
        %v7427 = vadd.f32 0.0, %v7426
        %v7428 = vpop.f32.mrf.mxu0
        %7429 = vmatprep.mubr.bf16.mxu0 0
        %7430 = vmatmul.mubr.bf16.gmra.mxu0 %v7108
        %v7431 = vpop.f32.mrf.mxu0
        %v7432 = vadd.f32 0.0, %v7431
        %v7433 = vpop.f32.mrf.mxu0
        %v7434 = vpop.f32.mrf.mxu0
        %v7435 = vadd.f32 0.0, %v7434
        %v7436 = vpop.f32.mrf.mxu0
        %7437 = vmatprep.mubr.bf16.mxu0 0
        %7438 = vmatmul.mubr.bf16.gmra.mxu0 %v7111
        %v7439 = vpop.f32.mrf.mxu0
        %v7440 = vadd.f32 0.0, %v7439
        %v7441 = vpop.f32.mrf.mxu0
        %v7442 = vpop.f32.mrf.mxu0
        %v7443 = vadd.f32 0.0, %v7442
        %v7444 = vpop.f32.mrf.mxu0
        %7445 = vmatprep.mubr.bf16.mxu0 0
        %7446 = vmatmul.mubr.bf16.gmra.mxu0 %v7114
        %v7447 = vpop.f32.mrf.mxu0
        %v7448 = vadd.f32 0.0, %v7447
        %v7449 = vpop.f32.mrf.mxu0
        %v7450 = vpop.f32.mrf.mxu0
        %v7451 = vpop.f32.mrf.mxu0
        %7452 = vdwg.mxu0
        %v7453 = vadd.f32 %v6635, %v7153
        %v7454 = vadd.f32 %v6636, %v7158
        %v7455 = vadd.f32 %v6637, %v7161
        %v7456 = vadd.f32 %v6638, %v7166
        %v7457 = vadd.f32 %v6639, %v7169
        %v7458 = vadd.f32 %v6640, %v7174
        %v7459 = vadd.f32 %v6641, %v7177
        %v7460 = vadd.f32 %v6642, %v7182
        %v7461 = vadd.f32 %v6643, %v7191
        %v7462 = vadd.f32 %v6644, %v7196
        %v7463 = vadd.f32 %v6645, %v7199
        %v7464 = vadd.f32 %v6646, %v7204
        %v7465 = vadd.f32 %v6647, %v7207
        %v7466 = vadd.f32 %v6648, %v7212
        %v7467 = vadd.f32 %v6649, %v7215
        %v7468 = vadd.f32 %v6650, %v7220
        %v7469 = vadd.f32 %v6651, %v7229
        %v7470 = vadd.f32 %v6652, %v7234
        %v7471 = vadd.f32 %v6653, %v7237
        %v7472 = vadd.f32 %v6654, %v7242
        %v7473 = vadd.f32 %v6655, %v7245
        %v7474 = vadd.f32 %v6656, %v7250
        %v7475 = vadd.f32 %v6657, %v7253
        %v7476 = vadd.f32 %v6658, %v7258
        %v7477 = vadd.f32 %v6659, %v7267
        %v7478 = vadd.f32 %v6660, %v7272
        %v7479 = vadd.f32 %v6661, %v7275
        %v7480 = vadd.f32 %v6662, %v7280
        %v7481 = vadd.f32 %v6663, %v7283
        %v7482 = vadd.f32 %v6664, %v7288
        %v7483 = vadd.f32 %v6665, %v7291
        %v7484 = vadd.f32 %v6666, %v7296
        %v7485 = vadd.f32 %v6667, %v7305
        %v7486 = vadd.f32 %v6668, %v7310
        %v7487 = vadd.f32 %v6669, %v7313
        %v7488 = vadd.f32 %v6670, %v7318
        %v7489 = vadd.f32 %v6671, %v7321
        %v7490 = vadd.f32 %v6672, %v7326
        %v7491 = vadd.f32 %v6673, %v7329
        %v7492 = vadd.f32 %v6674, %v7334
        %v7493 = vadd.f32 %v6675, %v7343
        %v7494 = vadd.f32 %v6676, %v7348
        %v7495 = vadd.f32 %v6677, %v7351
        %v7496 = vadd.f32 %v6678, %v7356
        %v7497 = vadd.f32 %v6679, %v7359
        %v7498 = vadd.f32 %v6680, %v7364
        %v7499 = vadd.f32 %v6681, %v7367
        %v7500 = vadd.f32 %v6682, %v7372
        %v7501 = vadd.f32 %v6683, %v7381
        %v7502 = vadd.f32 %v6684, %v7386
        %v7503 = vadd.f32 %v6685, %v7389
        %v7504 = vadd.f32 %v6686, %v7394
        %v7505 = vadd.f32 %v6687, %v7397
        %v7506 = vadd.f32 %v6688, %v7402
        %v7507 = vadd.f32 %v6689, %v7405
        %v7508 = vadd.f32 %v6690, %v7410
        %v7509 = vadd.f32 %v6691, %v7419
        %v7510 = vadd.f32 %v6692, %v7424
        %v7511 = vadd.f32 %v6693, %v7427
        %v7512 = vadd.f32 %v6694, %v7432
        %v7513 = vadd.f32 %v6695, %v7435
        %v7514 = vadd.f32 %v6696, %v7440
        %v7515 = vadd.f32 %v6697, %v7443
        %v7516 = vadd.f32 %v6698, %v7448
        %v7517 = vld [vmem:[#allocation2 + $0x58] sm:$0xf]
        %v7518 = vld [vmem:[#allocation2 + $0x5c] sm:$0xf]
        %v7519 = vld [vmem:[#allocation2 + $0x60] sm:$0xf]
        %v7520 = vld [vmem:[#allocation2 + $0x64] sm:$0xf]
        %v7521 = vld [vmem:[#allocation2 + $0x68] sm:$0xf]
        %v7522 = vld [vmem:[#allocation2 + $0x6c] sm:$0xf]
        %v7523 = vld [vmem:[#allocation2 + $0x70] sm:$0xf]
        %v7524 = vld [vmem:[#allocation2 + $0x74] sm:$0xf]
        %v7525 = vld [vmem:[#allocation2 + $0x78] sm:$0xf]
        %v7526 = vld [vmem:[#allocation2 + $0x7c] sm:$0xf]
        %v7527 = vld [vmem:[#allocation2 + $0x80] sm:$0xf]
        %v7528 = vld [vmem:[#allocation2 + $0x84] sm:$0xf]
        %v7529 = vld [vmem:[#allocation2 + $0x88] sm:$0xf]
        %v7530 = vld [vmem:[#allocation2 + $0x8c] sm:$0xf]
        %v7531 = vld [vmem:[#allocation2 + $0x90] sm:$0xf]
        %v7532 = vld [vmem:[#allocation2 + $0x94] sm:$0xf]
        %v7533 = vld [vmem:[#allocation2 + $0x98] sm:$0xf]
        %v7534 = vld [vmem:[#allocation2 + $0x9c] sm:$0xf]
        %v7535 = vld [vmem:[#allocation2 + $0xa0] sm:$0xf]
        %v7536 = vld [vmem:[#allocation2 + $0xa4] sm:$0xf]
        %v7537 = vld [vmem:[#allocation2 + $0xa8] sm:$0xf]
        %v7538 = vld [vmem:[#allocation2 + $0xac] sm:$0xf]
        %v7539 = vld [vmem:[#allocation2 + $0xb0] sm:$0xf]
        %v7540 = vld [vmem:[#allocation2 + $0xb4] sm:$0xf]
        %v7541 = vld [vmem:[#allocation2 + $0xb8] sm:$0xf]
        %v7542 = vld [vmem:[#allocation2 + $0xbc] sm:$0xf]
        %v7543 = vld [vmem:[#allocation2 + $0xc0] sm:$0xf]
        %v7544 = vld [vmem:[#allocation2 + $0xc4] sm:$0xf]
        %v7545 = vld [vmem:[#allocation2 + $0xc8] sm:$0xf]
        %v7546 = vld [vmem:[#allocation2 + $0xcc] sm:$0xf]
        %v7547 = vld [vmem:[#allocation2 + $0xd0] sm:$0xf]
        %v7548 = vld [vmem:[#allocation2 + $0xd4] sm:$0xf]
        %v7549 = vld [vmem:[#allocation2 + $0xd8] sm:$0xf]
        %v7550 = vld [vmem:[#allocation2 + $0xdc] sm:$0xf]
        %v7551 = vld [vmem:[#allocation2 + $0xe0] sm:$0xf]
        %v7552 = vld [vmem:[#allocation2 + $0xe4] sm:$0xf]
        %v7553 = vld [vmem:[#allocation2 + $0xe8] sm:$0xf]
        %v7554 = vld [vmem:[#allocation2 + $0xec] sm:$0xf]
        %v7555 = vld [vmem:[#allocation2 + $0xf0] sm:$0xf]
        %v7556 = vld [vmem:[#allocation2 + $0xf4] sm:$0xf]
        %v7557 = vld [vmem:[#allocation2 + $0xf8] sm:$0xf]
        %v7558 = vld [vmem:[#allocation2 + $0xfc] sm:$0xf]
        %v7559 = vld [vmem:[#allocation2 + $0x100] sm:$0xf]
        %v7560 = vld [vmem:[#allocation2 + $0x104] sm:$0xf]
        %v7561 = vld [vmem:[#allocation2 + $0x108] sm:$0xf]
        %v7562 = vld [vmem:[#allocation2 + $0x10c] sm:$0xf]
        %v7563 = vld [vmem:[#allocation2 + $0x110] sm:$0xf]
        %v7564 = vld [vmem:[#allocation2 + $0x114] sm:$0xf]
        %v7565 = vld [vmem:[#allocation2 + $0x118] sm:$0xf]
        %v7566 = vld [vmem:[#allocation2 + $0x11c] sm:$0xf]
        %v7567 = vld [vmem:[#allocation2 + $0x120] sm:$0xf]
        %v7568 = vld [vmem:[#allocation2 + $0x124] sm:$0xf]
        %v7569 = vld [vmem:[#allocation2 + $0x128] sm:$0xf]
        %v7570 = vld [vmem:[#allocation2 + $0x12c] sm:$0xf]
        %v7571 = vld [vmem:[#allocation2 + $0x130] sm:$0xf]
        %v7572 = vld [vmem:[#allocation2 + $0x134] sm:$0xf]
        %v7573 = vld [vmem:[#allocation2 + $0x138] sm:$0xf]
        %v7574 = vld [vmem:[#allocation2 + $0x13c] sm:$0xf]
        %v7575 = vld [vmem:[#allocation2 + $0x140] sm:$0xf]
        %v7576 = vld [vmem:[#allocation2 + $0x144] sm:$0xf]
        %v7577 = vld [vmem:[#allocation2 + $0x148] sm:$0xf]
        %v7578 = vld [vmem:[#allocation2 + $0x14c] sm:$0xf]
        %v7579 = vld [vmem:[#allocation2 + $0x150] sm:$0xf]
        %v7580 = vld [vmem:[#allocation2 + $0x154] sm:$0xf]
        %v7581 = vld [vmem:[#allocation2 + $0x158] sm:$0xf]
        %v7582 = vld [vmem:[#allocation2 + $0x15c] sm:$0xf]
        %v7583 = vld [vmem:[#allocation2 + $0x160] sm:$0xf]
        %v7584 = vld [vmem:[#allocation2 + $0x164] sm:$0xf]
        %v7585 = vld [vmem:[#allocation2 + $0x168] sm:$0xf]
        %v7586 = vld [vmem:[#allocation2 + $0x16c] sm:$0xf]
        %v7587 = vld [vmem:[#allocation2 + $0x170] sm:$0xf]
        %v7588 = vld [vmem:[#allocation2 + $0x174] sm:$0xf]
        %v7589 = vld [vmem:[#allocation2 + $0x178] sm:$0xf]
        %v7590 = vld [vmem:[#allocation2 + $0x17c] sm:$0xf]
        %v7591 = vld [vmem:[#allocation2 + $0x180] sm:$0xf]
        %v7592 = vld [vmem:[#allocation2 + $0x184] sm:$0xf]
        %v7593 = vld [vmem:[#allocation2 + $0x188] sm:$0xf]
        %v7594 = vld [vmem:[#allocation2 + $0x18c] sm:$0xf]
        %v7595 = vld [vmem:[#allocation2 + $0x190] sm:$0xf]
        %v7596 = vld [vmem:[#allocation2 + $0x194] sm:$0xf]
        %s7597 = scalar_lea.vmem %s2, 128
        %v7598 = vld [vmem:[%s7597] sm:$0xf]
        %v7599 = vld [vmem:[%s7597 + $0x4] sm:$0xf]
        %v7600 = vld [vmem:[%s7597 + $0x8] sm:$0xf]
        %v7601 = vld [vmem:[%s7597 + $0xc] sm:$0xf]
        %v7682 = vunpack.c.l.b16 %v7517
        %v7683 = vunpack.c.l.b16 %v7518
        %v7684 = vunpack.c.l.b16 %v7519
        %v7685 = vunpack.c.l.b16 %v7520
        %v7686 = vunpack.c.l.b16 %v7521
        %v7687 = vunpack.c.l.b16 %v7522
        %v7688 = vunpack.c.l.b16 %v7523
        %v7689 = vunpack.c.l.b16 %v7524
        %v7690 = vunpack.c.l.b16 %v7525
        %v7691 = vunpack.c.l.b16 %v7526
        %v7692 = vunpack.c.l.b16 %v7527
        %v7693 = vunpack.c.l.b16 %v7528
        %v7694 = vunpack.c.l.b16 %v7529
        %v7695 = vunpack.c.l.b16 %v7530
        %v7696 = vunpack.c.l.b16 %v7531
        %v7697 = vunpack.c.l.b16 %v7532
        %v7698 = vunpack.c.l.b16 %v7533
        %v7699 = vunpack.c.l.b16 %v7534
        %v7700 = vunpack.c.l.b16 %v7535
        %v7701 = vunpack.c.l.b16 %v7536
        %v7702 = vunpack.c.l.b16 %v7537
        %v7703 = vunpack.c.l.b16 %v7538
        %v7704 = vunpack.c.l.b16 %v7539
        %v7705 = vunpack.c.l.b16 %v7540
        %v7706 = vunpack.c.l.b16 %v7541
        %v7707 = vunpack.c.l.b16 %v7542
        %v7708 = vunpack.c.l.b16 %v7543
        %v7709 = vunpack.c.l.b16 %v7544
        %v7710 = vunpack.c.l.b16 %v7545
        %v7711 = vunpack.c.l.b16 %v7546
        %v7712 = vunpack.c.l.b16 %v7547
        %v7713 = vunpack.c.l.b16 %v7548
        %v7714 = vunpack.c.l.b16 %v7549
        %v7715 = vunpack.c.l.b16 %v7550
        %v7716 = vunpack.c.l.b16 %v7551
        %v7717 = vunpack.c.l.b16 %v7552
        %v7718 = vunpack.c.l.b16 %v7553
        %v7719 = vunpack.c.l.b16 %v7554
        %v7720 = vunpack.c.l.b16 %v7555
        %v7721 = vunpack.c.l.b16 %v7556
        %v7722 = vunpack.c.l.b16 %v7557
        %v7723 = vunpack.c.l.b16 %v7558
        %v7724 = vunpack.c.l.b16 %v7559
        %v7725 = vunpack.c.l.b16 %v7560
        %v7726 = vunpack.c.l.b16 %v7561
        %v7727 = vunpack.c.l.b16 %v7562
        %v7728 = vunpack.c.l.b16 %v7563
        %v7729 = vunpack.c.l.b16 %v7564
        %v7730 = vunpack.c.l.b16 %v7565
        %v7731 = vunpack.c.l.b16 %v7566
        %v7732 = vunpack.c.l.b16 %v7567
        %v7733 = vunpack.c.l.b16 %v7568
        %v7734 = vunpack.c.l.b16 %v7569
        %v7735 = vunpack.c.l.b16 %v7570
        %v7736 = vunpack.c.l.b16 %v7571
        %v7737 = vunpack.c.l.b16 %v7572
        %v7738 = vunpack.c.l.b16 %v7573
        %v7739 = vunpack.c.l.b16 %v7574
        %v7740 = vunpack.c.l.b16 %v7575
        %v7741 = vunpack.c.l.b16 %v7576
        %v7742 = vunpack.c.l.b16 %v7577
        %v7743 = vunpack.c.l.b16 %v7578
        %v7744 = vunpack.c.l.b16 %v7579
        %v7745 = vunpack.c.l.b16 %v7580
        %v7746 = vunpack.c.l.b16 %v7581
        %v7747 = vunpack.c.l.b16 %v7582
        %v7748 = vunpack.c.l.b16 %v7583
        %v7749 = vunpack.c.l.b16 %v7584
        %v7750 = vunpack.c.l.b16 %v7585
        %v7751 = vunpack.c.l.b16 %v7586
        %v7752 = vunpack.c.l.b16 %v7587
        %v7753 = vunpack.c.l.b16 %v7588
        %v7754 = vunpack.c.l.b16 %v7589
        %v7755 = vunpack.c.l.b16 %v7590
        %v7756 = vunpack.c.l.b16 %v7591
        %v7757 = vunpack.c.l.b16 %v7592
        %v7758 = vunpack.c.l.b16 %v7593
        %v7759 = vunpack.c.l.b16 %v7594
        %v7760 = vunpack.c.l.b16 %v7595
        %v7761 = vunpack.c.l.b16 %v7596
        %v7762 = vpack.c.b16 %v7683, %v7682
        %v7763 = vpack.c.b16 %v7685, %v7684
        %v7764 = vpack.c.b16 %v7687, %v7686
        %v7765 = vpack.c.b16 %v7689, %v7688
        %v7766 = vpack.c.b16 %v7691, %v7690
        %v7767 = vpack.c.b16 %v7693, %v7692
        %v7768 = vpack.c.b16 %v7695, %v7694
        %v7769 = vpack.c.b16 %v7697, %v7696
        %v7770 = vpack.c.b16 %v7699, %v7698
        %v7771 = vpack.c.b16 %v7701, %v7700
        %v7772 = vpack.c.b16 %v7703, %v7702
        %v7773 = vpack.c.b16 %v7705, %v7704
        %v7774 = vpack.c.b16 %v7707, %v7706
        %v7775 = vpack.c.b16 %v7709, %v7708
        %v7776 = vpack.c.b16 %v7711, %v7710
        %v7777 = vpack.c.b16 %v7713, %v7712
        %v7778 = vpack.c.b16 %v7715, %v7714
        %v7779 = vpack.c.b16 %v7717, %v7716
        %v7780 = vpack.c.b16 %v7719, %v7718
        %v7781 = vpack.c.b16 %v7721, %v7720
        %v7782 = vpack.c.b16 %v7723, %v7722
        %v7783 = vpack.c.b16 %v7725, %v7724
        %v7784 = vpack.c.b16 %v7727, %v7726
        %v7785 = vpack.c.b16 %v7729, %v7728
        %v7786 = vpack.c.b16 %v7731, %v7730
        %v7787 = vpack.c.b16 %v7733, %v7732
        %v7788 = vpack.c.b16 %v7735, %v7734
        %v7789 = vpack.c.b16 %v7737, %v7736
        %v7790 = vpack.c.b16 %v7739, %v7738
        %v7791 = vpack.c.b16 %v7741, %v7740
        %v7792 = vpack.c.b16 %v7743, %v7742
        %v7793 = vpack.c.b16 %v7745, %v7744
        %v7794 = vpack.c.b16 %v7747, %v7746
        %v7795 = vpack.c.b16 %v7749, %v7748
        %v7796 = vpack.c.b16 %v7751, %v7750
        %v7797 = vpack.c.b16 %v7753, %v7752
        %v7798 = vpack.c.b16 %v7755, %v7754
        %v7799 = vpack.c.b16 %v7757, %v7756
        %v7800 = vpack.c.b16 %v7759, %v7758
        %v7801 = vpack.c.b16 %v7761, %v7760
        %v7806 = vunpack.c.l.b16 %v7598
        %v7807 = vunpack.c.l.b16 %v7599
        %v7808 = vunpack.c.l.b16 %v7600
        %v7809 = vunpack.c.l.b16 %v7601
        %v7810 = vpack.c.b16 %v7807, %v7806
        %v7811 = vpack.c.b16 %v7809, %v7808
        %v7815 = vsel %vm1640, %v7762, 0
        %v7818 = vsel %vm1640, %v7763, 0
        %v7821 = vsel %vm1640, %v7764, 0
        %v7824 = vsel %vm1640, %v7765, 0
        %v7827 = vsel %vm1640, %v7766, 0
        %v7830 = vsel %vm1640, %v7767, 0
        %v7833 = vsel %vm1640, %v7768, 0
        %v7836 = vsel %vm1640, %v7769, 0
        %v7839 = vsel %vm1640, %v7770, 0
        %v7842 = vsel %vm1640, %v7771, 0
        %v7845 = vsel %vm1640, %v7772, 0
        %v7848 = vsel %vm1640, %v7773, 0
        %v7851 = vsel %vm1640, %v7774, 0
        %v7854 = vsel %vm1640, %v7775, 0
        %v7857 = vsel %vm1640, %v7776, 0
        %v7860 = vsel %vm1640, %v7777, 0
        %v7863 = vsel %vm1640, %v7778, 0
        %v7866 = vsel %vm1640, %v7779, 0
        %v7869 = vsel %vm1640, %v7780, 0
        %v7872 = vsel %vm1640, %v7781, 0
        %v7875 = vsel %vm1640, %v7782, 0
        %v7878 = vsel %vm1640, %v7783, 0
        %v7881 = vsel %vm1640, %v7784, 0
        %v7884 = vsel %vm1640, %v7785, 0
        %v7887 = vsel %vm1640, %v7786, 0
        %v7890 = vsel %vm1640, %v7787, 0
        %v7893 = vsel %vm1640, %v7788, 0
        %v7896 = vsel %vm1640, %v7789, 0
        %v7899 = vsel %vm1640, %v7790, 0
        %v7902 = vsel %vm1640, %v7791, 0
        %v7905 = vsel %vm1640, %v7792, 0
        %v7908 = vsel %vm1640, %v7793, 0
        %v7911 = vsel %vm1640, %v7794, 0
        %v7914 = vsel %vm1640, %v7795, 0
        %v7917 = vsel %vm1640, %v7796, 0
        %v7920 = vsel %vm1640, %v7797, 0
        %v7923 = vsel %vm1640, %v7798, 0
        %v7926 = vsel %vm1640, %v7799, 0
        %v7929 = vsel %vm1640, %v7800, 0
        %v7932 = vsel %vm1640, %v7801, 0
        %7934 = vmatprep.subr.bf16.mxu0 0
        %7935 = vmatpush1.bf16.msra.mxu0 0
        %7936 = vmatprep.subr.bf16.mxu0 0
        %7937 = vmatpush1.bf16.msra.mxu0 0
        %7938 = vmatprep.subr.bf16.mxu0 0
        %7939 = vmatpush1.bf16.msra.mxu0 0
        %7940 = vmatprep.subr.bf16.mxu0 0
        %7941 = vmatpush1.bf16.msra.mxu0 0
        %7942 = vmatprep.subr.bf16.mxu0 0
        %7943 = vmatpush1.bf16.msra.mxu0 0
        %7944 = vmatprep.subr.bf16.mxu0 0
        %7945 = vmatpush1.bf16.msra.mxu0 0
        %7946 = vmatprep.subr.bf16.mxu0 0
        %7947 = vmatpush1.bf16.msra.mxu0 %v7811
        %7948 = vmatprep.subr.bf16.mxu0 0
        %7949 = vmatpush1.bf16.msra.mxu0 %v7810
        %7950 = vmatprep.subr.bf16.mxu0 0
        %7951 = vmatpush2.bf16.msra.mxu0 0
        %7952 = vmatprep.subr.bf16.mxu0 0
        %7953 = vmatpush2.bf16.msra.mxu0 0
        %7954 = vmatprep.subr.bf16.mxu0 0
        %7955 = vmatpush2.bf16.msra.mxu0 0
        %7956 = vmatprep.subr.bf16.mxu0 0
        %7957 = vmatpush2.bf16.msra.mxu0 0
        %7958 = vmatprep.subr.bf16.mxu0 0
        %7959 = vmatpush2.bf16.msra.mxu0 0
        %7960 = vmatprep.subr.bf16.mxu0 0
        %7961 = vmatpush2.bf16.msra.mxu0 0
        %7962 = vmatprep.subr.bf16.mxu0 0
        %7963 = vmatpush2.bf16.msra.mxu0 0
        %7964 = vmatprep.subr.bf16.mxu0 0
        %7965 = vmatpush2.bf16.msra.mxu0 0
        %7966 = vmatprep.mubr.bf16.mxu0 0
        %7967 = vmatmul.mubr.bf16.gmra.mxu0 %v7815
        %v7968 = vpop.f32.mrf.mxu0
        %v7969 = vpop.f32.mrf.mxu0
        %v7970 = vpop.f32.mrf.mxu0
        %v7971 = vadd.f32 0.0, %v7970
        %v7972 = vpop.f32.mrf.mxu0
        %7973 = vmatprep.mubr.bf16.mxu0 0
        %7974 = vmatmul.mubr.bf16.gmra.mxu0 %v7818
        %v7975 = vpop.f32.mrf.mxu0
        %v7976 = vadd.f32 0.0, %v7975
        %v7977 = vpop.f32.mrf.mxu0
        %v7978 = vpop.f32.mrf.mxu0
        %v7979 = vadd.f32 0.0, %v7978
        %v7980 = vpop.f32.mrf.mxu0
        %7981 = vmatprep.mubr.bf16.mxu0 0
        %7982 = vmatmul.mubr.bf16.gmra.mxu0 %v7821
        %v7983 = vpop.f32.mrf.mxu0
        %v7984 = vadd.f32 0.0, %v7983
        %v7985 = vpop.f32.mrf.mxu0
        %v7986 = vpop.f32.mrf.mxu0
        %v7987 = vadd.f32 0.0, %v7986
        %v7988 = vpop.f32.mrf.mxu0
        %7989 = vmatprep.mubr.bf16.mxu0 0
        %7990 = vmatmul.mubr.bf16.gmra.mxu0 %v7824
        %v7991 = vpop.f32.mrf.mxu0
        %v7992 = vadd.f32 0.0, %v7991
        %v7993 = vpop.f32.mrf.mxu0
        %v7994 = vpop.f32.mrf.mxu0
        %v7995 = vadd.f32 0.0, %v7994
        %v7996 = vpop.f32.mrf.mxu0
        %7997 = vmatprep.mubr.bf16.mxu0 0
        %7998 = vmatmul.mubr.bf16.gmra.mxu0 %v7827
        %v7999 = vpop.f32.mrf.mxu0
        %v8000 = vadd.f32 0.0, %v7999
        %v8001 = vpop.f32.mrf.mxu0
        %v8002 = vpop.f32.mrf.mxu0
        %v8003 = vpop.f32.mrf.mxu0
        %8004 = vmatprep.mubr.bf16.mxu0 0
        %8005 = vmatmul.mubr.bf16.gmra.mxu0 %v7830
        %v8006 = vpop.f32.mrf.mxu0
        %v8007 = vpop.f32.mrf.mxu0
        %v8008 = vpop.f32.mrf.mxu0
        %v8009 = vadd.f32 0.0, %v8008
        %v8010 = vpop.f32.mrf.mxu0
        %8011 = vmatprep.mubr.bf16.mxu0 0
        %8012 = vmatmul.mubr.bf16.gmra.mxu0 %v7833
        %v8013 = vpop.f32.mrf.mxu0
        %v8014 = vadd.f32 0.0, %v8013
        %v8015 = vpop.f32.mrf.mxu0
        %v8016 = vpop.f32.mrf.mxu0
        %v8017 = vadd.f32 0.0, %v8016
        %v8018 = vpop.f32.mrf.mxu0
        %8019 = vmatprep.mubr.bf16.mxu0 0
        %8020 = vmatmul.mubr.bf16.gmra.mxu0 %v7836
        %v8021 = vpop.f32.mrf.mxu0
        %v8022 = vadd.f32 0.0, %v8021
        %v8023 = vpop.f32.mrf.mxu0
        %v8024 = vpop.f32.mrf.mxu0
        %v8025 = vadd.f32 0.0, %v8024
        %v8026 = vpop.f32.mrf.mxu0
        %8027 = vmatprep.mubr.bf16.mxu0 0
        %8028 = vmatmul.mubr.bf16.gmra.mxu0 %v7839
        %v8029 = vpop.f32.mrf.mxu0
        %v8030 = vadd.f32 0.0, %v8029
        %v8031 = vpop.f32.mrf.mxu0
        %v8032 = vpop.f32.mrf.mxu0
        %v8033 = vadd.f32 0.0, %v8032
        %v8034 = vpop.f32.mrf.mxu0
        %8035 = vmatprep.mubr.bf16.mxu0 0
        %8036 = vmatmul.mubr.bf16.gmra.mxu0 %v7842
        %v8037 = vpop.f32.mrf.mxu0
        %v8038 = vadd.f32 0.0, %v8037
        %v8039 = vpop.f32.mrf.mxu0
        %v8040 = vpop.f32.mrf.mxu0
        %v8041 = vpop.f32.mrf.mxu0
        %8042 = vmatprep.mubr.bf16.mxu0 0
        %8043 = vmatmul.mubr.bf16.gmra.mxu0 %v7845
        %v8044 = vpop.f32.mrf.mxu0
        %v8045 = vpop.f32.mrf.mxu0
        %v8046 = vpop.f32.mrf.mxu0
        %v8047 = vadd.f32 0.0, %v8046
        %v8048 = vpop.f32.mrf.mxu0
        %8049 = vmatprep.mubr.bf16.mxu0 0
        %8050 = vmatmul.mubr.bf16.gmra.mxu0 %v7848
        %v8051 = vpop.f32.mrf.mxu0
        %v8052 = vadd.f32 0.0, %v8051
        %v8053 = vpop.f32.mrf.mxu0
        %v8054 = vpop.f32.mrf.mxu0
        %v8055 = vadd.f32 0.0, %v8054
        %v8056 = vpop.f32.mrf.mxu0
        %8057 = vmatprep.mubr.bf16.mxu0 0
        %8058 = vmatmul.mubr.bf16.gmra.mxu0 %v7851
        %v8059 = vpop.f32.mrf.mxu0
        %v8060 = vadd.f32 0.0, %v8059
        %v8061 = vpop.f32.mrf.mxu0
        %v8062 = vpop.f32.mrf.mxu0
        %v8063 = vadd.f32 0.0, %v8062
        %v8064 = vpop.f32.mrf.mxu0
        %8065 = vmatprep.mubr.bf16.mxu0 0
        %8066 = vmatmul.mubr.bf16.gmra.mxu0 %v7854
        %v8067 = vpop.f32.mrf.mxu0
        %v8068 = vadd.f32 0.0, %v8067
        %v8069 = vpop.f32.mrf.mxu0
        %v8070 = vpop.f32.mrf.mxu0
        %v8071 = vadd.f32 0.0, %v8070
        %v8072 = vpop.f32.mrf.mxu0
        %8073 = vmatprep.mubr.bf16.mxu0 0
        %8074 = vmatmul.mubr.bf16.gmra.mxu0 %v7857
        %v8075 = vpop.f32.mrf.mxu0
        %v8076 = vadd.f32 0.0, %v8075
        %v8077 = vpop.f32.mrf.mxu0
        %v8078 = vpop.f32.mrf.mxu0
        %v8079 = vpop.f32.mrf.mxu0
        %8080 = vmatprep.mubr.bf16.mxu0 0
        %8081 = vmatmul.mubr.bf16.gmra.mxu0 %v7860
        %v8082 = vpop.f32.mrf.mxu0
        %v8083 = vpop.f32.mrf.mxu0
        %v8084 = vpop.f32.mrf.mxu0
        %v8085 = vadd.f32 0.0, %v8084
        %v8086 = vpop.f32.mrf.mxu0
        %8087 = vmatprep.mubr.bf16.mxu0 0
        %8088 = vmatmul.mubr.bf16.gmra.mxu0 %v7863
        %v8089 = vpop.f32.mrf.mxu0
        %v8090 = vadd.f32 0.0, %v8089
        %v8091 = vpop.f32.mrf.mxu0
        %v8092 = vpop.f32.mrf.mxu0
        %v8093 = vadd.f32 0.0, %v8092
        %v8094 = vpop.f32.mrf.mxu0
        %8095 = vmatprep.mubr.bf16.mxu0 0
        %8096 = vmatmul.mubr.bf16.gmra.mxu0 %v7866
        %v8097 = vpop.f32.mrf.mxu0
        %v8098 = vadd.f32 0.0, %v8097
        %v8099 = vpop.f32.mrf.mxu0
        %v8100 = vpop.f32.mrf.mxu0
        %v8101 = vadd.f32 0.0, %v8100
        %v8102 = vpop.f32.mrf.mxu0
        %8103 = vmatprep.mubr.bf16.mxu0 0
        %8104 = vmatmul.mubr.bf16.gmra.mxu0 %v7869
        %v8105 = vpop.f32.mrf.mxu0
        %v8106 = vadd.f32 0.0, %v8105
        %v8107 = vpop.f32.mrf.mxu0
        %v8108 = vpop.f32.mrf.mxu0
        %v8109 = vadd.f32 0.0, %v8108
        %v8110 = vpop.f32.mrf.mxu0
        %8111 = vmatprep.mubr.bf16.mxu0 0
        %8112 = vmatmul.mubr.bf16.gmra.mxu0 %v7872
        %v8113 = vpop.f32.mrf.mxu0
        %v8114 = vadd.f32 0.0, %v8113
        %v8115 = vpop.f32.mrf.mxu0
        %v8116 = vpop.f32.mrf.mxu0
        %v8117 = vpop.f32.mrf.mxu0
        %8118 = vmatprep.mubr.bf16.mxu0 0
        %8119 = vmatmul.mubr.bf16.gmra.mxu0 %v7875
        %v8120 = vpop.f32.mrf.mxu0
        %v8121 = vpop.f32.mrf.mxu0
        %v8122 = vpop.f32.mrf.mxu0
        %v8123 = vadd.f32 0.0, %v8122
        %v8124 = vpop.f32.mrf.mxu0
        %8125 = vmatprep.mubr.bf16.mxu0 0
        %8126 = vmatmul.mubr.bf16.gmra.mxu0 %v7878
        %v8127 = vpop.f32.mrf.mxu0
        %v8128 = vadd.f32 0.0, %v8127
        %v8129 = vpop.f32.mrf.mxu0
        %v8130 = vpop.f32.mrf.mxu0
        %v8131 = vadd.f32 0.0, %v8130
        %v8132 = vpop.f32.mrf.mxu0
        %8133 = vmatprep.mubr.bf16.mxu0 0
        %8134 = vmatmul.mubr.bf16.gmra.mxu0 %v7881
        %v8135 = vpop.f32.mrf.mxu0
        %v8136 = vadd.f32 0.0, %v8135
        %v8137 = vpop.f32.mrf.mxu0
        %v8138 = vpop.f32.mrf.mxu0
        %v8139 = vadd.f32 0.0, %v8138
        %v8140 = vpop.f32.mrf.mxu0
        %8141 = vmatprep.mubr.bf16.mxu0 0
        %8142 = vmatmul.mubr.bf16.gmra.mxu0 %v7884
        %v8143 = vpop.f32.mrf.mxu0
        %v8144 = vadd.f32 0.0, %v8143
        %v8145 = vpop.f32.mrf.mxu0
        %v8146 = vpop.f32.mrf.mxu0
        %v8147 = vadd.f32 0.0, %v8146
        %v8148 = vpop.f32.mrf.mxu0
        %8149 = vmatprep.mubr.bf16.mxu0 0
        %8150 = vmatmul.mubr.bf16.gmra.mxu0 %v7887
        %v8151 = vpop.f32.mrf.mxu0
        %v8152 = vadd.f32 0.0, %v8151
        %v8153 = vpop.f32.mrf.mxu0
        %v8154 = vpop.f32.mrf.mxu0
        %v8155 = vpop.f32.mrf.mxu0
        %8156 = vmatprep.mubr.bf16.mxu0 0
        %8157 = vmatmul.mubr.bf16.gmra.mxu0 %v7890
        %v8158 = vpop.f32.mrf.mxu0
        %v8159 = vpop.f32.mrf.mxu0
        %v8160 = vpop.f32.mrf.mxu0
        %v8161 = vadd.f32 0.0, %v8160
        %v8162 = vpop.f32.mrf.mxu0
        %8163 = vmatprep.mubr.bf16.mxu0 0
        %8164 = vmatmul.mubr.bf16.gmra.mxu0 %v7893
        %v8165 = vpop.f32.mrf.mxu0
        %v8166 = vadd.f32 0.0, %v8165
        %v8167 = vpop.f32.mrf.mxu0
        %v8168 = vpop.f32.mrf.mxu0
        %v8169 = vadd.f32 0.0, %v8168
        %v8170 = vpop.f32.mrf.mxu0
        %8171 = vmatprep.mubr.bf16.mxu0 0
        %8172 = vmatmul.mubr.bf16.gmra.mxu0 %v7896
        %v8173 = vpop.f32.mrf.mxu0
        %v8174 = vadd.f32 0.0, %v8173
        %v8175 = vpop.f32.mrf.mxu0
        %v8176 = vpop.f32.mrf.mxu0
        %v8177 = vadd.f32 0.0, %v8176
        %v8178 = vpop.f32.mrf.mxu0
        %8179 = vmatprep.mubr.bf16.mxu0 0
        %8180 = vmatmul.mubr.bf16.gmra.mxu0 %v7899
        %v8181 = vpop.f32.mrf.mxu0
        %v8182 = vadd.f32 0.0, %v8181
        %v8183 = vpop.f32.mrf.mxu0
        %v8184 = vpop.f32.mrf.mxu0
        %v8185 = vadd.f32 0.0, %v8184
        %v8186 = vpop.f32.mrf.mxu0
        %8187 = vmatprep.mubr.bf16.mxu0 0
        %8188 = vmatmul.mubr.bf16.gmra.mxu0 %v7902
        %v8189 = vpop.f32.mrf.mxu0
        %v8190 = vadd.f32 0.0, %v8189
        %v8191 = vpop.f32.mrf.mxu0
        %v8192 = vpop.f32.mrf.mxu0
        %v8193 = vpop.f32.mrf.mxu0
        %8194 = vmatprep.mubr.bf16.mxu0 0
        %8195 = vmatmul.mubr.bf16.gmra.mxu0 %v7905
        %v8196 = vpop.f32.mrf.mxu0
        %v8197 = vpop.f32.mrf.mxu0
        %v8198 = vpop.f32.mrf.mxu0
        %v8199 = vadd.f32 0.0, %v8198
        %v8200 = vpop.f32.mrf.mxu0
        %8201 = vmatprep.mubr.bf16.mxu0 0
        %8202 = vmatmul.mubr.bf16.gmra.mxu0 %v7908
        %v8203 = vpop.f32.mrf.mxu0
        %v8204 = vadd.f32 0.0, %v8203
        %v8205 = vpop.f32.mrf.mxu0
        %v8206 = vpop.f32.mrf.mxu0
        %v8207 = vadd.f32 0.0, %v8206
        %v8208 = vpop.f32.mrf.mxu0
        %8209 = vmatprep.mubr.bf16.mxu0 0
        %8210 = vmatmul.mubr.bf16.gmra.mxu0 %v7911
        %v8211 = vpop.f32.mrf.mxu0
        %v8212 = vadd.f32 0.0, %v8211
        %v8213 = vpop.f32.mrf.mxu0
        %v8214 = vpop.f32.mrf.mxu0
        %v8215 = vadd.f32 0.0, %v8214
        %v8216 = vpop.f32.mrf.mxu0
        %8217 = vmatprep.mubr.bf16.mxu0 0
        %8218 = vmatmul.mubr.bf16.gmra.mxu0 %v7914
        %v8219 = vpop.f32.mrf.mxu0
        %v8220 = vadd.f32 0.0, %v8219
        %v8221 = vpop.f32.mrf.mxu0
        %v8222 = vpop.f32.mrf.mxu0
        %v8223 = vadd.f32 0.0, %v8222
        %v8224 = vpop.f32.mrf.mxu0
        %8225 = vmatprep.mubr.bf16.mxu0 0
        %8226 = vmatmul.mubr.bf16.gmra.mxu0 %v7917
        %v8227 = vpop.f32.mrf.mxu0
        %v8228 = vadd.f32 0.0, %v8227
        %v8229 = vpop.f32.mrf.mxu0
        %v8230 = vpop.f32.mrf.mxu0
        %v8231 = vpop.f32.mrf.mxu0
        %8232 = vmatprep.mubr.bf16.mxu0 0
        %8233 = vmatmul.mubr.bf16.gmra.mxu0 %v7920
        %v8234 = vpop.f32.mrf.mxu0
        %v8235 = vpop.f32.mrf.mxu0
        %v8236 = vpop.f32.mrf.mxu0
        %v8237 = vadd.f32 0.0, %v8236
        %v8238 = vpop.f32.mrf.mxu0
        %8239 = vmatprep.mubr.bf16.mxu0 0
        %8240 = vmatmul.mubr.bf16.gmra.mxu0 %v7923
        %v8241 = vpop.f32.mrf.mxu0
        %v8242 = vadd.f32 0.0, %v8241
        %v8243 = vpop.f32.mrf.mxu0
        %v8244 = vpop.f32.mrf.mxu0
        %v8245 = vadd.f32 0.0, %v8244
        %v8246 = vpop.f32.mrf.mxu0
        %8247 = vmatprep.mubr.bf16.mxu0 0
        %8248 = vmatmul.mubr.bf16.gmra.mxu0 %v7926
        %v8249 = vpop.f32.mrf.mxu0
        %v8250 = vadd.f32 0.0, %v8249
        %v8251 = vpop.f32.mrf.mxu0
        %v8252 = vpop.f32.mrf.mxu0
        %v8253 = vadd.f32 0.0, %v8252
        %v8254 = vpop.f32.mrf.mxu0
        %8255 = vmatprep.mubr.bf16.mxu0 0
        %8256 = vmatmul.mubr.bf16.gmra.mxu0 %v7929
        %v8257 = vpop.f32.mrf.mxu0
        %v8258 = vadd.f32 0.0, %v8257
        %v8259 = vpop.f32.mrf.mxu0
        %v8260 = vpop.f32.mrf.mxu0
        %v8261 = vadd.f32 0.0, %v8260
        %v8262 = vpop.f32.mrf.mxu0
        %8263 = vmatprep.mubr.bf16.mxu0 0
        %8264 = vmatmul.mubr.bf16.gmra.mxu0 %v7932
        %v8265 = vpop.f32.mrf.mxu0
        %v8266 = vadd.f32 0.0, %v8265
        %v8267 = vpop.f32.mrf.mxu0
        %v8268 = vpop.f32.mrf.mxu0
        %v8269 = vpop.f32.mrf.mxu0
        %8270 = vdwg.mxu0
        %v8271 = vadd.f32 %v7453, %v7971
        %v8272 = vadd.f32 %v7454, %v7976
        %v8273 = vadd.f32 %v7455, %v7979
        %v8274 = vadd.f32 %v7456, %v7984
        %v8275 = vadd.f32 %v7457, %v7987
        %v8276 = vadd.f32 %v7458, %v7992
        %v8277 = vadd.f32 %v7459, %v7995
        %v8278 = vadd.f32 %v7460, %v8000
        %v8279 = vadd.f32 %v7461, %v8009
        %v8280 = vadd.f32 %v7462, %v8014
        %v8281 = vadd.f32 %v7463, %v8017
        %v8282 = vadd.f32 %v7464, %v8022
        %v8283 = vadd.f32 %v7465, %v8025
        %v8284 = vadd.f32 %v7466, %v8030
        %v8285 = vadd.f32 %v7467, %v8033
        %v8286 = vadd.f32 %v7468, %v8038
        %v8287 = vadd.f32 %v7469, %v8047
        %v8288 = vadd.f32 %v7470, %v8052
        %v8289 = vadd.f32 %v7471, %v8055
        %v8290 = vadd.f32 %v7472, %v8060
        %v8291 = vadd.f32 %v7473, %v8063
        %v8292 = vadd.f32 %v7474, %v8068
        %v8293 = vadd.f32 %v7475, %v8071
        %v8294 = vadd.f32 %v7476, %v8076
        %v8295 = vadd.f32 %v7477, %v8085
        %v8296 = vadd.f32 %v7478, %v8090
        %v8297 = vadd.f32 %v7479, %v8093
        %v8298 = vadd.f32 %v7480, %v8098
        %v8299 = vadd.f32 %v7481, %v8101
        %v8300 = vadd.f32 %v7482, %v8106
        %v8301 = vadd.f32 %v7483, %v8109
        %v8302 = vadd.f32 %v7484, %v8114
        %v8303 = vadd.f32 %v7485, %v8123
        %v8304 = vadd.f32 %v7486, %v8128
        %v8305 = vadd.f32 %v7487, %v8131
        %v8306 = vadd.f32 %v7488, %v8136
        %v8307 = vadd.f32 %v7489, %v8139
        %v8308 = vadd.f32 %v7490, %v8144
        %v8309 = vadd.f32 %v7491, %v8147
        %v8310 = vadd.f32 %v7492, %v8152
        %v8311 = vadd.f32 %v7493, %v8161
        %v8312 = vadd.f32 %v7494, %v8166
        %v8313 = vadd.f32 %v7495, %v8169
        %v8314 = vadd.f32 %v7496, %v8174
        %v8315 = vadd.f32 %v7497, %v8177
        %v8316 = vadd.f32 %v7498, %v8182
        %v8317 = vadd.f32 %v7499, %v8185
        %v8318 = vadd.f32 %v7500, %v8190
        %v8319 = vadd.f32 %v7501, %v8199
        %v8320 = vadd.f32 %v7502, %v8204
        %v8321 = vadd.f32 %v7503, %v8207
        %v8322 = vadd.f32 %v7504, %v8212
        %v8323 = vadd.f32 %v7505, %v8215
        %v8324 = vadd.f32 %v7506, %v8220
        %v8325 = vadd.f32 %v7507, %v8223
        %v8326 = vadd.f32 %v7508, %v8228
        %v8327 = vadd.f32 %v7509, %v8237
        %v8328 = vadd.f32 %v7510, %v8242
        %v8329 = vadd.f32 %v7511, %v8245
        %v8330 = vadd.f32 %v7512, %v8250
        %v8331 = vadd.f32 %v7513, %v8253
        %v8332 = vadd.f32 %v7514, %v8258
        %v8333 = vadd.f32 %v7515, %v8261
        %v8334 = vadd.f32 %v7516, %v8266
        %v8335 = vadd.f32 %v8271, %v1337
        %v8336 = vadd.f32 %v8272, %v1337
        %v8337 = vadd.f32 %v8273, %v1337
        %v8338 = vadd.f32 %v8274, %v1337
        %v8339 = vadd.f32 %v8275, %v1337
        %v8340 = vadd.f32 %v8276, %v1337
        %v8341 = vadd.f32 %v8277, %v1337
        %v8342 = vadd.f32 %v8278, %v1337
        %v8343 = vadd.f32 %v8279, %v1337
        %v8344 = vadd.f32 %v8280, %v1337
        %v8345 = vadd.f32 %v8281, %v1337
        %v8346 = vadd.f32 %v8282, %v1337
        %v8347 = vadd.f32 %v8283, %v1337
        %v8348 = vadd.f32 %v8284, %v1337
        %v8349 = vadd.f32 %v8285, %v1337
        %v8350 = vadd.f32 %v8286, %v1337
        %v8351 = vadd.f32 %v8287, %v1337
        %v8352 = vadd.f32 %v8288, %v1337
        %v8353 = vadd.f32 %v8289, %v1337
        %v8354 = vadd.f32 %v8290, %v1337
        %v8355 = vadd.f32 %v8291, %v1337
        %v8356 = vadd.f32 %v8292, %v1337
        %v8357 = vadd.f32 %v8293, %v1337
        %v8358 = vadd.f32 %v8294, %v1337
        %v8359 = vadd.f32 %v8295, %v1337
        %v8360 = vadd.f32 %v8296, %v1337
        %v8361 = vadd.f32 %v8297, %v1337
        %v8362 = vadd.f32 %v8298, %v1337
        %v8363 = vadd.f32 %v8299, %v1337
        %v8364 = vadd.f32 %v8300, %v1337
        %v8365 = vadd.f32 %v8301, %v1337
        %v8366 = vadd.f32 %v8302, %v1337
        %v8367 = vadd.f32 %v8303, %v1337
        %v8368 = vadd.f32 %v8304, %v1337
        %v8369 = vadd.f32 %v8305, %v1337
        %v8370 = vadd.f32 %v8306, %v1337
        %v8371 = vadd.f32 %v8307, %v1337
        %v8372 = vadd.f32 %v8308, %v1337
        %v8373 = vadd.f32 %v8309, %v1337
        %v8374 = vadd.f32 %v8310, %v1337
        %v8375 = vadd.f32 %v8311, %v1337
        %v8376 = vadd.f32 %v8312, %v1337
        %v8377 = vadd.f32 %v8313, %v1337
        %v8378 = vadd.f32 %v8314, %v1337
        %v8379 = vadd.f32 %v8315, %v1337
        %v8380 = vadd.f32 %v8316, %v1337
        %v8381 = vadd.f32 %v8317, %v1337
        %v8382 = vadd.f32 %v8318, %v1337
        %v8383 = vadd.f32 %v8319, %v1337
        %v8384 = vadd.f32 %v8320, %v1337
        %v8385 = vadd.f32 %v8321, %v1337
        %v8386 = vadd.f32 %v8322, %v1337
        %v8387 = vadd.f32 %v8323, %v1337
        %v8388 = vadd.f32 %v8324, %v1337
        %v8389 = vadd.f32 %v8325, %v1337
        %v8390 = vadd.f32 %v8326, %v1337
        %v8391 = vadd.f32 %v8327, %v1337
        %v8392 = vadd.f32 %v8328, %v1337
        %v8393 = vadd.f32 %v8329, %v1337
        %v8394 = vadd.f32 %v8330, %v1337
        %v8395 = vadd.f32 %v8331, %v1337
        %v8396 = vadd.f32 %v8332, %v1337
        %v8397 = vadd.f32 %v8333, %v1337
        %v8398 = vadd.f32 %v8334, %v1337
        %v8399 = vmax.f32 %v8335, 0.0
        %v8400 = vmax.f32 %v8336, 0.0
        %v8401 = vmax.f32 %v8337, 0.0
        %v8402 = vmax.f32 %v8338, 0.0
        %v8403 = vmax.f32 %v8339, 0.0
        %v8404 = vmax.f32 %v8340, 0.0
        %v8405 = vmax.f32 %v8341, 0.0
        %v8406 = vmax.f32 %v8342, 0.0
        %v8407 = vmax.f32 %v8343, 0.0
        %v8408 = vmax.f32 %v8344, 0.0
        %v8409 = vmax.f32 %v8345, 0.0
        %v8410 = vmax.f32 %v8346, 0.0
        %v8411 = vmax.f32 %v8347, 0.0
        %v8412 = vmax.f32 %v8348, 0.0
        %v8413 = vmax.f32 %v8349, 0.0
        %v8414 = vmax.f32 %v8350, 0.0
        %v8415 = vmax.f32 %v8351, 0.0
        %v8416 = vmax.f32 %v8352, 0.0
        %v8417 = vmax.f32 %v8353, 0.0
        %v8418 = vmax.f32 %v8354, 0.0
        %v8419 = vmax.f32 %v8355, 0.0
        %v8420 = vmax.f32 %v8356, 0.0
        %v8421 = vmax.f32 %v8357, 0.0
        %v8422 = vmax.f32 %v8358, 0.0
        %v8423 = vmax.f32 %v8359, 0.0
        %v8424 = vmax.f32 %v8360, 0.0
        %v8425 = vmax.f32 %v8361, 0.0
        %v8426 = vmax.f32 %v8362, 0.0
        %v8427 = vmax.f32 %v8363, 0.0
        %v8428 = vmax.f32 %v8364, 0.0
        %v8429 = vmax.f32 %v8365, 0.0
        %v8430 = vmax.f32 %v8366, 0.0
        %v8431 = vmax.f32 %v8367, 0.0
        %v8432 = vmax.f32 %v8368, 0.0
        %v8433 = vmax.f32 %v8369, 0.0
        %v8434 = vmax.f32 %v8370, 0.0
        %v8435 = vmax.f32 %v8371, 0.0
        %v8436 = vmax.f32 %v8372, 0.0
        %v8437 = vmax.f32 %v8373, 0.0
        %v8438 = vmax.f32 %v8374, 0.0
        %v8439 = vmax.f32 %v8375, 0.0
        %v8440 = vmax.f32 %v8376, 0.0
        %v8441 = vmax.f32 %v8377, 0.0
        %v8442 = vmax.f32 %v8378, 0.0
        %v8443 = vmax.f32 %v8379, 0.0
        %v8444 = vmax.f32 %v8380, 0.0
        %v8445 = vmax.f32 %v8381, 0.0
        %v8446 = vmax.f32 %v8382, 0.0
        %v8447 = vmax.f32 %v8383, 0.0
        %v8448 = vmax.f32 %v8384, 0.0
        %v8449 = vmax.f32 %v8385, 0.0
        %v8450 = vmax.f32 %v8386, 0.0
        %v8451 = vmax.f32 %v8387, 0.0
        %v8452 = vmax.f32 %v8388, 0.0
        %v8453 = vmax.f32 %v8389, 0.0
        %v8454 = vmax.f32 %v8390, 0.0
        %v8455 = vmax.f32 %v8391, 0.0
        %v8456 = vmax.f32 %v8392, 0.0
        %v8457 = vmax.f32 %v8393, 0.0
        %v8458 = vmax.f32 %v8394, 0.0
        %v8459 = vmax.f32 %v8395, 0.0
        %v8460 = vmax.f32 %v8396, 0.0
        %v8461 = vmax.f32 %v8397, 0.0
        %v8462 = vmax.f32 %v8398, 0.0
        %v8463 = vpack.c.bf16 %v8399, %v8399
        %vm8464 = vcmask 519168
        %8465 = vst.msk [vmem:[#allocation3] sm:$0xf] %vm8464, %v8463
        %v8466 = vpack.c.bf16 %v8400, %v8400
        %v8468 = vunpack.c.l.b16 %v8466
        %v8469 = vpack.c.b16 %v8468, %v8468
        %8470 = vrot.lane.b32.xlu0 %v8469, 64
        %v8471 = vpop.permute.xlu0 %8470
        %vm8473 = vcmask 1043968
        %8474 = vst.msk [vmem:[#allocation3] sm:$0xf] %vm8473, %v8471
        %v8475 = vpack.c.bf16 %v8401, %v8401
        %8476 = vst.msk [vmem:[#allocation3 + $0x4] sm:$0xf] %vm8464, %v8475
        %v8477 = vpack.c.bf16 %v8402, %v8402
        %v8479 = vunpack.c.l.b16 %v8477
        %v8480 = vpack.c.b16 %v8479, %v8479
        %8481 = vrot.lane.b32.xlu0 %v8480, 64
        %v8482 = vpop.permute.xlu0 %8481
        %8484 = vst.msk [vmem:[#allocation3 + $0x4] sm:$0xf] %vm8473, %v8482
        %v8485 = vpack.c.bf16 %v8403, %v8403
        %8486 = vst.msk [vmem:[#allocation3 + $0x8] sm:$0xf] %vm8464, %v8485
        %v8487 = vpack.c.bf16 %v8404, %v8404
        %v8489 = vunpack.c.l.b16 %v8487
        %v8490 = vpack.c.b16 %v8489, %v8489
        %8491 = vrot.lane.b32.xlu0 %v8490, 64
        %v8492 = vpop.permute.xlu0 %8491
        %8494 = vst.msk [vmem:[#allocation3 + $0x8] sm:$0xf] %vm8473, %v8492
        %v8495 = vpack.c.bf16 %v8405, %v8405
        %8496 = vst.msk [vmem:[#allocation3 + $0xc] sm:$0xf] %vm8464, %v8495
        %v8497 = vpack.c.bf16 %v8406, %v8406
        %v8499 = vunpack.c.l.b16 %v8497
        %v8500 = vpack.c.b16 %v8499, %v8499
        %8501 = vrot.lane.b32.xlu0 %v8500, 64
        %v8502 = vpop.permute.xlu0 %8501
        %8504 = vst.msk [vmem:[#allocation3 + $0xc] sm:$0xf] %vm8473, %v8502
        %v8505 = vpack.c.bf16 %v8407, %v8407
        %8506 = vst.msk [vmem:[#allocation3 + $0x10] sm:$0xf] %vm8464, %v8505
        %v8507 = vpack.c.bf16 %v8408, %v8408
        %v8509 = vunpack.c.l.b16 %v8507
        %v8510 = vpack.c.b16 %v8509, %v8509
        %8511 = vrot.lane.b32.xlu0 %v8510, 64
        %v8512 = vpop.permute.xlu0 %8511
        %8514 = vst.msk [vmem:[#allocation3 + $0x10] sm:$0xf] %vm8473, %v8512
        %v8515 = vpack.c.bf16 %v8409, %v8409
        %8516 = vst.msk [vmem:[#allocation3 + $0x14] sm:$0xf] %vm8464, %v8515
        %v8517 = vpack.c.bf16 %v8410, %v8410
        %v8519 = vunpack.c.l.b16 %v8517
        %v8520 = vpack.c.b16 %v8519, %v8519
        %8521 = vrot.lane.b32.xlu0 %v8520, 64
        %v8522 = vpop.permute.xlu0 %8521
        %8524 = vst.msk [vmem:[#allocation3 + $0x14] sm:$0xf] %vm8473, %v8522
        %v8525 = vpack.c.bf16 %v8411, %v8411
        %8526 = vst.msk [vmem:[#allocation3 + $0x18] sm:$0xf] %vm8464, %v8525
        %v8527 = vpack.c.bf16 %v8412, %v8412
        %v8529 = vunpack.c.l.b16 %v8527
        %v8530 = vpack.c.b16 %v8529, %v8529
        %8531 = vrot.lane.b32.xlu0 %v8530, 64
        %v8532 = vpop.permute.xlu0 %8531
        %8534 = vst.msk [vmem:[#allocation3 + $0x18] sm:$0xf] %vm8473, %v8532
        %v8535 = vpack.c.bf16 %v8413, %v8413
        %8536 = vst.msk [vmem:[#allocation3 + $0x1c] sm:$0xf] %vm8464, %v8535
        %v8537 = vpack.c.bf16 %v8414, %v8414
        %v8539 = vunpack.c.l.b16 %v8537
        %v8540 = vpack.c.b16 %v8539, %v8539
        %8541 = vrot.lane.b32.xlu0 %v8540, 64
        %v8542 = vpop.permute.xlu0 %8541
        %8544 = vst.msk [vmem:[#allocation3 + $0x1c] sm:$0xf] %vm8473, %v8542
        %v8545 = vpack.c.bf16 %v8415, %v8415
        %8546 = vst.msk [vmem:[#allocation3 + $0x20] sm:$0xf] %vm8464, %v8545
        %v8547 = vpack.c.bf16 %v8416, %v8416
        %v8549 = vunpack.c.l.b16 %v8547
        %v8550 = vpack.c.b16 %v8549, %v8549
        %8551 = vrot.lane.b32.xlu0 %v8550, 64
        %v8552 = vpop.permute.xlu0 %8551
        %8554 = vst.msk [vmem:[#allocation3 + $0x20] sm:$0xf] %vm8473, %v8552
        %v8555 = vpack.c.bf16 %v8417, %v8417
        %8556 = vst.msk [vmem:[#allocation3 + $0x24] sm:$0xf] %vm8464, %v8555
        %v8557 = vpack.c.bf16 %v8418, %v8418
        %v8559 = vunpack.c.l.b16 %v8557
        %v8560 = vpack.c.b16 %v8559, %v8559
        %8561 = vrot.lane.b32.xlu0 %v8560, 64
        %v8562 = vpop.permute.xlu0 %8561
        %8564 = vst.msk [vmem:[#allocation3 + $0x24] sm:$0xf] %vm8473, %v8562
        %v8565 = vpack.c.bf16 %v8419, %v8419
        %8566 = vst.msk [vmem:[#allocation3 + $0x28] sm:$0xf] %vm8464, %v8565
        %v8567 = vpack.c.bf16 %v8420, %v8420
        %v8569 = vunpack.c.l.b16 %v8567
        %v8570 = vpack.c.b16 %v8569, %v8569
        %8571 = vrot.lane.b32.xlu0 %v8570, 64
        %v8572 = vpop.permute.xlu0 %8571
        %8574 = vst.msk [vmem:[#allocation3 + $0x28] sm:$0xf] %vm8473, %v8572
        %v8575 = vpack.c.bf16 %v8421, %v8421
        %8576 = vst.msk [vmem:[#allocation3 + $0x2c] sm:$0xf] %vm8464, %v8575
        %v8577 = vpack.c.bf16 %v8422, %v8422
        %v8579 = vunpack.c.l.b16 %v8577
        %v8580 = vpack.c.b16 %v8579, %v8579
        %8581 = vrot.lane.b32.xlu0 %v8580, 64
        %v8582 = vpop.permute.xlu0 %8581
        %8584 = vst.msk [vmem:[#allocation3 + $0x2c] sm:$0xf] %vm8473, %v8582
        %v8585 = vpack.c.bf16 %v8423, %v8423
        %8586 = vst.msk [vmem:[#allocation3 + $0x30] sm:$0xf] %vm8464, %v8585
        %v8587 = vpack.c.bf16 %v8424, %v8424
        %v8589 = vunpack.c.l.b16 %v8587
        %v8590 = vpack.c.b16 %v8589, %v8589
        %8591 = vrot.lane.b32.xlu0 %v8590, 64
        %v8592 = vpop.permute.xlu0 %8591
        %8594 = vst.msk [vmem:[#allocation3 + $0x30] sm:$0xf] %vm8473, %v8592
        %v8595 = vpack.c.bf16 %v8425, %v8425
        %8596 = vst.msk [vmem:[#allocation3 + $0x34] sm:$0xf] %vm8464, %v8595
        %v8597 = vpack.c.bf16 %v8426, %v8426
        %v8599 = vunpack.c.l.b16 %v8597
        %v8600 = vpack.c.b16 %v8599, %v8599
        %8601 = vrot.lane.b32.xlu0 %v8600, 64
        %v8602 = vpop.permute.xlu0 %8601
        %8604 = vst.msk [vmem:[#allocation3 + $0x34] sm:$0xf] %vm8473, %v8602
        %v8605 = vpack.c.bf16 %v8427, %v8427
        %8606 = vst.msk [vmem:[#allocation3 + $0x38] sm:$0xf] %vm8464, %v8605
        %v8607 = vpack.c.bf16 %v8428, %v8428
        %v8609 = vunpack.c.l.b16 %v8607
        %v8610 = vpack.c.b16 %v8609, %v8609
        %8611 = vrot.lane.b32.xlu0 %v8610, 64
        %v8612 = vpop.permute.xlu0 %8611
        %8614 = vst.msk [vmem:[#allocation3 + $0x38] sm:$0xf] %vm8473, %v8612
        %v8615 = vpack.c.bf16 %v8429, %v8429
        %8616 = vst.msk [vmem:[#allocation3 + $0x3c] sm:$0xf] %vm8464, %v8615
        %v8617 = vpack.c.bf16 %v8430, %v8430
        %v8619 = vunpack.c.l.b16 %v8617
        %v8620 = vpack.c.b16 %v8619, %v8619
        %8621 = vrot.lane.b32.xlu0 %v8620, 64
        %v8622 = vpop.permute.xlu0 %8621
        %8624 = vst.msk [vmem:[#allocation3 + $0x3c] sm:$0xf] %vm8473, %v8622
        %v8625 = vpack.c.bf16 %v8431, %v8431
        %s8626 = scalar_lea.vmem [#allocation3], 64
        %8627 = vst.msk [vmem:[%s8626] sm:$0xf] %vm8464, %v8625
        %v8628 = vpack.c.bf16 %v8432, %v8432
        %v8630 = vunpack.c.l.b16 %v8628
        %v8631 = vpack.c.b16 %v8630, %v8630
        %8632 = vrot.lane.b32.xlu0 %v8631, 64
        %v8633 = vpop.permute.xlu0 %8632
        %8635 = vst.msk [vmem:[%s8626] sm:$0xf] %vm8473, %v8633
        %v8636 = vpack.c.bf16 %v8433, %v8433
        %8637 = vst.msk [vmem:[%s8626 + $0x4] sm:$0xf] %vm8464, %v8636
        %v8638 = vpack.c.bf16 %v8434, %v8434
        %v8640 = vunpack.c.l.b16 %v8638
        %v8641 = vpack.c.b16 %v8640, %v8640
        %8642 = vrot.lane.b32.xlu0 %v8641, 64
        %v8643 = vpop.permute.xlu0 %8642
        %8645 = vst.msk [vmem:[%s8626 + $0x4] sm:$0xf] %vm8473, %v8643
        %v8646 = vpack.c.bf16 %v8435, %v8435
        %8647 = vst.msk [vmem:[%s8626 + $0x8] sm:$0xf] %vm8464, %v8646
        %v8648 = vpack.c.bf16 %v8436, %v8436
        %v8650 = vunpack.c.l.b16 %v8648
        %v8651 = vpack.c.b16 %v8650, %v8650
        %8652 = vrot.lane.b32.xlu0 %v8651, 64
        %v8653 = vpop.permute.xlu0 %8652
        %8655 = vst.msk [vmem:[%s8626 + $0x8] sm:$0xf] %vm8473, %v8653
        %v8656 = vpack.c.bf16 %v8437, %v8437
        %8657 = vst.msk [vmem:[%s8626 + $0xc] sm:$0xf] %vm8464, %v8656
        %v8658 = vpack.c.bf16 %v8438, %v8438
        %v8660 = vunpack.c.l.b16 %v8658
        %v8661 = vpack.c.b16 %v8660, %v8660
        %8662 = vrot.lane.b32.xlu0 %v8661, 64
        %v8663 = vpop.permute.xlu0 %8662
        %8665 = vst.msk [vmem:[%s8626 + $0xc] sm:$0xf] %vm8473, %v8663
        %v8666 = vpack.c.bf16 %v8439, %v8439
        %8667 = vst.msk [vmem:[%s8626 + $0x10] sm:$0xf] %vm8464, %v8666
        %v8668 = vpack.c.bf16 %v8440, %v8440
        %v8670 = vunpack.c.l.b16 %v8668
        %v8671 = vpack.c.b16 %v8670, %v8670
        %8672 = vrot.lane.b32.xlu0 %v8671, 64
        %v8673 = vpop.permute.xlu0 %8672
        %8675 = vst.msk [vmem:[%s8626 + $0x10] sm:$0xf] %vm8473, %v8673
        %v8676 = vpack.c.bf16 %v8441, %v8441
        %8677 = vst.msk [vmem:[%s8626 + $0x14] sm:$0xf] %vm8464, %v8676
        %v8678 = vpack.c.bf16 %v8442, %v8442
        %v8680 = vunpack.c.l.b16 %v8678
        %v8681 = vpack.c.b16 %v8680, %v8680
        %8682 = vrot.lane.b32.xlu0 %v8681, 64
        %v8683 = vpop.permute.xlu0 %8682
        %8685 = vst.msk [vmem:[%s8626 + $0x14] sm:$0xf] %vm8473, %v8683
        %v8686 = vpack.c.bf16 %v8443, %v8443
        %8687 = vst.msk [vmem:[%s8626 + $0x18] sm:$0xf] %vm8464, %v8686
        %v8688 = vpack.c.bf16 %v8444, %v8444
        %v8690 = vunpack.c.l.b16 %v8688
        %v8691 = vpack.c.b16 %v8690, %v8690
        %8692 = vrot.lane.b32.xlu0 %v8691, 64
        %v8693 = vpop.permute.xlu0 %8692
        %8695 = vst.msk [vmem:[%s8626 + $0x18] sm:$0xf] %vm8473, %v8693
        %v8696 = vpack.c.bf16 %v8445, %v8445
        %8697 = vst.msk [vmem:[%s8626 + $0x1c] sm:$0xf] %vm8464, %v8696
        %v8698 = vpack.c.bf16 %v8446, %v8446
        %v8700 = vunpack.c.l.b16 %v8698
        %v8701 = vpack.c.b16 %v8700, %v8700
        %8702 = vrot.lane.b32.xlu0 %v8701, 64
        %v8703 = vpop.permute.xlu0 %8702
        %8705 = vst.msk [vmem:[%s8626 + $0x1c] sm:$0xf] %vm8473, %v8703
        %v8706 = vpack.c.bf16 %v8447, %v8447
        %8707 = vst.msk [vmem:[%s8626 + $0x20] sm:$0xf] %vm8464, %v8706
        %v8708 = vpack.c.bf16 %v8448, %v8448
        %v8710 = vunpack.c.l.b16 %v8708
        %v8711 = vpack.c.b16 %v8710, %v8710
        %8712 = vrot.lane.b32.xlu0 %v8711, 64
        %v8713 = vpop.permute.xlu0 %8712
        %8715 = vst.msk [vmem:[%s8626 + $0x20] sm:$0xf] %vm8473, %v8713
        %v8716 = vpack.c.bf16 %v8449, %v8449
        %8717 = vst.msk [vmem:[%s8626 + $0x24] sm:$0xf] %vm8464, %v8716
        %v8718 = vpack.c.bf16 %v8450, %v8450
        %v8720 = vunpack.c.l.b16 %v8718
        %v8721 = vpack.c.b16 %v8720, %v8720
        %8722 = vrot.lane.b32.xlu0 %v8721, 64
        %v8723 = vpop.permute.xlu0 %8722
        %8725 = vst.msk [vmem:[%s8626 + $0x24] sm:$0xf] %vm8473, %v8723
        %v8726 = vpack.c.bf16 %v8451, %v8451
        %8727 = vst.msk [vmem:[%s8626 + $0x28] sm:$0xf] %vm8464, %v8726
        %v8728 = vpack.c.bf16 %v8452, %v8452
        %v8730 = vunpack.c.l.b16 %v8728
        %v8731 = vpack.c.b16 %v8730, %v8730
        %8732 = vrot.lane.b32.xlu0 %v8731, 64
        %v8733 = vpop.permute.xlu0 %8732
        %8735 = vst.msk [vmem:[%s8626 + $0x28] sm:$0xf] %vm8473, %v8733
        %v8736 = vpack.c.bf16 %v8453, %v8453
        %8737 = vst.msk [vmem:[%s8626 + $0x2c] sm:$0xf] %vm8464, %v8736
        %v8738 = vpack.c.bf16 %v8454, %v8454
        %v8740 = vunpack.c.l.b16 %v8738
        %v8741 = vpack.c.b16 %v8740, %v8740
        %8742 = vrot.lane.b32.xlu0 %v8741, 64
        %v8743 = vpop.permute.xlu0 %8742
        %8745 = vst.msk [vmem:[%s8626 + $0x2c] sm:$0xf] %vm8473, %v8743
        %v8746 = vpack.c.bf16 %v8455, %v8455
        %8747 = vst.msk [vmem:[%s8626 + $0x30] sm:$0xf] %vm8464, %v8746
        %v8748 = vpack.c.bf16 %v8456, %v8456
        %v8750 = vunpack.c.l.b16 %v8748
        %v8751 = vpack.c.b16 %v8750, %v8750
        %8752 = vrot.lane.b32.xlu0 %v8751, 64
        %v8753 = vpop.permute.xlu0 %8752
        %8755 = vst.msk [vmem:[%s8626 + $0x30] sm:$0xf] %vm8473, %v8753
        %v8756 = vpack.c.bf16 %v8457, %v8457
        %8757 = vst.msk [vmem:[%s8626 + $0x34] sm:$0xf] %vm8464, %v8756
        %v8758 = vpack.c.bf16 %v8458, %v8458
        %v8760 = vunpack.c.l.b16 %v8758
        %v8761 = vpack.c.b16 %v8760, %v8760
        %8762 = vrot.lane.b32.xlu0 %v8761, 64
        %v8763 = vpop.permute.xlu0 %8762
        %8765 = vst.msk [vmem:[%s8626 + $0x34] sm:$0xf] %vm8473, %v8763
        %v8766 = vpack.c.bf16 %v8459, %v8459
        %8767 = vst.msk [vmem:[%s8626 + $0x38] sm:$0xf] %vm8464, %v8766
        %v8768 = vpack.c.bf16 %v8460, %v8460
        %v8770 = vunpack.c.l.b16 %v8768
        %v8771 = vpack.c.b16 %v8770, %v8770
        %8772 = vrot.lane.b32.xlu0 %v8771, 64
        %v8773 = vpop.permute.xlu0 %8772
        %8775 = vst.msk [vmem:[%s8626 + $0x38] sm:$0xf] %vm8473, %v8773
        %v8776 = vpack.c.bf16 %v8461, %v8461
        %8777 = vst.msk [vmem:[%s8626 + $0x3c] sm:$0xf] %vm8464, %v8776
        %v8778 = vpack.c.bf16 %v8462, %v8462
        %v8780 = vunpack.c.l.b16 %v8778
        %v8781 = vpack.c.b16 %v8780, %v8780
        %8782 = vrot.lane.b32.xlu0 %v8781, 64
        %v8783 = vpop.permute.xlu0 %8782
        %8785 = vst.msk [vmem:[%s8626 + $0x3c] sm:$0xf] %vm8473, %v8783
        %8786 = vst [vmem:[#allocation4] sm:$0xff] 0.0
        %8787 = vst [vmem:[#allocation4 + $0x8] sm:$0xff] 0.0
      $region44: #{critic_forward.1} parent=39 // pred_fallthru
        _
      %v8788 = vld [vmem:[#allocation4] sm:$0xff]
      %v8789 = vld [vmem:[#allocation4 + $0x8] sm:$0xff]
      %s8790 = smul.u32 %s16, 16
      %s8791 = smul.addr %s8790, 4
      %s8792 = scalar_lea.vmem [#allocation3], %s8791
      %v8793 = vld [vmem:[%s8792] sm:$0xff]
      %v8794 = vld [vmem:[%s8792 + $0x8] sm:$0xff]
      %v8795 = vld [vmem:[%s8792 + $0x10] sm:$0xff]
      %v8796 = vld [vmem:[%s8792 + $0x18] sm:$0xff]
      %v8797 = vld [vmem:[%s8792 + $0x20] sm:$0xff]
      %v8798 = vld [vmem:[%s8792 + $0x28] sm:$0xff]
      %v8799 = vld [vmem:[%s8792 + $0x30] sm:$0xff]
      %v8800 = vld [vmem:[%s8792 + $0x38] sm:$0xff]
      %v8801 = vld [vmem:[%s209] sm:$0xff]
      %v8802 = vld [vmem:[%s209 + $0x8] sm:$0xff]
      %v8803 = vld [vmem:[%s209 + $0x10] sm:$0xff]
      %v8804 = vld [vmem:[%s209 + $0x18] sm:$0xff]
      %v8805 = vld [vmem:[%s209 + $0x20] sm:$0xff]
      %v8806 = vld [vmem:[%s209 + $0x28] sm:$0xff]
      %v8807 = vld [vmem:[%s209 + $0x30] sm:$0xff]
      %v8808 = vld [vmem:[%s209 + $0x38] sm:$0xff]
      %v8809 = vld [vmem:[%s209 + $0x40] sm:$0xff]
      %v8810 = vld [vmem:[%s209 + $0x48] sm:$0xff]
      %v8811 = vld [vmem:[%s209 + $0x50] sm:$0xff]
      %v8812 = vld [vmem:[%s209 + $0x58] sm:$0xff]
      %v8813 = vld [vmem:[%s209 + $0x60] sm:$0xff]
      %v8814 = vld [vmem:[%s209 + $0x68] sm:$0xff]
      %v8815 = vld [vmem:[%s209 + $0x70] sm:$0xff]
      %v8816 = vld [vmem:[%s209 + $0x78] sm:$0xff]
      %v8817 = vld [vmem:[%s209 + $0x80] sm:$0xff]
      %v8818 = vld [vmem:[%s209 + $0x88] sm:$0xff]
      %v8819 = vld [vmem:[%s209 + $0x90] sm:$0xff]
      %v8820 = vld [vmem:[%s209 + $0x98] sm:$0xff]
      %v8821 = vld [vmem:[%s209 + $0xa0] sm:$0xff]
      %v8822 = vld [vmem:[%s209 + $0xa8] sm:$0xff]
      %v8823 = vld [vmem:[%s209 + $0xb0] sm:$0xff]
      %v8824 = vld [vmem:[%s209 + $0xb8] sm:$0xff]
      %v8825 = vld [vmem:[%s209 + $0xc0] sm:$0xff]
      %v8826 = vld [vmem:[%s209 + $0xc8] sm:$0xff]
      %v8827 = vld [vmem:[%s209 + $0xd0] sm:$0xff]
      %v8828 = vld [vmem:[%s209 + $0xd8] sm:$0xff]
      %v8829 = vld [vmem:[%s209 + $0xe0] sm:$0xff]
      %v8830 = vld [vmem:[%s209 + $0xe8] sm:$0xff]
      %v8831 = vld [vmem:[%s209 + $0xf0] sm:$0xff]
      %v8832 = vld [vmem:[%s209 + $0xf8] sm:$0xff]
      %v8833 = vld [vmem:[%s209 + $0x100] sm:$0xff]
      %v8834 = vld [vmem:[%s209 + $0x108] sm:$0xff]
      %v8835 = vld [vmem:[%s209 + $0x110] sm:$0xff]
      %v8836 = vld [vmem:[%s209 + $0x118] sm:$0xff]
      %v8837 = vld [vmem:[%s209 + $0x120] sm:$0xff]
      %v8838 = vld [vmem:[%s209 + $0x128] sm:$0xff]
      %v8839 = vld [vmem:[%s209 + $0x130] sm:$0xff]
      %v8840 = vld [vmem:[%s209 + $0x138] sm:$0xff]
      %v8841 = vld [vmem:[%s209 + $0x140] sm:$0xff]
      %v8842 = vld [vmem:[%s209 + $0x148] sm:$0xff]
      %v8843 = vld [vmem:[%s209 + $0x150] sm:$0xff]
      %v8844 = vld [vmem:[%s209 + $0x158] sm:$0xff]
      %v8845 = vld [vmem:[%s209 + $0x160] sm:$0xff]
      %v8846 = vld [vmem:[%s209 + $0x168] sm:$0xff]
      %v8847 = vld [vmem:[%s209 + $0x170] sm:$0xff]
      %v8848 = vld [vmem:[%s209 + $0x178] sm:$0xff]
      %v8849 = vld [vmem:[%s209 + $0x180] sm:$0xff]
      %v8850 = vld [vmem:[%s209 + $0x188] sm:$0xff]
      %v8851 = vld [vmem:[%s209 + $0x190] sm:$0xff]
      %v8852 = vld [vmem:[%s209 + $0x198] sm:$0xff]
      %v8853 = vld [vmem:[%s209 + $0x1a0] sm:$0xff]
      %v8854 = vld [vmem:[%s209 + $0x1a8] sm:$0xff]
      %v8855 = vld [vmem:[%s209 + $0x1b0] sm:$0xff]
      %v8856 = vld [vmem:[%s209 + $0x1b8] sm:$0xff]
      %v8857 = vld [vmem:[%s209 + $0x1c0] sm:$0xff]
      %v8858 = vld [vmem:[%s209 + $0x1c8] sm:$0xff]
      %v8859 = vld [vmem:[%s209 + $0x1d0] sm:$0xff]
      %v8860 = vld [vmem:[%s209 + $0x1d8] sm:$0xff]
      %v8861 = vld [vmem:[%s209 + $0x1e0] sm:$0xff]
      %v8862 = vld [vmem:[%s209 + $0x1e8] sm:$0xff]
      %v8863 = vld [vmem:[%s209 + $0x1f0] sm:$0xff]
      %v8864 = vld [vmem:[%s209 + $0x1f8] sm:$0xff]
      %v8865 = vld [vmem:[%s209 + $0x200] sm:$0xff]
      %v8866 = vld [vmem:[%s209 + $0x208] sm:$0xff]
      %v8867 = vld [vmem:[%s209 + $0x210] sm:$0xff]
      %v8868 = vld [vmem:[%s209 + $0x218] sm:$0xff]
      %v8869 = vld [vmem:[%s209 + $0x220] sm:$0xff]
      %v8870 = vld [vmem:[%s209 + $0x228] sm:$0xff]
      %v8871 = vld [vmem:[%s209 + $0x230] sm:$0xff]
      %v8872 = vld [vmem:[%s209 + $0x238] sm:$0xff]
      %v8873 = vld [vmem:[%s209 + $0x240] sm:$0xff]
      %v8874 = vld [vmem:[%s209 + $0x248] sm:$0xff]
      %v8875 = vld [vmem:[%s209 + $0x250] sm:$0xff]
      %v8876 = vld [vmem:[%s209 + $0x258] sm:$0xff]
      %v8877 = vld [vmem:[%s209 + $0x260] sm:$0xff]
      %v8878 = vld [vmem:[%s209 + $0x268] sm:$0xff]
      %v8879 = vld [vmem:[%s209 + $0x270] sm:$0xff]
      %v8880 = vld [vmem:[%s209 + $0x278] sm:$0xff]
      %v8881 = vld [vmem:[%s209 + $0x280] sm:$0xff]
      %v8882 = vld [vmem:[%s209 + $0x288] sm:$0xff]
      %v8883 = vld [vmem:[%s209 + $0x290] sm:$0xff]
      %v8884 = vld [vmem:[%s209 + $0x298] sm:$0xff]
      %v8885 = vld [vmem:[%s209 + $0x2a0] sm:$0xff]
      %v8886 = vld [vmem:[%s209 + $0x2a8] sm:$0xff]
      %v8887 = vld [vmem:[%s209 + $0x2b0] sm:$0xff]
      %v8888 = vld [vmem:[%s209 + $0x2b8] sm:$0xff]
      %v8889 = vld [vmem:[%s209 + $0x2c0] sm:$0xff]
      %v8890 = vld [vmem:[%s209 + $0x2c8] sm:$0xff]
      %v8891 = vld [vmem:[%s209 + $0x2d0] sm:$0xff]
      %v8892 = vld [vmem:[%s209 + $0x2d8] sm:$0xff]
      %v8893 = vld [vmem:[%s209 + $0x2e0] sm:$0xff]
      %v8894 = vld [vmem:[%s209 + $0x2e8] sm:$0xff]
      %v8895 = vld [vmem:[%s209 + $0x2f0] sm:$0xff]
      %v8896 = vld [vmem:[%s209 + $0x2f8] sm:$0xff]
      %v8897 = vld [vmem:[%s209 + $0x300] sm:$0xff]
      %v8898 = vld [vmem:[%s209 + $0x308] sm:$0xff]
      %v8899 = vld [vmem:[%s209 + $0x310] sm:$0xff]
      %v8900 = vld [vmem:[%s209 + $0x318] sm:$0xff]
      %v8901 = vld [vmem:[%s209 + $0x320] sm:$0xff]
      %v8902 = vld [vmem:[%s209 + $0x328] sm:$0xff]
      %v8903 = vld [vmem:[%s209 + $0x330] sm:$0xff]
      %v8904 = vld [vmem:[%s209 + $0x338] sm:$0xff]
      %v8905 = vld [vmem:[%s209 + $0x340] sm:$0xff]
      %v8906 = vld [vmem:[%s209 + $0x348] sm:$0xff]
      %v8907 = vld [vmem:[%s209 + $0x350] sm:$0xff]
      %v8908 = vld [vmem:[%s209 + $0x358] sm:$0xff]
      %v8909 = vld [vmem:[%s209 + $0x360] sm:$0xff]
      %v8910 = vld [vmem:[%s209 + $0x368] sm:$0xff]
      %v8911 = vld [vmem:[%s209 + $0x370] sm:$0xff]
      %v8912 = vld [vmem:[%s209 + $0x378] sm:$0xff]
      %v8913 = vld [vmem:[%s209 + $0x380] sm:$0xff]
      %v8914 = vld [vmem:[%s209 + $0x388] sm:$0xff]
      %v8915 = vld [vmem:[%s209 + $0x390] sm:$0xff]
      %v8916 = vld [vmem:[%s209 + $0x398] sm:$0xff]
      %v8917 = vld [vmem:[%s209 + $0x3a0] sm:$0xff]
      %v8918 = vld [vmem:[%s209 + $0x3a8] sm:$0xff]
      %v8919 = vld [vmem:[%s209 + $0x3b0] sm:$0xff]
      %v8920 = vld [vmem:[%s209 + $0x3b8] sm:$0xff]
      %v8921 = vld [vmem:[%s209 + $0x3c0] sm:$0xff]
      %v8922 = vld [vmem:[%s209 + $0x3c8] sm:$0xff]
      %v8923 = vld [vmem:[%s209 + $0x3d0] sm:$0xff]
      %v8924 = vld [vmem:[%s209 + $0x3d8] sm:$0xff]
      %v8925 = vld [vmem:[%s209 + $0x3e0] sm:$0xff]
      %v8926 = vld [vmem:[%s209 + $0x3e8] sm:$0xff]
      %v8927 = vld [vmem:[%s209 + $0x3f0] sm:$0xff]
      %v8928 = vld [vmem:[%s209 + $0x3f8] sm:$0xff]
      %v8929 = vld [vmem:[%s209 + $0x400] sm:$0xff]
      %v8930 = vld [vmem:[%s209 + $0x408] sm:$0xff]
      %v8931 = vld [vmem:[%s209 + $0x410] sm:$0xff]
      %v8932 = vld [vmem:[%s209 + $0x418] sm:$0xff]
      %v8933 = vld [vmem:[%s209 + $0x420] sm:$0xff]
      %v8934 = vld [vmem:[%s209 + $0x428] sm:$0xff]
      %v8935 = vld [vmem:[%s209 + $0x430] sm:$0xff]
      %v8936 = vld [vmem:[%s209 + $0x438] sm:$0xff]
      %v8937 = vld [vmem:[%s209 + $0x440] sm:$0xff]
      %v8938 = vld [vmem:[%s209 + $0x448] sm:$0xff]
      %v8939 = vld [vmem:[%s209 + $0x450] sm:$0xff]
      %v8940 = vld [vmem:[%s209 + $0x458] sm:$0xff]
      %v8941 = vld [vmem:[%s209 + $0x460] sm:$0xff]
      %v8942 = vld [vmem:[%s209 + $0x468] sm:$0xff]
      %v8943 = vld [vmem:[%s209 + $0x470] sm:$0xff]
      %v8944 = vld [vmem:[%s209 + $0x478] sm:$0xff]
      %v8945 = vld [vmem:[%s209 + $0x480] sm:$0xff]
      %v8946 = vld [vmem:[%s209 + $0x488] sm:$0xff]
      %v8947 = vld [vmem:[%s209 + $0x490] sm:$0xff]
      %v8948 = vld [vmem:[%s209 + $0x498] sm:$0xff]
      %v8949 = vld [vmem:[%s209 + $0x4a0] sm:$0xff]
      %v8950 = vld [vmem:[%s209 + $0x4a8] sm:$0xff]
      %v8951 = vld [vmem:[%s209 + $0x4b0] sm:$0xff]
      %v8952 = vld [vmem:[%s209 + $0x4b8] sm:$0xff]
      %v8953 = vld [vmem:[%s209 + $0x4c0] sm:$0xff]
      %v8954 = vld [vmem:[%s209 + $0x4c8] sm:$0xff]
      %v8955 = vld [vmem:[%s209 + $0x4d0] sm:$0xff]
      %v8956 = vld [vmem:[%s209 + $0x4d8] sm:$0xff]
      %v8957 = vld [vmem:[%s209 + $0x4e0] sm:$0xff]
      %v8958 = vld [vmem:[%s209 + $0x4e8] sm:$0xff]
      %v8959 = vld [vmem:[%s209 + $0x4f0] sm:$0xff]
      %v8960 = vld [vmem:[%s209 + $0x4f8] sm:$0xff]
      %v8961 = vld [vmem:[%s209 + $0x500] sm:$0xff]
      %v8962 = vld [vmem:[%s209 + $0x508] sm:$0xff]
      %v8963 = vld [vmem:[%s209 + $0x510] sm:$0xff]
      %v8964 = vld [vmem:[%s209 + $0x518] sm:$0xff]
      %v8965 = vld [vmem:[%s209 + $0x520] sm:$0xff]
      %v8966 = vld [vmem:[%s209 + $0x528] sm:$0xff]
      %v8967 = vld [vmem:[%s209 + $0x530] sm:$0xff]
      %v8968 = vld [vmem:[%s209 + $0x538] sm:$0xff]
      %v8969 = vld [vmem:[%s209 + $0x540] sm:$0xff]
      %v8970 = vld [vmem:[%s209 + $0x548] sm:$0xff]
      %v8971 = vld [vmem:[%s209 + $0x550] sm:$0xff]
      %v8972 = vld [vmem:[%s209 + $0x558] sm:$0xff]
      %v8973 = vld [vmem:[%s209 + $0x560] sm:$0xff]
      %v8974 = vld [vmem:[%s209 + $0x568] sm:$0xff]
      %v8975 = vld [vmem:[%s209 + $0x570] sm:$0xff]
      %v8976 = vld [vmem:[%s209 + $0x578] sm:$0xff]
      %v8977 = vld [vmem:[%s209 + $0x580] sm:$0xff]
      %v8978 = vld [vmem:[%s209 + $0x588] sm:$0xff]
      %v8979 = vld [vmem:[%s209 + $0x590] sm:$0xff]
      %v8980 = vld [vmem:[%s209 + $0x598] sm:$0xff]
      %v8981 = vld [vmem:[%s209 + $0x5a0] sm:$0xff]
      %v8982 = vld [vmem:[%s209 + $0x5a8] sm:$0xff]
      %v8983 = vld [vmem:[%s209 + $0x5b0] sm:$0xff]
      %v8984 = vld [vmem:[%s209 + $0x5b8] sm:$0xff]
      %v8985 = vld [vmem:[%s209 + $0x5c0] sm:$0xff]
      %v8986 = vld [vmem:[%s209 + $0x5c8] sm:$0xff]
      %v8987 = vld [vmem:[%s209 + $0x5d0] sm:$0xff]
      %v8988 = vld [vmem:[%s209 + $0x5d8] sm:$0xff]
      %v8989 = vld [vmem:[%s209 + $0x5e0] sm:$0xff]
      %v8990 = vld [vmem:[%s209 + $0x5e8] sm:$0xff]
      %v8991 = vld [vmem:[%s209 + $0x5f0] sm:$0xff]
      %v8992 = vld [vmem:[%s209 + $0x5f8] sm:$0xff]
      %v8993 = vld [vmem:[%s209 + $0x600] sm:$0xff]
      %v8994 = vld [vmem:[%s209 + $0x608] sm:$0xff]
      %v8995 = vld [vmem:[%s209 + $0x610] sm:$0xff]
      %v8996 = vld [vmem:[%s209 + $0x618] sm:$0xff]
      %v8997 = vld [vmem:[%s209 + $0x620] sm:$0xff]
      %v8998 = vld [vmem:[%s209 + $0x628] sm:$0xff]
      %v8999 = vld [vmem:[%s209 + $0x630] sm:$0xff]
      %v9000 = vld [vmem:[%s209 + $0x638] sm:$0xff]
      %v9001 = vld [vmem:[%s209 + $0x640] sm:$0xff]
      %v9002 = vld [vmem:[%s209 + $0x648] sm:$0xff]
      %v9003 = vld [vmem:[%s209 + $0x650] sm:$0xff]
      %v9004 = vld [vmem:[%s209 + $0x658] sm:$0xff]
      %v9005 = vld [vmem:[%s209 + $0x660] sm:$0xff]
      %v9006 = vld [vmem:[%s209 + $0x668] sm:$0xff]
      %v9007 = vld [vmem:[%s209 + $0x670] sm:$0xff]
      %v9008 = vld [vmem:[%s209 + $0x678] sm:$0xff]
      %v9009 = vld [vmem:[%s209 + $0x680] sm:$0xff]
      %v9010 = vld [vmem:[%s209 + $0x688] sm:$0xff]
      %v9011 = vld [vmem:[%s209 + $0x690] sm:$0xff]
      %v9012 = vld [vmem:[%s209 + $0x698] sm:$0xff]
      %v9013 = vld [vmem:[%s209 + $0x6a0] sm:$0xff]
      %v9014 = vld [vmem:[%s209 + $0x6a8] sm:$0xff]
      %v9015 = vld [vmem:[%s209 + $0x6b0] sm:$0xff]
      %v9016 = vld [vmem:[%s209 + $0x6b8] sm:$0xff]
      %v9017 = vld [vmem:[%s209 + $0x6c0] sm:$0xff]
      %v9018 = vld [vmem:[%s209 + $0x6c8] sm:$0xff]
      %v9019 = vld [vmem:[%s209 + $0x6d0] sm:$0xff]
      %v9020 = vld [vmem:[%s209 + $0x6d8] sm:$0xff]
      %v9021 = vld [vmem:[%s209 + $0x6e0] sm:$0xff]
      %v9022 = vld [vmem:[%s209 + $0x6e8] sm:$0xff]
      %v9023 = vld [vmem:[%s209 + $0x6f0] sm:$0xff]
      %v9024 = vld [vmem:[%s209 + $0x6f8] sm:$0xff]
      %v9025 = vld [vmem:[%s209 + $0x700] sm:$0xff]
      %v9026 = vld [vmem:[%s209 + $0x708] sm:$0xff]
      %v9027 = vld [vmem:[%s209 + $0x710] sm:$0xff]
      %v9028 = vld [vmem:[%s209 + $0x718] sm:$0xff]
      %v9029 = vld [vmem:[%s209 + $0x720] sm:$0xff]
      %v9030 = vld [vmem:[%s209 + $0x728] sm:$0xff]
      %v9031 = vld [vmem:[%s209 + $0x730] sm:$0xff]
      %v9032 = vld [vmem:[%s209 + $0x738] sm:$0xff]
      %v9033 = vld [vmem:[%s209 + $0x740] sm:$0xff]
      %v9034 = vld [vmem:[%s209 + $0x748] sm:$0xff]
      %v9035 = vld [vmem:[%s209 + $0x750] sm:$0xff]
      %v9036 = vld [vmem:[%s209 + $0x758] sm:$0xff]
      %v9037 = vld [vmem:[%s209 + $0x760] sm:$0xff]
      %v9038 = vld [vmem:[%s209 + $0x768] sm:$0xff]
      %v9039 = vld [vmem:[%s209 + $0x770] sm:$0xff]
      %v9040 = vld [vmem:[%s209 + $0x778] sm:$0xff]
      %v9041 = vld [vmem:[%s209 + $0x780] sm:$0xff]
      %v9042 = vld [vmem:[%s209 + $0x788] sm:$0xff]
      %v9043 = vld [vmem:[%s209 + $0x790] sm:$0xff]
      %v9044 = vld [vmem:[%s209 + $0x798] sm:$0xff]
      %v9045 = vld [vmem:[%s209 + $0x7a0] sm:$0xff]
      %v9046 = vld [vmem:[%s209 + $0x7a8] sm:$0xff]
      %v9047 = vld [vmem:[%s209 + $0x7b0] sm:$0xff]
      %v9048 = vld [vmem:[%s209 + $0x7b8] sm:$0xff]
      %v9049 = vld [vmem:[%s209 + $0x7c0] sm:$0xff]
      %v9050 = vld [vmem:[%s209 + $0x7c8] sm:$0xff]
      %v9051 = vld [vmem:[%s209 + $0x7d0] sm:$0xff]
      %v9052 = vld [vmem:[%s209 + $0x7d8] sm:$0xff]
      %v9053 = vld [vmem:[%s209 + $0x7e0] sm:$0xff]
      %v9054 = vld [vmem:[%s209 + $0x7e8] sm:$0xff]
      %v9055 = vld [vmem:[%s209 + $0x7f0] sm:$0xff]
      %v9056 = vld [vmem:[%s209 + $0x7f8] sm:$0xff]
      %v9065 = vunpack.c.l.b16 %v8793
      %v9066 = vunpack.c.h.b16 %v8793
      %v9067 = vunpack.c.l.b16 %v8794
      %v9068 = vunpack.c.h.b16 %v8794
      %v9069 = vunpack.c.l.b16 %v8795
      %v9070 = vunpack.c.h.b16 %v8795
      %v9071 = vunpack.c.l.b16 %v8796
      %v9072 = vunpack.c.h.b16 %v8796
      %v9073 = vunpack.c.l.b16 %v8797
      %v9074 = vunpack.c.h.b16 %v8797
      %v9075 = vunpack.c.l.b16 %v8798
      %v9076 = vunpack.c.h.b16 %v8798
      %v9077 = vunpack.c.l.b16 %v8799
      %v9078 = vunpack.c.h.b16 %v8799
      %v9079 = vunpack.c.l.b16 %v8800
      %v9080 = vunpack.c.h.b16 %v8800
      %v9081 = vpack.c.b16 %v9065, %v9065
      %v9082 = vpack.c.b16 %v9066, %v9066
      %v9083 = vpack.c.b16 %v9067, %v9067
      %v9084 = vpack.c.b16 %v9068, %v9068
      %v9085 = vpack.c.b16 %v9069, %v9069
      %v9086 = vpack.c.b16 %v9070, %v9070
      %v9087 = vpack.c.b16 %v9071, %v9071
      %v9088 = vpack.c.b16 %v9072, %v9072
      %v9089 = vpack.c.b16 %v9073, %v9073
      %v9090 = vpack.c.b16 %v9074, %v9074
      %v9091 = vpack.c.b16 %v9075, %v9075
      %v9092 = vpack.c.b16 %v9076, %v9076
      %v9093 = vpack.c.b16 %v9077, %v9077
      %v9094 = vpack.c.b16 %v9078, %v9078
      %v9095 = vpack.c.b16 %v9079, %v9079
      %v9096 = vpack.c.b16 %v9080, %v9080
      %v9369 = vunpack.c.l.b16 %v8801
      %v9370 = vunpack.c.h.b16 %v8801
      %v9371 = vunpack.c.l.b16 %v8802
      %v9372 = vunpack.c.h.b16 %v8802
      %v9373 = vunpack.c.l.b16 %v8803
      %v9374 = vunpack.c.h.b16 %v8803
      %v9375 = vunpack.c.l.b16 %v8804
      %v9376 = vunpack.c.h.b16 %v8804
      %v9377 = vunpack.c.l.b16 %v8805
      %v9378 = vunpack.c.h.b16 %v8805
      %v9379 = vunpack.c.l.b16 %v8806
      %v9380 = vunpack.c.h.b16 %v8806
      %v9381 = vunpack.c.l.b16 %v8807
      %v9382 = vunpack.c.h.b16 %v8807
      %v9383 = vunpack.c.l.b16 %v8808
      %v9384 = vunpack.c.h.b16 %v8808
      %v9385 = vunpack.c.l.b16 %v8809
      %v9386 = vunpack.c.h.b16 %v8809
      %v9387 = vunpack.c.l.b16 %v8810
      %v9388 = vunpack.c.h.b16 %v8810
      %v9389 = vunpack.c.l.b16 %v8811
      %v9390 = vunpack.c.h.b16 %v8811
      %v9391 = vunpack.c.l.b16 %v8812
      %v9392 = vunpack.c.h.b16 %v8812
      %v9393 = vunpack.c.l.b16 %v8813
      %v9394 = vunpack.c.h.b16 %v8813
      %v9395 = vunpack.c.l.b16 %v8814
      %v9396 = vunpack.c.h.b16 %v8814
      %v9397 = vunpack.c.l.b16 %v8815
      %v9398 = vunpack.c.h.b16 %v8815
      %v9399 = vunpack.c.l.b16 %v8816
      %v9400 = vunpack.c.h.b16 %v8816
      %v9401 = vunpack.c.l.b16 %v8817
      %v9402 = vunpack.c.h.b16 %v8817
      %v9403 = vunpack.c.l.b16 %v8818
      %v9404 = vunpack.c.h.b16 %v8818
      %v9405 = vunpack.c.l.b16 %v8819
      %v9406 = vunpack.c.h.b16 %v8819
      %v9407 = vunpack.c.l.b16 %v8820
      %v9408 = vunpack.c.h.b16 %v8820
      %v9409 = vunpack.c.l.b16 %v8821
      %v9410 = vunpack.c.h.b16 %v8821
      %v9411 = vunpack.c.l.b16 %v8822
      %v9412 = vunpack.c.h.b16 %v8822
      %v9413 = vunpack.c.l.b16 %v8823
      %v9414 = vunpack.c.h.b16 %v8823
      %v9415 = vunpack.c.l.b16 %v8824
      %v9416 = vunpack.c.h.b16 %v8824
      %v9417 = vunpack.c.l.b16 %v8825
      %v9418 = vunpack.c.h.b16 %v8825
      %v9419 = vunpack.c.l.b16 %v8826
      %v9420 = vunpack.c.h.b16 %v8826
      %v9421 = vunpack.c.l.b16 %v8827
      %v9422 = vunpack.c.h.b16 %v8827
      %v9423 = vunpack.c.l.b16 %v8828
      %v9424 = vunpack.c.h.b16 %v8828
      %v9425 = vunpack.c.l.b16 %v8829
      %v9426 = vunpack.c.h.b16 %v8829
      %v9427 = vunpack.c.l.b16 %v8830
      %v9428 = vunpack.c.h.b16 %v8830
      %v9429 = vunpack.c.l.b16 %v8831
      %v9430 = vunpack.c.h.b16 %v8831
      %v9431 = vunpack.c.l.b16 %v8832
      %v9432 = vunpack.c.h.b16 %v8832
      %v9433 = vunpack.c.l.b16 %v8833
      %v9434 = vunpack.c.h.b16 %v8833
      %v9435 = vunpack.c.l.b16 %v8834
      %v9436 = vunpack.c.h.b16 %v8834
      %v9437 = vunpack.c.l.b16 %v8835
      %v9438 = vunpack.c.h.b16 %v8835
      %v9439 = vunpack.c.l.b16 %v8836
      %v9440 = vunpack.c.h.b16 %v8836
      %v9441 = vunpack.c.l.b16 %v8837
      %v9442 = vunpack.c.h.b16 %v8837
      %v9443 = vunpack.c.l.b16 %v8838
      %v9444 = vunpack.c.h.b16 %v8838
      %v9445 = vunpack.c.l.b16 %v8839
      %v9446 = vunpack.c.h.b16 %v8839
      %v9447 = vunpack.c.l.b16 %v8840
      %v9448 = vunpack.c.h.b16 %v8840
      %v9449 = vunpack.c.l.b16 %v8841
      %v9450 = vunpack.c.h.b16 %v8841
      %v9451 = vunpack.c.l.b16 %v8842
      %v9452 = vunpack.c.h.b16 %v8842
      %v9453 = vunpack.c.l.b16 %v8843
      %v9454 = vunpack.c.h.b16 %v8843
      %v9455 = vunpack.c.l.b16 %v8844
      %v9456 = vunpack.c.h.b16 %v8844
      %v9457 = vunpack.c.l.b16 %v8845
      %v9458 = vunpack.c.h.b16 %v8845
      %v9459 = vunpack.c.l.b16 %v8846
      %v9460 = vunpack.c.h.b16 %v8846
      %v9461 = vunpack.c.l.b16 %v8847
      %v9462 = vunpack.c.h.b16 %v8847
      %v9463 = vunpack.c.l.b16 %v8848
      %v9464 = vunpack.c.h.b16 %v8848
      %v9465 = vunpack.c.l.b16 %v8849
      %v9466 = vunpack.c.h.b16 %v8849
      %v9467 = vunpack.c.l.b16 %v8850
      %v9468 = vunpack.c.h.b16 %v8850
      %v9469 = vunpack.c.l.b16 %v8851
      %v9470 = vunpack.c.h.b16 %v8851
      %v9471 = vunpack.c.l.b16 %v8852
      %v9472 = vunpack.c.h.b16 %v8852
      %v9473 = vunpack.c.l.b16 %v8853
      %v9474 = vunpack.c.h.b16 %v8853
      %v9475 = vunpack.c.l.b16 %v8854
      %v9476 = vunpack.c.h.b16 %v8854
      %v9477 = vunpack.c.l.b16 %v8855
      %v9478 = vunpack.c.h.b16 %v8855
      %v9479 = vunpack.c.l.b16 %v8856
      %v9480 = vunpack.c.h.b16 %v8856
      %v9481 = vunpack.c.l.b16 %v8857
      %v9482 = vunpack.c.h.b16 %v8857
      %v9483 = vunpack.c.l.b16 %v8858
      %v9484 = vunpack.c.h.b16 %v8858
      %v9485 = vunpack.c.l.b16 %v8859
      %v9486 = vunpack.c.h.b16 %v8859
      %v9487 = vunpack.c.l.b16 %v8860
      %v9488 = vunpack.c.h.b16 %v8860
      %v9489 = vunpack.c.l.b16 %v8861
      %v9490 = vunpack.c.h.b16 %v8861
      %v9491 = vunpack.c.l.b16 %v8862
      %v9492 = vunpack.c.h.b16 %v8862
      %v9493 = vunpack.c.l.b16 %v8863
      %v9494 = vunpack.c.h.b16 %v8863
      %v9495 = vunpack.c.l.b16 %v8864
      %v9496 = vunpack.c.h.b16 %v8864
      %v9497 = vunpack.c.l.b16 %v8865
      %v9498 = vunpack.c.h.b16 %v8865
      %v9499 = vunpack.c.l.b16 %v8866
      %v9500 = vunpack.c.h.b16 %v8866
      %v9501 = vunpack.c.l.b16 %v8867
      %v9502 = vunpack.c.h.b16 %v8867
      %v9503 = vunpack.c.l.b16 %v8868
      %v9504 = vunpack.c.h.b16 %v8868
      %v9505 = vunpack.c.l.b16 %v8869
      %v9506 = vunpack.c.h.b16 %v8869
      %v9507 = vunpack.c.l.b16 %v8870
      %v9508 = vunpack.c.h.b16 %v8870
      %v9509 = vunpack.c.l.b16 %v8871
      %v9510 = vunpack.c.h.b16 %v8871
      %v9511 = vunpack.c.l.b16 %v8872
      %v9512 = vunpack.c.h.b16 %v8872
      %v9513 = vunpack.c.l.b16 %v8873
      %v9514 = vunpack.c.h.b16 %v8873
      %v9515 = vunpack.c.l.b16 %v8874
      %v9516 = vunpack.c.h.b16 %v8874
      %v9517 = vunpack.c.l.b16 %v8875
      %v9518 = vunpack.c.h.b16 %v8875
      %v9519 = vunpack.c.l.b16 %v8876
      %v9520 = vunpack.c.h.b16 %v8876
      %v9521 = vunpack.c.l.b16 %v8877
      %v9522 = vunpack.c.h.b16 %v8877
      %v9523 = vunpack.c.l.b16 %v8878
      %v9524 = vunpack.c.h.b16 %v8878
      %v9525 = vunpack.c.l.b16 %v8879
      %v9526 = vunpack.c.h.b16 %v8879
      %v9527 = vunpack.c.l.b16 %v8880
      %v9528 = vunpack.c.h.b16 %v8880
      %v9529 = vunpack.c.l.b16 %v8881
      %v9530 = vunpack.c.h.b16 %v8881
      %v9531 = vunpack.c.l.b16 %v8882
      %v9532 = vunpack.c.h.b16 %v8882
      %v9533 = vunpack.c.l.b16 %v8883
      %v9534 = vunpack.c.h.b16 %v8883
      %v9535 = vunpack.c.l.b16 %v8884
      %v9536 = vunpack.c.h.b16 %v8884
      %v9537 = vunpack.c.l.b16 %v8885
      %v9538 = vunpack.c.h.b16 %v8885
      %v9539 = vunpack.c.l.b16 %v8886
      %v9540 = vunpack.c.h.b16 %v8886
      %v9541 = vunpack.c.l.b16 %v8887
      %v9542 = vunpack.c.h.b16 %v8887
      %v9543 = vunpack.c.l.b16 %v8888
      %v9544 = vunpack.c.h.b16 %v8888
      %v9545 = vunpack.c.l.b16 %v8889
      %v9546 = vunpack.c.h.b16 %v8889
      %v9547 = vunpack.c.l.b16 %v8890
      %v9548 = vunpack.c.h.b16 %v8890
      %v9549 = vunpack.c.l.b16 %v8891
      %v9550 = vunpack.c.h.b16 %v8891
      %v9551 = vunpack.c.l.b16 %v8892
      %v9552 = vunpack.c.h.b16 %v8892
      %v9553 = vunpack.c.l.b16 %v8893
      %v9554 = vunpack.c.h.b16 %v8893
      %v9555 = vunpack.c.l.b16 %v8894
      %v9556 = vunpack.c.h.b16 %v8894
      %v9557 = vunpack.c.l.b16 %v8895
      %v9558 = vunpack.c.h.b16 %v8895
      %v9559 = vunpack.c.l.b16 %v8896
      %v9560 = vunpack.c.h.b16 %v8896
      %v9561 = vunpack.c.l.b16 %v8897
      %v9562 = vunpack.c.h.b16 %v8897
      %v9563 = vunpack.c.l.b16 %v8898
      %v9564 = vunpack.c.h.b16 %v8898
      %v9565 = vunpack.c.l.b16 %v8899
      %v9566 = vunpack.c.h.b16 %v8899
      %v9567 = vunpack.c.l.b16 %v8900
      %v9568 = vunpack.c.h.b16 %v8900
      %v9569 = vunpack.c.l.b16 %v8901
      %v9570 = vunpack.c.h.b16 %v8901
      %v9571 = vunpack.c.l.b16 %v8902
      %v9572 = vunpack.c.h.b16 %v8902
      %v9573 = vunpack.c.l.b16 %v8903
      %v9574 = vunpack.c.h.b16 %v8903
      %v9575 = vunpack.c.l.b16 %v8904
      %v9576 = vunpack.c.h.b16 %v8904
      %v9577 = vunpack.c.l.b16 %v8905
      %v9578 = vunpack.c.h.b16 %v8905
      %v9579 = vunpack.c.l.b16 %v8906
      %v9580 = vunpack.c.h.b16 %v8906
      %v9581 = vunpack.c.l.b16 %v8907
      %v9582 = vunpack.c.h.b16 %v8907
      %v9583 = vunpack.c.l.b16 %v8908
      %v9584 = vunpack.c.h.b16 %v8908
      %v9585 = vunpack.c.l.b16 %v8909
      %v9586 = vunpack.c.h.b16 %v8909
      %v9587 = vunpack.c.l.b16 %v8910
      %v9588 = vunpack.c.h.b16 %v8910
      %v9589 = vunpack.c.l.b16 %v8911
      %v9590 = vunpack.c.h.b16 %v8911
      %v9591 = vunpack.c.l.b16 %v8912
      %v9592 = vunpack.c.h.b16 %v8912
      %v9593 = vunpack.c.l.b16 %v8913
      %v9594 = vunpack.c.h.b16 %v8913
      %v9595 = vunpack.c.l.b16 %v8914
      %v9596 = vunpack.c.h.b16 %v8914
      %v9597 = vunpack.c.l.b16 %v8915
      %v9598 = vunpack.c.h.b16 %v8915
      %v9599 = vunpack.c.l.b16 %v8916
      %v9600 = vunpack.c.h.b16 %v8916
      %v9601 = vunpack.c.l.b16 %v8917
      %v9602 = vunpack.c.h.b16 %v8917
      %v9603 = vunpack.c.l.b16 %v8918
      %v9604 = vunpack.c.h.b16 %v8918
      %v9605 = vunpack.c.l.b16 %v8919
      %v9606 = vunpack.c.h.b16 %v8919
      %v9607 = vunpack.c.l.b16 %v8920
      %v9608 = vunpack.c.h.b16 %v8920
      %v9609 = vunpack.c.l.b16 %v8921
      %v9610 = vunpack.c.h.b16 %v8921
      %v9611 = vunpack.c.l.b16 %v8922
      %v9612 = vunpack.c.h.b16 %v8922
      %v9613 = vunpack.c.l.b16 %v8923
      %v9614 = vunpack.c.h.b16 %v8923
      %v9615 = vunpack.c.l.b16 %v8924
      %v9616 = vunpack.c.h.b16 %v8924
      %v9617 = vunpack.c.l.b16 %v8925
      %v9618 = vunpack.c.h.b16 %v8925
      %v9619 = vunpack.c.l.b16 %v8926
      %v9620 = vunpack.c.h.b16 %v8926
      %v9621 = vunpack.c.l.b16 %v8927
      %v9622 = vunpack.c.h.b16 %v8927
      %v9623 = vunpack.c.l.b16 %v8928
      %v9624 = vunpack.c.h.b16 %v8928
      %v9625 = vunpack.c.l.b16 %v8929
      %v9626 = vunpack.c.h.b16 %v8929
      %v9627 = vunpack.c.l.b16 %v8930
      %v9628 = vunpack.c.h.b16 %v8930
      %v9629 = vunpack.c.l.b16 %v8931
      %v9630 = vunpack.c.h.b16 %v8931
      %v9631 = vunpack.c.l.b16 %v8932
      %v9632 = vunpack.c.h.b16 %v8932
      %v9633 = vunpack.c.l.b16 %v8933
      %v9634 = vunpack.c.h.b16 %v8933
      %v9635 = vunpack.c.l.b16 %v8934
      %v9636 = vunpack.c.h.b16 %v8934
      %v9637 = vunpack.c.l.b16 %v8935
      %v9638 = vunpack.c.h.b16 %v8935
      %v9639 = vunpack.c.l.b16 %v8936
      %v9640 = vunpack.c.h.b16 %v8936
      %v9641 = vunpack.c.l.b16 %v8937
      %v9642 = vunpack.c.h.b16 %v8937
      %v9643 = vunpack.c.l.b16 %v8938
      %v9644 = vunpack.c.h.b16 %v8938
      %v9645 = vunpack.c.l.b16 %v8939
      %v9646 = vunpack.c.h.b16 %v8939
      %v9647 = vunpack.c.l.b16 %v8940
      %v9648 = vunpack.c.h.b16 %v8940
      %v9649 = vunpack.c.l.b16 %v8941
      %v9650 = vunpack.c.h.b16 %v8941
      %v9651 = vunpack.c.l.b16 %v8942
      %v9652 = vunpack.c.h.b16 %v8942
      %v9653 = vunpack.c.l.b16 %v8943
      %v9654 = vunpack.c.h.b16 %v8943
      %v9655 = vunpack.c.l.b16 %v8944
      %v9656 = vunpack.c.h.b16 %v8944
      %v9657 = vunpack.c.l.b16 %v8945
      %v9658 = vunpack.c.h.b16 %v8945
      %v9659 = vunpack.c.l.b16 %v8946
      %v9660 = vunpack.c.h.b16 %v8946
      %v9661 = vunpack.c.l.b16 %v8947
      %v9662 = vunpack.c.h.b16 %v8947
      %v9663 = vunpack.c.l.b16 %v8948
      %v9664 = vunpack.c.h.b16 %v8948
      %v9665 = vunpack.c.l.b16 %v8949
      %v9666 = vunpack.c.h.b16 %v8949
      %v9667 = vunpack.c.l.b16 %v8950
      %v9668 = vunpack.c.h.b16 %v8950
      %v9669 = vunpack.c.l.b16 %v8951
      %v9670 = vunpack.c.h.b16 %v8951
      %v9671 = vunpack.c.l.b16 %v8952
      %v9672 = vunpack.c.h.b16 %v8952
      %v9673 = vunpack.c.l.b16 %v8953
      %v9674 = vunpack.c.h.b16 %v8953
      %v9675 = vunpack.c.l.b16 %v8954
      %v9676 = vunpack.c.h.b16 %v8954
      %v9677 = vunpack.c.l.b16 %v8955
      %v9678 = vunpack.c.h.b16 %v8955
      %v9679 = vunpack.c.l.b16 %v8956
      %v9680 = vunpack.c.h.b16 %v8956
      %v9681 = vunpack.c.l.b16 %v8957
      %v9682 = vunpack.c.h.b16 %v8957
      %v9683 = vunpack.c.l.b16 %v8958
      %v9684 = vunpack.c.h.b16 %v8958
      %v9685 = vunpack.c.l.b16 %v8959
      %v9686 = vunpack.c.h.b16 %v8959
      %v9687 = vunpack.c.l.b16 %v8960
      %v9688 = vunpack.c.h.b16 %v8960
      %v9689 = vunpack.c.l.b16 %v8961
      %v9690 = vunpack.c.h.b16 %v8961
      %v9691 = vunpack.c.l.b16 %v8962
      %v9692 = vunpack.c.h.b16 %v8962
      %v9693 = vunpack.c.l.b16 %v8963
      %v9694 = vunpack.c.h.b16 %v8963
      %v9695 = vunpack.c.l.b16 %v8964
      %v9696 = vunpack.c.h.b16 %v8964
      %v9697 = vunpack.c.l.b16 %v8965
      %v9698 = vunpack.c.h.b16 %v8965
      %v9699 = vunpack.c.l.b16 %v8966
      %v9700 = vunpack.c.h.b16 %v8966
      %v9701 = vunpack.c.l.b16 %v8967
      %v9702 = vunpack.c.h.b16 %v8967
      %v9703 = vunpack.c.l.b16 %v8968
      %v9704 = vunpack.c.h.b16 %v8968
      %v9705 = vunpack.c.l.b16 %v8969
      %v9706 = vunpack.c.h.b16 %v8969
      %v9707 = vunpack.c.l.b16 %v8970
      %v9708 = vunpack.c.h.b16 %v8970
      %v9709 = vunpack.c.l.b16 %v8971
      %v9710 = vunpack.c.h.b16 %v8971
      %v9711 = vunpack.c.l.b16 %v8972
      %v9712 = vunpack.c.h.b16 %v8972
      %v9713 = vunpack.c.l.b16 %v8973
      %v9714 = vunpack.c.h.b16 %v8973
      %v9715 = vunpack.c.l.b16 %v8974
      %v9716 = vunpack.c.h.b16 %v8974
      %v9717 = vunpack.c.l.b16 %v8975
      %v9718 = vunpack.c.h.b16 %v8975
      %v9719 = vunpack.c.l.b16 %v8976
      %v9720 = vunpack.c.h.b16 %v8976
      %v9721 = vunpack.c.l.b16 %v8977
      %v9722 = vunpack.c.h.b16 %v8977
      %v9723 = vunpack.c.l.b16 %v8978
      %v9724 = vunpack.c.h.b16 %v8978
      %v9725 = vunpack.c.l.b16 %v8979
      %v9726 = vunpack.c.h.b16 %v8979
      %v9727 = vunpack.c.l.b16 %v8980
      %v9728 = vunpack.c.h.b16 %v8980
      %v9729 = vunpack.c.l.b16 %v8981
      %v9730 = vunpack.c.h.b16 %v8981
      %v9731 = vunpack.c.l.b16 %v8982
      %v9732 = vunpack.c.h.b16 %v8982
      %v9733 = vunpack.c.l.b16 %v8983
      %v9734 = vunpack.c.h.b16 %v8983
      %v9735 = vunpack.c.l.b16 %v8984
      %v9736 = vunpack.c.h.b16 %v8984
      %v9737 = vunpack.c.l.b16 %v8985
      %v9738 = vunpack.c.h.b16 %v8985
      %v9739 = vunpack.c.l.b16 %v8986
      %v9740 = vunpack.c.h.b16 %v8986
      %v9741 = vunpack.c.l.b16 %v8987
      %v9742 = vunpack.c.h.b16 %v8987
      %v9743 = vunpack.c.l.b16 %v8988
      %v9744 = vunpack.c.h.b16 %v8988
      %v9745 = vunpack.c.l.b16 %v8989
      %v9746 = vunpack.c.h.b16 %v8989
      %v9747 = vunpack.c.l.b16 %v8990
      %v9748 = vunpack.c.h.b16 %v8990
      %v9749 = vunpack.c.l.b16 %v8991
      %v9750 = vunpack.c.h.b16 %v8991
      %v9751 = vunpack.c.l.b16 %v8992
      %v9752 = vunpack.c.h.b16 %v8992
      %v9753 = vunpack.c.l.b16 %v8993
      %v9754 = vunpack.c.h.b16 %v8993
      %v9755 = vunpack.c.l.b16 %v8994
      %v9756 = vunpack.c.h.b16 %v8994
      %v9757 = vunpack.c.l.b16 %v8995
      %v9758 = vunpack.c.h.b16 %v8995
      %v9759 = vunpack.c.l.b16 %v8996
      %v9760 = vunpack.c.h.b16 %v8996
      %v9761 = vunpack.c.l.b16 %v8997
      %v9762 = vunpack.c.h.b16 %v8997
      %v9763 = vunpack.c.l.b16 %v8998
      %v9764 = vunpack.c.h.b16 %v8998
      %v9765 = vunpack.c.l.b16 %v8999
      %v9766 = vunpack.c.h.b16 %v8999
      %v9767 = vunpack.c.l.b16 %v9000
      %v9768 = vunpack.c.h.b16 %v9000
      %v9769 = vunpack.c.l.b16 %v9001
      %v9770 = vunpack.c.h.b16 %v9001
      %v9771 = vunpack.c.l.b16 %v9002
      %v9772 = vunpack.c.h.b16 %v9002
      %v9773 = vunpack.c.l.b16 %v9003
      %v9774 = vunpack.c.h.b16 %v9003
      %v9775 = vunpack.c.l.b16 %v9004
      %v9776 = vunpack.c.h.b16 %v9004
      %v9777 = vunpack.c.l.b16 %v9005
      %v9778 = vunpack.c.h.b16 %v9005
      %v9779 = vunpack.c.l.b16 %v9006
      %v9780 = vunpack.c.h.b16 %v9006
      %v9781 = vunpack.c.l.b16 %v9007
      %v9782 = vunpack.c.h.b16 %v9007
      %v9783 = vunpack.c.l.b16 %v9008
      %v9784 = vunpack.c.h.b16 %v9008
      %v9785 = vunpack.c.l.b16 %v9009
      %v9786 = vunpack.c.h.b16 %v9009
      %v9787 = vunpack.c.l.b16 %v9010
      %v9788 = vunpack.c.h.b16 %v9010
      %v9789 = vunpack.c.l.b16 %v9011
      %v9790 = vunpack.c.h.b16 %v9011
      %v9791 = vunpack.c.l.b16 %v9012
      %v9792 = vunpack.c.h.b16 %v9012
      %v9793 = vunpack.c.l.b16 %v9013
      %v9794 = vunpack.c.h.b16 %v9013
      %v9795 = vunpack.c.l.b16 %v9014
      %v9796 = vunpack.c.h.b16 %v9014
      %v9797 = vunpack.c.l.b16 %v9015
      %v9798 = vunpack.c.h.b16 %v9015
      %v9799 = vunpack.c.l.b16 %v9016
      %v9800 = vunpack.c.h.b16 %v9016
      %v9801 = vunpack.c.l.b16 %v9017
      %v9802 = vunpack.c.h.b16 %v9017
      %v9803 = vunpack.c.l.b16 %v9018
      %v9804 = vunpack.c.h.b16 %v9018
      %v9805 = vunpack.c.l.b16 %v9019
      %v9806 = vunpack.c.h.b16 %v9019
      %v9807 = vunpack.c.l.b16 %v9020
      %v9808 = vunpack.c.h.b16 %v9020
      %v9809 = vunpack.c.l.b16 %v9021
      %v9810 = vunpack.c.h.b16 %v9021
      %v9811 = vunpack.c.l.b16 %v9022
      %v9812 = vunpack.c.h.b16 %v9022
      %v9813 = vunpack.c.l.b16 %v9023
      %v9814 = vunpack.c.h.b16 %v9023
      %v9815 = vunpack.c.l.b16 %v9024
      %v9816 = vunpack.c.h.b16 %v9024
      %v9817 = vunpack.c.l.b16 %v9025
      %v9818 = vunpack.c.h.b16 %v9025
      %v9819 = vunpack.c.l.b16 %v9026
      %v9820 = vunpack.c.h.b16 %v9026
      %v9821 = vunpack.c.l.b16 %v9027
      %v9822 = vunpack.c.h.b16 %v9027
      %v9823 = vunpack.c.l.b16 %v9028
      %v9824 = vunpack.c.h.b16 %v9028
      %v9825 = vunpack.c.l.b16 %v9029
      %v9826 = vunpack.c.h.b16 %v9029
      %v9827 = vunpack.c.l.b16 %v9030
      %v9828 = vunpack.c.h.b16 %v9030
      %v9829 = vunpack.c.l.b16 %v9031
      %v9830 = vunpack.c.h.b16 %v9031
      %v9831 = vunpack.c.l.b16 %v9032
      %v9832 = vunpack.c.h.b16 %v9032
      %v9833 = vunpack.c.l.b16 %v9033
      %v9834 = vunpack.c.h.b16 %v9033
      %v9835 = vunpack.c.l.b16 %v9034
      %v9836 = vunpack.c.h.b16 %v9034
      %v9837 = vunpack.c.l.b16 %v9035
      %v9838 = vunpack.c.h.b16 %v9035
      %v9839 = vunpack.c.l.b16 %v9036
      %v9840 = vunpack.c.h.b16 %v9036
      %v9841 = vunpack.c.l.b16 %v9037
      %v9842 = vunpack.c.h.b16 %v9037
      %v9843 = vunpack.c.l.b16 %v9038
      %v9844 = vunpack.c.h.b16 %v9038
      %v9845 = vunpack.c.l.b16 %v9039
      %v9846 = vunpack.c.h.b16 %v9039
      %v9847 = vunpack.c.l.b16 %v9040
      %v9848 = vunpack.c.h.b16 %v9040
      %v9849 = vunpack.c.l.b16 %v9041
      %v9850 = vunpack.c.h.b16 %v9041
      %v9851 = vunpack.c.l.b16 %v9042
      %v9852 = vunpack.c.h.b16 %v9042
      %v9853 = vunpack.c.l.b16 %v9043
      %v9854 = vunpack.c.h.b16 %v9043
      %v9855 = vunpack.c.l.b16 %v9044
      %v9856 = vunpack.c.h.b16 %v9044
      %v9857 = vunpack.c.l.b16 %v9045
      %v9858 = vunpack.c.h.b16 %v9045
      %v9859 = vunpack.c.l.b16 %v9046
      %v9860 = vunpack.c.h.b16 %v9046
      %v9861 = vunpack.c.l.b16 %v9047
      %v9862 = vunpack.c.h.b16 %v9047
      %v9863 = vunpack.c.l.b16 %v9048
      %v9864 = vunpack.c.h.b16 %v9048
      %v9865 = vunpack.c.l.b16 %v9049
      %v9866 = vunpack.c.h.b16 %v9049
      %v9867 = vunpack.c.l.b16 %v9050
      %v9868 = vunpack.c.h.b16 %v9050
      %v9869 = vunpack.c.l.b16 %v9051
      %v9870 = vunpack.c.h.b16 %v9051
      %v9871 = vunpack.c.l.b16 %v9052
      %v9872 = vunpack.c.h.b16 %v9052
      %v9873 = vunpack.c.l.b16 %v9053
      %v9874 = vunpack.c.h.b16 %v9053
      %v9875 = vunpack.c.l.b16 %v9054
      %v9876 = vunpack.c.h.b16 %v9054
      %v9877 = vunpack.c.l.b16 %v9055
      %v9878 = vunpack.c.h.b16 %v9055
      %v9879 = vunpack.c.l.b16 %v9056
      %v9880 = vunpack.c.h.b16 %v9056
      %v9881 = vpack.c.b16 %v9371, %v9369
      %v9882 = vpack.c.b16 %v9372, %v9370
      %v9883 = vpack.c.b16 %v9375, %v9373
      %v9884 = vpack.c.b16 %v9376, %v9374
      %v9885 = vpack.c.b16 %v9379, %v9377
      %v9886 = vpack.c.b16 %v9380, %v9378
      %v9887 = vpack.c.b16 %v9383, %v9381
      %v9888 = vpack.c.b16 %v9384, %v9382
      %v9889 = vpack.c.b16 %v9387, %v9385
      %v9890 = vpack.c.b16 %v9388, %v9386
      %v9891 = vpack.c.b16 %v9391, %v9389
      %v9892 = vpack.c.b16 %v9392, %v9390
      %v9893 = vpack.c.b16 %v9395, %v9393
      %v9894 = vpack.c.b16 %v9396, %v9394
      %v9895 = vpack.c.b16 %v9399, %v9397
      %v9896 = vpack.c.b16 %v9400, %v9398
      %v9897 = vpack.c.b16 %v9403, %v9401
      %v9898 = vpack.c.b16 %v9404, %v9402
      %v9899 = vpack.c.b16 %v9407, %v9405
      %v9900 = vpack.c.b16 %v9408, %v9406
      %v9901 = vpack.c.b16 %v9411, %v9409
      %v9902 = vpack.c.b16 %v9412, %v9410
      %v9903 = vpack.c.b16 %v9415, %v9413
      %v9904 = vpack.c.b16 %v9416, %v9414
      %v9905 = vpack.c.b16 %v9419, %v9417
      %v9906 = vpack.c.b16 %v9420, %v9418
      %v9907 = vpack.c.b16 %v9423, %v9421
      %v9908 = vpack.c.b16 %v9424, %v9422
      %v9909 = vpack.c.b16 %v9427, %v9425
      %v9910 = vpack.c.b16 %v9428, %v9426
      %v9911 = vpack.c.b16 %v9431, %v9429
      %v9912 = vpack.c.b16 %v9432, %v9430
      %v9913 = vpack.c.b16 %v9435, %v9433
      %v9914 = vpack.c.b16 %v9436, %v9434
      %v9915 = vpack.c.b16 %v9439, %v9437
      %v9916 = vpack.c.b16 %v9440, %v9438
      %v9917 = vpack.c.b16 %v9443, %v9441
      %v9918 = vpack.c.b16 %v9444, %v9442
      %v9919 = vpack.c.b16 %v9447, %v9445
      %v9920 = vpack.c.b16 %v9448, %v9446
      %v9921 = vpack.c.b16 %v9451, %v9449
      %v9922 = vpack.c.b16 %v9452, %v9450
      %v9923 = vpack.c.b16 %v9455, %v9453
      %v9924 = vpack.c.b16 %v9456, %v9454
      %v9925 = vpack.c.b16 %v9459, %v9457
      %v9926 = vpack.c.b16 %v9460, %v9458
      %v9927 = vpack.c.b16 %v9463, %v9461
      %v9928 = vpack.c.b16 %v9464, %v9462
      %v9929 = vpack.c.b16 %v9467, %v9465
      %v9930 = vpack.c.b16 %v9468, %v9466
      %v9931 = vpack.c.b16 %v9471, %v9469
      %v9932 = vpack.c.b16 %v9472, %v9470
      %v9933 = vpack.c.b16 %v9475, %v9473
      %v9934 = vpack.c.b16 %v9476, %v9474
      %v9935 = vpack.c.b16 %v9479, %v9477
      %v9936 = vpack.c.b16 %v9480, %v9478
      %v9937 = vpack.c.b16 %v9483, %v9481
      %v9938 = vpack.c.b16 %v9484, %v9482
      %v9939 = vpack.c.b16 %v9487, %v9485
      %v9940 = vpack.c.b16 %v9488, %v9486
      %v9941 = vpack.c.b16 %v9491, %v9489
      %v9942 = vpack.c.b16 %v9492, %v9490
      %v9943 = vpack.c.b16 %v9495, %v9493
      %v9944 = vpack.c.b16 %v9496, %v9494
      %v9945 = vpack.c.b16 %v9499, %v9497
      %v9946 = vpack.c.b16 %v9500, %v9498
      %v9947 = vpack.c.b16 %v9503, %v9501
      %v9948 = vpack.c.b16 %v9504, %v9502
      %v9949 = vpack.c.b16 %v9507, %v9505
      %v9950 = vpack.c.b16 %v9508, %v9506
      %v9951 = vpack.c.b16 %v9511, %v9509
      %v9952 = vpack.c.b16 %v9512, %v9510
      %v9953 = vpack.c.b16 %v9515, %v9513
      %v9954 = vpack.c.b16 %v9516, %v9514
      %v9955 = vpack.c.b16 %v9519, %v9517
      %v9956 = vpack.c.b16 %v9520, %v9518
      %v9957 = vpack.c.b16 %v9523, %v9521
      %v9958 = vpack.c.b16 %v9524, %v9522
      %v9959 = vpack.c.b16 %v9527, %v9525
      %v9960 = vpack.c.b16 %v9528, %v9526
      %v9961 = vpack.c.b16 %v9531, %v9529
      %v9962 = vpack.c.b16 %v9532, %v9530
      %v9963 = vpack.c.b16 %v9535, %v9533
      %v9964 = vpack.c.b16 %v9536, %v9534
      %v9965 = vpack.c.b16 %v9539, %v9537
      %v9966 = vpack.c.b16 %v9540, %v9538
      %v9967 = vpack.c.b16 %v9543, %v9541
      %v9968 = vpack.c.b16 %v9544, %v9542
      %v9969 = vpack.c.b16 %v9547, %v9545
      %v9970 = vpack.c.b16 %v9548, %v9546
      %v9971 = vpack.c.b16 %v9551, %v9549
      %v9972 = vpack.c.b16 %v9552, %v9550
      %v9973 = vpack.c.b16 %v9555, %v9553
      %v9974 = vpack.c.b16 %v9556, %v9554
      %v9975 = vpack.c.b16 %v9559, %v9557
      %v9976 = vpack.c.b16 %v9560, %v9558
      %v9977 = vpack.c.b16 %v9563, %v9561
      %v9978 = vpack.c.b16 %v9564, %v9562
      %v9979 = vpack.c.b16 %v9567, %v9565
      %v9980 = vpack.c.b16 %v9568, %v9566
      %v9981 = vpack.c.b16 %v9571, %v9569
      %v9982 = vpack.c.b16 %v9572, %v9570
      %v9983 = vpack.c.b16 %v9575, %v9573
      %v9984 = vpack.c.b16 %v9576, %v9574
      %v9985 = vpack.c.b16 %v9579, %v9577
      %v9986 = vpack.c.b16 %v9580, %v9578
      %v9987 = vpack.c.b16 %v9583, %v9581
      %v9988 = vpack.c.b16 %v9584, %v9582
      %v9989 = vpack.c.b16 %v9587, %v9585
      %v9990 = vpack.c.b16 %v9588, %v9586
      %v9991 = vpack.c.b16 %v9591, %v9589
      %v9992 = vpack.c.b16 %v9592, %v9590
      %v9993 = vpack.c.b16 %v9595, %v9593
      %v9994 = vpack.c.b16 %v9596, %v9594
      %v9995 = vpack.c.b16 %v9599, %v9597
      %v9996 = vpack.c.b16 %v9600, %v9598
      %v9997 = vpack.c.b16 %v9603, %v9601
      %v9998 = vpack.c.b16 %v9604, %v9602
      %v9999 = vpack.c.b16 %v9607, %v9605
      %v10000 = vpack.c.b16 %v9608, %v9606
      %v10001 = vpack.c.b16 %v9611, %v9609
      %v10002 = vpack.c.b16 %v9612, %v9610
      %v10003 = vpack.c.b16 %v9615, %v9613
      %v10004 = vpack.c.b16 %v9616, %v9614
      %v10005 = vpack.c.b16 %v9619, %v9617
      %v10006 = vpack.c.b16 %v9620, %v9618
      %v10007 = vpack.c.b16 %v9623, %v9621
      %v10008 = vpack.c.b16 %v9624, %v9622
      %v10009 = vpack.c.b16 %v9627, %v9625
      %v10010 = vpack.c.b16 %v9628, %v9626
      %v10011 = vpack.c.b16 %v9631, %v9629
      %v10012 = vpack.c.b16 %v9632, %v9630
      %v10013 = vpack.c.b16 %v9635, %v9633
      %v10014 = vpack.c.b16 %v9636, %v9634
      %v10015 = vpack.c.b16 %v9639, %v9637
      %v10016 = vpack.c.b16 %v9640, %v9638
      %v10017 = vpack.c.b16 %v9643, %v9641
      %v10018 = vpack.c.b16 %v9644, %v9642
      %v10019 = vpack.c.b16 %v9647, %v9645
      %v10020 = vpack.c.b16 %v9648, %v9646
      %v10021 = vpack.c.b16 %v9651, %v9649
      %v10022 = vpack.c.b16 %v9652, %v9650
      %v10023 = vpack.c.b16 %v9655, %v9653
      %v10024 = vpack.c.b16 %v9656, %v9654
      %v10025 = vpack.c.b16 %v9659, %v9657
      %v10026 = vpack.c.b16 %v9660, %v9658
      %v10027 = vpack.c.b16 %v9663, %v9661
      %v10028 = vpack.c.b16 %v9664, %v9662
      %v10029 = vpack.c.b16 %v9667, %v9665
      %v10030 = vpack.c.b16 %v9668, %v9666
      %v10031 = vpack.c.b16 %v9671, %v9669
      %v10032 = vpack.c.b16 %v9672, %v9670
      %v10033 = vpack.c.b16 %v9675, %v9673
      %v10034 = vpack.c.b16 %v9676, %v9674
      %v10035 = vpack.c.b16 %v9679, %v9677
      %v10036 = vpack.c.b16 %v9680, %v9678
      %v10037 = vpack.c.b16 %v9683, %v9681
      %v10038 = vpack.c.b16 %v9684, %v9682
      %v10039 = vpack.c.b16 %v9687, %v9685
      %v10040 = vpack.c.b16 %v9688, %v9686
      %v10041 = vpack.c.b16 %v9691, %v9689
      %v10042 = vpack.c.b16 %v9692, %v9690
      %v10043 = vpack.c.b16 %v9695, %v9693
      %v10044 = vpack.c.b16 %v9696, %v9694
      %v10045 = vpack.c.b16 %v9699, %v9697
      %v10046 = vpack.c.b16 %v9700, %v9698
      %v10047 = vpack.c.b16 %v9703, %v9701
      %v10048 = vpack.c.b16 %v9704, %v9702
      %v10049 = vpack.c.b16 %v9707, %v9705
      %v10050 = vpack.c.b16 %v9708, %v9706
      %v10051 = vpack.c.b16 %v9711, %v9709
      %v10052 = vpack.c.b16 %v9712, %v9710
      %v10053 = vpack.c.b16 %v9715, %v9713
      %v10054 = vpack.c.b16 %v9716, %v9714
      %v10055 = vpack.c.b16 %v9719, %v9717
      %v10056 = vpack.c.b16 %v9720, %v9718
      %v10057 = vpack.c.b16 %v9723, %v9721
      %v10058 = vpack.c.b16 %v9724, %v9722
      %v10059 = vpack.c.b16 %v9727, %v9725
      %v10060 = vpack.c.b16 %v9728, %v9726
      %v10061 = vpack.c.b16 %v9731, %v9729
      %v10062 = vpack.c.b16 %v9732, %v9730
      %v10063 = vpack.c.b16 %v9735, %v9733
      %v10064 = vpack.c.b16 %v9736, %v9734
      %v10065 = vpack.c.b16 %v9739, %v9737
      %v10066 = vpack.c.b16 %v9740, %v9738
      %v10067 = vpack.c.b16 %v9743, %v9741
      %v10068 = vpack.c.b16 %v9744, %v9742
      %v10069 = vpack.c.b16 %v9747, %v9745
      %v10070 = vpack.c.b16 %v9748, %v9746
      %v10071 = vpack.c.b16 %v9751, %v9749
      %v10072 = vpack.c.b16 %v9752, %v9750
      %v10073 = vpack.c.b16 %v9755, %v9753
      %v10074 = vpack.c.b16 %v9756, %v9754
      %v10075 = vpack.c.b16 %v9759, %v9757
      %v10076 = vpack.c.b16 %v9760, %v9758
      %v10077 = vpack.c.b16 %v9763, %v9761
      %v10078 = vpack.c.b16 %v9764, %v9762
      %v10079 = vpack.c.b16 %v9767, %v9765
      %v10080 = vpack.c.b16 %v9768, %v9766
      %v10081 = vpack.c.b16 %v9771, %v9769
      %v10082 = vpack.c.b16 %v9772, %v9770
      %v10083 = vpack.c.b16 %v9775, %v9773
      %v10084 = vpack.c.b16 %v9776, %v9774
      %v10085 = vpack.c.b16 %v9779, %v9777
      %v10086 = vpack.c.b16 %v9780, %v9778
      %v10087 = vpack.c.b16 %v9783, %v9781
      %v10088 = vpack.c.b16 %v9784, %v9782
      %v10089 = vpack.c.b16 %v9787, %v9785
      %v10090 = vpack.c.b16 %v9788, %v9786
      %v10091 = vpack.c.b16 %v9791, %v9789
      %v10092 = vpack.c.b16 %v9792, %v9790
      %v10093 = vpack.c.b16 %v9795, %v9793
      %v10094 = vpack.c.b16 %v9796, %v9794
      %v10095 = vpack.c.b16 %v9799, %v9797
      %v10096 = vpack.c.b16 %v9800, %v9798
      %v10097 = vpack.c.b16 %v9803, %v9801
      %v10098 = vpack.c.b16 %v9804, %v9802
      %v10099 = vpack.c.b16 %v9807, %v9805
      %v10100 = vpack.c.b16 %v9808, %v9806
      %v10101 = vpack.c.b16 %v9811, %v9809
      %v10102 = vpack.c.b16 %v9812, %v9810
      %v10103 = vpack.c.b16 %v9815, %v9813
      %v10104 = vpack.c.b16 %v9816, %v9814
      %v10105 = vpack.c.b16 %v9819, %v9817
      %v10106 = vpack.c.b16 %v9820, %v9818
      %v10107 = vpack.c.b16 %v9823, %v9821
      %v10108 = vpack.c.b16 %v9824, %v9822
      %v10109 = vpack.c.b16 %v9827, %v9825
      %v10110 = vpack.c.b16 %v9828, %v9826
      %v10111 = vpack.c.b16 %v9831, %v9829
      %v10112 = vpack.c.b16 %v9832, %v9830
      %v10113 = vpack.c.b16 %v9835, %v9833
      %v10114 = vpack.c.b16 %v9836, %v9834
      %v10115 = vpack.c.b16 %v9839, %v9837
      %v10116 = vpack.c.b16 %v9840, %v9838
      %v10117 = vpack.c.b16 %v9843, %v9841
      %v10118 = vpack.c.b16 %v9844, %v9842
      %v10119 = vpack.c.b16 %v9847, %v9845
      %v10120 = vpack.c.b16 %v9848, %v9846
      %v10121 = vpack.c.b16 %v9851, %v9849
      %v10122 = vpack.c.b16 %v9852, %v9850
      %v10123 = vpack.c.b16 %v9855, %v9853
      %v10124 = vpack.c.b16 %v9856, %v9854
      %v10125 = vpack.c.b16 %v9859, %v9857
      %v10126 = vpack.c.b16 %v9860, %v9858
      %v10127 = vpack.c.b16 %v9863, %v9861
      %v10128 = vpack.c.b16 %v9864, %v9862
      %v10129 = vpack.c.b16 %v9867, %v9865
      %v10130 = vpack.c.b16 %v9868, %v9866
      %v10131 = vpack.c.b16 %v9871, %v9869
      %v10132 = vpack.c.b16 %v9872, %v9870
      %v10133 = vpack.c.b16 %v9875, %v9873
      %v10134 = vpack.c.b16 %v9876, %v9874
      %v10135 = vpack.c.b16 %v9879, %v9877
      %v10136 = vpack.c.b16 %v9880, %v9878
      %10393 = vmatprep.subr.bf16.mxu0 %v9896
      %10394 = vmatpush1.bf16.msra.mxu0 %v9895
      %10395 = vmatprep.subr.bf16.mxu0 %v9894
      %10396 = vmatpush1.bf16.msra.mxu0 %v9893
      %10397 = vmatprep.subr.bf16.mxu0 %v9892
      %10398 = vmatpush1.bf16.msra.mxu0 %v9891
      %10399 = vmatprep.subr.bf16.mxu0 %v9890
      %10400 = vmatpush1.bf16.msra.mxu0 %v9889
      %10401 = vmatprep.subr.bf16.mxu0 %v9888
      %10402 = vmatpush1.bf16.msra.mxu0 %v9887
      %10403 = vmatprep.subr.bf16.mxu0 %v9886
      %10404 = vmatpush1.bf16.msra.mxu0 %v9885
      %10405 = vmatprep.subr.bf16.mxu0 %v9884
      %10406 = vmatpush1.bf16.msra.mxu0 %v9883
      %10407 = vmatprep.subr.bf16.mxu0 %v9882
      %10408 = vmatpush1.bf16.msra.mxu0 %v9881
      %10409 = vmatprep.subr.bf16.mxu0 %v9912
      %10410 = vmatpush2.bf16.msra.mxu0 %v9911
      %10411 = vmatprep.subr.bf16.mxu0 %v9910
      %10412 = vmatpush2.bf16.msra.mxu0 %v9909
      %10413 = vmatprep.subr.bf16.mxu0 %v9908
      %10414 = vmatpush2.bf16.msra.mxu0 %v9907
      %10415 = vmatprep.subr.bf16.mxu0 %v9906
      %10416 = vmatpush2.bf16.msra.mxu0 %v9905
      %10417 = vmatprep.subr.bf16.mxu0 %v9904
      %10418 = vmatpush2.bf16.msra.mxu0 %v9903
      %10419 = vmatprep.subr.bf16.mxu0 %v9902
      %10420 = vmatpush2.bf16.msra.mxu0 %v9901
      %10421 = vmatprep.subr.bf16.mxu0 %v9900
      %10422 = vmatpush2.bf16.msra.mxu0 %v9899
      %10423 = vmatprep.subr.bf16.mxu0 %v9898
      %10424 = vmatpush2.bf16.msra.mxu0 %v9897
      %10425 = vmatprep.mubr.bf16.mxu0 %v9082
      %10426 = vmatmul.mubr.bf16.gmra.mxu0 %v9081
      %v10427 = vpop.f32.mrf.mxu0
      %v10428 = vadd.f32 0.0, %v10427
      %v10429 = vpop.f32.mrf.mxu0
      %v10430 = vadd.f32 0.0, %v10429
      %v10431 = vpop.f32.mrf.mxu0
      %v10432 = vpop.f32.mrf.mxu0
      %10433 = vdwg.mxu0
      %10434 = vmatprep.subr.bf16.mxu0 %v9928
      %10435 = vmatpush1.bf16.msra.mxu0 %v9927
      %10436 = vmatprep.subr.bf16.mxu0 %v9926
      %10437 = vmatpush1.bf16.msra.mxu0 %v9925
      %10438 = vmatprep.subr.bf16.mxu0 %v9924
      %10439 = vmatpush1.bf16.msra.mxu0 %v9923
      %10440 = vmatprep.subr.bf16.mxu0 %v9922
      %10441 = vmatpush1.bf16.msra.mxu0 %v9921
      %10442 = vmatprep.subr.bf16.mxu0 %v9920
      %10443 = vmatpush1.bf16.msra.mxu0 %v9919
      %10444 = vmatprep.subr.bf16.mxu0 %v9918
      %10445 = vmatpush1.bf16.msra.mxu0 %v9917
      %10446 = vmatprep.subr.bf16.mxu0 %v9916
      %10447 = vmatpush1.bf16.msra.mxu0 %v9915
      %10448 = vmatprep.subr.bf16.mxu0 %v9914
      %10449 = vmatpush1.bf16.msra.mxu0 %v9913
      %10450 = vmatprep.subr.bf16.mxu0 %v9944
      %10451 = vmatpush2.bf16.msra.mxu0 %v9943
      %10452 = vmatprep.subr.bf16.mxu0 %v9942
      %10453 = vmatpush2.bf16.msra.mxu0 %v9941
      %10454 = vmatprep.subr.bf16.mxu0 %v9940
      %10455 = vmatpush2.bf16.msra.mxu0 %v9939
      %10456 = vmatprep.subr.bf16.mxu0 %v9938
      %10457 = vmatpush2.bf16.msra.mxu0 %v9937
      %10458 = vmatprep.subr.bf16.mxu0 %v9936
      %10459 = vmatpush2.bf16.msra.mxu0 %v9935
      %10460 = vmatprep.subr.bf16.mxu0 %v9934
      %10461 = vmatpush2.bf16.msra.mxu0 %v9933
      %10462 = vmatprep.subr.bf16.mxu0 %v9932
      %10463 = vmatpush2.bf16.msra.mxu0 %v9931
      %10464 = vmatprep.subr.bf16.mxu0 %v9930
      %10465 = vmatpush2.bf16.msra.mxu0 %v9929
      %10466 = vmatprep.mubr.bf16.mxu0 %v9084
      %10467 = vmatmul.mubr.bf16.gmra.mxu0 %v9083
      %v10468 = vpop.f32.mrf.mxu0
      %v10469 = vadd.f32 %v10428, %v10468
      %v10470 = vpop.f32.mrf.mxu0
      %v10471 = vadd.f32 %v10430, %v10470
      %v10472 = vpop.f32.mrf.mxu0
      %v10473 = vpop.f32.mrf.mxu0
      %10474 = vdwg.mxu0
      %10475 = vmatprep.subr.bf16.mxu0 %v9960
      %10476 = vmatpush1.bf16.msra.mxu0 %v9959
      %10477 = vmatprep.subr.bf16.mxu0 %v9958
      %10478 = vmatpush1.bf16.msra.mxu0 %v9957
      %10479 = vmatprep.subr.bf16.mxu0 %v9956
      %10480 = vmatpush1.bf16.msra.mxu0 %v9955
      %10481 = vmatprep.subr.bf16.mxu0 %v9954
      %10482 = vmatpush1.bf16.msra.mxu0 %v9953
      %10483 = vmatprep.subr.bf16.mxu0 %v9952
      %10484 = vmatpush1.bf16.msra.mxu0 %v9951
      %10485 = vmatprep.subr.bf16.mxu0 %v9950
      %10486 = vmatpush1.bf16.msra.mxu0 %v9949
      %10487 = vmatprep.subr.bf16.mxu0 %v9948
      %10488 = vmatpush1.bf16.msra.mxu0 %v9947
      %10489 = vmatprep.subr.bf16.mxu0 %v9946
      %10490 = vmatpush1.bf16.msra.mxu0 %v9945
      %10491 = vmatprep.subr.bf16.mxu0 %v9976
      %10492 = vmatpush2.bf16.msra.mxu0 %v9975
      %10493 = vmatprep.subr.bf16.mxu0 %v9974
      %10494 = vmatpush2.bf16.msra.mxu0 %v9973
      %10495 = vmatprep.subr.bf16.mxu0 %v9972
      %10496 = vmatpush2.bf16.msra.mxu0 %v9971
      %10497 = vmatprep.subr.bf16.mxu0 %v9970
      %10498 = vmatpush2.bf16.msra.mxu0 %v9969
      %10499 = vmatprep.subr.bf16.mxu0 %v9968
      %10500 = vmatpush2.bf16.msra.mxu0 %v9967
      %10501 = vmatprep.subr.bf16.mxu0 %v9966
      %10502 = vmatpush2.bf16.msra.mxu0 %v9965
      %10503 = vmatprep.subr.bf16.mxu0 %v9964
      %10504 = vmatpush2.bf16.msra.mxu0 %v9963
      %10505 = vmatprep.subr.bf16.mxu0 %v9962
      %10506 = vmatpush2.bf16.msra.mxu0 %v9961
      %10507 = vmatprep.mubr.bf16.mxu0 %v9086
      %10508 = vmatmul.mubr.bf16.gmra.mxu0 %v9085
      %v10509 = vpop.f32.mrf.mxu0
      %v10510 = vadd.f32 %v10469, %v10509
      %v10511 = vpop.f32.mrf.mxu0
      %v10512 = vadd.f32 %v10471, %v10511
      %v10513 = vpop.f32.mrf.mxu0
      %v10514 = vpop.f32.mrf.mxu0
      %10515 = vdwg.mxu0
      %10516 = vmatprep.subr.bf16.mxu0 %v9992
      %10517 = vmatpush1.bf16.msra.mxu0 %v9991
      %10518 = vmatprep.subr.bf16.mxu0 %v9990
      %10519 = vmatpush1.bf16.msra.mxu0 %v9989
      %10520 = vmatprep.subr.bf16.mxu0 %v9988
      %10521 = vmatpush1.bf16.msra.mxu0 %v9987
      %10522 = vmatprep.subr.bf16.mxu0 %v9986
      %10523 = vmatpush1.bf16.msra.mxu0 %v9985
      %10524 = vmatprep.subr.bf16.mxu0 %v9984
      %10525 = vmatpush1.bf16.msra.mxu0 %v9983
      %10526 = vmatprep.subr.bf16.mxu0 %v9982
      %10527 = vmatpush1.bf16.msra.mxu0 %v9981
      %10528 = vmatprep.subr.bf16.mxu0 %v9980
      %10529 = vmatpush1.bf16.msra.mxu0 %v9979
      %10530 = vmatprep.subr.bf16.mxu0 %v9978
      %10531 = vmatpush1.bf16.msra.mxu0 %v9977
      %10532 = vmatprep.subr.bf16.mxu0 %v10008
      %10533 = vmatpush2.bf16.msra.mxu0 %v10007
      %10534 = vmatprep.subr.bf16.mxu0 %v10006
      %10535 = vmatpush2.bf16.msra.mxu0 %v10005
      %10536 = vmatprep.subr.bf16.mxu0 %v10004
      %10537 = vmatpush2.bf16.msra.mxu0 %v10003
      %10538 = vmatprep.subr.bf16.mxu0 %v10002
      %10539 = vmatpush2.bf16.msra.mxu0 %v10001
      %10540 = vmatprep.subr.bf16.mxu0 %v10000
      %10541 = vmatpush2.bf16.msra.mxu0 %v9999
      %10542 = vmatprep.subr.bf16.mxu0 %v9998
      %10543 = vmatpush2.bf16.msra.mxu0 %v9997
      %10544 = vmatprep.subr.bf16.mxu0 %v9996
      %10545 = vmatpush2.bf16.msra.mxu0 %v9995
      %10546 = vmatprep.subr.bf16.mxu0 %v9994
      %10547 = vmatpush2.bf16.msra.mxu0 %v9993
      %10548 = vmatprep.mubr.bf16.mxu0 %v9088
      %10549 = vmatmul.mubr.bf16.gmra.mxu0 %v9087
      %v10550 = vpop.f32.mrf.mxu0
      %v10551 = vadd.f32 %v10510, %v10550
      %v10552 = vpop.f32.mrf.mxu0
      %v10553 = vadd.f32 %v10512, %v10552
      %v10554 = vpop.f32.mrf.mxu0
      %v10555 = vpop.f32.mrf.mxu0
      %10556 = vdwg.mxu0
      %10557 = vmatprep.subr.bf16.mxu0 %v10024
      %10558 = vmatpush1.bf16.msra.mxu0 %v10023
      %10559 = vmatprep.subr.bf16.mxu0 %v10022
      %10560 = vmatpush1.bf16.msra.mxu0 %v10021
      %10561 = vmatprep.subr.bf16.mxu0 %v10020
      %10562 = vmatpush1.bf16.msra.mxu0 %v10019
      %10563 = vmatprep.subr.bf16.mxu0 %v10018
      %10564 = vmatpush1.bf16.msra.mxu0 %v10017
      %10565 = vmatprep.subr.bf16.mxu0 %v10016
      %10566 = vmatpush1.bf16.msra.mxu0 %v10015
      %10567 = vmatprep.subr.bf16.mxu0 %v10014
      %10568 = vmatpush1.bf16.msra.mxu0 %v10013
      %10569 = vmatprep.subr.bf16.mxu0 %v10012
      %10570 = vmatpush1.bf16.msra.mxu0 %v10011
      %10571 = vmatprep.subr.bf16.mxu0 %v10010
      %10572 = vmatpush1.bf16.msra.mxu0 %v10009
      %10573 = vmatprep.subr.bf16.mxu0 %v10040
      %10574 = vmatpush2.bf16.msra.mxu0 %v10039
      %10575 = vmatprep.subr.bf16.mxu0 %v10038
      %10576 = vmatpush2.bf16.msra.mxu0 %v10037
      %10577 = vmatprep.subr.bf16.mxu0 %v10036
      %10578 = vmatpush2.bf16.msra.mxu0 %v10035
      %10579 = vmatprep.subr.bf16.mxu0 %v10034
      %10580 = vmatpush2.bf16.msra.mxu0 %v10033
      %10581 = vmatprep.subr.bf16.mxu0 %v10032
      %10582 = vmatpush2.bf16.msra.mxu0 %v10031
      %10583 = vmatprep.subr.bf16.mxu0 %v10030
      %10584 = vmatpush2.bf16.msra.mxu0 %v10029
      %10585 = vmatprep.subr.bf16.mxu0 %v10028
      %10586 = vmatpush2.bf16.msra.mxu0 %v10027
      %10587 = vmatprep.subr.bf16.mxu0 %v10026
      %10588 = vmatpush2.bf16.msra.mxu0 %v10025
      %10589 = vmatprep.mubr.bf16.mxu0 %v9090
      %10590 = vmatmul.mubr.bf16.gmra.mxu0 %v9089
      %v10591 = vpop.f32.mrf.mxu0
      %v10592 = vadd.f32 %v10551, %v10591
      %v10593 = vpop.f32.mrf.mxu0
      %v10594 = vadd.f32 %v10553, %v10593
      %v10595 = vpop.f32.mrf.mxu0
      %v10596 = vpop.f32.mrf.mxu0
      %10597 = vdwg.mxu0
      %10598 = vmatprep.subr.bf16.mxu0 %v10056
      %10599 = vmatpush1.bf16.msra.mxu0 %v10055
      %10600 = vmatprep.subr.bf16.mxu0 %v10054
      %10601 = vmatpush1.bf16.msra.mxu0 %v10053
      %10602 = vmatprep.subr.bf16.mxu0 %v10052
      %10603 = vmatpush1.bf16.msra.mxu0 %v10051
      %10604 = vmatprep.subr.bf16.mxu0 %v10050
      %10605 = vmatpush1.bf16.msra.mxu0 %v10049
      %10606 = vmatprep.subr.bf16.mxu0 %v10048
      %10607 = vmatpush1.bf16.msra.mxu0 %v10047
      %10608 = vmatprep.subr.bf16.mxu0 %v10046
      %10609 = vmatpush1.bf16.msra.mxu0 %v10045
      %10610 = vmatprep.subr.bf16.mxu0 %v10044
      %10611 = vmatpush1.bf16.msra.mxu0 %v10043
      %10612 = vmatprep.subr.bf16.mxu0 %v10042
      %10613 = vmatpush1.bf16.msra.mxu0 %v10041
      %10614 = vmatprep.subr.bf16.mxu0 %v10072
      %10615 = vmatpush2.bf16.msra.mxu0 %v10071
      %10616 = vmatprep.subr.bf16.mxu0 %v10070
      %10617 = vmatpush2.bf16.msra.mxu0 %v10069
      %10618 = vmatprep.subr.bf16.mxu0 %v10068
      %10619 = vmatpush2.bf16.msra.mxu0 %v10067
      %10620 = vmatprep.subr.bf16.mxu0 %v10066
      %10621 = vmatpush2.bf16.msra.mxu0 %v10065
      %10622 = vmatprep.subr.bf16.mxu0 %v10064
      %10623 = vmatpush2.bf16.msra.mxu0 %v10063
      %10624 = vmatprep.subr.bf16.mxu0 %v10062
      %10625 = vmatpush2.bf16.msra.mxu0 %v10061
      %10626 = vmatprep.subr.bf16.mxu0 %v10060
      %10627 = vmatpush2.bf16.msra.mxu0 %v10059
      %10628 = vmatprep.subr.bf16.mxu0 %v10058
      %10629 = vmatpush2.bf16.msra.mxu0 %v10057
      %10630 = vmatprep.mubr.bf16.mxu0 %v9092
      %10631 = vmatmul.mubr.bf16.gmra.mxu0 %v9091
      %v10632 = vpop.f32.mrf.mxu0
      %v10633 = vadd.f32 %v10592, %v10632
      %v10634 = vpop.f32.mrf.mxu0
      %v10635 = vadd.f32 %v10594, %v10634
      %v10636 = vpop.f32.mrf.mxu0
      %v10637 = vpop.f32.mrf.mxu0
      %10638 = vdwg.mxu0
      %10639 = vmatprep.subr.bf16.mxu0 %v10088
      %10640 = vmatpush1.bf16.msra.mxu0 %v10087
      %10641 = vmatprep.subr.bf16.mxu0 %v10086
      %10642 = vmatpush1.bf16.msra.mxu0 %v10085
      %10643 = vmatprep.subr.bf16.mxu0 %v10084
      %10644 = vmatpush1.bf16.msra.mxu0 %v10083
      %10645 = vmatprep.subr.bf16.mxu0 %v10082
      %10646 = vmatpush1.bf16.msra.mxu0 %v10081
      %10647 = vmatprep.subr.bf16.mxu0 %v10080
      %10648 = vmatpush1.bf16.msra.mxu0 %v10079
      %10649 = vmatprep.subr.bf16.mxu0 %v10078
      %10650 = vmatpush1.bf16.msra.mxu0 %v10077
      %10651 = vmatprep.subr.bf16.mxu0 %v10076
      %10652 = vmatpush1.bf16.msra.mxu0 %v10075
      %10653 = vmatprep.subr.bf16.mxu0 %v10074
      %10654 = vmatpush1.bf16.msra.mxu0 %v10073
      %10655 = vmatprep.subr.bf16.mxu0 %v10104
      %10656 = vmatpush2.bf16.msra.mxu0 %v10103
      %10657 = vmatprep.subr.bf16.mxu0 %v10102
      %10658 = vmatpush2.bf16.msra.mxu0 %v10101
      %10659 = vmatprep.subr.bf16.mxu0 %v10100
      %10660 = vmatpush2.bf16.msra.mxu0 %v10099
      %10661 = vmatprep.subr.bf16.mxu0 %v10098
      %10662 = vmatpush2.bf16.msra.mxu0 %v10097
      %10663 = vmatprep.subr.bf16.mxu0 %v10096
      %10664 = vmatpush2.bf16.msra.mxu0 %v10095
      %10665 = vmatprep.subr.bf16.mxu0 %v10094
      %10666 = vmatpush2.bf16.msra.mxu0 %v10093
      %10667 = vmatprep.subr.bf16.mxu0 %v10092
      %10668 = vmatpush2.bf16.msra.mxu0 %v10091
      %10669 = vmatprep.subr.bf16.mxu0 %v10090
      %10670 = vmatpush2.bf16.msra.mxu0 %v10089
      %10671 = vmatprep.mubr.bf16.mxu0 %v9094
      %10672 = vmatmul.mubr.bf16.gmra.mxu0 %v9093
      %v10673 = vpop.f32.mrf.mxu0
      %v10674 = vadd.f32 %v10633, %v10673
      %v10675 = vpop.f32.mrf.mxu0
      %v10676 = vadd.f32 %v10635, %v10675
      %v10677 = vpop.f32.mrf.mxu0
      %v10678 = vpop.f32.mrf.mxu0
      %10679 = vdwg.mxu0
      %10680 = vmatprep.subr.bf16.mxu0 %v10120
      %10681 = vmatpush1.bf16.msra.mxu0 %v10119
      %10682 = vmatprep.subr.bf16.mxu0 %v10118
      %10683 = vmatpush1.bf16.msra.mxu0 %v10117
      %10684 = vmatprep.subr.bf16.mxu0 %v10116
      %10685 = vmatpush1.bf16.msra.mxu0 %v10115
      %10686 = vmatprep.subr.bf16.mxu0 %v10114
      %10687 = vmatpush1.bf16.msra.mxu0 %v10113
      %10688 = vmatprep.subr.bf16.mxu0 %v10112
      %10689 = vmatpush1.bf16.msra.mxu0 %v10111
      %10690 = vmatprep.subr.bf16.mxu0 %v10110
      %10691 = vmatpush1.bf16.msra.mxu0 %v10109
      %10692 = vmatprep.subr.bf16.mxu0 %v10108
      %10693 = vmatpush1.bf16.msra.mxu0 %v10107
      %10694 = vmatprep.subr.bf16.mxu0 %v10106
      %10695 = vmatpush1.bf16.msra.mxu0 %v10105
      %10696 = vmatprep.subr.bf16.mxu0 %v10136
      %10697 = vmatpush2.bf16.msra.mxu0 %v10135
      %10698 = vmatprep.subr.bf16.mxu0 %v10134
      %10699 = vmatpush2.bf16.msra.mxu0 %v10133
      %10700 = vmatprep.subr.bf16.mxu0 %v10132
      %10701 = vmatpush2.bf16.msra.mxu0 %v10131
      %10702 = vmatprep.subr.bf16.mxu0 %v10130
      %10703 = vmatpush2.bf16.msra.mxu0 %v10129
      %10704 = vmatprep.subr.bf16.mxu0 %v10128
      %10705 = vmatpush2.bf16.msra.mxu0 %v10127
      %10706 = vmatprep.subr.bf16.mxu0 %v10126
      %10707 = vmatpush2.bf16.msra.mxu0 %v10125
      %10708 = vmatprep.subr.bf16.mxu0 %v10124
      %10709 = vmatpush2.bf16.msra.mxu0 %v10123
      %10710 = vmatprep.subr.bf16.mxu0 %v10122
      %10711 = vmatpush2.bf16.msra.mxu0 %v10121
      %10712 = vmatprep.mubr.bf16.mxu0 %v9096
      %10713 = vmatmul.mubr.bf16.gmra.mxu0 %v9095
      %v10714 = vpop.f32.mrf.mxu0
      %v10715 = vadd.f32 %v10674, %v10714
      %v10716 = vpop.f32.mrf.mxu0
      %v10717 = vadd.f32 %v10676, %v10716
      %v10718 = vpop.f32.mrf.mxu0
      %v10719 = vpop.f32.mrf.mxu0
      %10720 = vdwg.mxu0
      %v10721 = vadd.f32 %v8788, %v10715
      %v10722 = vadd.f32 %v8789, %v10717
      %10723 = vst [vmem:[#allocation4] sm:$0xff] %v10721
      %10724 = vst [vmem:[#allocation4 + $0x8] sm:$0xff] %v10722
      %p10725 = scmp.eq.s32.totalorder %s16, 1
      // Predicated region
      $region45: #{critic_forward.1} parent=39 // pred_check
        %p10726 = pneg %p10725
      $region46: #{critic_forward.1} parent=39 // pred_check_branch
        %10728 = sbr.rel (%p10726) target = $region48
      $region47: #{critic_forward.1} parent=39 // pred_region
        %v10729 = vld [vmem:[#allocation4] sm:$0xff]
        %v10730 = vld [vmem:[#allocation4 + $0x8] sm:$0xff]
        %s10731 = scalar_lea.vmem %s3, 2
        %v10732 = vld [vmem:[%s10731] ss:$8 sm:$0x3]
        %v10734 = vlaneseq
        %v10735 = vshrl.u32 %v10734, 7
        %v10736 = vsub.s32 0, %v10735
        %v10737 = vrot.slane %v10732, %v10736
        %v10738 = vlaneseq
        %v10739 = vshrl.u32 %v10738, 7
        %v10740 = vsub.s32 1, %v10739
        %v10741 = vrot.slane %v10732, %v10740
        %v10744 = vadd.f32 %v10729, %v10737
        %v10745 = vadd.f32 %v10730, %v10741
        %v10746 = vmax.f32 %v10744, 0.0
        %v10747 = vmax.f32 %v10745, 0.0
        %s10748 = scalar_lea.vmem %s3, 3
        %v10749 = vld [vmem:[%s10748] ss:$8 sm:$0x3]
        %v10751 = vlaneseq
        %v10752 = vshrl.u32 %v10751, 7
        %v10753 = vsub.s32 0, %v10752
        %v10754 = vrot.slane %v10749, %v10753
        %v10755 = vlaneseq
        %v10756 = vshrl.u32 %v10755, 7
        %v10757 = vsub.s32 1, %v10756
        %v10758 = vrot.slane %v10749, %v10757
        %v10761 = vmul.f32 %v10746, %v10754
        %v10762 = vmul.f32 %v10747, %v10758
        %v10763 = vadd.f32 %v10761, %v10762
        %10764 = vadd.xlane.f32.xlu0 %v10763
        %v10765 = vpop.xlane.xlu0 %10764
        %v10766 = vld [vmem:[%s3 + $0x4] ss:$0 sm:$0xff]
        %v10767 = vadd.f32 %v10765, %v10766
        %vm10768 = vcmask 1024
        %10769 = vst.msk [vmem:[%s5] sm:$0x3] %vm10768, %v10767
      $region48: #{critic_forward.1} parent=39 // pred_fallthru
        _
      // Predicated region
      $region49: #{critic_forward.1} parent=39 // pred_check
        %p10770 = pneg %p139
      $region50: #{critic_forward.1} parent=39 // pred_check_branch
        %10772 = sbr.rel (%p10770) target = $region52
      $region51: #{critic_forward.1} parent=39 // pred_region
        _
      $region52: #{critic_forward.1} parent=39 // pred_fallthru
        _
      // Predicated region
      $region53: #{critic_forward.1} parent=39 // pred_check
        %p10773 = pneg %p139
      $region54: #{critic_forward.1} parent=39 // pred_check_branch
        %10775 = sbr.rel (%p10773) target = $region56
      $region55: #{critic_forward.1} parent=39 // pred_region
        _
      $region56: #{critic_forward.1} parent=39 // pred_fallthru
        _
    $region40: #{critic_forward.1} parent=5 // pred_fallthru
      _
    %p10776 = scmp.le.s32.totalorder 2, %s11
    // Predicated region
    $region57: #{critic_forward.1} parent=5 // pred_check
      %p10777 = pneg %p10776
    $region58: #{critic_forward.1} parent=5 // pred_check_branch
      %10779 = sbr.rel (%p10777) target = $region60
    $region59: #{critic_forward.1} parent=5 // pred_region
      %s10780 = ssub.s32 %s11, 2
    $region60: #{critic_forward.1} parent=5 // pred_fallthru
      _
  $region6: #{critic_forward.1} parent=0 // loop_footer
    %s15 = sadd.s32 1, %s11
  $region7: #{critic_forward.1} parent=0 // loop_footer_branch
    %10 = sbr.rel target = $region3
  $region8: #{critic_forward.1} parent=0 // loop_exit
    _

</llo_original>
